<compile_context>
chip_gen: v7x
topology: tpu7x:2x2x1
jax: 0.10.0
libtpu: 0.0.40
codegen_flags: <defaults>
</compile_context>

<pallas_src>
import functools

import jax
import jax.numpy as jnp
import numpy as np
from jax.experimental import pallas as pl
from jax.experimental.pallas import tpu as pltpu


# --------------------------- model configuration ---------------------------

VOCAB = 64
SEQ = 8
HIDDEN = 32
HEADS = 4
HEAD_DIM = HIDDEN // HEADS
FFN = 64
LAYERS = 2
LN_EPS = 1e-12


# ------------------------------ shared math ---------------------------------

def _layer_norm(x, g, b):
    mu = jnp.mean(x, axis=-1, keepdims=True)
    var = jnp.mean(jnp.square(x - mu), axis=-1, keepdims=True)
    return (x - mu) * jax.lax.rsqrt(var + LN_EPS) * g + b


def _gelu(x):
    # tanh approximation (HF "gelu_new").
    # TODO(synk): exact erf-GELU (HF BERT default) not used to keep the Mosaic
    # lowering to known-good EUP ops (tanh); difference is <1e-3 at these scales.
    c = 0.7978845608028654  # sqrt(2/pi)
    return 0.5 * x * (1.0 + jnp.tanh(c * (x + 0.044715 * x * x * x)))


# ------------------------------ Pallas kernel -------------------------------

def _encoder_kernel(emb_ref, emb_g_ref, emb_b_ref,
                    wq_ref, bq_ref, wk_ref, bk_ref, wv_ref, bv_ref,
                    wo_ref, bo_ref, ln1_g_ref, ln1_b_ref,
                    w1_ref, b1_ref, w2_ref, b2_ref, ln2_g_ref, ln2_b_ref,
                    hs_ref, attn_ref, *, layers, heads):
    """One program = one batch element. Everything stays in VMEM/vregs."""
    _, S, D = emb_ref.shape

    # Embedding LayerNorm -> hidden_states[0]
    h = _layer_norm(emb_ref[0], emb_g_ref[...], emb_b_ref[...])      # (S, D)
    hs_ref[0, 0] = h

    for li in range(layers):                     # static unroll (LAYERS=2)
        attn_out = jnp.zeros((S, D), jnp.float32)
        for hh in range(heads):                  # static unroll (HEADS=4)
            # Per-head projections; 1/sqrt(head_dim) already folded into wq/bq.
            q = jnp.dot(h, wq_ref[li, hh],
                        preferred_element_type=jnp.float32) + bq_ref[li, hh]
            k = jnp.dot(h, wk_ref[li, hh],
                        preferred_element_type=jnp.float32) + bk_ref[li, hh]
            v = jnp.dot(h, wv_ref[li, hh],
                        preferred_element_type=jnp.float32) + bv_ref[li, hh]
            s = jnp.dot(q, k.T, preferred_element_type=jnp.float32)  # (S, S)
            m = jnp.max(s, axis=-1, keepdims=True)
            p = jnp.exp(s - m)
            denom = jnp.sum(p, axis=-1, keepdims=True)
            probs = p * pl.reciprocal(denom, approx=True)            # EUP recip
            attn_ref[0, li * heads + hh] = probs
            ctx = jnp.dot(probs, v, preferred_element_type=jnp.float32)  # (S, hd)
            # Fold the per-head slice of the output projection into the sum.
            attn_out = attn_out + jnp.dot(ctx, wo_ref[li, hh],
                                          preferred_element_type=jnp.float32)
        attn_out = attn_out + bo_ref[li]
        h1 = _layer_norm(h + attn_out, ln1_g_ref[li], ln1_b_ref[li])
        ff = _gelu(jnp.dot(h1, w1_ref[li],
                           preferred_element_type=jnp.float32) + b1_ref[li])
        ff = jnp.dot(ff, w2_ref[li],
                     preferred_element_type=jnp.float32) + b2_ref[li]
        h = _layer_norm(h1 + ff, ln2_g_ref[li], ln2_b_ref[li])
        hs_ref[0, li + 1] = h


# --------------------------- parameters & packing ----------------------------

def init_params(key):
    def normal(k, shape):
        return (0.02 * jax.random.normal(k, shape)).astype(jnp.float32)

    keys = jax.random.split(key, 4 + LAYERS * 8)
    params = {
        "word_emb": normal(keys[0], (VOCAB, HIDDEN)),
        "pos_emb": normal(keys[1], (SEQ, HIDDEN)),
        "emb_ln_g": jnp.ones((HIDDEN,), jnp.float32),
        "emb_ln_b": jnp.zeros((HIDDEN,), jnp.float32),
        "layers": [],
    }
    for li in range(LAYERS):
        k = keys[4 + li * 8: 4 + (li + 1) * 8]
        params["layers"].append({
            "wq": normal(k[0], (HIDDEN, HIDDEN)), "bq": jnp.zeros((HIDDEN,), jnp.float32),
            "wk": normal(k[1], (HIDDEN, HIDDEN)), "bk": jnp.zeros((HIDDEN,), jnp.float32),
            "wv": normal(k[2], (HIDDEN, HIDDEN)), "bv": jnp.zeros((HIDDEN,), jnp.float32),
            "wo": normal(k[3], (HIDDEN, HIDDEN)), "bo": jnp.zeros((HIDDEN,), jnp.float32),
            "ln1_g": jnp.ones((HIDDEN,), jnp.float32), "ln1_b": jnp.zeros((HIDDEN,), jnp.float32),
            "w1": normal(k[4], (HIDDEN, FFN)), "b1": jnp.zeros((FFN,), jnp.float32),
            "w2": normal(k[5], (FFN, HIDDEN)), "b2": jnp.zeros((HIDDEN,), jnp.float32),
            "ln2_g": jnp.ones((HIDDEN,), jnp.float32), "ln2_b": jnp.zeros((HIDDEN,), jnp.float32),
        })
    return params


def _pack_params(params):
    """Stack per-layer weights on leading axes, split attention weights per head,
    and fold 1/sqrt(head_dim) into the Q projection."""
    L, H, D, hd = LAYERS, HEADS, HIDDEN, HEAD_DIM
    scale = 1.0 / float(hd) ** 0.5
    lyr = params["layers"]

    def split_in(w):    # (D, D) -> (H, D, hd): column block per head
        return w.reshape(D, H, hd).transpose(1, 0, 2)

    def split_out(w):   # (D, D) -> (H, hd, D): row block per head (wo)
        return w.reshape(H, hd, D)

    return {
        "wq": jnp.stack([split_in(lp["wq"] * scale) for lp in lyr]),
        "bq": jnp.stack([(lp["bq"] * scale).reshape(H, 1, hd) for lp in lyr]),
        "wk": jnp.stack([split_in(lp["wk"]) for lp in lyr]),
        "bk": jnp.stack([lp["bk"].reshape(H, 1, hd) for lp in lyr]),
        "wv": jnp.stack([split_in(lp["wv"]) for lp in lyr]),
        "bv": jnp.stack([lp["bv"].reshape(H, 1, hd) for lp in lyr]),
        "wo": jnp.stack([split_out(lp["wo"]) for lp in lyr]),
        "bo": jnp.stack([lp["bo"][None, :] for lp in lyr]),
        "ln1_g": jnp.stack([lp["ln1_g"][None, :] for lp in lyr]),
        "ln1_b": jnp.stack([lp["ln1_b"][None, :] for lp in lyr]),
        "w1": jnp.stack([lp["w1"] for lp in lyr]),
        "b1": jnp.stack([lp["b1"][None, :] for lp in lyr]),
        "w2": jnp.stack([lp["w2"] for lp in lyr]),
        "b2": jnp.stack([lp["b2"][None, :] for lp in lyr]),
        "ln2_g": jnp.stack([lp["ln2_g"][None, :] for lp in lyr]),
        "ln2_b": jnp.stack([lp["ln2_b"][None, :] for lp in lyr]),
    }


# ------------------------------- forward pass --------------------------------

@jax.jit
def encoder_forward(params, inputs):
    """Mirrors Encoder.forward: run with hidden states + attentions, then apply
    the same [:, 1:, ...] post-processing as the reference module."""
    B, S = inputs.shape
    D, H, hd, F, L = HIDDEN, HEADS, HEAD_DIM, FFN, LAYERS

    # Embedding gather is XLA glue; LayerNorm happens inside the fused kernel.
    emb = params["word_emb"][inputs] + params["pos_emb"][None, :S, :]
    p = _pack_params(params)

    def _rep(shape):  # weight spec: same (whole-array) block for every program
        zeros = (0,) * len(shape)
        return pl.BlockSpec(shape, lambda b, _z=zeros: _z)

    kernel = functools.partial(_encoder_kernel, layers=L, heads=H)

    hs, att = pl.pallas_call(
        kernel,
        out_shape=(
            jax.ShapeDtypeStruct((B, L + 1, S, D), jnp.float32),   # hidden states
            jax.ShapeDtypeStruct((B, L * H, S, S), jnp.float32),   # attn probs
        ),
        grid=(B,),
        in_specs=[
            pl.BlockSpec((1, S, D), lambda b: (b, 0, 0)),          # embeddings
            _rep((1, D)), _rep((1, D)),                            # emb LN g, b
            _rep((L, H, D, hd)), _rep((L, H, 1, hd)),              # wq, bq
            _rep((L, H, D, hd)), _rep((L, H, 1, hd)),              # wk, bk
            _rep((L, H, D, hd)), _rep((L, H, 1, hd)),              # wv, bv
            _rep((L, H, hd, D)), _rep((L, 1, D)),                  # wo, bo
            _rep((L, 1, D)), _rep((L, 1, D)),                      # ln1 g, b
            _rep((L, D, F)), _rep((L, 1, F)),                      # w1, b1
            _rep((L, F, D)), _rep((L, 1, D)),                      # w2, b2
            _rep((L, 1, D)), _rep((L, 1, D)),                      # ln2 g, b
        ],
        out_specs=(
            pl.BlockSpec((1, L + 1, S, D), lambda b: (b, 0, 0, 0)),
            pl.BlockSpec((1, L * H, S, S), lambda b: (b, 0, 0, 0)),
        ),
        compiler_params=pltpu.CompilerParams(
            dimension_semantics=("parallel",)),     # 2 TCs on v7x split batch
    )(
        emb,
        params["emb_ln_g"][None, :], params["emb_ln_b"][None, :],
        p["wq"], p["bq"], p["wk"], p["bk"], p["wv"], p["bv"],
        p["wo"], p["bo"], p["ln1_g"], p["ln1_b"],
        p["w1"], p["b1"], p["w2"], p["b2"], p["ln2_g"], p["ln2_b"],
    )

    hidden_states = [hs[:, i] for i in range(L + 1)]
    att = att.reshape(B, L, H, S, S)
    attn_layers = [att[:, i] for i in range(L)]

    # Post-processing exactly as in Encoder.forward:
    #   encoder_states = hidden_states[:-1]; strip token 0 from every state;
    #   attentions: `output[:, 1:, 1:]` applied to a (B, H, S, S) tensor — this
    #   slices the HEAD axis and the QUERY axis, mirroring the reference code
    #   literally (result shape (B, H-1, S-1, S)).
    encoder_states = [x[:, 1:, :] for x in hidden_states[:-1]]
    encoder_out = hidden_states[-1][:, 1:, :]
    attentions = [a[:, 1:, 1:] for a in attn_layers]
    return {"encoder_states": encoder_states,
            "encoder_out": encoder_out,
            "attentions": attentions}


# --------------------------- pure-JAX reference ------------------------------

def encoder_reference(params, inputs):
    """Plain-JAX reference of the same model (for correctness checking)."""
    B, S = inputs.shape
    D, H, hd = HIDDEN, HEADS, HEAD_DIM
    scale = 1.0 / float(hd) ** 0.5
    hi = jax.lax.Precision.HIGHEST

    emb = params["word_emb"][inputs] + params["pos_emb"][None, :S, :]
    h = _layer_norm(emb, params["emb_ln_g"], params["emb_ln_b"])
    hidden_states = [h]
    attentions = []
    for lp in params["layers"]:
        q = jnp.dot(h, lp["wq"], precision=hi) + lp["bq"]
        k = jnp.dot(h, lp["wk"], precision=hi) + lp["bk"]
        v = jnp.dot(h, lp["wv"], precision=hi) + lp["bv"]

        def split(t):
            return t.reshape(B, S, H, hd).transpose(0, 2, 1, 3)

        s = jnp.einsum("bhqd,bhkd->bhqk", split(q) * scale, split(k), precision=hi)
        probs = jax.nn.softmax(s, axis=-1)
        attentions.append(probs)
        ctx = jnp.einsum("bhqk,bhkd->bhqd", probs, split(v), precision=hi)
        ctx = ctx.transpose(0, 2, 1, 3).reshape(B, S, D)
        h1 = _layer_norm(h + jnp.dot(ctx, lp["wo"], precision=hi) + lp["bo"],
                         lp["ln1_g"], lp["ln1_b"])
        ff = _gelu(jnp.dot(h1, lp["w1"], precision=hi) + lp["b1"])
        ff = jnp.dot(ff, lp["w2"], precision=hi) + lp["b2"]
        h = _layer_norm(h1 + ff, lp["ln2_g"], lp["ln2_b"])
        hidden_states.append(h)
    return hidden_states, attentions


# ----------------------------------- main ------------------------------------

if __name__ == "__main__":
    key = jax.random.PRNGKey(0)
    pkey, ikey = jax.random.split(key)
    params = init_params(pkey)
    B = 2
    inputs = jax.random.randint(ikey, (B, SEQ), 0, VOCAB, dtype=jnp.int32)

    out = encoder_forward(params, inputs)
    jax.block_until_ready(out["encoder_out"])
    jax.block_until_ready(out["attentions"])

    # Shape checks, matching the reference Encoder.forward post-processing.
    assert out["encoder_out"].shape == (B, SEQ - 1, HIDDEN)
    assert len(out["encoder_states"]) == LAYERS
    assert all(e.shape == (B, SEQ - 1, HIDDEN) for e in out["encoder_states"])
    assert len(out["attentions"]) == LAYERS
    # `output[:, 1:, 1:]` on (B, H, S, S) -> (B, H-1, S-1, S), as in the
    # original module's literal indexing.
    assert all(a.shape == (B, HEADS - 1, SEQ - 1, SEQ) for a in out["attentions"])

    # Numerical check against the plain-JAX reference of the same model.
    ref_hidden, ref_attn = encoder_reference(params, inputs)
    np.testing.assert_allclose(np.asarray(out["encoder_out"]),
                               np.asarray(ref_hidden[-1][:, 1:, :]),
                               atol=1e-2, rtol=1e-2)
    for got_s, ref_s in zip(out["encoder_states"], ref_hidden[:-1]):
        np.testing.assert_allclose(np.asarray(got_s), np.asarray(ref_s[:, 1:, :]),
                                   atol=1e-2, rtol=1e-2)
    for got_a, ref_a in zip(out["attentions"], ref_attn):
        np.testing.assert_allclose(np.asarray(got_a), np.asarray(ref_a[:, 1:, 1:]),
                                   atol=1e-2, rtol=1e-2)

    print("KERNEL_OK")
</pallas_src>

<mosaic_0001>
module attributes {stable_mosaic.version = 11 : i64} {
  func.func @_encoder_kernel(%arg0: i32, %arg1: memref<1x8x32xf32, #tpu.memory_space<vmem>>, %arg2: memref<1x32xf32, #tpu.memory_space<vmem>>, %arg3: memref<1x32xf32, #tpu.memory_space<vmem>>, %arg4: memref<2x4x32x8xf32, #tpu.memory_space<vmem>>, %arg5: memref<2x4x1x8xf32, #tpu.memory_space<vmem>>, %arg6: memref<2x4x32x8xf32, #tpu.memory_space<vmem>>, %arg7: memref<2x4x1x8xf32, #tpu.memory_space<vmem>>, %arg8: memref<2x4x32x8xf32, #tpu.memory_space<vmem>>, %arg9: memref<2x4x1x8xf32, #tpu.memory_space<vmem>>, %arg10: memref<2x4x8x32xf32, #tpu.memory_space<vmem>>, %arg11: memref<2x1x32xf32, #tpu.memory_space<vmem>>, %arg12: memref<2x1x32xf32, #tpu.memory_space<vmem>>, %arg13: memref<2x1x32xf32, #tpu.memory_space<vmem>>, %arg14: memref<2x32x64xf32, #tpu.memory_space<vmem>>, %arg15: memref<2x1x64xf32, #tpu.memory_space<vmem>>, %arg16: memref<2x64x32xf32, #tpu.memory_space<vmem>>, %arg17: memref<2x1x32xf32, #tpu.memory_space<vmem>>, %arg18: memref<2x1x32xf32, #tpu.memory_space<vmem>>, %arg19: memref<2x1x32xf32, #tpu.memory_space<vmem>>, %arg20: memref<1x3x8x32xf32, #tpu.memory_space<vmem>>, %arg21: memref<1x8x8x8xf32, #tpu.memory_space<vmem>>) attributes {dimension_semantics = [#tpu.dimension_semantics<parallel>], iteration_bounds = array<i64: 2>, scalar_prefetch = 0 : i64, scratch_operands = 0 : i64, tpu.core_type = #tpu.core_type<tc>, window_params = [{transform_indices = @transform_0, window_bounds = array<i64: 1, 8, 32>}, {pipeline_mode = #tpu.pipeline_mode<synchronous>, transform_indices = @transform_1, window_bounds = array<i64: 1, 32>}, {pipeline_mode = #tpu.pipeline_mode<synchronous>, transform_indices = @transform_2, window_bounds = array<i64: 1, 32>}, {pipeline_mode = #tpu.pipeline_mode<synchronous>, transform_indices = @transform_3, window_bounds = array<i64: 2, 4, 32, 8>}, {pipeline_mode = #tpu.pipeline_mode<synchronous>, transform_indices = @transform_4, window_bounds = array<i64: 2, 4, 1, 8>}, {pipeline_mode = #tpu.pipeline_mode<synchronous>, transform_indices = @transform_5, window_bounds = array<i64: 2, 4, 32, 8>}, {pipeline_mode = #tpu.pipeline_mode<synchronous>, transform_indices = @transform_6, window_bounds = array<i64: 2, 4, 1, 8>}, {pipeline_mode = #tpu.pipeline_mode<synchronous>, transform_indices = @transform_7, window_bounds = array<i64: 2, 4, 32, 8>}, {pipeline_mode = #tpu.pipeline_mode<synchronous>, transform_indices = @transform_8, window_bounds = array<i64: 2, 4, 1, 8>}, {pipeline_mode = #tpu.pipeline_mode<synchronous>, transform_indices = @transform_9, window_bounds = array<i64: 2, 4, 8, 32>}, {pipeline_mode = #tpu.pipeline_mode<synchronous>, transform_indices = @transform_10, window_bounds = array<i64: 2, 1, 32>}, {pipeline_mode = #tpu.pipeline_mode<synchronous>, transform_indices = @transform_11, window_bounds = array<i64: 2, 1, 32>}, {pipeline_mode = #tpu.pipeline_mode<synchronous>, transform_indices = @transform_12, window_bounds = array<i64: 2, 1, 32>}, {pipeline_mode = #tpu.pipeline_mode<synchronous>, transform_indices = @transform_13, window_bounds = array<i64: 2, 32, 64>}, {pipeline_mode = #tpu.pipeline_mode<synchronous>, transform_indices = @transform_14, window_bounds = array<i64: 2, 1, 64>}, {pipeline_mode = #tpu.pipeline_mode<synchronous>, transform_indices = @transform_15, window_bounds = array<i64: 2, 64, 32>}, {pipeline_mode = #tpu.pipeline_mode<synchronous>, transform_indices = @transform_16, window_bounds = array<i64: 2, 1, 32>}, {pipeline_mode = #tpu.pipeline_mode<synchronous>, transform_indices = @transform_17, window_bounds = array<i64: 2, 1, 32>}, {pipeline_mode = #tpu.pipeline_mode<synchronous>, transform_indices = @transform_18, window_bounds = array<i64: 2, 1, 32>}, {transform_indices = @transform_19, window_bounds = array<i64: 1, 3, 8, 32>}, {transform_indices = @transform_20, window_bounds = array<i64: 1, 8, 8, 8>}]} {
    %c0 = arith.constant 0 : index
    %c0_0 = arith.constant 0 : index
    %c0_1 = arith.constant 0 : index
    %0 = vector.load %arg1[%c0, %c0_0, %c0_1] : memref<1x8x32xf32, #tpu.memory_space<vmem>>, vector<1x8x32xf32>
    %1 = vector.shape_cast %0 : vector<1x8x32xf32> to vector<8x32xf32>
    %c0_2 = arith.constant 0 : index
    %c0_3 = arith.constant 0 : index
    %2 = vector.load %arg2[%c0_2, %c0_3] : memref<1x32xf32, #tpu.memory_space<vmem>>, vector<1x32xf32>
    %c0_4 = arith.constant 0 : index
    %c0_5 = arith.constant 0 : index
    %3 = vector.load %arg3[%c0_4, %c0_5] : memref<1x32xf32, #tpu.memory_space<vmem>>, vector<1x32xf32>
    %cst = arith.constant dense<0.000000e+00> : vector<8xf32>
    %4 = vector.multi_reduction <add>, %1, %cst [1] : vector<8x32xf32> to vector<8xf32>
    %5 = vector.shape_cast %4 : vector<8xf32> to vector<8x1xf32>
    %cst_6 = arith.constant 3.200000e+01 : f32
    %6 = vector.broadcast %cst_6 : f32 to vector<8x1xf32>
    %7 = arith.divf %5, %6 : vector<8x1xf32>
    %8 = vector.broadcast %7 : vector<8x1xf32> to vector<8x32xf32>
    %9 = arith.subf %1, %8 : vector<8x32xf32>
    %10 = arith.mulf %9, %9 : vector<8x32xf32>
    %cst_7 = arith.constant dense<0.000000e+00> : vector<8xf32>
    %11 = vector.multi_reduction <add>, %10, %cst_7 [1] : vector<8x32xf32> to vector<8xf32>
    %12 = vector.shape_cast %11 : vector<8xf32> to vector<8x1xf32>
    %cst_8 = arith.constant 3.200000e+01 : f32
    %13 = vector.broadcast %cst_8 : f32 to vector<8x1xf32>
    %14 = arith.divf %12, %13 : vector<8x1xf32>
    %15 = vector.broadcast %7 : vector<8x1xf32> to vector<8x32xf32>
    %16 = arith.subf %1, %15 : vector<8x32xf32>
    %cst_9 = arith.constant 9.99999996E-13 : f32
    %17 = vector.broadcast %cst_9 : f32 to vector<8x1xf32>
    %18 = arith.addf %14, %17 : vector<8x1xf32>
    %19 = math.rsqrt %18 : vector<8x1xf32>
    %20 = vector.broadcast %19 : vector<8x1xf32> to vector<8x32xf32>
    %21 = arith.mulf %16, %20 : vector<8x32xf32>
    %22 = vector.broadcast %2 : vector<1x32xf32> to vector<8x32xf32>
    %23 = arith.mulf %21, %22 : vector<8x32xf32>
    %24 = vector.broadcast %3 : vector<1x32xf32> to vector<8x32xf32>
    %25 = arith.addf %23, %24 : vector<8x32xf32>
    %c0_10 = arith.constant 0 : index
    %c0_11 = arith.constant 0 : index
    %c0_12 = arith.constant 0 : index
    %c0_13 = arith.constant 0 : index
    %26 = vector.load %arg20[%c0_10, %c0_11, %c0_12, %c0_13] : memref<1x3x8x32xf32, #tpu.memory_space<vmem>>, vector<1x1x8x32xf32>
    %27 = vector.shape_cast %26 : vector<1x1x8x32xf32> to vector<8x32xf32>
    %28 = vector.shape_cast %25 : vector<8x32xf32> to vector<1x1x8x32xf32>
    tpu.vector_store %arg20[%c0_10, %c0_11, %c0_12, %c0_13], %28 {strides = array<i32>} : memref<1x3x8x32xf32, #tpu.memory_space<vmem>>, vector<1x1x8x32xf32>,
    %cst_14 = arith.constant 0.000000e+00 : f32
    %29 = vector.broadcast %cst_14 : f32 to vector<8x32xf32>
    %c0_15 = arith.constant 0 : index
    %c0_16 = arith.constant 0 : index
    %c0_17 = arith.constant 0 : index
    %c0_18 = arith.constant 0 : index
    %30 = vector.load %arg4[%c0_15, %c0_16, %c0_17, %c0_18] : memref<2x4x32x8xf32, #tpu.memory_space<vmem>>, vector<1x1x32x8xf32>
    %31 = vector.shape_cast %30 : vector<1x1x32x8xf32> to vector<32x8xf32>
    %cst_19 = arith.constant dense<0.000000e+00> : vector<8x8xf32>
    %32 = tpu.matmul %25, %31, %cst_19 {dimension_numbers = #tpu.dot_dimension_numbers<[1], [0], [0], [1], [0, 0, 1, 1], [], []>} : vector<8x32xf32>, vector<32x8xf32>, vector<8x8xf32> -> vector<8x8xf32>
    %c0_20 = arith.constant 0 : index
    %c0_21 = arith.constant 0 : index
    %c0_22 = arith.constant 0 : index
    %c0_23 = arith.constant 0 : index
    %33 = vector.load %arg5[%c0_20, %c0_21, %c0_22, %c0_23] : memref<2x4x1x8xf32, #tpu.memory_space<vmem>>, vector<1x1x1x8xf32>
    %34 = vector.shape_cast %33 : vector<1x1x1x8xf32> to vector<1x8xf32>
    %35 = vector.broadcast %34 : vector<1x8xf32> to vector<8x8xf32>
    %36 = arith.addf %32, %35 : vector<8x8xf32>
    %c0_24 = arith.constant 0 : index
    %c0_25 = arith.constant 0 : index
    %c0_26 = arith.constant 0 : index
    %c0_27 = arith.constant 0 : index
    %37 = vector.load %arg6[%c0_24, %c0_25, %c0_26, %c0_27] : memref<2x4x32x8xf32, #tpu.memory_space<vmem>>, vector<1x1x32x8xf32>
    %38 = vector.shape_cast %37 : vector<1x1x32x8xf32> to vector<32x8xf32>
    %cst_28 = arith.constant dense<0.000000e+00> : vector<8x8xf32>
    %39 = tpu.matmul %25, %38, %cst_28 {dimension_numbers = #tpu.dot_dimension_numbers<[1], [0], [0], [1], [0, 0, 1, 1], [], []>} : vector<8x32xf32>, vector<32x8xf32>, vector<8x8xf32> -> vector<8x8xf32>
    %c0_29 = arith.constant 0 : index
    %c0_30 = arith.constant 0 : index
    %c0_31 = arith.constant 0 : index
    %c0_32 = arith.constant 0 : index
    %40 = vector.load %arg7[%c0_29, %c0_30, %c0_31, %c0_32] : memref<2x4x1x8xf32, #tpu.memory_space<vmem>>, vector<1x1x1x8xf32>
    %41 = vector.shape_cast %40 : vector<1x1x1x8xf32> to vector<1x8xf32>
    %42 = vector.broadcast %41 : vector<1x8xf32> to vector<8x8xf32>
    %43 = arith.addf %39, %42 : vector<8x8xf32>
    %c0_33 = arith.constant 0 : index
    %c0_34 = arith.constant 0 : index
    %c0_35 = arith.constant 0 : index
    %c0_36 = arith.constant 0 : index
    %44 = vector.load %arg8[%c0_33, %c0_34, %c0_35, %c0_36] : memref<2x4x32x8xf32, #tpu.memory_space<vmem>>, vector<1x1x32x8xf32>
    %45 = vector.shape_cast %44 : vector<1x1x32x8xf32> to vector<32x8xf32>
    %cst_37 = arith.constant dense<0.000000e+00> : vector<8x8xf32>
    %46 = tpu.matmul %25, %45, %cst_37 {dimension_numbers = #tpu.dot_dimension_numbers<[1], [0], [0], [1], [0, 0, 1, 1], [], []>} : vector<8x32xf32>, vector<32x8xf32>, vector<8x8xf32> -> vector<8x8xf32>
    %c0_38 = arith.constant 0 : index
    %c0_39 = arith.constant 0 : index
    %c0_40 = arith.constant 0 : index
    %c0_41 = arith.constant 0 : index
    %47 = vector.load %arg9[%c0_38, %c0_39, %c0_40, %c0_41] : memref<2x4x1x8xf32, #tpu.memory_space<vmem>>, vector<1x1x1x8xf32>
    %48 = vector.shape_cast %47 : vector<1x1x1x8xf32> to vector<1x8xf32>
    %49 = vector.broadcast %48 : vector<1x8xf32> to vector<8x8xf32>
    %50 = arith.addf %46, %49 : vector<8x8xf32>
    %51 = tpu.transpose %43, [1, 0] : vector<8x8xf32> -> vector<8x8xf32>
    %cst_42 = arith.constant dense<0.000000e+00> : vector<8x8xf32>
    %52 = tpu.matmul %36, %51, %cst_42 {dimension_numbers = #tpu.dot_dimension_numbers<[1], [0], [0], [1], [0, 0, 1, 1], [], []>} : vector<8x8xf32>, vector<8x8xf32>, vector<8x8xf32> -> vector<8x8xf32>
    %cst_43 = arith.constant dense<0xFF800000> : vector<8xf32>
    %53 = vector.multi_reduction <maximumf>, %52, %cst_43 [1] : vector<8x8xf32> to vector<8xf32>
    %54 = vector.shape_cast %53 : vector<8xf32> to vector<8x1xf32>
    %55 = vector.broadcast %54 : vector<8x1xf32> to vector<8x8xf32>
    %56 = arith.subf %52, %55 : vector<8x8xf32>
    %57 = math.exp %56 : vector<8x8xf32>
    %cst_44 = arith.constant dense<0.000000e+00> : vector<8xf32>
    %58 = vector.multi_reduction <add>, %57, %cst_44 [1] : vector<8x8xf32> to vector<8xf32>
    %59 = vector.shape_cast %58 : vector<8xf32> to vector<8x1xf32>
    %60 = tpu.reciprocal %59 {approx = true} : vector<8x1xf32> -> vector<8x1xf32>
    %61 = vector.broadcast %60 : vector<8x1xf32> to vector<8x8xf32>
    %62 = arith.mulf %57, %61 : vector<8x8xf32>
    %c0_45 = arith.constant 0 : index
    %c0_46 = arith.constant 0 : index
    %c0_47 = arith.constant 0 : index
    %c0_48 = arith.constant 0 : index
    %63 = vector.load %arg21[%c0_45, %c0_46, %c0_47, %c0_48] : memref<1x8x8x8xf32, #tpu.memory_space<vmem>>, vector<1x1x8x8xf32>
    %64 = vector.shape_cast %63 : vector<1x1x8x8xf32> to vector<8x8xf32>
    %65 = vector.shape_cast %62 : vector<8x8xf32> to vector<1x1x8x8xf32>
    tpu.vector_store %arg21[%c0_45, %c0_46, %c0_47, %c0_48], %65 {strides = array<i32>} : memref<1x8x8x8xf32, #tpu.memory_space<vmem>>, vector<1x1x8x8xf32>,
    %cst_49 = arith.constant dense<0.000000e+00> : vector<8x8xf32>
    %66 = tpu.matmul %62, %50, %cst_49 {dimension_numbers = #tpu.dot_dimension_numbers<[1], [0], [0], [1], [0, 0, 1, 1], [], []>} : vector<8x8xf32>, vector<8x8xf32>, vector<8x8xf32> -> vector<8x8xf32>
    %c0_50 = arith.constant 0 : index
    %c0_51 = arith.constant 0 : index
    %c0_52 = arith.constant 0 : index
    %c0_53 = arith.constant 0 : index
    %67 = vector.load %arg10[%c0_50, %c0_51, %c0_52, %c0_53] : memref<2x4x8x32xf32, #tpu.memory_space<vmem>>, vector<1x1x8x32xf32>
    %68 = vector.shape_cast %67 : vector<1x1x8x32xf32> to vector<8x32xf32>
    %cst_54 = arith.constant dense<0.000000e+00> : vector<8x32xf32>
    %69 = tpu.matmul %66, %68, %cst_54 {dimension_numbers = #tpu.dot_dimension_numbers<[1], [0], [0], [1], [0, 0, 1, 1], [], []>} : vector<8x8xf32>, vector<8x32xf32>, vector<8x32xf32> -> vector<8x32xf32>
    %70 = arith.addf %29, %69 : vector<8x32xf32>
    %c0_55 = arith.constant 0 : index
    %c1 = arith.constant 1 : index
    %c0_56 = arith.constant 0 : index
    %c0_57 = arith.constant 0 : index
    %71 = vector.load %arg4[%c0_55, %c1, %c0_56, %c0_57] : memref<2x4x32x8xf32, #tpu.memory_space<vmem>>, vector<1x1x32x8xf32>
    %72 = vector.shape_cast %71 : vector<1x1x32x8xf32> to vector<32x8xf32>
    %cst_58 = arith.constant dense<0.000000e+00> : vector<8x8xf32>
    %73 = tpu.matmul %25, %72, %cst_58 {dimension_numbers = #tpu.dot_dimension_numbers<[1], [0], [0], [1], [0, 0, 1, 1], [], []>} : vector<8x32xf32>, vector<32x8xf32>, vector<8x8xf32> -> vector<8x8xf32>
    %c0_59 = arith.constant 0 : index
    %c1_60 = arith.constant 1 : index
    %c0_61 = arith.constant 0 : index
    %c0_62 = arith.constant 0 : index
    %74 = vector.load %arg5[%c0_59, %c1_60, %c0_61, %c0_62] : memref<2x4x1x8xf32, #tpu.memory_space<vmem>>, vector<1x1x1x8xf32>
    %75 = vector.shape_cast %74 : vector<1x1x1x8xf32> to vector<1x8xf32>
    %76 = vector.broadcast %75 : vector<1x8xf32> to vector<8x8xf32>
    %77 = arith.addf %73, %76 : vector<8x8xf32>
    %c0_63 = arith.constant 0 : index
    %c1_64 = arith.constant 1 : index
    %c0_65 = arith.constant 0 : index
    %c0_66 = arith.constant 0 : index
    %78 = vector.load %arg6[%c0_63, %c1_64, %c0_65, %c0_66] : memref<2x4x32x8xf32, #tpu.memory_space<vmem>>, vector<1x1x32x8xf32>
    %79 = vector.shape_cast %78 : vector<1x1x32x8xf32> to vector<32x8xf32>
    %cst_67 = arith.constant dense<0.000000e+00> : vector<8x8xf32>
    %80 = tpu.matmul %25, %79, %cst_67 {dimension_numbers = #tpu.dot_dimension_numbers<[1], [0], [0], [1], [0, 0, 1, 1], [], []>} : vector<8x32xf32>, vector<32x8xf32>, vector<8x8xf32> -> vector<8x8xf32>
    %c0_68 = arith.constant 0 : index
    %c1_69 = arith.constant 1 : index
    %c0_70 = arith.constant 0 : index
    %c0_71 = arith.constant 0 : index
    %81 = vector.load %arg7[%c0_68, %c1_69, %c0_70, %c0_71] : memref<2x4x1x8xf32, #tpu.memory_space<vmem>>, vector<1x1x1x8xf32>
    %82 = vector.shape_cast %81 : vector<1x1x1x8xf32> to vector<1x8xf32>
    %83 = vector.broadcast %82 : vector<1x8xf32> to vector<8x8xf32>
    %84 = arith.addf %80, %83 : vector<8x8xf32>
    %c0_72 = arith.constant 0 : index
    %c1_73 = arith.constant 1 : index
    %c0_74 = arith.constant 0 : index
    %c0_75 = arith.constant 0 : index
    %85 = vector.load %arg8[%c0_72, %c1_73, %c0_74, %c0_75] : memref<2x4x32x8xf32, #tpu.memory_space<vmem>>, vector<1x1x32x8xf32>
    %86 = vector.shape_cast %85 : vector<1x1x32x8xf32> to vector<32x8xf32>
    %cst_76 = arith.constant dense<0.000000e+00> : vector<8x8xf32>
    %87 = tpu.matmul %25, %86, %cst_76 {dimension_numbers = #tpu.dot_dimension_numbers<[1], [0], [0], [1], [0, 0, 1, 1], [], []>} : vector<8x32xf32>, vector<32x8xf32>, vector<8x8xf32> -> vector<8x8xf32>
    %c0_77 = arith.constant 0 : index
    %c1_78 = arith.constant 1 : index
    %c0_79 = arith.constant 0 : index
    %c0_80 = arith.constant 0 : index
    %88 = vector.load %arg9[%c0_77, %c1_78, %c0_79, %c0_80] : memref<2x4x1x8xf32, #tpu.memory_space<vmem>>, vector<1x1x1x8xf32>
    %89 = vector.shape_cast %88 : vector<1x1x1x8xf32> to vector<1x8xf32>
    %90 = vector.broadcast %89 : vector<1x8xf32> to vector<8x8xf32>
    %91 = arith.addf %87, %90 : vector<8x8xf32>
    %92 = tpu.transpose %84, [1, 0] : vector<8x8xf32> -> vector<8x8xf32>
    %cst_81 = arith.constant dense<0.000000e+00> : vector<8x8xf32>
    %93 = tpu.matmul %77, %92, %cst_81 {dimension_numbers = #tpu.dot_dimension_numbers<[1], [0], [0], [1], [0, 0, 1, 1], [], []>} : vector<8x8xf32>, vector<8x8xf32>, vector<8x8xf32> -> vector<8x8xf32>
    %cst_82 = arith.constant dense<0xFF800000> : vector<8xf32>
    %94 = vector.multi_reduction <maximumf>, %93, %cst_82 [1] : vector<8x8xf32> to vector<8xf32>
    %95 = vector.shape_cast %94 : vector<8xf32> to vector<8x1xf32>
    %96 = vector.broadcast %95 : vector<8x1xf32> to vector<8x8xf32>
    %97 = arith.subf %93, %96 : vector<8x8xf32>
    %98 = math.exp %97 : vector<8x8xf32>
    %cst_83 = arith.constant dense<0.000000e+00> : vector<8xf32>
    %99 = vector.multi_reduction <add>, %98, %cst_83 [1] : vector<8x8xf32> to vector<8xf32>
    %100 = vector.shape_cast %99 : vector<8xf32> to vector<8x1xf32>
    %101 = tpu.reciprocal %100 {approx = true} : vector<8x1xf32> -> vector<8x1xf32>
    %102 = vector.broadcast %101 : vector<8x1xf32> to vector<8x8xf32>
    %103 = arith.mulf %98, %102 : vector<8x8xf32>
    %c0_84 = arith.constant 0 : index
    %c1_85 = arith.constant 1 : index
    %c0_86 = arith.constant 0 : index
    %c0_87 = arith.constant 0 : index
    %104 = vector.load %arg21[%c0_84, %c1_85, %c0_86, %c0_87] : memref<1x8x8x8xf32, #tpu.memory_space<vmem>>, vector<1x1x8x8xf32>
    %105 = vector.shape_cast %104 : vector<1x1x8x8xf32> to vector<8x8xf32>
    %106 = vector.shape_cast %103 : vector<8x8xf32> to vector<1x1x8x8xf32>
    tpu.vector_store %arg21[%c0_84, %c1_85, %c0_86, %c0_87], %106 {strides = array<i32>} : memref<1x8x8x8xf32, #tpu.memory_space<vmem>>, vector<1x1x8x8xf32>,
    %cst_88 = arith.constant dense<0.000000e+00> : vector<8x8xf32>
    %107 = tpu.matmul %103, %91, %cst_88 {dimension_numbers = #tpu.dot_dimension_numbers<[1], [0], [0], [1], [0, 0, 1, 1], [], []>} : vector<8x8xf32>, vector<8x8xf32>, vector<8x8xf32> -> vector<8x8xf32>
    %c0_89 = arith.constant 0 : index
    %c1_90 = arith.constant 1 : index
    %c0_91 = arith.constant 0 : index
    %c0_92 = arith.constant 0 : index
    %108 = vector.load %arg10[%c0_89, %c1_90, %c0_91, %c0_92] : memref<2x4x8x32xf32, #tpu.memory_space<vmem>>, vector<1x1x8x32xf32>
    %109 = vector.shape_cast %108 : vector<1x1x8x32xf32> to vector<8x32xf32>
    %cst_93 = arith.constant dense<0.000000e+00> : vector<8x32xf32>
    %110 = tpu.matmul %107, %109, %cst_93 {dimension_numbers = #tpu.dot_dimension_numbers<[1], [0], [0], [1], [0, 0, 1, 1], [], []>} : vector<8x8xf32>, vector<8x32xf32>, vector<8x32xf32> -> vector<8x32xf32>
    %111 = arith.addf %70, %110 : vector<8x32xf32>
    %c0_94 = arith.constant 0 : index
    %c2 = arith.constant 2 : index
    %c0_95 = arith.constant 0 : index
    %c0_96 = arith.constant 0 : index
    %112 = vector.load %arg4[%c0_94, %c2, %c0_95, %c0_96] : memref<2x4x32x8xf32, #tpu.memory_space<vmem>>, vector<1x1x32x8xf32>
    %113 = vector.shape_cast %112 : vector<1x1x32x8xf32> to vector<32x8xf32>
    %cst_97 = arith.constant dense<0.000000e+00> : vector<8x8xf32>
    %114 = tpu.matmul %25, %113, %cst_97 {dimension_numbers = #tpu.dot_dimension_numbers<[1], [0], [0], [1], [0, 0, 1, 1], [], []>} : vector<8x32xf32>, vector<32x8xf32>, vector<8x8xf32> -> vector<8x8xf32>
    %c0_98 = arith.constant 0 : index
    %c2_99 = arith.constant 2 : index
    %c0_100 = arith.constant 0 : index
    %c0_101 = arith.constant 0 : index
    %115 = vector.load %arg5[%c0_98, %c2_99, %c0_100, %c0_101] : memref<2x4x1x8xf32, #tpu.memory_space<vmem>>, vector<1x1x1x8xf32>
    %116 = vector.shape_cast %115 : vector<1x1x1x8xf32> to vector<1x8xf32>
    %117 = vector.broadcast %116 : vector<1x8xf32> to vector<8x8xf32>
    %118 = arith.addf %114, %117 : vector<8x8xf32>
    %c0_102 = arith.constant 0 : index
    %c2_103 = arith.constant 2 : index
    %c0_104 = arith.constant 0 : index
    %c0_105 = arith.constant 0 : index
    %119 = vector.load %arg6[%c0_102, %c2_103, %c0_104, %c0_105] : memref<2x4x32x8xf32, #tpu.memory_space<vmem>>, vector<1x1x32x8xf32>
    %120 = vector.shape_cast %119 : vector<1x1x32x8xf32> to vector<32x8xf32>
    %cst_106 = arith.constant dense<0.000000e+00> : vector<8x8xf32>
    %121 = tpu.matmul %25, %120, %cst_106 {dimension_numbers = #tpu.dot_dimension_numbers<[1], [0], [0], [1], [0, 0, 1, 1], [], []>} : vector<8x32xf32>, vector<32x8xf32>, vector<8x8xf32> -> vector<8x8xf32>
    %c0_107 = arith.constant 0 : index
    %c2_108 = arith.constant 2 : index
    %c0_109 = arith.constant 0 : index
    %c0_110 = arith.constant 0 : index
    %122 = vector.load %arg7[%c0_107, %c2_108, %c0_109, %c0_110] : memref<2x4x1x8xf32, #tpu.memory_space<vmem>>, vector<1x1x1x8xf32>
    %123 = vector.shape_cast %122 : vector<1x1x1x8xf32> to vector<1x8xf32>
    %124 = vector.broadcast %123 : vector<1x8xf32> to vector<8x8xf32>
    %125 = arith.addf %121, %124 : vector<8x8xf32>
    %c0_111 = arith.constant 0 : index
    %c2_112 = arith.constant 2 : index
    %c0_113 = arith.constant 0 : index
    %c0_114 = arith.constant 0 : index
    %126 = vector.load %arg8[%c0_111, %c2_112, %c0_113, %c0_114] : memref<2x4x32x8xf32, #tpu.memory_space<vmem>>, vector<1x1x32x8xf32>
    %127 = vector.shape_cast %126 : vector<1x1x32x8xf32> to vector<32x8xf32>
    %cst_115 = arith.constant dense<0.000000e+00> : vector<8x8xf32>
    %128 = tpu.matmul %25, %127, %cst_115 {dimension_numbers = #tpu.dot_dimension_numbers<[1], [0], [0], [1], [0, 0, 1, 1], [], []>} : vector<8x32xf32>, vector<32x8xf32>, vector<8x8xf32> -> vector<8x8xf32>
    %c0_116 = arith.constant 0 : index
    %c2_117 = arith.constant 2 : index
    %c0_118 = arith.constant 0 : index
    %c0_119 = arith.constant 0 : index
    %129 = vector.load %arg9[%c0_116, %c2_117, %c0_118, %c0_119] : memref<2x4x1x8xf32, #tpu.memory_space<vmem>>, vector<1x1x1x8xf32>
    %130 = vector.shape_cast %129 : vector<1x1x1x8xf32> to vector<1x8xf32>
    %131 = vector.broadcast %130 : vector<1x8xf32> to vector<8x8xf32>
    %132 = arith.addf %128, %131 : vector<8x8xf32>
    %133 = tpu.transpose %125, [1, 0] : vector<8x8xf32> -> vector<8x8xf32>
    %cst_120 = arith.constant dense<0.000000e+00> : vector<8x8xf32>
    %134 = tpu.matmul %118, %133, %cst_120 {dimension_numbers = #tpu.dot_dimension_numbers<[1], [0], [0], [1], [0, 0, 1, 1], [], []>} : vector<8x8xf32>, vector<8x8xf32>, vector<8x8xf32> -> vector<8x8xf32>
    %cst_121 = arith.constant dense<0xFF800000> : vector<8xf32>
    %135 = vector.multi_reduction <maximumf>, %134, %cst_121 [1] : vector<8x8xf32> to vector<8xf32>
    %136 = vector.shape_cast %135 : vector<8xf32> to vector<8x1xf32>
    %137 = vector.broadcast %136 : vector<8x1xf32> to vector<8x8xf32>
    %138 = arith.subf %134, %137 : vector<8x8xf32>
    %139 = math.exp %138 : vector<8x8xf32>
    %cst_122 = arith.constant dense<0.000000e+00> : vector<8xf32>
    %140 = vector.multi_reduction <add>, %139, %cst_122 [1] : vector<8x8xf32> to vector<8xf32>
    %141 = vector.shape_cast %140 : vector<8xf32> to vector<8x1xf32>
    %142 = tpu.reciprocal %141 {approx = true} : vector<8x1xf32> -> vector<8x1xf32>
    %143 = vector.broadcast %142 : vector<8x1xf32> to vector<8x8xf32>
    %144 = arith.mulf %139, %143 : vector<8x8xf32>
    %c0_123 = arith.constant 0 : index
    %c2_124 = arith.constant 2 : index
    %c0_125 = arith.constant 0 : index
    %c0_126 = arith.constant 0 : index
    %145 = vector.load %arg21[%c0_123, %c2_124, %c0_125, %c0_126] : memref<1x8x8x8xf32, #tpu.memory_space<vmem>>, vector<1x1x8x8xf32>
    %146 = vector.shape_cast %145 : vector<1x1x8x8xf32> to vector<8x8xf32>
    %147 = vector.shape_cast %144 : vector<8x8xf32> to vector<1x1x8x8xf32>
    tpu.vector_store %arg21[%c0_123, %c2_124, %c0_125, %c0_126], %147 {strides = array<i32>} : memref<1x8x8x8xf32, #tpu.memory_space<vmem>>, vector<1x1x8x8xf32>,
    %cst_127 = arith.constant dense<0.000000e+00> : vector<8x8xf32>
    %148 = tpu.matmul %144, %132, %cst_127 {dimension_numbers = #tpu.dot_dimension_numbers<[1], [0], [0], [1], [0, 0, 1, 1], [], []>} : vector<8x8xf32>, vector<8x8xf32>, vector<8x8xf32> -> vector<8x8xf32>
    %c0_128 = arith.constant 0 : index
    %c2_129 = arith.constant 2 : index
    %c0_130 = arith.constant 0 : index
    %c0_131 = arith.constant 0 : index
    %149 = vector.load %arg10[%c0_128, %c2_129, %c0_130, %c0_131] : memref<2x4x8x32xf32, #tpu.memory_space<vmem>>, vector<1x1x8x32xf32>
    %150 = vector.shape_cast %149 : vector<1x1x8x32xf32> to vector<8x32xf32>
    %cst_132 = arith.constant dense<0.000000e+00> : vector<8x32xf32>
    %151 = tpu.matmul %148, %150, %cst_132 {dimension_numbers = #tpu.dot_dimension_numbers<[1], [0], [0], [1], [0, 0, 1, 1], [], []>} : vector<8x8xf32>, vector<8x32xf32>, vector<8x32xf32> -> vector<8x32xf32>
    %152 = arith.addf %111, %151 : vector<8x32xf32>
    %c0_133 = arith.constant 0 : index
    %c3 = arith.constant 3 : index
    %c0_134 = arith.constant 0 : index
    %c0_135 = arith.constant 0 : index
    %153 = vector.load %arg4[%c0_133, %c3, %c0_134, %c0_135] : memref<2x4x32x8xf32, #tpu.memory_space<vmem>>, vector<1x1x32x8xf32>
    %154 = vector.shape_cast %153 : vector<1x1x32x8xf32> to vector<32x8xf32>
    %cst_136 = arith.constant dense<0.000000e+00> : vector<8x8xf32>
    %155 = tpu.matmul %25, %154, %cst_136 {dimension_numbers = #tpu.dot_dimension_numbers<[1], [0], [0], [1], [0, 0, 1, 1], [], []>} : vector<8x32xf32>, vector<32x8xf32>, vector<8x8xf32> -> vector<8x8xf32>
    %c0_137 = arith.constant 0 : index
    %c3_138 = arith.constant 3 : index
    %c0_139 = arith.constant 0 : index
    %c0_140 = arith.constant 0 : index
    %156 = vector.load %arg5[%c0_137, %c3_138, %c0_139, %c0_140] : memref<2x4x1x8xf32, #tpu.memory_space<vmem>>, vector<1x1x1x8xf32>
    %157 = vector.shape_cast %156 : vector<1x1x1x8xf32> to vector<1x8xf32>
    %158 = vector.broadcast %157 : vector<1x8xf32> to vector<8x8xf32>
    %159 = arith.addf %155, %158 : vector<8x8xf32>
    %c0_141 = arith.constant 0 : index
    %c3_142 = arith.constant 3 : index
    %c0_143 = arith.constant 0 : index
    %c0_144 = arith.constant 0 : index
    %160 = vector.load %arg6[%c0_141, %c3_142, %c0_143, %c0_144] : memref<2x4x32x8xf32, #tpu.memory_space<vmem>>, vector<1x1x32x8xf32>
    %161 = vector.shape_cast %160 : vector<1x1x32x8xf32> to vector<32x8xf32>
    %cst_145 = arith.constant dense<0.000000e+00> : vector<8x8xf32>
    %162 = tpu.matmul %25, %161, %cst_145 {dimension_numbers = #tpu.dot_dimension_numbers<[1], [0], [0], [1], [0, 0, 1, 1], [], []>} : vector<8x32xf32>, vector<32x8xf32>, vector<8x8xf32> -> vector<8x8xf32>
    %c0_146 = arith.constant 0 : index
    %c3_147 = arith.constant 3 : index
    %c0_148 = arith.constant 0 : index
    %c0_149 = arith.constant 0 : index
    %163 = vector.load %arg7[%c0_146, %c3_147, %c0_148, %c0_149] : memref<2x4x1x8xf32, #tpu.memory_space<vmem>>, vector<1x1x1x8xf32>
    %164 = vector.shape_cast %163 : vector<1x1x1x8xf32> to vector<1x8xf32>
    %165 = vector.broadcast %164 : vector<1x8xf32> to vector<8x8xf32>
    %166 = arith.addf %162, %165 : vector<8x8xf32>
    %c0_150 = arith.constant 0 : index
    %c3_151 = arith.constant 3 : index
    %c0_152 = arith.constant 0 : index
    %c0_153 = arith.constant 0 : index
    %167 = vector.load %arg8[%c0_150, %c3_151, %c0_152, %c0_153] : memref<2x4x32x8xf32, #tpu.memory_space<vmem>>, vector<1x1x32x8xf32>
    %168 = vector.shape_cast %167 : vector<1x1x32x8xf32> to vector<32x8xf32>
    %cst_154 = arith.constant dense<0.000000e+00> : vector<8x8xf32>
    %169 = tpu.matmul %25, %168, %cst_154 {dimension_numbers = #tpu.dot_dimension_numbers<[1], [0], [0], [1], [0, 0, 1, 1], [], []>} : vector<8x32xf32>, vector<32x8xf32>, vector<8x8xf32> -> vector<8x8xf32>
    %c0_155 = arith.constant 0 : index
    %c3_156 = arith.constant 3 : index
    %c0_157 = arith.constant 0 : index
    %c0_158 = arith.constant 0 : index
    %170 = vector.load %arg9[%c0_155, %c3_156, %c0_157, %c0_158] : memref<2x4x1x8xf32, #tpu.memory_space<vmem>>, vector<1x1x1x8xf32>
    %171 = vector.shape_cast %170 : vector<1x1x1x8xf32> to vector<1x8xf32>
    %172 = vector.broadcast %171 : vector<1x8xf32> to vector<8x8xf32>
    %173 = arith.addf %169, %172 : vector<8x8xf32>
    %174 = tpu.transpose %166, [1, 0] : vector<8x8xf32> -> vector<8x8xf32>
    %cst_159 = arith.constant dense<0.000000e+00> : vector<8x8xf32>
    %175 = tpu.matmul %159, %174, %cst_159 {dimension_numbers = #tpu.dot_dimension_numbers<[1], [0], [0], [1], [0, 0, 1, 1], [], []>} : vector<8x8xf32>, vector<8x8xf32>, vector<8x8xf32> -> vector<8x8xf32>
    %cst_160 = arith.constant dense<0xFF800000> : vector<8xf32>
    %176 = vector.multi_reduction <maximumf>, %175, %cst_160 [1] : vector<8x8xf32> to vector<8xf32>
    %177 = vector.shape_cast %176 : vector<8xf32> to vector<8x1xf32>
    %178 = vector.broadcast %177 : vector<8x1xf32> to vector<8x8xf32>
    %179 = arith.subf %175, %178 : vector<8x8xf32>
    %180 = math.exp %179 : vector<8x8xf32>
    %cst_161 = arith.constant dense<0.000000e+00> : vector<8xf32>
    %181 = vector.multi_reduction <add>, %180, %cst_161 [1] : vector<8x8xf32> to vector<8xf32>
    %182 = vector.shape_cast %181 : vector<8xf32> to vector<8x1xf32>
    %183 = tpu.reciprocal %182 {approx = true} : vector<8x1xf32> -> vector<8x1xf32>
    %184 = vector.broadcast %183 : vector<8x1xf32> to vector<8x8xf32>
    %185 = arith.mulf %180, %184 : vector<8x8xf32>
    %c0_162 = arith.constant 0 : index
    %c3_163 = arith.constant 3 : index
    %c0_164 = arith.constant 0 : index
    %c0_165 = arith.constant 0 : index
    %186 = vector.load %arg21[%c0_162, %c3_163, %c0_164, %c0_165] : memref<1x8x8x8xf32, #tpu.memory_space<vmem>>, vector<1x1x8x8xf32>
    %187 = vector.shape_cast %186 : vector<1x1x8x8xf32> to vector<8x8xf32>
    %188 = vector.shape_cast %185 : vector<8x8xf32> to vector<1x1x8x8xf32>
    tpu.vector_store %arg21[%c0_162, %c3_163, %c0_164, %c0_165], %188 {strides = array<i32>} : memref<1x8x8x8xf32, #tpu.memory_space<vmem>>, vector<1x1x8x8xf32>,
    %cst_166 = arith.constant dense<0.000000e+00> : vector<8x8xf32>
    %189 = tpu.matmul %185, %173, %cst_166 {dimension_numbers = #tpu.dot_dimension_numbers<[1], [0], [0], [1], [0, 0, 1, 1], [], []>} : vector<8x8xf32>, vector<8x8xf32>, vector<8x8xf32> -> vector<8x8xf32>
    %c0_167 = arith.constant 0 : index
    %c3_168 = arith.constant 3 : index
    %c0_169 = arith.constant 0 : index
    %c0_170 = arith.constant 0 : index
    %190 = vector.load %arg10[%c0_167, %c3_168, %c0_169, %c0_170] : memref<2x4x8x32xf32, #tpu.memory_space<vmem>>, vector<1x1x8x32xf32>
    %191 = vector.shape_cast %190 : vector<1x1x8x32xf32> to vector<8x32xf32>
    %cst_171 = arith.constant dense<0.000000e+00> : vector<8x32xf32>
    %192 = tpu.matmul %189, %191, %cst_171 {dimension_numbers = #tpu.dot_dimension_numbers<[1], [0], [0], [1], [0, 0, 1, 1], [], []>} : vector<8x8xf32>, vector<8x32xf32>, vector<8x32xf32> -> vector<8x32xf32>
    %193 = arith.addf %152, %192 : vector<8x32xf32>
    %c0_172 = arith.constant 0 : index
    %c0_173 = arith.constant 0 : index
    %c0_174 = arith.constant 0 : index
    %194 = vector.load %arg11[%c0_172, %c0_173, %c0_174] : memref<2x1x32xf32, #tpu.memory_space<vmem>>, vector<1x1x32xf32>
    %195 = vector.shape_cast %194 : vector<1x1x32xf32> to vector<1x32xf32>
    %196 = vector.broadcast %195 : vector<1x32xf32> to vector<8x32xf32>
    %197 = arith.addf %193, %196 : vector<8x32xf32>
    %198 = arith.addf %25, %197 : vector<8x32xf32>
    %c0_175 = arith.constant 0 : index
    %c0_176 = arith.constant 0 : index
    %c0_177 = arith.constant 0 : index
    %199 = vector.load %arg12[%c0_175, %c0_176, %c0_177] : memref<2x1x32xf32, #tpu.memory_space<vmem>>, vector<1x1x32xf32>
    %200 = vector.shape_cast %199 : vector<1x1x32xf32> to vector<1x32xf32>
    %c0_178 = arith.constant 0 : index
    %c0_179 = arith.constant 0 : index
    %c0_180 = arith.constant 0 : index
    %201 = vector.load %arg13[%c0_178, %c0_179, %c0_180] : memref<2x1x32xf32, #tpu.memory_space<vmem>>, vector<1x1x32xf32>
    %202 = vector.shape_cast %201 : vector<1x1x32xf32> to vector<1x32xf32>
    %cst_181 = arith.constant dense<0.000000e+00> : vector<8xf32>
    %203 = vector.multi_reduction <add>, %198, %cst_181 [1] : vector<8x32xf32> to vector<8xf32>
    %204 = vector.shape_cast %203 : vector<8xf32> to vector<8x1xf32>
    %cst_182 = arith.constant 3.200000e+01 : f32
    %205 = vector.broadcast %cst_182 : f32 to vector<8x1xf32>
    %206 = arith.divf %204, %205 : vector<8x1xf32>
    %207 = vector.broadcast %206 : vector<8x1xf32> to vector<8x32xf32>
    %208 = arith.subf %198, %207 : vector<8x32xf32>
    %209 = arith.mulf %208, %208 : vector<8x32xf32>
    %cst_183 = arith.constant dense<0.000000e+00> : vector<8xf32>
    %210 = vector.multi_reduction <add>, %209, %cst_183 [1] : vector<8x32xf32> to vector<8xf32>
    %211 = vector.shape_cast %210 : vector<8xf32> to vector<8x1xf32>
    %cst_184 = arith.constant 3.200000e+01 : f32
    %212 = vector.broadcast %cst_184 : f32 to vector<8x1xf32>
    %213 = arith.divf %211, %212 : vector<8x1xf32>
    %214 = vector.broadcast %206 : vector<8x1xf32> to vector<8x32xf32>
    %215 = arith.subf %198, %214 : vector<8x32xf32>
    %cst_185 = arith.constant 9.99999996E-13 : f32
    %216 = vector.broadcast %cst_185 : f32 to vector<8x1xf32>
    %217 = arith.addf %213, %216 : vector<8x1xf32>
    %218 = math.rsqrt %217 : vector<8x1xf32>
    %219 = vector.broadcast %218 : vector<8x1xf32> to vector<8x32xf32>
    %220 = arith.mulf %215, %219 : vector<8x32xf32>
    %221 = vector.broadcast %200 : vector<1x32xf32> to vector<8x32xf32>
    %222 = arith.mulf %220, %221 : vector<8x32xf32>
    %223 = vector.broadcast %202 : vector<1x32xf32> to vector<8x32xf32>
    %224 = arith.addf %222, %223 : vector<8x32xf32>
    %c0_186 = arith.constant 0 : index
    %c0_187 = arith.constant 0 : index
    %c0_188 = arith.constant 0 : index
    %225 = vector.load %arg14[%c0_186, %c0_187, %c0_188] : memref<2x32x64xf32, #tpu.memory_space<vmem>>, vector<1x32x64xf32>
    %226 = vector.shape_cast %225 : vector<1x32x64xf32> to vector<32x64xf32>
    %cst_189 = arith.constant dense<0.000000e+00> : vector<8x64xf32>
    %227 = tpu.matmul %224, %226, %cst_189 {dimension_numbers = #tpu.dot_dimension_numbers<[1], [0], [0], [1], [0, 0, 1, 1], [], []>} : vector<8x32xf32>, vector<32x64xf32>, vector<8x64xf32> -> vector<8x64xf32>
    %c0_190 = arith.constant 0 : index
    %c0_191 = arith.constant 0 : index
    %c0_192 = arith.constant 0 : index
    %228 = vector.load %arg15[%c0_190, %c0_191, %c0_192] : memref<2x1x64xf32, #tpu.memory_space<vmem>>, vector<1x1x64xf32>
    %229 = vector.shape_cast %228 : vector<1x1x64xf32> to vector<1x64xf32>
    %230 = vector.broadcast %229 : vector<1x64xf32> to vector<8x64xf32>
    %231 = arith.addf %227, %230 : vector<8x64xf32>
    %cst_193 = arith.constant 5.000000e-01 : f32
    %232 = vector.broadcast %cst_193 : f32 to vector<8x64xf32>
    %233 = arith.mulf %232, %231 : vector<8x64xf32>
    %cst_194 = arith.constant 4.471500e-02 : f32
    %234 = vector.broadcast %cst_194 : f32 to vector<8x64xf32>
    %235 = arith.mulf %234, %231 : vector<8x64xf32>
    %236 = arith.mulf %235, %231 : vector<8x64xf32>
    %237 = arith.mulf %236, %231 : vector<8x64xf32>
    %238 = arith.addf %231, %237 : vector<8x64xf32>
    %cst_195 = arith.constant 0.797884583 : f32
    %239 = vector.broadcast %cst_195 : f32 to vector<8x64xf32>
    %240 = arith.mulf %239, %238 : vector<8x64xf32>
    %241 = math.tanh %240 : vector<8x64xf32>
    %cst_196 = arith.constant 1.000000e+00 : f32
    %242 = vector.broadcast %cst_196 : f32 to vector<8x64xf32>
    %243 = arith.addf %242, %241 : vector<8x64xf32>
    %244 = arith.mulf %233, %243 : vector<8x64xf32>
    %c0_197 = arith.constant 0 : index
    %c0_198 = arith.constant 0 : index
    %c0_199 = arith.constant 0 : index
    %245 = vector.load %arg16[%c0_197, %c0_198, %c0_199] : memref<2x64x32xf32, #tpu.memory_space<vmem>>, vector<1x64x32xf32>
    %246 = vector.shape_cast %245 : vector<1x64x32xf32> to vector<64x32xf32>
    %cst_200 = arith.constant dense<0.000000e+00> : vector<8x32xf32>
    %247 = tpu.matmul %244, %246, %cst_200 {dimension_numbers = #tpu.dot_dimension_numbers<[1], [0], [0], [1], [0, 0, 1, 1], [], []>} : vector<8x64xf32>, vector<64x32xf32>, vector<8x32xf32> -> vector<8x32xf32>
    %c0_201 = arith.constant 0 : index
    %c0_202 = arith.constant 0 : index
    %c0_203 = arith.constant 0 : index
    %248 = vector.load %arg17[%c0_201, %c0_202, %c0_203] : memref<2x1x32xf32, #tpu.memory_space<vmem>>, vector<1x1x32xf32>
    %249 = vector.shape_cast %248 : vector<1x1x32xf32> to vector<1x32xf32>
    %250 = vector.broadcast %249 : vector<1x32xf32> to vector<8x32xf32>
    %251 = arith.addf %247, %250 : vector<8x32xf32>
    %252 = arith.addf %224, %251 : vector<8x32xf32>
    %c0_204 = arith.constant 0 : index
    %c0_205 = arith.constant 0 : index
    %c0_206 = arith.constant 0 : index
    %253 = vector.load %arg18[%c0_204, %c0_205, %c0_206] : memref<2x1x32xf32, #tpu.memory_space<vmem>>, vector<1x1x32xf32>
    %254 = vector.shape_cast %253 : vector<1x1x32xf32> to vector<1x32xf32>
    %c0_207 = arith.constant 0 : index
    %c0_208 = arith.constant 0 : index
    %c0_209 = arith.constant 0 : index
    %255 = vector.load %arg19[%c0_207, %c0_208, %c0_209] : memref<2x1x32xf32, #tpu.memory_space<vmem>>, vector<1x1x32xf32>
    %256 = vector.shape_cast %255 : vector<1x1x32xf32> to vector<1x32xf32>
    %cst_210 = arith.constant dense<0.000000e+00> : vector<8xf32>
    %257 = vector.multi_reduction <add>, %252, %cst_210 [1] : vector<8x32xf32> to vector<8xf32>
    %258 = vector.shape_cast %257 : vector<8xf32> to vector<8x1xf32>
    %cst_211 = arith.constant 3.200000e+01 : f32
    %259 = vector.broadcast %cst_211 : f32 to vector<8x1xf32>
    %260 = arith.divf %258, %259 : vector<8x1xf32>
    %261 = vector.broadcast %260 : vector<8x1xf32> to vector<8x32xf32>
    %262 = arith.subf %252, %261 : vector<8x32xf32>
    %263 = arith.mulf %262, %262 : vector<8x32xf32>
    %cst_212 = arith.constant dense<0.000000e+00> : vector<8xf32>
    %264 = vector.multi_reduction <add>, %263, %cst_212 [1] : vector<8x32xf32> to vector<8xf32>
    %265 = vector.shape_cast %264 : vector<8xf32> to vector<8x1xf32>
    %cst_213 = arith.constant 3.200000e+01 : f32
    %266 = vector.broadcast %cst_213 : f32 to vector<8x1xf32>
    %267 = arith.divf %265, %266 : vector<8x1xf32>
    %268 = vector.broadcast %260 : vector<8x1xf32> to vector<8x32xf32>
    %269 = arith.subf %252, %268 : vector<8x32xf32>
    %cst_214 = arith.constant 9.99999996E-13 : f32
    %270 = vector.broadcast %cst_214 : f32 to vector<8x1xf32>
    %271 = arith.addf %267, %270 : vector<8x1xf32>
    %272 = math.rsqrt %271 : vector<8x1xf32>
    %273 = vector.broadcast %272 : vector<8x1xf32> to vector<8x32xf32>
    %274 = arith.mulf %269, %273 : vector<8x32xf32>
    %275 = vector.broadcast %254 : vector<1x32xf32> to vector<8x32xf32>
    %276 = arith.mulf %274, %275 : vector<8x32xf32>
    %277 = vector.broadcast %256 : vector<1x32xf32> to vector<8x32xf32>
    %278 = arith.addf %276, %277 : vector<8x32xf32>
    %c0_215 = arith.constant 0 : index
    %c1_216 = arith.constant 1 : index
    %c0_217 = arith.constant 0 : index
    %c0_218 = arith.constant 0 : index
    %279 = vector.load %arg20[%c0_215, %c1_216, %c0_217, %c0_218] : memref<1x3x8x32xf32, #tpu.memory_space<vmem>>, vector<1x1x8x32xf32>
    %280 = vector.shape_cast %279 : vector<1x1x8x32xf32> to vector<8x32xf32>
    %281 = vector.shape_cast %278 : vector<8x32xf32> to vector<1x1x8x32xf32>
    tpu.vector_store %arg20[%c0_215, %c1_216, %c0_217, %c0_218], %281 {strides = array<i32>} : memref<1x3x8x32xf32, #tpu.memory_space<vmem>>, vector<1x1x8x32xf32>,
    %cst_219 = arith.constant 0.000000e+00 : f32
    %282 = vector.broadcast %cst_219 : f32 to vector<8x32xf32>
    %c1_220 = arith.constant 1 : index
    %c0_221 = arith.constant 0 : index
    %c0_222 = arith.constant 0 : index
    %c0_223 = arith.constant 0 : index
    %283 = vector.load %arg4[%c1_220, %c0_221, %c0_222, %c0_223] : memref<2x4x32x8xf32, #tpu.memory_space<vmem>>, vector<1x1x32x8xf32>
    %284 = vector.shape_cast %283 : vector<1x1x32x8xf32> to vector<32x8xf32>
    %cst_224 = arith.constant dense<0.000000e+00> : vector<8x8xf32>
    %285 = tpu.matmul %278, %284, %cst_224 {dimension_numbers = #tpu.dot_dimension_numbers<[1], [0], [0], [1], [0, 0, 1, 1], [], []>} : vector<8x32xf32>, vector<32x8xf32>, vector<8x8xf32> -> vector<8x8xf32>
    %c1_225 = arith.constant 1 : index
    %c0_226 = arith.constant 0 : index
    %c0_227 = arith.constant 0 : index
    %c0_228 = arith.constant 0 : index
    %286 = vector.load %arg5[%c1_225, %c0_226, %c0_227, %c0_228] : memref<2x4x1x8xf32, #tpu.memory_space<vmem>>, vector<1x1x1x8xf32>
    %287 = vector.shape_cast %286 : vector<1x1x1x8xf32> to vector<1x8xf32>
    %288 = vector.broadcast %287 : vector<1x8xf32> to vector<8x8xf32>
    %289 = arith.addf %285, %288 : vector<8x8xf32>
    %c1_229 = arith.constant 1 : index
    %c0_230 = arith.constant 0 : index
    %c0_231 = arith.constant 0 : index
    %c0_232 = arith.constant 0 : index
    %290 = vector.load %arg6[%c1_229, %c0_230, %c0_231, %c0_232] : memref<2x4x32x8xf32, #tpu.memory_space<vmem>>, vector<1x1x32x8xf32>
    %291 = vector.shape_cast %290 : vector<1x1x32x8xf32> to vector<32x8xf32>
    %cst_233 = arith.constant dense<0.000000e+00> : vector<8x8xf32>
    %292 = tpu.matmul %278, %291, %cst_233 {dimension_numbers = #tpu.dot_dimension_numbers<[1], [0], [0], [1], [0, 0, 1, 1], [], []>} : vector<8x32xf32>, vector<32x8xf32>, vector<8x8xf32> -> vector<8x8xf32>
    %c1_234 = arith.constant 1 : index
    %c0_235 = arith.constant 0 : index
    %c0_236 = arith.constant 0 : index
    %c0_237 = arith.constant 0 : index
    %293 = vector.load %arg7[%c1_234, %c0_235, %c0_236, %c0_237] : memref<2x4x1x8xf32, #tpu.memory_space<vmem>>, vector<1x1x1x8xf32>
    %294 = vector.shape_cast %293 : vector<1x1x1x8xf32> to vector<1x8xf32>
    %295 = vector.broadcast %294 : vector<1x8xf32> to vector<8x8xf32>
    %296 = arith.addf %292, %295 : vector<8x8xf32>
    %c1_238 = arith.constant 1 : index
    %c0_239 = arith.constant 0 : index
    %c0_240 = arith.constant 0 : index
    %c0_241 = arith.constant 0 : index
    %297 = vector.load %arg8[%c1_238, %c0_239, %c0_240, %c0_241] : memref<2x4x32x8xf32, #tpu.memory_space<vmem>>, vector<1x1x32x8xf32>
    %298 = vector.shape_cast %297 : vector<1x1x32x8xf32> to vector<32x8xf32>
    %cst_242 = arith.constant dense<0.000000e+00> : vector<8x8xf32>
    %299 = tpu.matmul %278, %298, %cst_242 {dimension_numbers = #tpu.dot_dimension_numbers<[1], [0], [0], [1], [0, 0, 1, 1], [], []>} : vector<8x32xf32>, vector<32x8xf32>, vector<8x8xf32> -> vector<8x8xf32>
    %c1_243 = arith.constant 1 : index
    %c0_244 = arith.constant 0 : index
    %c0_245 = arith.constant 0 : index
    %c0_246 = arith.constant 0 : index
    %300 = vector.load %arg9[%c1_243, %c0_244, %c0_245, %c0_246] : memref<2x4x1x8xf32, #tpu.memory_space<vmem>>, vector<1x1x1x8xf32>
    %301 = vector.shape_cast %300 : vector<1x1x1x8xf32> to vector<1x8xf32>
    %302 = vector.broadcast %301 : vector<1x8xf32> to vector<8x8xf32>
    %303 = arith.addf %299, %302 : vector<8x8xf32>
    %304 = tpu.transpose %296, [1, 0] : vector<8x8xf32> -> vector<8x8xf32>
    %cst_247 = arith.constant dense<0.000000e+00> : vector<8x8xf32>
    %305 = tpu.matmul %289, %304, %cst_247 {dimension_numbers = #tpu.dot_dimension_numbers<[1], [0], [0], [1], [0, 0, 1, 1], [], []>} : vector<8x8xf32>, vector<8x8xf32>, vector<8x8xf32> -> vector<8x8xf32>
    %cst_248 = arith.constant dense<0xFF800000> : vector<8xf32>
    %306 = vector.multi_reduction <maximumf>, %305, %cst_248 [1] : vector<8x8xf32> to vector<8xf32>
    %307 = vector.shape_cast %306 : vector<8xf32> to vector<8x1xf32>
    %308 = vector.broadcast %307 : vector<8x1xf32> to vector<8x8xf32>
    %309 = arith.subf %305, %308 : vector<8x8xf32>
    %310 = math.exp %309 : vector<8x8xf32>
    %cst_249 = arith.constant dense<0.000000e+00> : vector<8xf32>
    %311 = vector.multi_reduction <add>, %310, %cst_249 [1] : vector<8x8xf32> to vector<8xf32>
    %312 = vector.shape_cast %311 : vector<8xf32> to vector<8x1xf32>
    %313 = tpu.reciprocal %312 {approx = true} : vector<8x1xf32> -> vector<8x1xf32>
    %314 = vector.broadcast %313 : vector<8x1xf32> to vector<8x8xf32>
    %315 = arith.mulf %310, %314 : vector<8x8xf32>
    %c0_250 = arith.constant 0 : index
    %c4 = arith.constant 4 : index
    %c0_251 = arith.constant 0 : index
    %c0_252 = arith.constant 0 : index
    %316 = vector.load %arg21[%c0_250, %c4, %c0_251, %c0_252] : memref<1x8x8x8xf32, #tpu.memory_space<vmem>>, vector<1x1x8x8xf32>
    %317 = vector.shape_cast %316 : vector<1x1x8x8xf32> to vector<8x8xf32>
    %318 = vector.shape_cast %315 : vector<8x8xf32> to vector<1x1x8x8xf32>
    tpu.vector_store %arg21[%c0_250, %c4, %c0_251, %c0_252], %318 {strides = array<i32>} : memref<1x8x8x8xf32, #tpu.memory_space<vmem>>, vector<1x1x8x8xf32>,
    %cst_253 = arith.constant dense<0.000000e+00> : vector<8x8xf32>
    %319 = tpu.matmul %315, %303, %cst_253 {dimension_numbers = #tpu.dot_dimension_numbers<[1], [0], [0], [1], [0, 0, 1, 1], [], []>} : vector<8x8xf32>, vector<8x8xf32>, vector<8x8xf32> -> vector<8x8xf32>
    %c1_254 = arith.constant 1 : index
    %c0_255 = arith.constant 0 : index
    %c0_256 = arith.constant 0 : index
    %c0_257 = arith.constant 0 : index
    %320 = vector.load %arg10[%c1_254, %c0_255, %c0_256, %c0_257] : memref<2x4x8x32xf32, #tpu.memory_space<vmem>>, vector<1x1x8x32xf32>
    %321 = vector.shape_cast %320 : vector<1x1x8x32xf32> to vector<8x32xf32>
    %cst_258 = arith.constant dense<0.000000e+00> : vector<8x32xf32>
    %322 = tpu.matmul %319, %321, %cst_258 {dimension_numbers = #tpu.dot_dimension_numbers<[1], [0], [0], [1], [0, 0, 1, 1], [], []>} : vector<8x8xf32>, vector<8x32xf32>, vector<8x32xf32> -> vector<8x32xf32>
    %323 = arith.addf %282, %322 : vector<8x32xf32>
    %c1_259 = arith.constant 1 : index
    %c1_260 = arith.constant 1 : index
    %c0_261 = arith.constant 0 : index
    %c0_262 = arith.constant 0 : index
    %324 = vector.load %arg4[%c1_259, %c1_260, %c0_261, %c0_262] : memref<2x4x32x8xf32, #tpu.memory_space<vmem>>, vector<1x1x32x8xf32>
    %325 = vector.shape_cast %324 : vector<1x1x32x8xf32> to vector<32x8xf32>
    %cst_263 = arith.constant dense<0.000000e+00> : vector<8x8xf32>
    %326 = tpu.matmul %278, %325, %cst_263 {dimension_numbers = #tpu.dot_dimension_numbers<[1], [0], [0], [1], [0, 0, 1, 1], [], []>} : vector<8x32xf32>, vector<32x8xf32>, vector<8x8xf32> -> vector<8x8xf32>
    %c1_264 = arith.constant 1 : index
    %c1_265 = arith.constant 1 : index
    %c0_266 = arith.constant 0 : index
    %c0_267 = arith.constant 0 : index
    %327 = vector.load %arg5[%c1_264, %c1_265, %c0_266, %c0_267] : memref<2x4x1x8xf32, #tpu.memory_space<vmem>>, vector<1x1x1x8xf32>
    %328 = vector.shape_cast %327 : vector<1x1x1x8xf32> to vector<1x8xf32>
    %329 = vector.broadcast %328 : vector<1x8xf32> to vector<8x8xf32>
    %330 = arith.addf %326, %329 : vector<8x8xf32>
    %c1_268 = arith.constant 1 : index
    %c1_269 = arith.constant 1 : index
    %c0_270 = arith.constant 0 : index
    %c0_271 = arith.constant 0 : index
    %331 = vector.load %arg6[%c1_268, %c1_269, %c0_270, %c0_271] : memref<2x4x32x8xf32, #tpu.memory_space<vmem>>, vector<1x1x32x8xf32>
    %332 = vector.shape_cast %331 : vector<1x1x32x8xf32> to vector<32x8xf32>
    %cst_272 = arith.constant dense<0.000000e+00> : vector<8x8xf32>
    %333 = tpu.matmul %278, %332, %cst_272 {dimension_numbers = #tpu.dot_dimension_numbers<[1], [0], [0], [1], [0, 0, 1, 1], [], []>} : vector<8x32xf32>, vector<32x8xf32>, vector<8x8xf32> -> vector<8x8xf32>
    %c1_273 = arith.constant 1 : index
    %c1_274 = arith.constant 1 : index
    %c0_275 = arith.constant 0 : index
    %c0_276 = arith.constant 0 : index
    %334 = vector.load %arg7[%c1_273, %c1_274, %c0_275, %c0_276] : memref<2x4x1x8xf32, #tpu.memory_space<vmem>>, vector<1x1x1x8xf32>
    %335 = vector.shape_cast %334 : vector<1x1x1x8xf32> to vector<1x8xf32>
    %336 = vector.broadcast %335 : vector<1x8xf32> to vector<8x8xf32>
    %337 = arith.addf %333, %336 : vector<8x8xf32>
    %c1_277 = arith.constant 1 : index
    %c1_278 = arith.constant 1 : index
    %c0_279 = arith.constant 0 : index
    %c0_280 = arith.constant 0 : index
    %338 = vector.load %arg8[%c1_277, %c1_278, %c0_279, %c0_280] : memref<2x4x32x8xf32, #tpu.memory_space<vmem>>, vector<1x1x32x8xf32>
    %339 = vector.shape_cast %338 : vector<1x1x32x8xf32> to vector<32x8xf32>
    %cst_281 = arith.constant dense<0.000000e+00> : vector<8x8xf32>
    %340 = tpu.matmul %278, %339, %cst_281 {dimension_numbers = #tpu.dot_dimension_numbers<[1], [0], [0], [1], [0, 0, 1, 1], [], []>} : vector<8x32xf32>, vector<32x8xf32>, vector<8x8xf32> -> vector<8x8xf32>
    %c1_282 = arith.constant 1 : index
    %c1_283 = arith.constant 1 : index
    %c0_284 = arith.constant 0 : index
    %c0_285 = arith.constant 0 : index
    %341 = vector.load %arg9[%c1_282, %c1_283, %c0_284, %c0_285] : memref<2x4x1x8xf32, #tpu.memory_space<vmem>>, vector<1x1x1x8xf32>
    %342 = vector.shape_cast %341 : vector<1x1x1x8xf32> to vector<1x8xf32>
    %343 = vector.broadcast %342 : vector<1x8xf32> to vector<8x8xf32>
    %344 = arith.addf %340, %343 : vector<8x8xf32>
    %345 = tpu.transpose %337, [1, 0] : vector<8x8xf32> -> vector<8x8xf32>
    %cst_286 = arith.constant dense<0.000000e+00> : vector<8x8xf32>
    %346 = tpu.matmul %330, %345, %cst_286 {dimension_numbers = #tpu.dot_dimension_numbers<[1], [0], [0], [1], [0, 0, 1, 1], [], []>} : vector<8x8xf32>, vector<8x8xf32>, vector<8x8xf32> -> vector<8x8xf32>
    %cst_287 = arith.constant dense<0xFF800000> : vector<8xf32>
    %347 = vector.multi_reduction <maximumf>, %346, %cst_287 [1] : vector<8x8xf32> to vector<8xf32>
    %348 = vector.shape_cast %347 : vector<8xf32> to vector<8x1xf32>
    %349 = vector.broadcast %348 : vector<8x1xf32> to vector<8x8xf32>
    %350 = arith.subf %346, %349 : vector<8x8xf32>
    %351 = math.exp %350 : vector<8x8xf32>
    %cst_288 = arith.constant dense<0.000000e+00> : vector<8xf32>
    %352 = vector.multi_reduction <add>, %351, %cst_288 [1] : vector<8x8xf32> to vector<8xf32>
    %353 = vector.shape_cast %352 : vector<8xf32> to vector<8x1xf32>
    %354 = tpu.reciprocal %353 {approx = true} : vector<8x1xf32> -> vector<8x1xf32>
    %355 = vector.broadcast %354 : vector<8x1xf32> to vector<8x8xf32>
    %356 = arith.mulf %351, %355 : vector<8x8xf32>
    %c0_289 = arith.constant 0 : index
    %c5 = arith.constant 5 : index
    %c0_290 = arith.constant 0 : index
    %c0_291 = arith.constant 0 : index
    %357 = vector.load %arg21[%c0_289, %c5, %c0_290, %c0_291] : memref<1x8x8x8xf32, #tpu.memory_space<vmem>>, vector<1x1x8x8xf32>
    %358 = vector.shape_cast %357 : vector<1x1x8x8xf32> to vector<8x8xf32>
    %359 = vector.shape_cast %356 : vector<8x8xf32> to vector<1x1x8x8xf32>
    tpu.vector_store %arg21[%c0_289, %c5, %c0_290, %c0_291], %359 {strides = array<i32>} : memref<1x8x8x8xf32, #tpu.memory_space<vmem>>, vector<1x1x8x8xf32>,
    %cst_292 = arith.constant dense<0.000000e+00> : vector<8x8xf32>
    %360 = tpu.matmul %356, %344, %cst_292 {dimension_numbers = #tpu.dot_dimension_numbers<[1], [0], [0], [1], [0, 0, 1, 1], [], []>} : vector<8x8xf32>, vector<8x8xf32>, vector<8x8xf32> -> vector<8x8xf32>
    %c1_293 = arith.constant 1 : index
    %c1_294 = arith.constant 1 : index
    %c0_295 = arith.constant 0 : index
    %c0_296 = arith.constant 0 : index
    %361 = vector.load %arg10[%c1_293, %c1_294, %c0_295, %c0_296] : memref<2x4x8x32xf32, #tpu.memory_space<vmem>>, vector<1x1x8x32xf32>
    %362 = vector.shape_cast %361 : vector<1x1x8x32xf32> to vector<8x32xf32>
    %cst_297 = arith.constant dense<0.000000e+00> : vector<8x32xf32>
    %363 = tpu.matmul %360, %362, %cst_297 {dimension_numbers = #tpu.dot_dimension_numbers<[1], [0], [0], [1], [0, 0, 1, 1], [], []>} : vector<8x8xf32>, vector<8x32xf32>, vector<8x32xf32> -> vector<8x32xf32>
    %364 = arith.addf %323, %363 : vector<8x32xf32>
    %c1_298 = arith.constant 1 : index
    %c2_299 = arith.constant 2 : index
    %c0_300 = arith.constant 0 : index
    %c0_301 = arith.constant 0 : index
    %365 = vector.load %arg4[%c1_298, %c2_299, %c0_300, %c0_301] : memref<2x4x32x8xf32, #tpu.memory_space<vmem>>, vector<1x1x32x8xf32>
    %366 = vector.shape_cast %365 : vector<1x1x32x8xf32> to vector<32x8xf32>
    %cst_302 = arith.constant dense<0.000000e+00> : vector<8x8xf32>
    %367 = tpu.matmul %278, %366, %cst_302 {dimension_numbers = #tpu.dot_dimension_numbers<[1], [0], [0], [1], [0, 0, 1, 1], [], []>} : vector<8x32xf32>, vector<32x8xf32>, vector<8x8xf32> -> vector<8x8xf32>
    %c1_303 = arith.constant 1 : index
    %c2_304 = arith.constant 2 : index
    %c0_305 = arith.constant 0 : index
    %c0_306 = arith.constant 0 : index
    %368 = vector.load %arg5[%c1_303, %c2_304, %c0_305, %c0_306] : memref<2x4x1x8xf32, #tpu.memory_space<vmem>>, vector<1x1x1x8xf32>
    %369 = vector.shape_cast %368 : vector<1x1x1x8xf32> to vector<1x8xf32>
    %370 = vector.broadcast %369 : vector<1x8xf32> to vector<8x8xf32>
    %371 = arith.addf %367, %370 : vector<8x8xf32>
    %c1_307 = arith.constant 1 : index
    %c2_308 = arith.constant 2 : index
    %c0_309 = arith.constant 0 : index
    %c0_310 = arith.constant 0 : index
    %372 = vector.load %arg6[%c1_307, %c2_308, %c0_309, %c0_310] : memref<2x4x32x8xf32, #tpu.memory_space<vmem>>, vector<1x1x32x8xf32>
    %373 = vector.shape_cast %372 : vector<1x1x32x8xf32> to vector<32x8xf32>
    %cst_311 = arith.constant dense<0.000000e+00> : vector<8x8xf32>
    %374 = tpu.matmul %278, %373, %cst_311 {dimension_numbers = #tpu.dot_dimension_numbers<[1], [0], [0], [1], [0, 0, 1, 1], [], []>} : vector<8x32xf32>, vector<32x8xf32>, vector<8x8xf32> -> vector<8x8xf32>
    %c1_312 = arith.constant 1 : index
    %c2_313 = arith.constant 2 : index
    %c0_314 = arith.constant 0 : index
    %c0_315 = arith.constant 0 : index
    %375 = vector.load %arg7[%c1_312, %c2_313, %c0_314, %c0_315] : memref<2x4x1x8xf32, #tpu.memory_space<vmem>>, vector<1x1x1x8xf32>
    %376 = vector.shape_cast %375 : vector<1x1x1x8xf32> to vector<1x8xf32>
    %377 = vector.broadcast %376 : vector<1x8xf32> to vector<8x8xf32>
    %378 = arith.addf %374, %377 : vector<8x8xf32>
    %c1_316 = arith.constant 1 : index
    %c2_317 = arith.constant 2 : index
    %c0_318 = arith.constant 0 : index
    %c0_319 = arith.constant 0 : index
    %379 = vector.load %arg8[%c1_316, %c2_317, %c0_318, %c0_319] : memref<2x4x32x8xf32, #tpu.memory_space<vmem>>, vector<1x1x32x8xf32>
    %380 = vector.shape_cast %379 : vector<1x1x32x8xf32> to vector<32x8xf32>
    %cst_320 = arith.constant dense<0.000000e+00> : vector<8x8xf32>
    %381 = tpu.matmul %278, %380, %cst_320 {dimension_numbers = #tpu.dot_dimension_numbers<[1], [0], [0], [1], [0, 0, 1, 1], [], []>} : vector<8x32xf32>, vector<32x8xf32>, vector<8x8xf32> -> vector<8x8xf32>
    %c1_321 = arith.constant 1 : index
    %c2_322 = arith.constant 2 : index
    %c0_323 = arith.constant 0 : index
    %c0_324 = arith.constant 0 : index
    %382 = vector.load %arg9[%c1_321, %c2_322, %c0_323, %c0_324] : memref<2x4x1x8xf32, #tpu.memory_space<vmem>>, vector<1x1x1x8xf32>
    %383 = vector.shape_cast %382 : vector<1x1x1x8xf32> to vector<1x8xf32>
    %384 = vector.broadcast %383 : vector<1x8xf32> to vector<8x8xf32>
    %385 = arith.addf %381, %384 : vector<8x8xf32>
    %386 = tpu.transpose %378, [1, 0] : vector<8x8xf32> -> vector<8x8xf32>
    %cst_325 = arith.constant dense<0.000000e+00> : vector<8x8xf32>
    %387 = tpu.matmul %371, %386, %cst_325 {dimension_numbers = #tpu.dot_dimension_numbers<[1], [0], [0], [1], [0, 0, 1, 1], [], []>} : vector<8x8xf32>, vector<8x8xf32>, vector<8x8xf32> -> vector<8x8xf32>
    %cst_326 = arith.constant dense<0xFF800000> : vector<8xf32>
    %388 = vector.multi_reduction <maximumf>, %387, %cst_326 [1] : vector<8x8xf32> to vector<8xf32>
    %389 = vector.shape_cast %388 : vector<8xf32> to vector<8x1xf32>
    %390 = vector.broadcast %389 : vector<8x1xf32> to vector<8x8xf32>
    %391 = arith.subf %387, %390 : vector<8x8xf32>
    %392 = math.exp %391 : vector<8x8xf32>
    %cst_327 = arith.constant dense<0.000000e+00> : vector<8xf32>
    %393 = vector.multi_reduction <add>, %392, %cst_327 [1] : vector<8x8xf32> to vector<8xf32>
    %394 = vector.shape_cast %393 : vector<8xf32> to vector<8x1xf32>
    %395 = tpu.reciprocal %394 {approx = true} : vector<8x1xf32> -> vector<8x1xf32>
    %396 = vector.broadcast %395 : vector<8x1xf32> to vector<8x8xf32>
    %397 = arith.mulf %392, %396 : vector<8x8xf32>
    %c0_328 = arith.constant 0 : index
    %c6 = arith.constant 6 : index
    %c0_329 = arith.constant 0 : index
    %c0_330 = arith.constant 0 : index
    %398 = vector.load %arg21[%c0_328, %c6, %c0_329, %c0_330] : memref<1x8x8x8xf32, #tpu.memory_space<vmem>>, vector<1x1x8x8xf32>
    %399 = vector.shape_cast %398 : vector<1x1x8x8xf32> to vector<8x8xf32>
    %400 = vector.shape_cast %397 : vector<8x8xf32> to vector<1x1x8x8xf32>
    tpu.vector_store %arg21[%c0_328, %c6, %c0_329, %c0_330], %400 {strides = array<i32>} : memref<1x8x8x8xf32, #tpu.memory_space<vmem>>, vector<1x1x8x8xf32>,
    %cst_331 = arith.constant dense<0.000000e+00> : vector<8x8xf32>
    %401 = tpu.matmul %397, %385, %cst_331 {dimension_numbers = #tpu.dot_dimension_numbers<[1], [0], [0], [1], [0, 0, 1, 1], [], []>} : vector<8x8xf32>, vector<8x8xf32>, vector<8x8xf32> -> vector<8x8xf32>
    %c1_332 = arith.constant 1 : index
    %c2_333 = arith.constant 2 : index
    %c0_334 = arith.constant 0 : index
    %c0_335 = arith.constant 0 : index
    %402 = vector.load %arg10[%c1_332, %c2_333, %c0_334, %c0_335] : memref<2x4x8x32xf32, #tpu.memory_space<vmem>>, vector<1x1x8x32xf32>
    %403 = vector.shape_cast %402 : vector<1x1x8x32xf32> to vector<8x32xf32>
    %cst_336 = arith.constant dense<0.000000e+00> : vector<8x32xf32>
    %404 = tpu.matmul %401, %403, %cst_336 {dimension_numbers = #tpu.dot_dimension_numbers<[1], [0], [0], [1], [0, 0, 1, 1], [], []>} : vector<8x8xf32>, vector<8x32xf32>, vector<8x32xf32> -> vector<8x32xf32>
    %405 = arith.addf %364, %404 : vector<8x32xf32>
    %c1_337 = arith.constant 1 : index
    %c3_338 = arith.constant 3 : index
    %c0_339 = arith.constant 0 : index
    %c0_340 = arith.constant 0 : index
    %406 = vector.load %arg4[%c1_337, %c3_338, %c0_339, %c0_340] : memref<2x4x32x8xf32, #tpu.memory_space<vmem>>, vector<1x1x32x8xf32>
    %407 = vector.shape_cast %406 : vector<1x1x32x8xf32> to vector<32x8xf32>
    %cst_341 = arith.constant dense<0.000000e+00> : vector<8x8xf32>
    %408 = tpu.matmul %278, %407, %cst_341 {dimension_numbers = #tpu.dot_dimension_numbers<[1], [0], [0], [1], [0, 0, 1, 1], [], []>} : vector<8x32xf32>, vector<32x8xf32>, vector<8x8xf32> -> vector<8x8xf32>
    %c1_342 = arith.constant 1 : index
    %c3_343 = arith.constant 3 : index
    %c0_344 = arith.constant 0 : index
    %c0_345 = arith.constant 0 : index
    %409 = vector.load %arg5[%c1_342, %c3_343, %c0_344, %c0_345] : memref<2x4x1x8xf32, #tpu.memory_space<vmem>>, vector<1x1x1x8xf32>
    %410 = vector.shape_cast %409 : vector<1x1x1x8xf32> to vector<1x8xf32>
    %411 = vector.broadcast %410 : vector<1x8xf32> to vector<8x8xf32>
    %412 = arith.addf %408, %411 : vector<8x8xf32>
    %c1_346 = arith.constant 1 : index
    %c3_347 = arith.constant 3 : index
    %c0_348 = arith.constant 0 : index
    %c0_349 = arith.constant 0 : index
    %413 = vector.load %arg6[%c1_346, %c3_347, %c0_348, %c0_349] : memref<2x4x32x8xf32, #tpu.memory_space<vmem>>, vector<1x1x32x8xf32>
    %414 = vector.shape_cast %413 : vector<1x1x32x8xf32> to vector<32x8xf32>
    %cst_350 = arith.constant dense<0.000000e+00> : vector<8x8xf32>
    %415 = tpu.matmul %278, %414, %cst_350 {dimension_numbers = #tpu.dot_dimension_numbers<[1], [0], [0], [1], [0, 0, 1, 1], [], []>} : vector<8x32xf32>, vector<32x8xf32>, vector<8x8xf32> -> vector<8x8xf32>
    %c1_351 = arith.constant 1 : index
    %c3_352 = arith.constant 3 : index
    %c0_353 = arith.constant 0 : index
    %c0_354 = arith.constant 0 : index
    %416 = vector.load %arg7[%c1_351, %c3_352, %c0_353, %c0_354] : memref<2x4x1x8xf32, #tpu.memory_space<vmem>>, vector<1x1x1x8xf32>
    %417 = vector.shape_cast %416 : vector<1x1x1x8xf32> to vector<1x8xf32>
    %418 = vector.broadcast %417 : vector<1x8xf32> to vector<8x8xf32>
    %419 = arith.addf %415, %418 : vector<8x8xf32>
    %c1_355 = arith.constant 1 : index
    %c3_356 = arith.constant 3 : index
    %c0_357 = arith.constant 0 : index
    %c0_358 = arith.constant 0 : index
    %420 = vector.load %arg8[%c1_355, %c3_356, %c0_357, %c0_358] : memref<2x4x32x8xf32, #tpu.memory_space<vmem>>, vector<1x1x32x8xf32>
    %421 = vector.shape_cast %420 : vector<1x1x32x8xf32> to vector<32x8xf32>
    %cst_359 = arith.constant dense<0.000000e+00> : vector<8x8xf32>
    %422 = tpu.matmul %278, %421, %cst_359 {dimension_numbers = #tpu.dot_dimension_numbers<[1], [0], [0], [1], [0, 0, 1, 1], [], []>} : vector<8x32xf32>, vector<32x8xf32>, vector<8x8xf32> -> vector<8x8xf32>
    %c1_360 = arith.constant 1 : index
    %c3_361 = arith.constant 3 : index
    %c0_362 = arith.constant 0 : index
    %c0_363 = arith.constant 0 : index
    %423 = vector.load %arg9[%c1_360, %c3_361, %c0_362, %c0_363] : memref<2x4x1x8xf32, #tpu.memory_space<vmem>>, vector<1x1x1x8xf32>
    %424 = vector.shape_cast %423 : vector<1x1x1x8xf32> to vector<1x8xf32>
    %425 = vector.broadcast %424 : vector<1x8xf32> to vector<8x8xf32>
    %426 = arith.addf %422, %425 : vector<8x8xf32>
    %427 = tpu.transpose %419, [1, 0] : vector<8x8xf32> -> vector<8x8xf32>
    %cst_364 = arith.constant dense<0.000000e+00> : vector<8x8xf32>
    %428 = tpu.matmul %412, %427, %cst_364 {dimension_numbers = #tpu.dot_dimension_numbers<[1], [0], [0], [1], [0, 0, 1, 1], [], []>} : vector<8x8xf32>, vector<8x8xf32>, vector<8x8xf32> -> vector<8x8xf32>
    %cst_365 = arith.constant dense<0xFF800000> : vector<8xf32>
    %429 = vector.multi_reduction <maximumf>, %428, %cst_365 [1] : vector<8x8xf32> to vector<8xf32>
    %430 = vector.shape_cast %429 : vector<8xf32> to vector<8x1xf32>
    %431 = vector.broadcast %430 : vector<8x1xf32> to vector<8x8xf32>
    %432 = arith.subf %428, %431 : vector<8x8xf32>
    %433 = math.exp %432 : vector<8x8xf32>
    %cst_366 = arith.constant dense<0.000000e+00> : vector<8xf32>
    %434 = vector.multi_reduction <add>, %433, %cst_366 [1] : vector<8x8xf32> to vector<8xf32>
    %435 = vector.shape_cast %434 : vector<8xf32> to vector<8x1xf32>
    %436 = tpu.reciprocal %435 {approx = true} : vector<8x1xf32> -> vector<8x1xf32>
    %437 = vector.broadcast %436 : vector<8x1xf32> to vector<8x8xf32>
    %438 = arith.mulf %433, %437 : vector<8x8xf32>
    %c0_367 = arith.constant 0 : index
    %c7 = arith.constant 7 : index
    %c0_368 = arith.constant 0 : index
    %c0_369 = arith.constant 0 : index
    %439 = vector.load %arg21[%c0_367, %c7, %c0_368, %c0_369] : memref<1x8x8x8xf32, #tpu.memory_space<vmem>>, vector<1x1x8x8xf32>
    %440 = vector.shape_cast %439 : vector<1x1x8x8xf32> to vector<8x8xf32>
    %441 = vector.shape_cast %438 : vector<8x8xf32> to vector<1x1x8x8xf32>
    tpu.vector_store %arg21[%c0_367, %c7, %c0_368, %c0_369], %441 {strides = array<i32>} : memref<1x8x8x8xf32, #tpu.memory_space<vmem>>, vector<1x1x8x8xf32>,
    %cst_370 = arith.constant dense<0.000000e+00> : vector<8x8xf32>
    %442 = tpu.matmul %438, %426, %cst_370 {dimension_numbers = #tpu.dot_dimension_numbers<[1], [0], [0], [1], [0, 0, 1, 1], [], []>} : vector<8x8xf32>, vector<8x8xf32>, vector<8x8xf32> -> vector<8x8xf32>
    %c1_371 = arith.constant 1 : index
    %c3_372 = arith.constant 3 : index
    %c0_373 = arith.constant 0 : index
    %c0_374 = arith.constant 0 : index
    %443 = vector.load %arg10[%c1_371, %c3_372, %c0_373, %c0_374] : memref<2x4x8x32xf32, #tpu.memory_space<vmem>>, vector<1x1x8x32xf32>
    %444 = vector.shape_cast %443 : vector<1x1x8x32xf32> to vector<8x32xf32>
    %cst_375 = arith.constant dense<0.000000e+00> : vector<8x32xf32>
    %445 = tpu.matmul %442, %444, %cst_375 {dimension_numbers = #tpu.dot_dimension_numbers<[1], [0], [0], [1], [0, 0, 1, 1], [], []>} : vector<8x8xf32>, vector<8x32xf32>, vector<8x32xf32> -> vector<8x32xf32>
    %446 = arith.addf %405, %445 : vector<8x32xf32>
    %c1_376 = arith.constant 1 : index
    %c0_377 = arith.constant 0 : index
    %c0_378 = arith.constant 0 : index
    %447 = vector.load %arg11[%c1_376, %c0_377, %c0_378] : memref<2x1x32xf32, #tpu.memory_space<vmem>>, vector<1x1x32xf32>
    %448 = vector.shape_cast %447 : vector<1x1x32xf32> to vector<1x32xf32>
    %449 = vector.broadcast %448 : vector<1x32xf32> to vector<8x32xf32>
    %450 = arith.addf %446, %449 : vector<8x32xf32>
    %451 = arith.addf %278, %450 : vector<8x32xf32>
    %c1_379 = arith.constant 1 : index
    %c0_380 = arith.constant 0 : index
    %c0_381 = arith.constant 0 : index
    %452 = vector.load %arg12[%c1_379, %c0_380, %c0_381] : memref<2x1x32xf32, #tpu.memory_space<vmem>>, vector<1x1x32xf32>
    %453 = vector.shape_cast %452 : vector<1x1x32xf32> to vector<1x32xf32>
    %c1_382 = arith.constant 1 : index
    %c0_383 = arith.constant 0 : index
    %c0_384 = arith.constant 0 : index
    %454 = vector.load %arg13[%c1_382, %c0_383, %c0_384] : memref<2x1x32xf32, #tpu.memory_space<vmem>>, vector<1x1x32xf32>
    %455 = vector.shape_cast %454 : vector<1x1x32xf32> to vector<1x32xf32>
    %cst_385 = arith.constant dense<0.000000e+00> : vector<8xf32>
    %456 = vector.multi_reduction <add>, %451, %cst_385 [1] : vector<8x32xf32> to vector<8xf32>
    %457 = vector.shape_cast %456 : vector<8xf32> to vector<8x1xf32>
    %cst_386 = arith.constant 3.200000e+01 : f32
    %458 = vector.broadcast %cst_386 : f32 to vector<8x1xf32>
    %459 = arith.divf %457, %458 : vector<8x1xf32>
    %460 = vector.broadcast %459 : vector<8x1xf32> to vector<8x32xf32>
    %461 = arith.subf %451, %460 : vector<8x32xf32>
    %462 = arith.mulf %461, %461 : vector<8x32xf32>
    %cst_387 = arith.constant dense<0.000000e+00> : vector<8xf32>
    %463 = vector.multi_reduction <add>, %462, %cst_387 [1] : vector<8x32xf32> to vector<8xf32>
    %464 = vector.shape_cast %463 : vector<8xf32> to vector<8x1xf32>
    %cst_388 = arith.constant 3.200000e+01 : f32
    %465 = vector.broadcast %cst_388 : f32 to vector<8x1xf32>
    %466 = arith.divf %464, %465 : vector<8x1xf32>
    %467 = vector.broadcast %459 : vector<8x1xf32> to vector<8x32xf32>
    %468 = arith.subf %451, %467 : vector<8x32xf32>
    %cst_389 = arith.constant 9.99999996E-13 : f32
    %469 = vector.broadcast %cst_389 : f32 to vector<8x1xf32>
    %470 = arith.addf %466, %469 : vector<8x1xf32>
    %471 = math.rsqrt %470 : vector<8x1xf32>
    %472 = vector.broadcast %471 : vector<8x1xf32> to vector<8x32xf32>
    %473 = arith.mulf %468, %472 : vector<8x32xf32>
    %474 = vector.broadcast %453 : vector<1x32xf32> to vector<8x32xf32>
    %475 = arith.mulf %473, %474 : vector<8x32xf32>
    %476 = vector.broadcast %455 : vector<1x32xf32> to vector<8x32xf32>
    %477 = arith.addf %475, %476 : vector<8x32xf32>
    %c1_390 = arith.constant 1 : index
    %c0_391 = arith.constant 0 : index
    %c0_392 = arith.constant 0 : index
    %478 = vector.load %arg14[%c1_390, %c0_391, %c0_392] : memref<2x32x64xf32, #tpu.memory_space<vmem>>, vector<1x32x64xf32>
    %479 = vector.shape_cast %478 : vector<1x32x64xf32> to vector<32x64xf32>
    %cst_393 = arith.constant dense<0.000000e+00> : vector<8x64xf32>
    %480 = tpu.matmul %477, %479, %cst_393 {dimension_numbers = #tpu.dot_dimension_numbers<[1], [0], [0], [1], [0, 0, 1, 1], [], []>} : vector<8x32xf32>, vector<32x64xf32>, vector<8x64xf32> -> vector<8x64xf32>
    %c1_394 = arith.constant 1 : index
    %c0_395 = arith.constant 0 : index
    %c0_396 = arith.constant 0 : index
    %481 = vector.load %arg15[%c1_394, %c0_395, %c0_396] : memref<2x1x64xf32, #tpu.memory_space<vmem>>, vector<1x1x64xf32>
    %482 = vector.shape_cast %481 : vector<1x1x64xf32> to vector<1x64xf32>
    %483 = vector.broadcast %482 : vector<1x64xf32> to vector<8x64xf32>
    %484 = arith.addf %480, %483 : vector<8x64xf32>
    %cst_397 = arith.constant 5.000000e-01 : f32
    %485 = vector.broadcast %cst_397 : f32 to vector<8x64xf32>
    %486 = arith.mulf %485, %484 : vector<8x64xf32>
    %cst_398 = arith.constant 4.471500e-02 : f32
    %487 = vector.broadcast %cst_398 : f32 to vector<8x64xf32>
    %488 = arith.mulf %487, %484 : vector<8x64xf32>
    %489 = arith.mulf %488, %484 : vector<8x64xf32>
    %490 = arith.mulf %489, %484 : vector<8x64xf32>
    %491 = arith.addf %484, %490 : vector<8x64xf32>
    %cst_399 = arith.constant 0.797884583 : f32
    %492 = vector.broadcast %cst_399 : f32 to vector<8x64xf32>
    %493 = arith.mulf %492, %491 : vector<8x64xf32>
    %494 = math.tanh %493 : vector<8x64xf32>
    %cst_400 = arith.constant 1.000000e+00 : f32
    %495 = vector.broadcast %cst_400 : f32 to vector<8x64xf32>
    %496 = arith.addf %495, %494 : vector<8x64xf32>
    %497 = arith.mulf %486, %496 : vector<8x64xf32>
    %c1_401 = arith.constant 1 : index
    %c0_402 = arith.constant 0 : index
    %c0_403 = arith.constant 0 : index
    %498 = vector.load %arg16[%c1_401, %c0_402, %c0_403] : memref<2x64x32xf32, #tpu.memory_space<vmem>>, vector<1x64x32xf32>
    %499 = vector.shape_cast %498 : vector<1x64x32xf32> to vector<64x32xf32>
    %cst_404 = arith.constant dense<0.000000e+00> : vector<8x32xf32>
    %500 = tpu.matmul %497, %499, %cst_404 {dimension_numbers = #tpu.dot_dimension_numbers<[1], [0], [0], [1], [0, 0, 1, 1], [], []>} : vector<8x64xf32>, vector<64x32xf32>, vector<8x32xf32> -> vector<8x32xf32>
    %c1_405 = arith.constant 1 : index
    %c0_406 = arith.constant 0 : index
    %c0_407 = arith.constant 0 : index
    %501 = vector.load %arg17[%c1_405, %c0_406, %c0_407] : memref<2x1x32xf32, #tpu.memory_space<vmem>>, vector<1x1x32xf32>
    %502 = vector.shape_cast %501 : vector<1x1x32xf32> to vector<1x32xf32>
    %503 = vector.broadcast %502 : vector<1x32xf32> to vector<8x32xf32>
    %504 = arith.addf %500, %503 : vector<8x32xf32>
    %505 = arith.addf %477, %504 : vector<8x32xf32>
    %c1_408 = arith.constant 1 : index
    %c0_409 = arith.constant 0 : index
    %c0_410 = arith.constant 0 : index
    %506 = vector.load %arg18[%c1_408, %c0_409, %c0_410] : memref<2x1x32xf32, #tpu.memory_space<vmem>>, vector<1x1x32xf32>
    %507 = vector.shape_cast %506 : vector<1x1x32xf32> to vector<1x32xf32>
    %c1_411 = arith.constant 1 : index
    %c0_412 = arith.constant 0 : index
    %c0_413 = arith.constant 0 : index
    %508 = vector.load %arg19[%c1_411, %c0_412, %c0_413] : memref<2x1x32xf32, #tpu.memory_space<vmem>>, vector<1x1x32xf32>
    %509 = vector.shape_cast %508 : vector<1x1x32xf32> to vector<1x32xf32>
    %cst_414 = arith.constant dense<0.000000e+00> : vector<8xf32>
    %510 = vector.multi_reduction <add>, %505, %cst_414 [1] : vector<8x32xf32> to vector<8xf32>
    %511 = vector.shape_cast %510 : vector<8xf32> to vector<8x1xf32>
    %cst_415 = arith.constant 3.200000e+01 : f32
    %512 = vector.broadcast %cst_415 : f32 to vector<8x1xf32>
    %513 = arith.divf %511, %512 : vector<8x1xf32>
    %514 = vector.broadcast %513 : vector<8x1xf32> to vector<8x32xf32>
    %515 = arith.subf %505, %514 : vector<8x32xf32>
    %516 = arith.mulf %515, %515 : vector<8x32xf32>
    %cst_416 = arith.constant dense<0.000000e+00> : vector<8xf32>
    %517 = vector.multi_reduction <add>, %516, %cst_416 [1] : vector<8x32xf32> to vector<8xf32>
    %518 = vector.shape_cast %517 : vector<8xf32> to vector<8x1xf32>
    %cst_417 = arith.constant 3.200000e+01 : f32
    %519 = vector.broadcast %cst_417 : f32 to vector<8x1xf32>
    %520 = arith.divf %518, %519 : vector<8x1xf32>
    %521 = vector.broadcast %513 : vector<8x1xf32> to vector<8x32xf32>
    %522 = arith.subf %505, %521 : vector<8x32xf32>
    %cst_418 = arith.constant 9.99999996E-13 : f32
    %523 = vector.broadcast %cst_418 : f32 to vector<8x1xf32>
    %524 = arith.addf %520, %523 : vector<8x1xf32>
    %525 = math.rsqrt %524 : vector<8x1xf32>
    %526 = vector.broadcast %525 : vector<8x1xf32> to vector<8x32xf32>
    %527 = arith.mulf %522, %526 : vector<8x32xf32>
    %528 = vector.broadcast %507 : vector<1x32xf32> to vector<8x32xf32>
    %529 = arith.mulf %527, %528 : vector<8x32xf32>
    %530 = vector.broadcast %509 : vector<1x32xf32> to vector<8x32xf32>
    %531 = arith.addf %529, %530 : vector<8x32xf32>
    %c0_419 = arith.constant 0 : index
    %c2_420 = arith.constant 2 : index
    %c0_421 = arith.constant 0 : index
    %c0_422 = arith.constant 0 : index
    %532 = vector.load %arg20[%c0_419, %c2_420, %c0_421, %c0_422] : memref<1x3x8x32xf32, #tpu.memory_space<vmem>>, vector<1x1x8x32xf32>
    %533 = vector.shape_cast %532 : vector<1x1x8x32xf32> to vector<8x32xf32>
    %534 = vector.shape_cast %531 : vector<8x32xf32> to vector<1x1x8x32xf32>
    tpu.vector_store %arg20[%c0_419, %c2_420, %c0_421, %c0_422], %534 {strides = array<i32>} : memref<1x3x8x32xf32, #tpu.memory_space<vmem>>, vector<1x1x8x32xf32>,
    return
  }
  func.func @transform_0(%arg0: i32) -> (i32, i32, i32) {
    %c0_i32 = arith.constant 0 : i32
    %c0_i32_0 = arith.constant 0 : i32
    %c0_i32_1 = arith.constant 0 : i32
    return %arg0, %c0_i32, %c0_i32_0 : i32, i32, i32
  }
  func.func @transform_1(%arg0: i32) -> (i32, i32) {
    %c0_i32 = arith.constant 0 : i32
    %c0_i32_0 = arith.constant 0 : i32
    %c0_i32_1 = arith.constant 0 : i32
    return %c0_i32, %c0_i32_0 : i32, i32
  }
  func.func @transform_2(%arg0: i32) -> (i32, i32) {
    %c0_i32 = arith.constant 0 : i32
    %c0_i32_0 = arith.constant 0 : i32
    %c0_i32_1 = arith.constant 0 : i32
    return %c0_i32, %c0_i32_0 : i32, i32
  }
  func.func @transform_3(%arg0: i32) -> (i32, i32, i32, i32) {
    %c0_i32 = arith.constant 0 : i32
    %c0_i32_0 = arith.constant 0 : i32
    %c0_i32_1 = arith.constant 0 : i32
    %c0_i32_2 = arith.constant 0 : i32
    %c0_i32_3 = arith.constant 0 : i32
    return %c0_i32, %c0_i32_0, %c0_i32_1, %c0_i32_2 : i32, i32, i32, i32
  }
  func.func @transform_4(%arg0: i32) -> (i32, i32, i32, i32) {
    %c0_i32 = arith.constant 0 : i32
    %c0_i32_0 = arith.constant 0 : i32
    %c0_i32_1 = arith.constant 0 : i32
    %c0_i32_2 = arith.constant 0 : i32
    %c0_i32_3 = arith.constant 0 : i32
    return %c0_i32, %c0_i32_0, %c0_i32_1, %c0_i32_2 : i32, i32, i32, i32
  }
  func.func @transform_5(%arg0: i32) -> (i32, i32, i32, i32) {
    %c0_i32 = arith.constant 0 : i32
    %c0_i32_0 = arith.constant 0 : i32
    %c0_i32_1 = arith.constant 0 : i32
    %c0_i32_2 = arith.constant 0 : i32
    %c0_i32_3 = arith.constant 0 : i32
    return %c0_i32, %c0_i32_0, %c0_i32_1, %c0_i32_2 : i32, i32, i32, i32
  }
  func.func @transform_6(%arg0: i32) -> (i32, i32, i32, i32) {
    %c0_i32 = arith.constant 0 : i32
    %c0_i32_0 = arith.constant 0 : i32
    %c0_i32_1 = arith.constant 0 : i32
    %c0_i32_2 = arith.constant 0 : i32
    %c0_i32_3 = arith.constant 0 : i32
    return %c0_i32, %c0_i32_0, %c0_i32_1, %c0_i32_2 : i32, i32, i32, i32
  }
  func.func @transform_7(%arg0: i32) -> (i32, i32, i32, i32) {
    %c0_i32 = arith.constant 0 : i32
    %c0_i32_0 = arith.constant 0 : i32
    %c0_i32_1 = arith.constant 0 : i32
    %c0_i32_2 = arith.constant 0 : i32
    %c0_i32_3 = arith.constant 0 : i32
    return %c0_i32, %c0_i32_0, %c0_i32_1, %c0_i32_2 : i32, i32, i32, i32
  }
  func.func @transform_8(%arg0: i32) -> (i32, i32, i32, i32) {
    %c0_i32 = arith.constant 0 : i32
    %c0_i32_0 = arith.constant 0 : i32
    %c0_i32_1 = arith.constant 0 : i32
    %c0_i32_2 = arith.constant 0 : i32
    %c0_i32_3 = arith.constant 0 : i32
    return %c0_i32, %c0_i32_0, %c0_i32_1, %c0_i32_2 : i32, i32, i32, i32
  }
  func.func @transform_9(%arg0: i32) -> (i32, i32, i32, i32) {
    %c0_i32 = arith.constant 0 : i32
    %c0_i32_0 = arith.constant 0 : i32
    %c0_i32_1 = arith.constant 0 : i32
    %c0_i32_2 = arith.constant 0 : i32
    %c0_i32_3 = arith.constant 0 : i32
    return %c0_i32, %c0_i32_0, %c0_i32_1, %c0_i32_2 : i32, i32, i32, i32
  }
  func.func @transform_10(%arg0: i32) -> (i32, i32, i32) {
    %c0_i32 = arith.constant 0 : i32
    %c0_i32_0 = arith.constant 0 : i32
    %c0_i32_1 = arith.constant 0 : i32
    %c0_i32_2 = arith.constant 0 : i32
    return %c0_i32, %c0_i32_0, %c0_i32_1 : i32, i32, i32
  }
  func.func @transform_11(%arg0: i32) -> (i32, i32, i32) {
    %c0_i32 = arith.constant 0 : i32
    %c0_i32_0 = arith.constant 0 : i32
    %c0_i32_1 = arith.constant 0 : i32
    %c0_i32_2 = arith.constant 0 : i32
    return %c0_i32, %c0_i32_0, %c0_i32_1 : i32, i32, i32
  }
  func.func @transform_12(%arg0: i32) -> (i32, i32, i32) {
    %c0_i32 = arith.constant 0 : i32
    %c0_i32_0 = arith.constant 0 : i32
    %c0_i32_1 = arith.constant 0 : i32
    %c0_i32_2 = arith.constant 0 : i32
    return %c0_i32, %c0_i32_0, %c0_i32_1 : i32, i32, i32
  }
  func.func @transform_13(%arg0: i32) -> (i32, i32, i32) {
    %c0_i32 = arith.constant 0 : i32
    %c0_i32_0 = arith.constant 0 : i32
    %c0_i32_1 = arith.constant 0 : i32
    %c0_i32_2 = arith.constant 0 : i32
    return %c0_i32, %c0_i32_0, %c0_i32_1 : i32, i32, i32
  }
  func.func @transform_14(%arg0: i32) -> (i32, i32, i32) {
    %c0_i32 = arith.constant 0 : i32
    %c0_i32_0 = arith.constant 0 : i32
    %c0_i32_1 = arith.constant 0 : i32
    %c0_i32_2 = arith.constant 0 : i32
    return %c0_i32, %c0_i32_0, %c0_i32_1 : i32, i32, i32
  }
  func.func @transform_15(%arg0: i32) -> (i32, i32, i32) {
    %c0_i32 = arith.constant 0 : i32
    %c0_i32_0 = arith.constant 0 : i32
    %c0_i32_1 = arith.constant 0 : i32
    %c0_i32_2 = arith.constant 0 : i32
    return %c0_i32, %c0_i32_0, %c0_i32_1 : i32, i32, i32
  }
  func.func @transform_16(%arg0: i32) -> (i32, i32, i32) {
    %c0_i32 = arith.constant 0 : i32
    %c0_i32_0 = arith.constant 0 : i32
    %c0_i32_1 = arith.constant 0 : i32
    %c0_i32_2 = arith.constant 0 : i32
    return %c0_i32, %c0_i32_0, %c0_i32_1 : i32, i32, i32
  }
  func.func @transform_17(%arg0: i32) -> (i32, i32, i32) {
    %c0_i32 = arith.constant 0 : i32
    %c0_i32_0 = arith.constant 0 : i32
    %c0_i32_1 = arith.constant 0 : i32
    %c0_i32_2 = arith.constant 0 : i32
    return %c0_i32, %c0_i32_0, %c0_i32_1 : i32, i32, i32
  }
  func.func @transform_18(%arg0: i32) -> (i32, i32, i32) {
    %c0_i32 = arith.constant 0 : i32
    %c0_i32_0 = arith.constant 0 : i32
    %c0_i32_1 = arith.constant 0 : i32
    %c0_i32_2 = arith.constant 0 : i32
    return %c0_i32, %c0_i32_0, %c0_i32_1 : i32, i32, i32
  }
  func.func @transform_19(%arg0: i32) -> (i32, i32, i32, i32) {
    %c0_i32 = arith.constant 0 : i32
    %c0_i32_0 = arith.constant 0 : i32
    %c0_i32_1 = arith.constant 0 : i32
    %c0_i32_2 = arith.constant 0 : i32
    return %arg0, %c0_i32, %c0_i32_0, %c0_i32_1 : i32, i32, i32, i32
  }
  func.func @transform_20(%arg0: i32) -> (i32, i32, i32, i32) {
    %c0_i32 = arith.constant 0 : i32
    %c0_i32_0 = arith.constant 0 : i32
    %c0_i32_1 = arith.constant 0 : i32
    %c0_i32_2 = arith.constant 0 : i32
    return %arg0, %c0_i32, %c0_i32_0, %c0_i32_1 : i32, i32, i32, i32
  }
}

</mosaic_0001>

<llo_original>
// kernel: encoder_forward.1
$region0: #{encoder_forward.1}
  #allocation0 [shape = 'u32[]', space=smem, size = 0x4, offset = 0x4, fixed_abs, tag = 'smem constant byte address 0x4 - core index']
  #allocation1 [shape = 'u32[144,128]{1,0:T(1,128)}', space=vmem, size = 0x12000, scoped, tag = 'internal scratch']
  %s0 = inlined_call_operand.vmem [shape: f32[2,8,32], index: 0, kind: input, shape index: {}]
  %s1 = inlined_call_operand.vmem [shape: f32[1,32], index: 1, kind: input, shape index: {}]
  %s2 = inlined_call_operand.vmem [shape: f32[1,32], index: 2, kind: input, shape index: {}]
  %s3 = inlined_call_operand.vmem [shape: f32[2,4,32,8], index: 3, kind: input, shape index: {}]
  %s4 = inlined_call_operand.vmem [shape: f32[2,4,1,8], index: 4, kind: input, shape index: {}]
  %s5 = inlined_call_operand.vmem [shape: f32[2,4,32,8], index: 5, kind: input, shape index: {}]
  %s6 = inlined_call_operand.vmem [shape: f32[2,4,1,8], index: 6, kind: input, shape index: {}]
  %s7 = inlined_call_operand.vmem [shape: f32[2,4,32,8], index: 7, kind: input, shape index: {}]
  %s8 = inlined_call_operand.vmem [shape: f32[2,4,1,8], index: 8, kind: input, shape index: {}]
  %s9 = inlined_call_operand.vmem [shape: f32[2,4,8,32], index: 9, kind: input, shape index: {}]
  %s10 = inlined_call_operand.vmem [shape: f32[2,1,32], index: 10, kind: input, shape index: {}]
  %s11 = inlined_call_operand.vmem [shape: f32[2,1,32], index: 11, kind: input, shape index: {}]
  %s12 = inlined_call_operand.vmem [shape: f32[2,1,32], index: 12, kind: input, shape index: {}]
  %s13 = inlined_call_operand.vmem [shape: f32[2,32,64], index: 13, kind: input, shape index: {}]
  %s14 = inlined_call_operand.vmem [shape: f32[2,1,64], index: 14, kind: input, shape index: {}]
  %s15 = inlined_call_operand.vmem [shape: f32[2,64,32], index: 15, kind: input, shape index: {}]
  %s16 = inlined_call_operand.vmem [shape: f32[2,1,32], index: 16, kind: input, shape index: {}]
  %s17 = inlined_call_operand.vmem [shape: f32[2,1,32], index: 17, kind: input, shape index: {}]
  %s18 = inlined_call_operand.vmem [shape: f32[2,1,32], index: 18, kind: input, shape index: {}]
  %s19 = inlined_call_operand.vmem [shape: f32[2,3,8,32], index: 19, kind: output, shape index: {0}]
  %s20 = inlined_call_operand.vmem [shape: f32[2,8,8,8], index: 20, kind: output, shape index: {1}]
  %21 = xla_tuple %s19, %s20
  %s22 = sld [smem:[#allocation0]]
  $region117: #{encoder_forward.1} parent=0
    _
  %s24 = ssub.s32 1, %s22
  %s25 = scalar_select 0, %s24, %s22
  loop: start=0, step=1, limit=4
  $region2: #{encoder_forward.1} parent=0 // loop_pre_header
    _
  $region3: #{encoder_forward.1} parent=0 // loop_header
    %s27 = sphi 0, %s31
    %p28 = scmp.ge.s32.totalorder %s27, 4
    %s37 = sphi 0, %s39
    %s40 = sphi 0, %s37
    %s41 = sphi 0, %s40
    %s57 = sphi 0, %s41
    %s61 = sphi 0, %s61
    %s63 = sphi 0, %s61
    %s64 = sphi 0, %s63
    %s78 = sphi 0, %s64
    %s82 = sphi 0, %s82
    %s84 = sphi 0, %s82
    %s85 = sphi 0, %s84
    %s99 = sphi 0, %s85
    %s103 = sphi 0, %s103
    %s105 = sphi 0, %s103
    %s106 = sphi 0, %s105
    %s120 = sphi 0, %s106
    %s124 = sphi 0, %s124
    %s126 = sphi 0, %s124
    %s127 = sphi 0, %s126
    %s141 = sphi 0, %s127
    %s145 = sphi 0, %s145
    %s147 = sphi 0, %s145
    %s148 = sphi 0, %s147
    %s162 = sphi 0, %s148
    %s166 = sphi 0, %s166
    %s168 = sphi 0, %s166
    %s169 = sphi 0, %s168
    %s183 = sphi 0, %s169
    %s187 = sphi 0, %s187
    %s189 = sphi 0, %s187
    %s190 = sphi 0, %s189
    %s204 = sphi 0, %s190
    %s208 = sphi 0, %s208
    %s210 = sphi 0, %s208
    %s211 = sphi 0, %s210
    %s225 = sphi 0, %s211
    %s229 = sphi 0, %s229
    %s231 = sphi 0, %s229
    %s232 = sphi 0, %s231
    %s246 = sphi 0, %s232
    %s250 = sphi 0, %s250
    %s252 = sphi 0, %s250
    %s253 = sphi 0, %s252
    %s267 = sphi 0, %s253
    %s271 = sphi 0, %s271
    %s273 = sphi 0, %s271
    %s274 = sphi 0, %s273
    %s288 = sphi 0, %s274
    %s292 = sphi 0, %s292
    %s294 = sphi 0, %s292
    %s295 = sphi 0, %s294
    %s309 = sphi 0, %s295
    %s313 = sphi 0, %s313
    %s315 = sphi 0, %s313
    %s316 = sphi 0, %s315
    %s330 = sphi 0, %s316
    %s334 = sphi 0, %s334
    %s336 = sphi 0, %s334
    %s337 = sphi 0, %s336
    %s351 = sphi 0, %s337
    %s355 = sphi 0, %s355
    %s357 = sphi 0, %s355
    %s358 = sphi 0, %s357
    %s372 = sphi 0, %s358
    %s376 = sphi 0, %s376
    %s378 = sphi 0, %s376
    %s379 = sphi 0, %s378
    %s393 = sphi 0, %s379
    %s397 = sphi 0, %s397
    %s399 = sphi 0, %s397
    %s400 = sphi 0, %s399
    %s414 = sphi 0, %s400
    %s418 = sphi 0, %s418
    %s420 = sphi 0, %s418
    %s421 = sphi 0, %s420
    %s435 = sphi 0, %s421
    %s441 = sphi 0, %s443
    %s444 = sphi 0, %s441
    %s445 = sphi 0, %s444
    %s461 = sphi 0, %s445
    %s467 = sphi 0, %s469
    %s470 = sphi 0, %s467
    %s471 = sphi 0, %s470
    %s487 = sphi 0, %s471
  $region4: #{encoder_forward.1} parent=0 // loop_header_branch
    %30 = sbr.rel (%p28) target = $region8
  $region5: #{encoder_forward.1} parent=0 // loop_body
    %s32 = ssub.s32 %s27, 1
    %s33 = ssub.s32 %s27, 2
    %s34 = sadd.s32 %s27, 1
    %s35 = ssub.s32 %s27, %s34
    %p36 = scmp.eq.s32.totalorder %s35, 0
    %s38 = sadd.s32 %s37, 1
    %s39 = scalar_select %p36, %s37, %s38
    %p42 = pneg %p36
    %p43 = scmp.eq.s32.totalorder %s27, 1
    %p44 = por %p42, %p43
    %p45 = scmp.ne.s32.totalorder %s37, %s40
    %p46 = scmp.eq.s32.totalorder %s27, 0
    %p47 = por %p45, %p46
    %p48 = scmp.ne.s32.totalorder %s37, %s40
    %p49 = scmp.eq.s32.totalorder %s32, 1
    %p50 = por %p48, %p49
    %p51 = scmp.ne.s32.totalorder %s40, %s41
    %p52 = scmp.eq.s32.totalorder %s32, 0
    %p53 = por %p51, %p52
    %p54 = scmp.ne.s32.totalorder %s40, %s41
    %p55 = scmp.eq.s32.totalorder %s33, 1
    %p56 = por %p54, %p55
    %p58 = scmp.ne.s32.totalorder %s41, %s57
    %p59 = scmp.eq.s32.totalorder %s33, 0
    %p60 = por %p58, %p59
    %s62 = sadd.s32 %s61, 1
    %p65 = scmp.eq.s32.totalorder %s27, 1
    %p66 = scmp.ne.s32.totalorder %s61, %s63
    %p67 = scmp.eq.s32.totalorder %s27, 0
    %p68 = por %p66, %p67
    %p69 = scmp.ne.s32.totalorder %s61, %s63
    %p70 = scmp.eq.s32.totalorder %s32, 1
    %p71 = por %p69, %p70
    %p72 = scmp.ne.s32.totalorder %s63, %s64
    %p73 = scmp.eq.s32.totalorder %s32, 0
    %p74 = por %p72, %p73
    %p75 = scmp.ne.s32.totalorder %s63, %s64
    %p76 = scmp.eq.s32.totalorder %s33, 1
    %p77 = por %p75, %p76
    %p79 = scmp.ne.s32.totalorder %s64, %s78
    %p80 = scmp.eq.s32.totalorder %s33, 0
    %p81 = por %p79, %p80
    %s83 = sadd.s32 %s82, 1
    %p86 = scmp.eq.s32.totalorder %s27, 1
    %p87 = scmp.ne.s32.totalorder %s82, %s84
    %p88 = scmp.eq.s32.totalorder %s27, 0
    %p89 = por %p87, %p88
    %p90 = scmp.ne.s32.totalorder %s82, %s84
    %p91 = scmp.eq.s32.totalorder %s32, 1
    %p92 = por %p90, %p91
    %p93 = scmp.ne.s32.totalorder %s84, %s85
    %p94 = scmp.eq.s32.totalorder %s32, 0
    %p95 = por %p93, %p94
    %p96 = scmp.ne.s32.totalorder %s84, %s85
    %p97 = scmp.eq.s32.totalorder %s33, 1
    %p98 = por %p96, %p97
    %p100 = scmp.ne.s32.totalorder %s85, %s99
    %p101 = scmp.eq.s32.totalorder %s33, 0
    %p102 = por %p100, %p101
    %s104 = sadd.s32 %s103, 1
    %p107 = scmp.eq.s32.totalorder %s27, 1
    %p108 = scmp.ne.s32.totalorder %s103, %s105
    %p109 = scmp.eq.s32.totalorder %s27, 0
    %p110 = por %p108, %p109
    %p111 = scmp.ne.s32.totalorder %s103, %s105
    %p112 = scmp.eq.s32.totalorder %s32, 1
    %p113 = por %p111, %p112
    %p114 = scmp.ne.s32.totalorder %s105, %s106
    %p115 = scmp.eq.s32.totalorder %s32, 0
    %p116 = por %p114, %p115
    %p117 = scmp.ne.s32.totalorder %s105, %s106
    %p118 = scmp.eq.s32.totalorder %s33, 1
    %p119 = por %p117, %p118
    %p121 = scmp.ne.s32.totalorder %s106, %s120
    %p122 = scmp.eq.s32.totalorder %s33, 0
    %p123 = por %p121, %p122
    %s125 = sadd.s32 %s124, 1
    %p128 = scmp.eq.s32.totalorder %s27, 1
    %p129 = scmp.ne.s32.totalorder %s124, %s126
    %p130 = scmp.eq.s32.totalorder %s27, 0
    %p131 = por %p129, %p130
    %p132 = scmp.ne.s32.totalorder %s124, %s126
    %p133 = scmp.eq.s32.totalorder %s32, 1
    %p134 = por %p132, %p133
    %p135 = scmp.ne.s32.totalorder %s126, %s127
    %p136 = scmp.eq.s32.totalorder %s32, 0
    %p137 = por %p135, %p136
    %p138 = scmp.ne.s32.totalorder %s126, %s127
    %p139 = scmp.eq.s32.totalorder %s33, 1
    %p140 = por %p138, %p139
    %p142 = scmp.ne.s32.totalorder %s127, %s141
    %p143 = scmp.eq.s32.totalorder %s33, 0
    %p144 = por %p142, %p143
    %s146 = sadd.s32 %s145, 1
    %p149 = scmp.eq.s32.totalorder %s27, 1
    %p150 = scmp.ne.s32.totalorder %s145, %s147
    %p151 = scmp.eq.s32.totalorder %s27, 0
    %p152 = por %p150, %p151
    %p153 = scmp.ne.s32.totalorder %s145, %s147
    %p154 = scmp.eq.s32.totalorder %s32, 1
    %p155 = por %p153, %p154
    %p156 = scmp.ne.s32.totalorder %s147, %s148
    %p157 = scmp.eq.s32.totalorder %s32, 0
    %p158 = por %p156, %p157
    %p159 = scmp.ne.s32.totalorder %s147, %s148
    %p160 = scmp.eq.s32.totalorder %s33, 1
    %p161 = por %p159, %p160
    %p163 = scmp.ne.s32.totalorder %s148, %s162
    %p164 = scmp.eq.s32.totalorder %s33, 0
    %p165 = por %p163, %p164
    %s167 = sadd.s32 %s166, 1
    %p170 = scmp.eq.s32.totalorder %s27, 1
    %p171 = scmp.ne.s32.totalorder %s166, %s168
    %p172 = scmp.eq.s32.totalorder %s27, 0
    %p173 = por %p171, %p172
    %p174 = scmp.ne.s32.totalorder %s166, %s168
    %p175 = scmp.eq.s32.totalorder %s32, 1
    %p176 = por %p174, %p175
    %p177 = scmp.ne.s32.totalorder %s168, %s169
    %p178 = scmp.eq.s32.totalorder %s32, 0
    %p179 = por %p177, %p178
    %p180 = scmp.ne.s32.totalorder %s168, %s169
    %p181 = scmp.eq.s32.totalorder %s33, 1
    %p182 = por %p180, %p181
    %p184 = scmp.ne.s32.totalorder %s169, %s183
    %p185 = scmp.eq.s32.totalorder %s33, 0
    %p186 = por %p184, %p185
    %s188 = sadd.s32 %s187, 1
    %p191 = scmp.eq.s32.totalorder %s27, 1
    %p192 = scmp.ne.s32.totalorder %s187, %s189
    %p193 = scmp.eq.s32.totalorder %s27, 0
    %p194 = por %p192, %p193
    %p195 = scmp.ne.s32.totalorder %s187, %s189
    %p196 = scmp.eq.s32.totalorder %s32, 1
    %p197 = por %p195, %p196
    %p198 = scmp.ne.s32.totalorder %s189, %s190
    %p199 = scmp.eq.s32.totalorder %s32, 0
    %p200 = por %p198, %p199
    %p201 = scmp.ne.s32.totalorder %s189, %s190
    %p202 = scmp.eq.s32.totalorder %s33, 1
    %p203 = por %p201, %p202
    %p205 = scmp.ne.s32.totalorder %s190, %s204
    %p206 = scmp.eq.s32.totalorder %s33, 0
    %p207 = por %p205, %p206
    %s209 = sadd.s32 %s208, 1
    %p212 = scmp.eq.s32.totalorder %s27, 1
    %p213 = scmp.ne.s32.totalorder %s208, %s210
    %p214 = scmp.eq.s32.totalorder %s27, 0
    %p215 = por %p213, %p214
    %p216 = scmp.ne.s32.totalorder %s208, %s210
    %p217 = scmp.eq.s32.totalorder %s32, 1
    %p218 = por %p216, %p217
    %p219 = scmp.ne.s32.totalorder %s210, %s211
    %p220 = scmp.eq.s32.totalorder %s32, 0
    %p221 = por %p219, %p220
    %p222 = scmp.ne.s32.totalorder %s210, %s211
    %p223 = scmp.eq.s32.totalorder %s33, 1
    %p224 = por %p222, %p223
    %p226 = scmp.ne.s32.totalorder %s211, %s225
    %p227 = scmp.eq.s32.totalorder %s33, 0
    %p228 = por %p226, %p227
    %s230 = sadd.s32 %s229, 1
    %p233 = scmp.eq.s32.totalorder %s27, 1
    %p234 = scmp.ne.s32.totalorder %s229, %s231
    %p235 = scmp.eq.s32.totalorder %s27, 0
    %p236 = por %p234, %p235
    %p237 = scmp.ne.s32.totalorder %s229, %s231
    %p238 = scmp.eq.s32.totalorder %s32, 1
    %p239 = por %p237, %p238
    %p240 = scmp.ne.s32.totalorder %s231, %s232
    %p241 = scmp.eq.s32.totalorder %s32, 0
    %p242 = por %p240, %p241
    %p243 = scmp.ne.s32.totalorder %s231, %s232
    %p244 = scmp.eq.s32.totalorder %s33, 1
    %p245 = por %p243, %p244
    %p247 = scmp.ne.s32.totalorder %s232, %s246
    %p248 = scmp.eq.s32.totalorder %s33, 0
    %p249 = por %p247, %p248
    %s251 = sadd.s32 %s250, 1
    %p254 = scmp.eq.s32.totalorder %s27, 1
    %p255 = scmp.ne.s32.totalorder %s250, %s252
    %p256 = scmp.eq.s32.totalorder %s27, 0
    %p257 = por %p255, %p256
    %p258 = scmp.ne.s32.totalorder %s250, %s252
    %p259 = scmp.eq.s32.totalorder %s32, 1
    %p260 = por %p258, %p259
    %p261 = scmp.ne.s32.totalorder %s252, %s253
    %p262 = scmp.eq.s32.totalorder %s32, 0
    %p263 = por %p261, %p262
    %p264 = scmp.ne.s32.totalorder %s252, %s253
    %p265 = scmp.eq.s32.totalorder %s33, 1
    %p266 = por %p264, %p265
    %p268 = scmp.ne.s32.totalorder %s253, %s267
    %p269 = scmp.eq.s32.totalorder %s33, 0
    %p270 = por %p268, %p269
    %s272 = sadd.s32 %s271, 1
    %p275 = scmp.eq.s32.totalorder %s27, 1
    %p276 = scmp.ne.s32.totalorder %s271, %s273
    %p277 = scmp.eq.s32.totalorder %s27, 0
    %p278 = por %p276, %p277
    %p279 = scmp.ne.s32.totalorder %s271, %s273
    %p280 = scmp.eq.s32.totalorder %s32, 1
    %p281 = por %p279, %p280
    %p282 = scmp.ne.s32.totalorder %s273, %s274
    %p283 = scmp.eq.s32.totalorder %s32, 0
    %p284 = por %p282, %p283
    %p285 = scmp.ne.s32.totalorder %s273, %s274
    %p286 = scmp.eq.s32.totalorder %s33, 1
    %p287 = por %p285, %p286
    %p289 = scmp.ne.s32.totalorder %s274, %s288
    %p290 = scmp.eq.s32.totalorder %s33, 0
    %p291 = por %p289, %p290
    %s293 = sadd.s32 %s292, 1
    %p296 = scmp.eq.s32.totalorder %s27, 1
    %p297 = scmp.ne.s32.totalorder %s292, %s294
    %p298 = scmp.eq.s32.totalorder %s27, 0
    %p299 = por %p297, %p298
    %p300 = scmp.ne.s32.totalorder %s292, %s294
    %p301 = scmp.eq.s32.totalorder %s32, 1
    %p302 = por %p300, %p301
    %p303 = scmp.ne.s32.totalorder %s294, %s295
    %p304 = scmp.eq.s32.totalorder %s32, 0
    %p305 = por %p303, %p304
    %p306 = scmp.ne.s32.totalorder %s294, %s295
    %p307 = scmp.eq.s32.totalorder %s33, 1
    %p308 = por %p306, %p307
    %p310 = scmp.ne.s32.totalorder %s295, %s309
    %p311 = scmp.eq.s32.totalorder %s33, 0
    %p312 = por %p310, %p311
    %s314 = sadd.s32 %s313, 1
    %p317 = scmp.eq.s32.totalorder %s27, 1
    %p318 = scmp.ne.s32.totalorder %s313, %s315
    %p319 = scmp.eq.s32.totalorder %s27, 0
    %p320 = por %p318, %p319
    %p321 = scmp.ne.s32.totalorder %s313, %s315
    %p322 = scmp.eq.s32.totalorder %s32, 1
    %p323 = por %p321, %p322
    %p324 = scmp.ne.s32.totalorder %s315, %s316
    %p325 = scmp.eq.s32.totalorder %s32, 0
    %p326 = por %p324, %p325
    %p327 = scmp.ne.s32.totalorder %s315, %s316
    %p328 = scmp.eq.s32.totalorder %s33, 1
    %p329 = por %p327, %p328
    %p331 = scmp.ne.s32.totalorder %s316, %s330
    %p332 = scmp.eq.s32.totalorder %s33, 0
    %p333 = por %p331, %p332
    %s335 = sadd.s32 %s334, 1
    %p338 = scmp.eq.s32.totalorder %s27, 1
    %p339 = scmp.ne.s32.totalorder %s334, %s336
    %p340 = scmp.eq.s32.totalorder %s27, 0
    %p341 = por %p339, %p340
    %p342 = scmp.ne.s32.totalorder %s334, %s336
    %p343 = scmp.eq.s32.totalorder %s32, 1
    %p344 = por %p342, %p343
    %p345 = scmp.ne.s32.totalorder %s336, %s337
    %p346 = scmp.eq.s32.totalorder %s32, 0
    %p347 = por %p345, %p346
    %p348 = scmp.ne.s32.totalorder %s336, %s337
    %p349 = scmp.eq.s32.totalorder %s33, 1
    %p350 = por %p348, %p349
    %p352 = scmp.ne.s32.totalorder %s337, %s351
    %p353 = scmp.eq.s32.totalorder %s33, 0
    %p354 = por %p352, %p353
    %s356 = sadd.s32 %s355, 1
    %p359 = scmp.eq.s32.totalorder %s27, 1
    %p360 = scmp.ne.s32.totalorder %s355, %s357
    %p361 = scmp.eq.s32.totalorder %s27, 0
    %p362 = por %p360, %p361
    %p363 = scmp.ne.s32.totalorder %s355, %s357
    %p364 = scmp.eq.s32.totalorder %s32, 1
    %p365 = por %p363, %p364
    %p366 = scmp.ne.s32.totalorder %s357, %s358
    %p367 = scmp.eq.s32.totalorder %s32, 0
    %p368 = por %p366, %p367
    %p369 = scmp.ne.s32.totalorder %s357, %s358
    %p370 = scmp.eq.s32.totalorder %s33, 1
    %p371 = por %p369, %p370
    %p373 = scmp.ne.s32.totalorder %s358, %s372
    %p374 = scmp.eq.s32.totalorder %s33, 0
    %p375 = por %p373, %p374
    %s377 = sadd.s32 %s376, 1
    %p380 = scmp.eq.s32.totalorder %s27, 1
    %p381 = scmp.ne.s32.totalorder %s376, %s378
    %p382 = scmp.eq.s32.totalorder %s27, 0
    %p383 = por %p381, %p382
    %p384 = scmp.ne.s32.totalorder %s376, %s378
    %p385 = scmp.eq.s32.totalorder %s32, 1
    %p386 = por %p384, %p385
    %p387 = scmp.ne.s32.totalorder %s378, %s379
    %p388 = scmp.eq.s32.totalorder %s32, 0
    %p389 = por %p387, %p388
    %p390 = scmp.ne.s32.totalorder %s378, %s379
    %p391 = scmp.eq.s32.totalorder %s33, 1
    %p392 = por %p390, %p391
    %p394 = scmp.ne.s32.totalorder %s379, %s393
    %p395 = scmp.eq.s32.totalorder %s33, 0
    %p396 = por %p394, %p395
    %s398 = sadd.s32 %s397, 1
    %p401 = scmp.eq.s32.totalorder %s27, 1
    %p402 = scmp.ne.s32.totalorder %s397, %s399
    %p403 = scmp.eq.s32.totalorder %s27, 0
    %p404 = por %p402, %p403
    %p405 = scmp.ne.s32.totalorder %s397, %s399
    %p406 = scmp.eq.s32.totalorder %s32, 1
    %p407 = por %p405, %p406
    %p408 = scmp.ne.s32.totalorder %s399, %s400
    %p409 = scmp.eq.s32.totalorder %s32, 0
    %p410 = por %p408, %p409
    %p411 = scmp.ne.s32.totalorder %s399, %s400
    %p412 = scmp.eq.s32.totalorder %s33, 1
    %p413 = por %p411, %p412
    %p415 = scmp.ne.s32.totalorder %s400, %s414
    %p416 = scmp.eq.s32.totalorder %s33, 0
    %p417 = por %p415, %p416
    %s419 = sadd.s32 %s418, 1
    %p422 = scmp.eq.s32.totalorder %s27, 1
    %p423 = scmp.ne.s32.totalorder %s418, %s420
    %p424 = scmp.eq.s32.totalorder %s27, 0
    %p425 = por %p423, %p424
    %p426 = scmp.ne.s32.totalorder %s418, %s420
    %p427 = scmp.eq.s32.totalorder %s32, 1
    %p428 = por %p426, %p427
    %p429 = scmp.ne.s32.totalorder %s420, %s421
    %p430 = scmp.eq.s32.totalorder %s32, 0
    %p431 = por %p429, %p430
    %p432 = scmp.ne.s32.totalorder %s420, %s421
    %p433 = scmp.eq.s32.totalorder %s33, 1
    %p434 = por %p432, %p433
    %p436 = scmp.ne.s32.totalorder %s421, %s435
    %p437 = scmp.eq.s32.totalorder %s33, 0
    %p438 = por %p436, %p437
    %s439 = ssub.s32 %s27, %s34
    %p440 = scmp.eq.s32.totalorder %s439, 0
    %s442 = sadd.s32 %s441, 1
    %s443 = scalar_select %p440, %s441, %s442
    %p446 = pneg %p440
    %p447 = scmp.eq.s32.totalorder %s27, 1
    %p448 = por %p446, %p447
    %p449 = scmp.ne.s32.totalorder %s441, %s444
    %p450 = scmp.eq.s32.totalorder %s27, 0
    %p451 = por %p449, %p450
    %p452 = scmp.ne.s32.totalorder %s441, %s444
    %p453 = scmp.eq.s32.totalorder %s32, 1
    %p454 = por %p452, %p453
    %p455 = scmp.ne.s32.totalorder %s444, %s445
    %p456 = scmp.eq.s32.totalorder %s32, 0
    %p457 = por %p455, %p456
    %p458 = scmp.ne.s32.totalorder %s444, %s445
    %p459 = scmp.eq.s32.totalorder %s33, 1
    %p460 = por %p458, %p459
    %p462 = scmp.ne.s32.totalorder %s445, %s461
    %p463 = scmp.eq.s32.totalorder %s33, 0
    %p464 = por %p462, %p463
    %s465 = ssub.s32 %s27, %s34
    %p466 = scmp.eq.s32.totalorder %s465, 0
    %s468 = sadd.s32 %s467, 1
    %s469 = scalar_select %p466, %s467, %s468
    %p472 = pneg %p466
    %p473 = scmp.eq.s32.totalorder %s27, 1
    %p474 = por %p472, %p473
    %p475 = scmp.ne.s32.totalorder %s467, %s470
    %p476 = scmp.eq.s32.totalorder %s27, 0
    %p477 = por %p475, %p476
    %p478 = scmp.ne.s32.totalorder %s467, %s470
    %p479 = scmp.eq.s32.totalorder %s32, 1
    %p480 = por %p478, %p479
    %p481 = scmp.ne.s32.totalorder %s470, %s471
    %p482 = scmp.eq.s32.totalorder %s32, 0
    %p483 = por %p481, %p482
    %p484 = scmp.ne.s32.totalorder %s470, %s471
    %p485 = scmp.eq.s32.totalorder %s33, 1
    %p486 = por %p484, %p485
    %p488 = scmp.ne.s32.totalorder %s471, %s487
    %p489 = scmp.eq.s32.totalorder %s33, 0
    %p490 = por %p488, %p489
    %p491 = scmp.le.s32.totalorder 1, %s27
    %p492 = scmp.lt.s32.totalorder %s27, 3
    %p493 = pnand %p491, %p492
    %p494 = pneg %p493
    // Predicated region
    $region9: #{encoder_forward.1} parent=5 // pred_check
      _
    $region10: #{encoder_forward.1} parent=5 // pred_check_branch
      %496 = sbr.rel (%p493) target = $region12
    $region11: #{encoder_forward.1} parent=5 // pred_region
      %s497 = ssub.s32 %s27, 1
      // Predicated region
      $region13: #{encoder_forward.1} parent=11 // pred_check
        %p498 = pneg %p74
      $region14: #{encoder_forward.1} parent=11 // pred_check_branch
        %500 = sbr.rel (%p498) target = $region16
      $region15: #{encoder_forward.1} parent=11 // pred_region
        _
      $region16: #{encoder_forward.1} parent=11 // pred_fallthru
        _
      // Predicated region
      $region17: #{encoder_forward.1} parent=11 // pred_check
        %p501 = pneg %p95
      $region18: #{encoder_forward.1} parent=11 // pred_check_branch
        %503 = sbr.rel (%p501) target = $region20
      $region19: #{encoder_forward.1} parent=11 // pred_region
        _
      $region20: #{encoder_forward.1} parent=11 // pred_fallthru
        _
      // Predicated region
      $region21: #{encoder_forward.1} parent=11 // pred_check
        %p504 = pneg %p116
      $region22: #{encoder_forward.1} parent=11 // pred_check_branch
        %506 = sbr.rel (%p504) target = $region24
      $region23: #{encoder_forward.1} parent=11 // pred_region
        _
      $region24: #{encoder_forward.1} parent=11 // pred_fallthru
        _
      // Predicated region
      $region25: #{encoder_forward.1} parent=11 // pred_check
        %p507 = pneg %p137
      $region26: #{encoder_forward.1} parent=11 // pred_check_branch
        %509 = sbr.rel (%p507) target = $region28
      $region27: #{encoder_forward.1} parent=11 // pred_region
        _
      $region28: #{encoder_forward.1} parent=11 // pred_fallthru
        _
      // Predicated region
      $region29: #{encoder_forward.1} parent=11 // pred_check
        %p510 = pneg %p158
      $region30: #{encoder_forward.1} parent=11 // pred_check_branch
        %512 = sbr.rel (%p510) target = $region32
      $region31: #{encoder_forward.1} parent=11 // pred_region
        _
      $region32: #{encoder_forward.1} parent=11 // pred_fallthru
        _
      // Predicated region
      $region33: #{encoder_forward.1} parent=11 // pred_check
        %p513 = pneg %p179
      $region34: #{encoder_forward.1} parent=11 // pred_check_branch
        %515 = sbr.rel (%p513) target = $region36
      $region35: #{encoder_forward.1} parent=11 // pred_region
        _
      $region36: #{encoder_forward.1} parent=11 // pred_fallthru
        _
      // Predicated region
      $region37: #{encoder_forward.1} parent=11 // pred_check
        %p516 = pneg %p200
      $region38: #{encoder_forward.1} parent=11 // pred_check_branch
        %518 = sbr.rel (%p516) target = $region40
      $region39: #{encoder_forward.1} parent=11 // pred_region
        _
      $region40: #{encoder_forward.1} parent=11 // pred_fallthru
        _
      // Predicated region
      $region41: #{encoder_forward.1} parent=11 // pred_check
        %p519 = pneg %p221
      $region42: #{encoder_forward.1} parent=11 // pred_check_branch
        %521 = sbr.rel (%p519) target = $region44
      $region43: #{encoder_forward.1} parent=11 // pred_region
        _
      $region44: #{encoder_forward.1} parent=11 // pred_fallthru
        _
      // Predicated region
      $region45: #{encoder_forward.1} parent=11 // pred_check
        %p522 = pneg %p242
      $region46: #{encoder_forward.1} parent=11 // pred_check_branch
        %524 = sbr.rel (%p522) target = $region48
      $region47: #{encoder_forward.1} parent=11 // pred_region
        _
      $region48: #{encoder_forward.1} parent=11 // pred_fallthru
        _
      // Predicated region
      $region49: #{encoder_forward.1} parent=11 // pred_check
        %p525 = pneg %p263
      $region50: #{encoder_forward.1} parent=11 // pred_check_branch
        %527 = sbr.rel (%p525) target = $region52
      $region51: #{encoder_forward.1} parent=11 // pred_region
        _
      $region52: #{encoder_forward.1} parent=11 // pred_fallthru
        _
      // Predicated region
      $region53: #{encoder_forward.1} parent=11 // pred_check
        %p528 = pneg %p284
      $region54: #{encoder_forward.1} parent=11 // pred_check_branch
        %530 = sbr.rel (%p528) target = $region56
      $region55: #{encoder_forward.1} parent=11 // pred_region
        _
      $region56: #{encoder_forward.1} parent=11 // pred_fallthru
        _
      // Predicated region
      $region57: #{encoder_forward.1} parent=11 // pred_check
        %p531 = pneg %p305
      $region58: #{encoder_forward.1} parent=11 // pred_check_branch
        %533 = sbr.rel (%p531) target = $region60
      $region59: #{encoder_forward.1} parent=11 // pred_region
        _
      $region60: #{encoder_forward.1} parent=11 // pred_fallthru
        _
      // Predicated region
      $region61: #{encoder_forward.1} parent=11 // pred_check
        %p534 = pneg %p326
      $region62: #{encoder_forward.1} parent=11 // pred_check_branch
        %536 = sbr.rel (%p534) target = $region64
      $region63: #{encoder_forward.1} parent=11 // pred_region
        _
      $region64: #{encoder_forward.1} parent=11 // pred_fallthru
        _
      // Predicated region
      $region65: #{encoder_forward.1} parent=11 // pred_check
        %p537 = pneg %p347
      $region66: #{encoder_forward.1} parent=11 // pred_check_branch
        %539 = sbr.rel (%p537) target = $region68
      $region67: #{encoder_forward.1} parent=11 // pred_region
        _
      $region68: #{encoder_forward.1} parent=11 // pred_fallthru
        _
      // Predicated region
      $region69: #{encoder_forward.1} parent=11 // pred_check
        %p540 = pneg %p368
      $region70: #{encoder_forward.1} parent=11 // pred_check_branch
        %542 = sbr.rel (%p540) target = $region72
      $region71: #{encoder_forward.1} parent=11 // pred_region
        _
      $region72: #{encoder_forward.1} parent=11 // pred_fallthru
        _
      // Predicated region
      $region73: #{encoder_forward.1} parent=11 // pred_check
        %p543 = pneg %p389
      $region74: #{encoder_forward.1} parent=11 // pred_check_branch
        %545 = sbr.rel (%p543) target = $region76
      $region75: #{encoder_forward.1} parent=11 // pred_region
        _
      $region76: #{encoder_forward.1} parent=11 // pred_fallthru
        _
      // Predicated region
      $region77: #{encoder_forward.1} parent=11 // pred_check
        %p546 = pneg %p410
      $region78: #{encoder_forward.1} parent=11 // pred_check_branch
        %548 = sbr.rel (%p546) target = $region80
      $region79: #{encoder_forward.1} parent=11 // pred_region
        _
      $region80: #{encoder_forward.1} parent=11 // pred_fallthru
        _
      // Predicated region
      $region81: #{encoder_forward.1} parent=11 // pred_check
        %p549 = pneg %p431
      $region82: #{encoder_forward.1} parent=11 // pred_check_branch
        %551 = sbr.rel (%p549) target = $region84
      $region83: #{encoder_forward.1} parent=11 // pred_region
        _
      $region84: #{encoder_forward.1} parent=11 // pred_fallthru
        _
    $region12: #{encoder_forward.1} parent=5 // pred_fallthru
      _
    %p552 = scmp.lt.s32.totalorder %s27, 2
    // Predicated region
    $region85: #{encoder_forward.1} parent=5 // pred_check
      %p553 = pneg %p552
    $region86: #{encoder_forward.1} parent=5 // pred_check_branch
      %555 = sbr.rel (%p553) target = $region88
    $region87: #{encoder_forward.1} parent=5 // pred_region
      // Predicated region
      $region89: #{encoder_forward.1} parent=87 // pred_check
        %p556 = pneg %p47
      $region90: #{encoder_forward.1} parent=87 // pred_check_branch
        %558 = sbr.rel (%p556) target = $region92
      $region91: #{encoder_forward.1} parent=87 // pred_region
        %p559 = scmp.lt.s32.totalorder %s27, 1
        %s560 = scalar_select %p559, %s27, 1
        %s561 = smul.addr %s560, 8
        %s562 = scalar_lea.vmem %s0, %s561
      $region92: #{encoder_forward.1} parent=87 // pred_fallthru
        _
    $region88: #{encoder_forward.1} parent=5 // pred_fallthru
      _
    %p563 = scmp.le.s32.totalorder 1, %s27
    %p564 = scmp.lt.s32.totalorder %s27, 3
    %p565 = pnand %p563, %p564
    %p566 = pneg %p565
    // Predicated region
    $region93: #{encoder_forward.1} parent=5 // pred_check
      _
    $region94: #{encoder_forward.1} parent=5 // pred_check_branch
      %568 = sbr.rel (%p565) target = $region96
    $region95: #{encoder_forward.1} parent=5 // pred_region
      %s569 = ssub.s32 %s27, 1
      %p570 = scmp.lt.s32.totalorder %s32, 1
      %s571 = scalar_select %p570, %s32, 1
      %s572 = smul.addr %s571, 8
      %s573 = scalar_lea.vmem %s0, %s572
      %p574 = pneg %p53
      %p575 = pneg %p50
      %p576 = pneg %p74
      %p577 = pneg %p71
      %p578 = pneg %p95
      %p579 = pneg %p92
      %p580 = pneg %p116
      %p581 = pneg %p113
      %p582 = pneg %p137
      %p583 = pneg %p134
      %p584 = pneg %p158
      %p585 = pneg %p155
      %p586 = pneg %p179
      %p587 = pneg %p176
      %p588 = pneg %p200
      %p589 = pneg %p197
      %p590 = pneg %p221
      %p591 = pneg %p218
      %p592 = pneg %p242
      %p593 = pneg %p239
      %p594 = pneg %p263
      %p595 = pneg %p260
      %p596 = pneg %p284
      %p597 = pneg %p281
      %p598 = pneg %p305
      %p599 = pneg %p302
      %p600 = pneg %p326
      %p601 = pneg %p323
      %p602 = pneg %p347
      %p603 = pneg %p344
      %p604 = pneg %p368
      %p605 = pneg %p365
      %p606 = pneg %p389
      %p607 = pneg %p386
      %p608 = pneg %p410
      %p609 = pneg %p407
      %p610 = pneg %p431
      %p611 = pneg %p428
      %p612 = pneg %p457
      %p613 = pneg %p454
      %p614 = scmp.lt.s32.totalorder %s32, 1
      %s615 = scalar_select %p614, %s32, 1
      %s616 = smul.addr %s615, 3
      %s617 = smul.addr %s616, 8
      %s618 = scalar_lea.vmem %s19, %s617
      %p619 = pneg %p483
      %p620 = pneg %p480
      %p621 = scmp.lt.s32.totalorder %s32, 1
      %s622 = scalar_select %p621, %s32, 1
      %s623 = smul.addr %s622, 8
      %s624 = smul.addr %s623, 8
      %s625 = scalar_lea.vmem %s20, %s624
      %p626 = scmp.lt.s32.totalorder %s32, 1
      %s627 = scalar_select %p626, %s32, 1
      %s628 = smul.addr %s627, 8
      %s629 = scalar_lea.vmem %s0, %s628
      %p630 = scmp.lt.s32.totalorder %s32, 1
      %s631 = scalar_select %p630, %s32, 1
      %s632 = smul.addr %s631, 3
      %s633 = smul.addr %s632, 8
      %s634 = scalar_lea.vmem %s19, %s633
      %p635 = scmp.lt.s32.totalorder %s32, 1
      %s636 = scalar_select %p635, %s32, 1
      %s637 = smul.addr %s636, 8
      %s638 = smul.addr %s637, 8
      %s639 = scalar_lea.vmem %s20, %s638
      %v640 = vld [vmem:[%s629] sm:$0xff]
      %v641 = vld [vmem:[%s1] sm:$0x1]
      %v642 = vld [vmem:[%s2] sm:$0x1]
      %vm643 = vcmask 261120
      %v644 = vsel %vm643, %v640, 0.0
      %645 = vadd.xlane.f32.xlu0 %v644
      %v646 = vpop.xlane.xlu0 %645
      %v647 = vrcp.pop 32.0
      %v648 = vmul.f32 %v646, %v647
      %v649 = vsub.f32 %v640, %v648
      %v650 = vmul.f32 %v649, %v649
      %v651 = vsel %vm643, %v650, 0.0
      %652 = vadd.xlane.f32.xlu0 %v651
      %v653 = vpop.xlane.xlu0 %652
      %v654 = vmul.f32 %v653, %v647
      %v655 = vadd.f32 %v654, 1e-12
      %v656 = vrsqrt.pop %v655
      %v657 = vmul.f32 %v649, %v656
      %v659 = vlaneseq
      %v660 = vshrl.u32 %v659, 7
      %v661 = vsub.s32 0, %v660
      %v662 = vrot.slane %v641, %v661
      %v664 = vmul.f32 %v657, %v662
      %v666 = vlaneseq
      %v667 = vshrl.u32 %v666, 7
      %v668 = vsub.s32 0, %v667
      %v669 = vrot.slane %v642, %v668
      %v671 = vadd.f32 %v664, %v669
      %672 = vst.msk [vmem:[%s634] sm:$0xff] %vm643, %v671
      %v673 = vld [vmem:[%s3] sm:$0xff]
      %v674 = vld [vmem:[%s3 + $0x8] sm:$0xff]
      %v675 = vld [vmem:[%s3 + $0x10] sm:$0xff]
      %v676 = vld [vmem:[%s3 + $0x18] sm:$0xff]
      %v677 = vld [vmem:[%s4] sm:$0x1]
      %v679 = vlaneseq
      %v680 = vshrl.u32 %v679, 7
      %v681 = vsub.s32 0, %v680
      %v682 = vrot.slane %v677, %v681
      %v685 = vsel %vm643, %v671, 0
      %687 = vmatprep.subr.mxu0 0.0
      %688 = vmatpush1.msra.mxu0 %v673
      %689 = vmatprep.subr.mxu0 0.0
      %690 = vmatpush1.msra.mxu0 %v674
      %691 = vmatprep.subr.mxu0 0.0
      %692 = vmatpush1.msra.mxu0 %v675
      %693 = vmatprep.subr.mxu0 0.0
      %694 = vmatpush1.msra.mxu0 %v676
      %695 = vmatprep.subr.mxu0 0.0
      %696 = vmatpush1.msra.mxu0 0.0
      %697 = vmatprep.subr.mxu0 0.0
      %698 = vmatpush1.msra.mxu0 0.0
      %699 = vmatprep.subr.mxu0 0.0
      %700 = vmatpush1.msra.mxu0 0.0
      %701 = vmatprep.subr.mxu0 0.0
      %702 = vmatpush1.msra.mxu0 0.0
      %703 = vmatprep.subr.mxu0 0.0
      %704 = vmatpush1.msra.mxu0 0.0
      %705 = vmatprep.subr.mxu0 0.0
      %706 = vmatpush1.msra.mxu0 0.0
      %707 = vmatprep.subr.mxu0 0.0
      %708 = vmatpush1.msra.mxu0 0.0
      %709 = vmatprep.subr.mxu0 0.0
      %710 = vmatpush1.msra.mxu0 0.0
      %711 = vmatprep.subr.mxu0 0.0
      %712 = vmatpush1.msra.mxu0 0.0
      %713 = vmatprep.subr.mxu0 0.0
      %714 = vmatpush1.msra.mxu0 0.0
      %715 = vmatprep.subr.mxu0 0.0
      %716 = vmatpush1.msra.mxu0 0.0
      %717 = vmatprep.subr.mxu0 0.0
      %718 = vmatpush1.msra.mxu0 0.0
      %719 = vmatprep.subr.mxu0 0.0
      %720 = vmatpush1.msra.mxu0 0.0
      %721 = vmatprep.subr.mxu0 0.0
      %722 = vmatpush1.msra.mxu0 0.0
      %723 = vmatprep.subr.mxu0 0.0
      %724 = vmatpush1.msra.mxu0 0.0
      %725 = vmatprep.subr.mxu0 0.0
      %726 = vmatpush1.msra.mxu0 0.0
      %727 = vmatprep.subr.mxu0 0.0
      %728 = vmatpush1.msra.mxu0 0.0
      %729 = vmatprep.subr.mxu0 0.0
      %730 = vmatpush1.msra.mxu0 0.0
      %731 = vmatprep.subr.mxu0 0.0
      %732 = vmatpush1.msra.mxu0 0.0
      %733 = vmatprep.subr.mxu0 0.0
      %734 = vmatpush1.msra.mxu0 0.0
      %735 = vmatprep.subr.mxu0 0.0
      %736 = vmatpush1.msra.mxu0 0.0
      %737 = vmatprep.subr.mxu0 0.0
      %738 = vmatpush1.msra.mxu0 0.0
      %739 = vmatprep.subr.mxu0 0.0
      %740 = vmatpush1.msra.mxu0 0.0
      %741 = vmatprep.subr.mxu0 0.0
      %742 = vmatpush1.msra.mxu0 0.0
      %743 = vmatprep.subr.mxu0 0.0
      %744 = vmatpush1.msra.mxu0 0.0
      %745 = vmatprep.subr.mxu0 0.0
      %746 = vmatpush1.msra.mxu0 0.0
      %747 = vmatprep.subr.mxu0 0.0
      %748 = vmatpush1.msra.mxu0 0.0
      %749 = vmatprep.subr.mxu0 0.0
      %750 = vmatpush1.msra.mxu0 0.0
      %751 = vmatprep.mubr.f32.mxu0 0.0
      %752 = vmatmul.mubr.f32.gmra.mrb[0].mxu0 %v685
      %v753 = vpop.f32.mrb[0].mxu0
      %v754 = vadd.f32 %v682, %v753
      %v755 = vpop.f32.mrb[0].mxu0
      %756 = vdwg.mxu0
      %v757 = vld [vmem:[%s5] sm:$0xff]
      %v758 = vld [vmem:[%s5 + $0x8] sm:$0xff]
      %v759 = vld [vmem:[%s5 + $0x10] sm:$0xff]
      %v760 = vld [vmem:[%s5 + $0x18] sm:$0xff]
      %v761 = vld [vmem:[%s6] sm:$0x1]
      %v763 = vlaneseq
      %v764 = vshrl.u32 %v763, 7
      %v765 = vsub.s32 0, %v764
      %v766 = vrot.slane %v761, %v765
      %768 = vmatprep.subr.mxu0 0.0
      %769 = vmatpush1.msra.mxu0 %v757
      %770 = vmatprep.subr.mxu0 0.0
      %771 = vmatpush1.msra.mxu0 %v758
      %772 = vmatprep.subr.mxu0 0.0
      %773 = vmatpush1.msra.mxu0 %v759
      %774 = vmatprep.subr.mxu0 0.0
      %775 = vmatpush1.msra.mxu0 %v760
      %776 = vmatprep.subr.mxu0 0.0
      %777 = vmatpush1.msra.mxu0 0.0
      %778 = vmatprep.subr.mxu0 0.0
      %779 = vmatpush1.msra.mxu0 0.0
      %780 = vmatprep.subr.mxu0 0.0
      %781 = vmatpush1.msra.mxu0 0.0
      %782 = vmatprep.subr.mxu0 0.0
      %783 = vmatpush1.msra.mxu0 0.0
      %784 = vmatprep.subr.mxu0 0.0
      %785 = vmatpush1.msra.mxu0 0.0
      %786 = vmatprep.subr.mxu0 0.0
      %787 = vmatpush1.msra.mxu0 0.0
      %788 = vmatprep.subr.mxu0 0.0
      %789 = vmatpush1.msra.mxu0 0.0
      %790 = vmatprep.subr.mxu0 0.0
      %791 = vmatpush1.msra.mxu0 0.0
      %792 = vmatprep.subr.mxu0 0.0
      %793 = vmatpush1.msra.mxu0 0.0
      %794 = vmatprep.subr.mxu0 0.0
      %795 = vmatpush1.msra.mxu0 0.0
      %796 = vmatprep.subr.mxu0 0.0
      %797 = vmatpush1.msra.mxu0 0.0
      %798 = vmatprep.subr.mxu0 0.0
      %799 = vmatpush1.msra.mxu0 0.0
      %800 = vmatprep.subr.mxu0 0.0
      %801 = vmatpush1.msra.mxu0 0.0
      %802 = vmatprep.subr.mxu0 0.0
      %803 = vmatpush1.msra.mxu0 0.0
      %804 = vmatprep.subr.mxu0 0.0
      %805 = vmatpush1.msra.mxu0 0.0
      %806 = vmatprep.subr.mxu0 0.0
      %807 = vmatpush1.msra.mxu0 0.0
      %808 = vmatprep.subr.mxu0 0.0
      %809 = vmatpush1.msra.mxu0 0.0
      %810 = vmatprep.subr.mxu0 0.0
      %811 = vmatpush1.msra.mxu0 0.0
      %812 = vmatprep.subr.mxu0 0.0
      %813 = vmatpush1.msra.mxu0 0.0
      %814 = vmatprep.subr.mxu0 0.0
      %815 = vmatpush1.msra.mxu0 0.0
      %816 = vmatprep.subr.mxu0 0.0
      %817 = vmatpush1.msra.mxu0 0.0
      %818 = vmatprep.subr.mxu0 0.0
      %819 = vmatpush1.msra.mxu0 0.0
      %820 = vmatprep.subr.mxu0 0.0
      %821 = vmatpush1.msra.mxu0 0.0
      %822 = vmatprep.subr.mxu0 0.0
      %823 = vmatpush1.msra.mxu0 0.0
      %824 = vmatprep.subr.mxu0 0.0
      %825 = vmatpush1.msra.mxu0 0.0
      %826 = vmatprep.subr.mxu0 0.0
      %827 = vmatpush1.msra.mxu0 0.0
      %828 = vmatprep.subr.mxu0 0.0
      %829 = vmatpush1.msra.mxu0 0.0
      %830 = vmatprep.subr.mxu0 0.0
      %831 = vmatpush1.msra.mxu0 0.0
      %832 = vmatprep.mubr.f32.mxu0 0.0
      %833 = vmatmul.mubr.f32.gmra.mrb[0].mxu0 %v685
      %v834 = vpop.f32.mrb[0].mxu0
      %v835 = vadd.f32 %v766, %v834
      %v836 = vpop.f32.mrb[0].mxu0
      %837 = vdwg.mxu0
      %v838 = vld [vmem:[%s7] sm:$0xff]
      %v839 = vld [vmem:[%s7 + $0x8] sm:$0xff]
      %v840 = vld [vmem:[%s7 + $0x10] sm:$0xff]
      %v841 = vld [vmem:[%s7 + $0x18] sm:$0xff]
      %v842 = vld [vmem:[%s8] sm:$0x1]
      %v844 = vlaneseq
      %v845 = vshrl.u32 %v844, 7
      %v846 = vsub.s32 0, %v845
      %v847 = vrot.slane %v842, %v846
      %849 = vmatprep.subr.mxu0 0.0
      %850 = vmatpush1.msra.mxu0 %v838
      %851 = vmatprep.subr.mxu0 0.0
      %852 = vmatpush1.msra.mxu0 %v839
      %853 = vmatprep.subr.mxu0 0.0
      %854 = vmatpush1.msra.mxu0 %v840
      %855 = vmatprep.subr.mxu0 0.0
      %856 = vmatpush1.msra.mxu0 %v841
      %857 = vmatprep.subr.mxu0 0.0
      %858 = vmatpush1.msra.mxu0 0.0
      %859 = vmatprep.subr.mxu0 0.0
      %860 = vmatpush1.msra.mxu0 0.0
      %861 = vmatprep.subr.mxu0 0.0
      %862 = vmatpush1.msra.mxu0 0.0
      %863 = vmatprep.subr.mxu0 0.0
      %864 = vmatpush1.msra.mxu0 0.0
      %865 = vmatprep.subr.mxu0 0.0
      %866 = vmatpush1.msra.mxu0 0.0
      %867 = vmatprep.subr.mxu0 0.0
      %868 = vmatpush1.msra.mxu0 0.0
      %869 = vmatprep.subr.mxu0 0.0
      %870 = vmatpush1.msra.mxu0 0.0
      %871 = vmatprep.subr.mxu0 0.0
      %872 = vmatpush1.msra.mxu0 0.0
      %873 = vmatprep.subr.mxu0 0.0
      %874 = vmatpush1.msra.mxu0 0.0
      %875 = vmatprep.subr.mxu0 0.0
      %876 = vmatpush1.msra.mxu0 0.0
      %877 = vmatprep.subr.mxu0 0.0
      %878 = vmatpush1.msra.mxu0 0.0
      %879 = vmatprep.subr.mxu0 0.0
      %880 = vmatpush1.msra.mxu0 0.0
      %881 = vmatprep.subr.mxu0 0.0
      %882 = vmatpush1.msra.mxu0 0.0
      %883 = vmatprep.subr.mxu0 0.0
      %884 = vmatpush1.msra.mxu0 0.0
      %885 = vmatprep.subr.mxu0 0.0
      %886 = vmatpush1.msra.mxu0 0.0
      %887 = vmatprep.subr.mxu0 0.0
      %888 = vmatpush1.msra.mxu0 0.0
      %889 = vmatprep.subr.mxu0 0.0
      %890 = vmatpush1.msra.mxu0 0.0
      %891 = vmatprep.subr.mxu0 0.0
      %892 = vmatpush1.msra.mxu0 0.0
      %893 = vmatprep.subr.mxu0 0.0
      %894 = vmatpush1.msra.mxu0 0.0
      %895 = vmatprep.subr.mxu0 0.0
      %896 = vmatpush1.msra.mxu0 0.0
      %897 = vmatprep.subr.mxu0 0.0
      %898 = vmatpush1.msra.mxu0 0.0
      %899 = vmatprep.subr.mxu0 0.0
      %900 = vmatpush1.msra.mxu0 0.0
      %901 = vmatprep.subr.mxu0 0.0
      %902 = vmatpush1.msra.mxu0 0.0
      %903 = vmatprep.subr.mxu0 0.0
      %904 = vmatpush1.msra.mxu0 0.0
      %905 = vmatprep.subr.mxu0 0.0
      %906 = vmatpush1.msra.mxu0 0.0
      %907 = vmatprep.subr.mxu0 0.0
      %908 = vmatpush1.msra.mxu0 0.0
      %909 = vmatprep.subr.mxu0 0.0
      %910 = vmatpush1.msra.mxu0 0.0
      %911 = vmatprep.subr.mxu0 0.0
      %912 = vmatpush1.msra.mxu0 0.0
      %913 = vmatprep.mubr.f32.mxu0 0.0
      %914 = vmatmul.mubr.f32.gmra.mrb[0].mxu0 %v685
      %v915 = vpop.f32.mrb[0].mxu0
      %v916 = vadd.f32 %v847, %v915
      %v917 = vpop.f32.mrb[0].mxu0
      %918 = vdwg.mxu0
      %vm919 = vcmask 64512
      %v921 = vsel %vm919, %v754, 0
      %v924 = vsel %vm919, %v835, 0
      %926 = vmatprep.subr.mxu0 0.0
      %927 = vmatpush1.xpose.msra.mxu0 %v924
      %928 = vmatprep.subr.mxu0 0.0
      %929 = vmatpush1.xpose.msra.mxu0 0.0
      %930 = vmatprep.subr.mxu0 0.0
      %931 = vmatpush1.xpose.msra.mxu0 0.0
      %932 = vmatprep.subr.mxu0 0.0
      %933 = vmatpush1.xpose.msra.mxu0 0.0
      %934 = vmatprep.subr.mxu0 0.0
      %935 = vmatpush1.xpose.msra.mxu0 0.0
      %936 = vmatprep.subr.mxu0 0.0
      %937 = vmatpush1.xpose.msra.mxu0 0.0
      %938 = vmatprep.subr.mxu0 0.0
      %939 = vmatpush1.xpose.msra.mxu0 0.0
      %940 = vmatprep.subr.mxu0 0.0
      %941 = vmatpush1.xpose.msra.mxu0 0.0
      %942 = vmatprep.subr.mxu0 0.0
      %943 = vmatpush1.xpose.msra.mxu0 0.0
      %944 = vmatprep.subr.mxu0 0.0
      %945 = vmatpush1.xpose.msra.mxu0 0.0
      %946 = vmatprep.subr.mxu0 0.0
      %947 = vmatpush1.xpose.msra.mxu0 0.0
      %948 = vmatprep.subr.mxu0 0.0
      %949 = vmatpush1.xpose.msra.mxu0 0.0
      %950 = vmatprep.subr.mxu0 0.0
      %951 = vmatpush1.xpose.msra.mxu0 0.0
      %952 = vmatprep.subr.mxu0 0.0
      %953 = vmatpush1.xpose.msra.mxu0 0.0
      %954 = vmatprep.subr.mxu0 0.0
      %955 = vmatpush1.xpose.msra.mxu0 0.0
      %956 = vmatprep.subr.mxu0 0.0
      %957 = vmatpush1.xpose.msra.mxu0 0.0
      %958 = vmatprep.subr.mxu0 0.0
      %959 = vmatpush1.xpose.msra.mxu0 0.0
      %960 = vmatprep.subr.mxu0 0.0
      %961 = vmatpush1.xpose.msra.mxu0 0.0
      %962 = vmatprep.subr.mxu0 0.0
      %963 = vmatpush1.xpose.msra.mxu0 0.0
      %964 = vmatprep.subr.mxu0 0.0
      %965 = vmatpush1.xpose.msra.mxu0 0.0
      %966 = vmatprep.subr.mxu0 0.0
      %967 = vmatpush1.xpose.msra.mxu0 0.0
      %968 = vmatprep.subr.mxu0 0.0
      %969 = vmatpush1.xpose.msra.mxu0 0.0
      %970 = vmatprep.subr.mxu0 0.0
      %971 = vmatpush1.xpose.msra.mxu0 0.0
      %972 = vmatprep.subr.mxu0 0.0
      %973 = vmatpush1.xpose.msra.mxu0 0.0
      %974 = vmatprep.subr.mxu0 0.0
      %975 = vmatpush1.xpose.msra.mxu0 0.0
      %976 = vmatprep.subr.mxu0 0.0
      %977 = vmatpush1.xpose.msra.mxu0 0.0
      %978 = vmatprep.subr.mxu0 0.0
      %979 = vmatpush1.xpose.msra.mxu0 0.0
      %980 = vmatprep.subr.mxu0 0.0
      %981 = vmatpush1.xpose.msra.mxu0 0.0
      %982 = vmatprep.subr.mxu0 0.0
      %983 = vmatpush1.xpose.msra.mxu0 0.0
      %984 = vmatprep.subr.mxu0 0.0
      %985 = vmatpush1.xpose.msra.mxu0 0.0
      %986 = vmatprep.subr.mxu0 0.0
      %987 = vmatpush1.xpose.msra.mxu0 0.0
      %988 = vmatprep.subr.mxu0 0.0
      %989 = vmatpush1.xpose.msra.mxu0 0.0
      %990 = vmatprep.mubr.f32.mxu0 0.0
      %991 = vmatmul.mubr.f32.gmra.mrb[0].mxu0 %v921
      %v992 = vpop.f32.mrb[0].mxu0
      %v993 = vadd.f32 0.0, %v992
      %v994 = vpop.f32.mrb[0].mxu0
      %995 = vdwg.mxu0
      %v996 = vsel %vm919, %v993, -inf
      %997 = vmax.xlane.f32.xlu0 %v996
      %v998 = vpop.xlane.xlu0 %997
      %v999 = vsub.f32 %v993, %v998
      %v1000 = vmul.f32 %v999, 1.442695
      %v1001 = vpow.pop %v1000
      %v1002 = vsel %vm919, %v1001, 0.0
      %1003 = vadd.xlane.f32.xlu0 %v1002
      %v1004 = vpop.xlane.xlu0 %1003
      %v1005 = vrcp.pop %v1004
      %v1006 = vmul.f32 %v1001, %v1005
      %1007 = vst.msk [vmem:[%s639] sm:$0xff] %vm919, %v1006
      %v1009 = vsel %vm919, %v1006, 0
      %1011 = vmatprep.subr.mxu0 0.0
      %1012 = vmatpush1.msra.mxu0 %v916
      %1013 = vmatprep.subr.mxu0 0.0
      %1014 = vmatpush1.msra.mxu0 0.0
      %1015 = vmatprep.subr.mxu0 0.0
      %1016 = vmatpush1.msra.mxu0 0.0
      %1017 = vmatprep.subr.mxu0 0.0
      %1018 = vmatpush1.msra.mxu0 0.0
      %1019 = vmatprep.subr.mxu0 0.0
      %1020 = vmatpush1.msra.mxu0 0.0
      %1021 = vmatprep.subr.mxu0 0.0
      %1022 = vmatpush1.msra.mxu0 0.0
      %1023 = vmatprep.subr.mxu0 0.0
      %1024 = vmatpush1.msra.mxu0 0.0
      %1025 = vmatprep.subr.mxu0 0.0
      %1026 = vmatpush1.msra.mxu0 0.0
      %1027 = vmatprep.subr.mxu0 0.0
      %1028 = vmatpush1.msra.mxu0 0.0
      %1029 = vmatprep.subr.mxu0 0.0
      %1030 = vmatpush1.msra.mxu0 0.0
      %1031 = vmatprep.subr.mxu0 0.0
      %1032 = vmatpush1.msra.mxu0 0.0
      %1033 = vmatprep.subr.mxu0 0.0
      %1034 = vmatpush1.msra.mxu0 0.0
      %1035 = vmatprep.subr.mxu0 0.0
      %1036 = vmatpush1.msra.mxu0 0.0
      %1037 = vmatprep.subr.mxu0 0.0
      %1038 = vmatpush1.msra.mxu0 0.0
      %1039 = vmatprep.subr.mxu0 0.0
      %1040 = vmatpush1.msra.mxu0 0.0
      %1041 = vmatprep.subr.mxu0 0.0
      %1042 = vmatpush1.msra.mxu0 0.0
      %1043 = vmatprep.subr.mxu0 0.0
      %1044 = vmatpush1.msra.mxu0 0.0
      %1045 = vmatprep.subr.mxu0 0.0
      %1046 = vmatpush1.msra.mxu0 0.0
      %1047 = vmatprep.subr.mxu0 0.0
      %1048 = vmatpush1.msra.mxu0 0.0
      %1049 = vmatprep.subr.mxu0 0.0
      %1050 = vmatpush1.msra.mxu0 0.0
      %1051 = vmatprep.subr.mxu0 0.0
      %1052 = vmatpush1.msra.mxu0 0.0
      %1053 = vmatprep.subr.mxu0 0.0
      %1054 = vmatpush1.msra.mxu0 0.0
      %1055 = vmatprep.subr.mxu0 0.0
      %1056 = vmatpush1.msra.mxu0 0.0
      %1057 = vmatprep.subr.mxu0 0.0
      %1058 = vmatpush1.msra.mxu0 0.0
      %1059 = vmatprep.subr.mxu0 0.0
      %1060 = vmatpush1.msra.mxu0 0.0
      %1061 = vmatprep.subr.mxu0 0.0
      %1062 = vmatpush1.msra.mxu0 0.0
      %1063 = vmatprep.subr.mxu0 0.0
      %1064 = vmatpush1.msra.mxu0 0.0
      %1065 = vmatprep.subr.mxu0 0.0
      %1066 = vmatpush1.msra.mxu0 0.0
      %1067 = vmatprep.subr.mxu0 0.0
      %1068 = vmatpush1.msra.mxu0 0.0
      %1069 = vmatprep.subr.mxu0 0.0
      %1070 = vmatpush1.msra.mxu0 0.0
      %1071 = vmatprep.subr.mxu0 0.0
      %1072 = vmatpush1.msra.mxu0 0.0
      %1073 = vmatprep.subr.mxu0 0.0
      %1074 = vmatpush1.msra.mxu0 0.0
      %1075 = vmatprep.mubr.f32.mxu0 0.0
      %1076 = vmatmul.mubr.f32.gmra.mrb[0].mxu0 %v1009
      %v1077 = vpop.f32.mrb[0].mxu0
      %v1078 = vadd.f32 0.0, %v1077
      %v1079 = vpop.f32.mrb[0].mxu0
      %1080 = vdwg.mxu0
      %v1081 = vld [vmem:[%s9] sm:$0xff]
      %s1082 = scalar_lea.vmem %s3, 32
      %v1083 = vld [vmem:[%s1082] sm:$0xff]
      %v1084 = vld [vmem:[%s1082 + $0x8] sm:$0xff]
      %v1085 = vld [vmem:[%s1082 + $0x10] sm:$0xff]
      %v1086 = vld [vmem:[%s1082 + $0x18] sm:$0xff]
      %s1087 = scalar_lea.vmem %s4, 1
      %v1088 = vld [vmem:[%s1087] sm:$0x1]
      %v1090 = vlaneseq
      %v1091 = vshrl.u32 %v1090, 7
      %v1092 = vsub.s32 0, %v1091
      %v1093 = vrot.slane %v1088, %v1092
      %1095 = vmatprep.subr.mxu0 0.0
      %1096 = vmatpush1.msra.mxu0 %v1083
      %1097 = vmatprep.subr.mxu0 0.0
      %1098 = vmatpush1.msra.mxu0 %v1084
      %1099 = vmatprep.subr.mxu0 0.0
      %1100 = vmatpush1.msra.mxu0 %v1085
      %1101 = vmatprep.subr.mxu0 0.0
      %1102 = vmatpush1.msra.mxu0 %v1086
      %1103 = vmatprep.subr.mxu0 0.0
      %1104 = vmatpush1.msra.mxu0 0.0
      %1105 = vmatprep.subr.mxu0 0.0
      %1106 = vmatpush1.msra.mxu0 0.0
      %1107 = vmatprep.subr.mxu0 0.0
      %1108 = vmatpush1.msra.mxu0 0.0
      %1109 = vmatprep.subr.mxu0 0.0
      %1110 = vmatpush1.msra.mxu0 0.0
      %1111 = vmatprep.subr.mxu0 0.0
      %1112 = vmatpush1.msra.mxu0 0.0
      %1113 = vmatprep.subr.mxu0 0.0
      %1114 = vmatpush1.msra.mxu0 0.0
      %1115 = vmatprep.subr.mxu0 0.0
      %1116 = vmatpush1.msra.mxu0 0.0
      %1117 = vmatprep.subr.mxu0 0.0
      %1118 = vmatpush1.msra.mxu0 0.0
      %1119 = vmatprep.subr.mxu0 0.0
      %1120 = vmatpush1.msra.mxu0 0.0
      %1121 = vmatprep.subr.mxu0 0.0
      %1122 = vmatpush1.msra.mxu0 0.0
      %1123 = vmatprep.subr.mxu0 0.0
      %1124 = vmatpush1.msra.mxu0 0.0
      %1125 = vmatprep.subr.mxu0 0.0
      %1126 = vmatpush1.msra.mxu0 0.0
      %1127 = vmatprep.subr.mxu0 0.0
      %1128 = vmatpush1.msra.mxu0 0.0
      %1129 = vmatprep.subr.mxu0 0.0
      %1130 = vmatpush1.msra.mxu0 0.0
      %1131 = vmatprep.subr.mxu0 0.0
      %1132 = vmatpush1.msra.mxu0 0.0
      %1133 = vmatprep.subr.mxu0 0.0
      %1134 = vmatpush1.msra.mxu0 0.0
      %1135 = vmatprep.subr.mxu0 0.0
      %1136 = vmatpush1.msra.mxu0 0.0
      %1137 = vmatprep.subr.mxu0 0.0
      %1138 = vmatpush1.msra.mxu0 0.0
      %1139 = vmatprep.subr.mxu0 0.0
      %1140 = vmatpush1.msra.mxu0 0.0
      %1141 = vmatprep.subr.mxu0 0.0
      %1142 = vmatpush1.msra.mxu0 0.0
      %1143 = vmatprep.subr.mxu0 0.0
      %1144 = vmatpush1.msra.mxu0 0.0
      %1145 = vmatprep.subr.mxu0 0.0
      %1146 = vmatpush1.msra.mxu0 0.0
      %1147 = vmatprep.subr.mxu0 0.0
      %1148 = vmatpush1.msra.mxu0 0.0
      %1149 = vmatprep.subr.mxu0 0.0
      %1150 = vmatpush1.msra.mxu0 0.0
      %1151 = vmatprep.subr.mxu0 0.0
      %1152 = vmatpush1.msra.mxu0 0.0
      %1153 = vmatprep.subr.mxu0 0.0
      %1154 = vmatpush1.msra.mxu0 0.0
      %1155 = vmatprep.subr.mxu0 0.0
      %1156 = vmatpush1.msra.mxu0 0.0
      %1157 = vmatprep.subr.mxu0 0.0
      %1158 = vmatpush1.msra.mxu0 0.0
      %1159 = vmatprep.mubr.f32.mxu0 0.0
      %1160 = vmatmul.mubr.f32.gmra.mrb[0].mxu0 %v685
      %v1161 = vpop.f32.mrb[0].mxu0
      %v1162 = vadd.f32 %v1093, %v1161
      %v1163 = vpop.f32.mrb[0].mxu0
      %1164 = vdwg.mxu0
      %s1165 = scalar_lea.vmem %s5, 32
      %v1166 = vld [vmem:[%s1165] sm:$0xff]
      %v1167 = vld [vmem:[%s1165 + $0x8] sm:$0xff]
      %v1168 = vld [vmem:[%s1165 + $0x10] sm:$0xff]
      %v1169 = vld [vmem:[%s1165 + $0x18] sm:$0xff]
      %s1170 = scalar_lea.vmem %s6, 1
      %v1171 = vld [vmem:[%s1170] sm:$0x1]
      %v1173 = vlaneseq
      %v1174 = vshrl.u32 %v1173, 7
      %v1175 = vsub.s32 0, %v1174
      %v1176 = vrot.slane %v1171, %v1175
      %1178 = vmatprep.subr.mxu0 0.0
      %1179 = vmatpush1.msra.mxu0 %v1166
      %1180 = vmatprep.subr.mxu0 0.0
      %1181 = vmatpush1.msra.mxu0 %v1167
      %1182 = vmatprep.subr.mxu0 0.0
      %1183 = vmatpush1.msra.mxu0 %v1168
      %1184 = vmatprep.subr.mxu0 0.0
      %1185 = vmatpush1.msra.mxu0 %v1169
      %1186 = vmatprep.subr.mxu0 0.0
      %1187 = vmatpush1.msra.mxu0 0.0
      %1188 = vmatprep.subr.mxu0 0.0
      %1189 = vmatpush1.msra.mxu0 0.0
      %1190 = vmatprep.subr.mxu0 0.0
      %1191 = vmatpush1.msra.mxu0 0.0
      %1192 = vmatprep.subr.mxu0 0.0
      %1193 = vmatpush1.msra.mxu0 0.0
      %1194 = vmatprep.subr.mxu0 0.0
      %1195 = vmatpush1.msra.mxu0 0.0
      %1196 = vmatprep.subr.mxu0 0.0
      %1197 = vmatpush1.msra.mxu0 0.0
      %1198 = vmatprep.subr.mxu0 0.0
      %1199 = vmatpush1.msra.mxu0 0.0
      %1200 = vmatprep.subr.mxu0 0.0
      %1201 = vmatpush1.msra.mxu0 0.0
      %1202 = vmatprep.subr.mxu0 0.0
      %1203 = vmatpush1.msra.mxu0 0.0
      %1204 = vmatprep.subr.mxu0 0.0
      %1205 = vmatpush1.msra.mxu0 0.0
      %1206 = vmatprep.subr.mxu0 0.0
      %1207 = vmatpush1.msra.mxu0 0.0
      %1208 = vmatprep.subr.mxu0 0.0
      %1209 = vmatpush1.msra.mxu0 0.0
      %1210 = vmatprep.subr.mxu0 0.0
      %1211 = vmatpush1.msra.mxu0 0.0
      %1212 = vmatprep.subr.mxu0 0.0
      %1213 = vmatpush1.msra.mxu0 0.0
      %1214 = vmatprep.subr.mxu0 0.0
      %1215 = vmatpush1.msra.mxu0 0.0
      %1216 = vmatprep.subr.mxu0 0.0
      %1217 = vmatpush1.msra.mxu0 0.0
      %1218 = vmatprep.subr.mxu0 0.0
      %1219 = vmatpush1.msra.mxu0 0.0
      %1220 = vmatprep.subr.mxu0 0.0
      %1221 = vmatpush1.msra.mxu0 0.0
      %1222 = vmatprep.subr.mxu0 0.0
      %1223 = vmatpush1.msra.mxu0 0.0
      %1224 = vmatprep.subr.mxu0 0.0
      %1225 = vmatpush1.msra.mxu0 0.0
      %1226 = vmatprep.subr.mxu0 0.0
      %1227 = vmatpush1.msra.mxu0 0.0
      %1228 = vmatprep.subr.mxu0 0.0
      %1229 = vmatpush1.msra.mxu0 0.0
      %1230 = vmatprep.subr.mxu0 0.0
      %1231 = vmatpush1.msra.mxu0 0.0
      %1232 = vmatprep.subr.mxu0 0.0
      %1233 = vmatpush1.msra.mxu0 0.0
      %1234 = vmatprep.subr.mxu0 0.0
      %1235 = vmatpush1.msra.mxu0 0.0
      %1236 = vmatprep.subr.mxu0 0.0
      %1237 = vmatpush1.msra.mxu0 0.0
      %1238 = vmatprep.subr.mxu0 0.0
      %1239 = vmatpush1.msra.mxu0 0.0
      %1240 = vmatprep.subr.mxu0 0.0
      %1241 = vmatpush1.msra.mxu0 0.0
      %1242 = vmatprep.mubr.f32.mxu0 0.0
      %1243 = vmatmul.mubr.f32.gmra.mrb[0].mxu0 %v685
      %v1244 = vpop.f32.mrb[0].mxu0
      %v1245 = vadd.f32 %v1176, %v1244
      %v1246 = vpop.f32.mrb[0].mxu0
      %1247 = vdwg.mxu0
      %s1248 = scalar_lea.vmem %s7, 32
      %v1249 = vld [vmem:[%s1248] sm:$0xff]
      %v1250 = vld [vmem:[%s1248 + $0x8] sm:$0xff]
      %v1251 = vld [vmem:[%s1248 + $0x10] sm:$0xff]
      %v1252 = vld [vmem:[%s1248 + $0x18] sm:$0xff]
      %s1253 = scalar_lea.vmem %s8, 1
      %v1254 = vld [vmem:[%s1253] sm:$0x1]
      %v1256 = vlaneseq
      %v1257 = vshrl.u32 %v1256, 7
      %v1258 = vsub.s32 0, %v1257
      %v1259 = vrot.slane %v1254, %v1258
      %1261 = vmatprep.subr.mxu0 0.0
      %1262 = vmatpush1.msra.mxu0 %v1249
      %1263 = vmatprep.subr.mxu0 0.0
      %1264 = vmatpush1.msra.mxu0 %v1250
      %1265 = vmatprep.subr.mxu0 0.0
      %1266 = vmatpush1.msra.mxu0 %v1251
      %1267 = vmatprep.subr.mxu0 0.0
      %1268 = vmatpush1.msra.mxu0 %v1252
      %1269 = vmatprep.subr.mxu0 0.0
      %1270 = vmatpush1.msra.mxu0 0.0
      %1271 = vmatprep.subr.mxu0 0.0
      %1272 = vmatpush1.msra.mxu0 0.0
      %1273 = vmatprep.subr.mxu0 0.0
      %1274 = vmatpush1.msra.mxu0 0.0
      %1275 = vmatprep.subr.mxu0 0.0
      %1276 = vmatpush1.msra.mxu0 0.0
      %1277 = vmatprep.subr.mxu0 0.0
      %1278 = vmatpush1.msra.mxu0 0.0
      %1279 = vmatprep.subr.mxu0 0.0
      %1280 = vmatpush1.msra.mxu0 0.0
      %1281 = vmatprep.subr.mxu0 0.0
      %1282 = vmatpush1.msra.mxu0 0.0
      %1283 = vmatprep.subr.mxu0 0.0
      %1284 = vmatpush1.msra.mxu0 0.0
      %1285 = vmatprep.subr.mxu0 0.0
      %1286 = vmatpush1.msra.mxu0 0.0
      %1287 = vmatprep.subr.mxu0 0.0
      %1288 = vmatpush1.msra.mxu0 0.0
      %1289 = vmatprep.subr.mxu0 0.0
      %1290 = vmatpush1.msra.mxu0 0.0
      %1291 = vmatprep.subr.mxu0 0.0
      %1292 = vmatpush1.msra.mxu0 0.0
      %1293 = vmatprep.subr.mxu0 0.0
      %1294 = vmatpush1.msra.mxu0 0.0
      %1295 = vmatprep.subr.mxu0 0.0
      %1296 = vmatpush1.msra.mxu0 0.0
      %1297 = vmatprep.subr.mxu0 0.0
      %1298 = vmatpush1.msra.mxu0 0.0
      %1299 = vmatprep.subr.mxu0 0.0
      %1300 = vmatpush1.msra.mxu0 0.0
      %1301 = vmatprep.subr.mxu0 0.0
      %1302 = vmatpush1.msra.mxu0 0.0
      %1303 = vmatprep.subr.mxu0 0.0
      %1304 = vmatpush1.msra.mxu0 0.0
      %1305 = vmatprep.subr.mxu0 0.0
      %1306 = vmatpush1.msra.mxu0 0.0
      %1307 = vmatprep.subr.mxu0 0.0
      %1308 = vmatpush1.msra.mxu0 0.0
      %1309 = vmatprep.subr.mxu0 0.0
      %1310 = vmatpush1.msra.mxu0 0.0
      %1311 = vmatprep.subr.mxu0 0.0
      %1312 = vmatpush1.msra.mxu0 0.0
      %1313 = vmatprep.subr.mxu0 0.0
      %1314 = vmatpush1.msra.mxu0 0.0
      %1315 = vmatprep.subr.mxu0 0.0
      %1316 = vmatpush1.msra.mxu0 0.0
      %1317 = vmatprep.subr.mxu0 0.0
      %1318 = vmatpush1.msra.mxu0 0.0
      %1319 = vmatprep.subr.mxu0 0.0
      %1320 = vmatpush1.msra.mxu0 0.0
      %1321 = vmatprep.subr.mxu0 0.0
      %1322 = vmatpush1.msra.mxu0 0.0
      %1323 = vmatprep.subr.mxu0 0.0
      %1324 = vmatpush1.msra.mxu0 0.0
      %1325 = vmatprep.mubr.f32.mxu0 0.0
      %1326 = vmatmul.mubr.f32.gmra.mrb[0].mxu0 %v685
      %v1327 = vpop.f32.mrb[0].mxu0
      %v1328 = vadd.f32 %v1259, %v1327
      %v1329 = vpop.f32.mrb[0].mxu0
      %1330 = vdwg.mxu0
      %v1332 = vsel %vm919, %v1162, 0
      %v1335 = vsel %vm919, %v1245, 0
      %1337 = vmatprep.subr.mxu0 0.0
      %1338 = vmatpush1.xpose.msra.mxu0 %v1335
      %1339 = vmatprep.subr.mxu0 0.0
      %1340 = vmatpush1.xpose.msra.mxu0 0.0
      %1341 = vmatprep.subr.mxu0 0.0
      %1342 = vmatpush1.xpose.msra.mxu0 0.0
      %1343 = vmatprep.subr.mxu0 0.0
      %1344 = vmatpush1.xpose.msra.mxu0 0.0
      %1345 = vmatprep.subr.mxu0 0.0
      %1346 = vmatpush1.xpose.msra.mxu0 0.0
      %1347 = vmatprep.subr.mxu0 0.0
      %1348 = vmatpush1.xpose.msra.mxu0 0.0
      %1349 = vmatprep.subr.mxu0 0.0
      %1350 = vmatpush1.xpose.msra.mxu0 0.0
      %1351 = vmatprep.subr.mxu0 0.0
      %1352 = vmatpush1.xpose.msra.mxu0 0.0
      %1353 = vmatprep.subr.mxu0 0.0
      %1354 = vmatpush1.xpose.msra.mxu0 0.0
      %1355 = vmatprep.subr.mxu0 0.0
      %1356 = vmatpush1.xpose.msra.mxu0 0.0
      %1357 = vmatprep.subr.mxu0 0.0
      %1358 = vmatpush1.xpose.msra.mxu0 0.0
      %1359 = vmatprep.subr.mxu0 0.0
      %1360 = vmatpush1.xpose.msra.mxu0 0.0
      %1361 = vmatprep.subr.mxu0 0.0
      %1362 = vmatpush1.xpose.msra.mxu0 0.0
      %1363 = vmatprep.subr.mxu0 0.0
      %1364 = vmatpush1.xpose.msra.mxu0 0.0
      %1365 = vmatprep.subr.mxu0 0.0
      %1366 = vmatpush1.xpose.msra.mxu0 0.0
      %1367 = vmatprep.subr.mxu0 0.0
      %1368 = vmatpush1.xpose.msra.mxu0 0.0
      %1369 = vmatprep.subr.mxu0 0.0
      %1370 = vmatpush1.xpose.msra.mxu0 0.0
      %1371 = vmatprep.subr.mxu0 0.0
      %1372 = vmatpush1.xpose.msra.mxu0 0.0
      %1373 = vmatprep.subr.mxu0 0.0
      %1374 = vmatpush1.xpose.msra.mxu0 0.0
      %1375 = vmatprep.subr.mxu0 0.0
      %1376 = vmatpush1.xpose.msra.mxu0 0.0
      %1377 = vmatprep.subr.mxu0 0.0
      %1378 = vmatpush1.xpose.msra.mxu0 0.0
      %1379 = vmatprep.subr.mxu0 0.0
      %1380 = vmatpush1.xpose.msra.mxu0 0.0
      %1381 = vmatprep.subr.mxu0 0.0
      %1382 = vmatpush1.xpose.msra.mxu0 0.0
      %1383 = vmatprep.subr.mxu0 0.0
      %1384 = vmatpush1.xpose.msra.mxu0 0.0
      %1385 = vmatprep.subr.mxu0 0.0
      %1386 = vmatpush1.xpose.msra.mxu0 0.0
      %1387 = vmatprep.subr.mxu0 0.0
      %1388 = vmatpush1.xpose.msra.mxu0 0.0
      %1389 = vmatprep.subr.mxu0 0.0
      %1390 = vmatpush1.xpose.msra.mxu0 0.0
      %1391 = vmatprep.subr.mxu0 0.0
      %1392 = vmatpush1.xpose.msra.mxu0 0.0
      %1393 = vmatprep.subr.mxu0 0.0
      %1394 = vmatpush1.xpose.msra.mxu0 0.0
      %1395 = vmatprep.subr.mxu0 0.0
      %1396 = vmatpush1.xpose.msra.mxu0 0.0
      %1397 = vmatprep.subr.mxu0 0.0
      %1398 = vmatpush1.xpose.msra.mxu0 0.0
      %1399 = vmatprep.subr.mxu0 0.0
      %1400 = vmatpush1.xpose.msra.mxu0 0.0
      %1401 = vmatprep.mubr.f32.mxu0 0.0
      %1402 = vmatmul.mubr.f32.gmra.mrb[0].mxu0 %v1332
      %v1403 = vpop.f32.mrb[0].mxu0
      %v1404 = vadd.f32 0.0, %v1403
      %v1405 = vpop.f32.mrb[0].mxu0
      %1406 = vdwg.mxu0
      %v1407 = vsel %vm919, %v1404, -inf
      %1408 = vmax.xlane.f32.xlu0 %v1407
      %v1409 = vpop.xlane.xlu0 %1408
      %v1410 = vsub.f32 %v1404, %v1409
      %v1411 = vmul.f32 %v1410, 1.442695
      %v1412 = vpow.pop %v1411
      %v1413 = vsel %vm919, %v1412, 0.0
      %1414 = vadd.xlane.f32.xlu0 %v1413
      %v1415 = vpop.xlane.xlu0 %1414
      %v1416 = vrcp.pop %v1415
      %v1417 = vmul.f32 %v1412, %v1416
      %s1418 = scalar_lea.vmem %s639, 8
      %1419 = vst.msk [vmem:[%s1418] sm:$0xff] %vm919, %v1417
      %v1421 = vsel %vm919, %v1417, 0
      %1423 = vmatprep.subr.mxu0 0.0
      %1424 = vmatpush1.msra.mxu0 %v1328
      %1425 = vmatprep.subr.mxu0 0.0
      %1426 = vmatpush1.msra.mxu0 0.0
      %1427 = vmatprep.subr.mxu0 0.0
      %1428 = vmatpush1.msra.mxu0 0.0
      %1429 = vmatprep.subr.mxu0 0.0
      %1430 = vmatpush1.msra.mxu0 0.0
      %1431 = vmatprep.subr.mxu0 0.0
      %1432 = vmatpush1.msra.mxu0 0.0
      %1433 = vmatprep.subr.mxu0 0.0
      %1434 = vmatpush1.msra.mxu0 0.0
      %1435 = vmatprep.subr.mxu0 0.0
      %1436 = vmatpush1.msra.mxu0 0.0
      %1437 = vmatprep.subr.mxu0 0.0
      %1438 = vmatpush1.msra.mxu0 0.0
      %1439 = vmatprep.subr.mxu0 0.0
      %1440 = vmatpush1.msra.mxu0 0.0
      %1441 = vmatprep.subr.mxu0 0.0
      %1442 = vmatpush1.msra.mxu0 0.0
      %1443 = vmatprep.subr.mxu0 0.0
      %1444 = vmatpush1.msra.mxu0 0.0
      %1445 = vmatprep.subr.mxu0 0.0
      %1446 = vmatpush1.msra.mxu0 0.0
      %1447 = vmatprep.subr.mxu0 0.0
      %1448 = vmatpush1.msra.mxu0 0.0
      %1449 = vmatprep.subr.mxu0 0.0
      %1450 = vmatpush1.msra.mxu0 0.0
      %1451 = vmatprep.subr.mxu0 0.0
      %1452 = vmatpush1.msra.mxu0 0.0
      %1453 = vmatprep.subr.mxu0 0.0
      %1454 = vmatpush1.msra.mxu0 0.0
      %1455 = vmatprep.subr.mxu0 0.0
      %1456 = vmatpush1.msra.mxu0 0.0
      %1457 = vmatprep.subr.mxu0 0.0
      %1458 = vmatpush1.msra.mxu0 0.0
      %1459 = vmatprep.subr.mxu0 0.0
      %1460 = vmatpush1.msra.mxu0 0.0
      %1461 = vmatprep.subr.mxu0 0.0
      %1462 = vmatpush1.msra.mxu0 0.0
      %1463 = vmatprep.subr.mxu0 0.0
      %1464 = vmatpush1.msra.mxu0 0.0
      %1465 = vmatprep.subr.mxu0 0.0
      %1466 = vmatpush1.msra.mxu0 0.0
      %1467 = vmatprep.subr.mxu0 0.0
      %1468 = vmatpush1.msra.mxu0 0.0
      %1469 = vmatprep.subr.mxu0 0.0
      %1470 = vmatpush1.msra.mxu0 0.0
      %1471 = vmatprep.subr.mxu0 0.0
      %1472 = vmatpush1.msra.mxu0 0.0
      %1473 = vmatprep.subr.mxu0 0.0
      %1474 = vmatpush1.msra.mxu0 0.0
      %1475 = vmatprep.subr.mxu0 0.0
      %1476 = vmatpush1.msra.mxu0 0.0
      %1477 = vmatprep.subr.mxu0 0.0
      %1478 = vmatpush1.msra.mxu0 0.0
      %1479 = vmatprep.subr.mxu0 0.0
      %1480 = vmatpush1.msra.mxu0 0.0
      %1481 = vmatprep.subr.mxu0 0.0
      %1482 = vmatpush1.msra.mxu0 0.0
      %1483 = vmatprep.subr.mxu0 0.0
      %1484 = vmatpush1.msra.mxu0 0.0
      %1485 = vmatprep.subr.mxu0 0.0
      %1486 = vmatpush1.msra.mxu0 0.0
      %1487 = vmatprep.mubr.f32.mxu0 0.0
      %1488 = vmatmul.mubr.f32.gmra.mrb[0].mxu0 %v1421
      %v1489 = vpop.f32.mrb[0].mxu0
      %v1490 = vadd.f32 0.0, %v1489
      %v1491 = vpop.f32.mrb[0].mxu0
      %1492 = vdwg.mxu0
      %s1493 = scalar_lea.vmem %s9, 8
      %v1494 = vld [vmem:[%s1493] sm:$0xff]
      %v1496 = vsel %vm919, %v1490, 0
      %1498 = vmatprep.subr.mxu0 0.0
      %1499 = vmatpush1.msra.mxu0 %v1494
      %1500 = vmatprep.subr.mxu0 0.0
      %1501 = vmatpush1.msra.mxu0 0.0
      %1502 = vmatprep.subr.mxu0 0.0
      %1503 = vmatpush1.msra.mxu0 0.0
      %1504 = vmatprep.subr.mxu0 0.0
      %1505 = vmatpush1.msra.mxu0 0.0
      %1506 = vmatprep.subr.mxu0 0.0
      %1507 = vmatpush1.msra.mxu0 0.0
      %1508 = vmatprep.subr.mxu0 0.0
      %1509 = vmatpush1.msra.mxu0 0.0
      %1510 = vmatprep.subr.mxu0 0.0
      %1511 = vmatpush1.msra.mxu0 0.0
      %1512 = vmatprep.subr.mxu0 0.0
      %1513 = vmatpush1.msra.mxu0 0.0
      %1514 = vmatprep.subr.mxu0 0.0
      %1515 = vmatpush1.msra.mxu0 0.0
      %1516 = vmatprep.subr.mxu0 0.0
      %1517 = vmatpush1.msra.mxu0 0.0
      %1518 = vmatprep.subr.mxu0 0.0
      %1519 = vmatpush1.msra.mxu0 0.0
      %1520 = vmatprep.subr.mxu0 0.0
      %1521 = vmatpush1.msra.mxu0 0.0
      %1522 = vmatprep.subr.mxu0 0.0
      %1523 = vmatpush1.msra.mxu0 0.0
      %1524 = vmatprep.subr.mxu0 0.0
      %1525 = vmatpush1.msra.mxu0 0.0
      %1526 = vmatprep.subr.mxu0 0.0
      %1527 = vmatpush1.msra.mxu0 0.0
      %1528 = vmatprep.subr.mxu0 0.0
      %1529 = vmatpush1.msra.mxu0 0.0
      %1530 = vmatprep.subr.mxu0 0.0
      %1531 = vmatpush1.msra.mxu0 0.0
      %1532 = vmatprep.subr.mxu0 0.0
      %1533 = vmatpush1.msra.mxu0 0.0
      %1534 = vmatprep.subr.mxu0 0.0
      %1535 = vmatpush1.msra.mxu0 0.0
      %1536 = vmatprep.subr.mxu0 0.0
      %1537 = vmatpush1.msra.mxu0 0.0
      %1538 = vmatprep.subr.mxu0 0.0
      %1539 = vmatpush1.msra.mxu0 0.0
      %1540 = vmatprep.subr.mxu0 0.0
      %1541 = vmatpush1.msra.mxu0 0.0
      %1542 = vmatprep.subr.mxu0 0.0
      %1543 = vmatpush1.msra.mxu0 0.0
      %1544 = vmatprep.subr.mxu0 0.0
      %1545 = vmatpush1.msra.mxu0 0.0
      %1546 = vmatprep.subr.mxu0 0.0
      %1547 = vmatpush1.msra.mxu0 0.0
      %1548 = vmatprep.subr.mxu0 0.0
      %1549 = vmatpush1.msra.mxu0 0.0
      %1550 = vmatprep.subr.mxu0 0.0
      %1551 = vmatpush1.msra.mxu0 0.0
      %1552 = vmatprep.subr.mxu0 0.0
      %1553 = vmatpush1.msra.mxu0 0.0
      %1554 = vmatprep.subr.mxu0 0.0
      %1555 = vmatpush1.msra.mxu0 0.0
      %1556 = vmatprep.subr.mxu0 0.0
      %1557 = vmatpush1.msra.mxu0 0.0
      %1558 = vmatprep.subr.mxu0 0.0
      %1559 = vmatpush1.msra.mxu0 0.0
      %1560 = vmatprep.subr.mxu0 0.0
      %1561 = vmatpush1.msra.mxu0 0.0
      %1562 = vmatprep.mubr.f32.mxu0 0.0
      %1563 = vmatmul.mubr.f32.gmra.mrb[0].mxu0 %v1496
      %v1564 = vpop.f32.mrb[0].mxu0
      %v1565 = vadd.f32 0.0, %v1564
      %v1566 = vpop.f32.mrb[0].mxu0
      %1567 = vdwg.mxu0
      %v1569 = vsel %vm919, %v1078, 0
      %1571 = vmatprep.subr.mxu0 0.0
      %1572 = vmatpush1.msra.mxu0 %v1081
      %1573 = vmatprep.subr.mxu0 0.0
      %1574 = vmatpush1.msra.mxu0 0.0
      %1575 = vmatprep.subr.mxu0 0.0
      %1576 = vmatpush1.msra.mxu0 0.0
      %1577 = vmatprep.subr.mxu0 0.0
      %1578 = vmatpush1.msra.mxu0 0.0
      %1579 = vmatprep.subr.mxu0 0.0
      %1580 = vmatpush1.msra.mxu0 0.0
      %1581 = vmatprep.subr.mxu0 0.0
      %1582 = vmatpush1.msra.mxu0 0.0
      %1583 = vmatprep.subr.mxu0 0.0
      %1584 = vmatpush1.msra.mxu0 0.0
      %1585 = vmatprep.subr.mxu0 0.0
      %1586 = vmatpush1.msra.mxu0 0.0
      %1587 = vmatprep.subr.mxu0 0.0
      %1588 = vmatpush1.msra.mxu0 0.0
      %1589 = vmatprep.subr.mxu0 0.0
      %1590 = vmatpush1.msra.mxu0 0.0
      %1591 = vmatprep.subr.mxu0 0.0
      %1592 = vmatpush1.msra.mxu0 0.0
      %1593 = vmatprep.subr.mxu0 0.0
      %1594 = vmatpush1.msra.mxu0 0.0
      %1595 = vmatprep.subr.mxu0 0.0
      %1596 = vmatpush1.msra.mxu0 0.0
      %1597 = vmatprep.subr.mxu0 0.0
      %1598 = vmatpush1.msra.mxu0 0.0
      %1599 = vmatprep.subr.mxu0 0.0
      %1600 = vmatpush1.msra.mxu0 0.0
      %1601 = vmatprep.subr.mxu0 0.0
      %1602 = vmatpush1.msra.mxu0 0.0
      %1603 = vmatprep.subr.mxu0 0.0
      %1604 = vmatpush1.msra.mxu0 0.0
      %1605 = vmatprep.subr.mxu0 0.0
      %1606 = vmatpush1.msra.mxu0 0.0
      %1607 = vmatprep.subr.mxu0 0.0
      %1608 = vmatpush1.msra.mxu0 0.0
      %1609 = vmatprep.subr.mxu0 0.0
      %1610 = vmatpush1.msra.mxu0 0.0
      %1611 = vmatprep.subr.mxu0 0.0
      %1612 = vmatpush1.msra.mxu0 0.0
      %1613 = vmatprep.subr.mxu0 0.0
      %1614 = vmatpush1.msra.mxu0 0.0
      %1615 = vmatprep.subr.mxu0 0.0
      %1616 = vmatpush1.msra.mxu0 0.0
      %1617 = vmatprep.subr.mxu0 0.0
      %1618 = vmatpush1.msra.mxu0 0.0
      %1619 = vmatprep.subr.mxu0 0.0
      %1620 = vmatpush1.msra.mxu0 0.0
      %1621 = vmatprep.subr.mxu0 0.0
      %1622 = vmatpush1.msra.mxu0 0.0
      %1623 = vmatprep.subr.mxu0 0.0
      %1624 = vmatpush1.msra.mxu0 0.0
      %1625 = vmatprep.subr.mxu0 0.0
      %1626 = vmatpush1.msra.mxu0 0.0
      %1627 = vmatprep.subr.mxu0 0.0
      %1628 = vmatpush1.msra.mxu0 0.0
      %1629 = vmatprep.subr.mxu0 0.0
      %1630 = vmatpush1.msra.mxu0 0.0
      %1631 = vmatprep.subr.mxu0 0.0
      %1632 = vmatpush1.msra.mxu0 0.0
      %1633 = vmatprep.subr.mxu0 0.0
      %1634 = vmatpush1.msra.mxu0 0.0
      %1635 = vmatprep.mubr.f32.mxu0 0.0
      %1636 = vmatmul.mubr.f32.gmra.mrb[0].mxu0 %v1569
      %v1637 = vpop.f32.mrb[0].mxu0
      %v1638 = vadd.f32 %v1565, %v1637
      %v1639 = vpop.f32.mrb[0].mxu0
      %1640 = vdwg.mxu0
      %s1641 = scalar_lea.vmem %s3, 64
      %v1642 = vld [vmem:[%s1641] sm:$0xff]
      %v1643 = vld [vmem:[%s1641 + $0x8] sm:$0xff]
      %v1644 = vld [vmem:[%s1641 + $0x10] sm:$0xff]
      %v1645 = vld [vmem:[%s1641 + $0x18] sm:$0xff]
      %s1646 = scalar_lea.vmem %s4, 2
      %v1647 = vld [vmem:[%s1646] sm:$0x1]
      %v1649 = vlaneseq
      %v1650 = vshrl.u32 %v1649, 7
      %v1651 = vsub.s32 0, %v1650
      %v1652 = vrot.slane %v1647, %v1651
      %1654 = vmatprep.subr.mxu0 0.0
      %1655 = vmatpush1.msra.mxu0 %v1642
      %1656 = vmatprep.subr.mxu0 0.0
      %1657 = vmatpush1.msra.mxu0 %v1643
      %1658 = vmatprep.subr.mxu0 0.0
      %1659 = vmatpush1.msra.mxu0 %v1644
      %1660 = vmatprep.subr.mxu0 0.0
      %1661 = vmatpush1.msra.mxu0 %v1645
      %1662 = vmatprep.subr.mxu0 0.0
      %1663 = vmatpush1.msra.mxu0 0.0
      %1664 = vmatprep.subr.mxu0 0.0
      %1665 = vmatpush1.msra.mxu0 0.0
      %1666 = vmatprep.subr.mxu0 0.0
      %1667 = vmatpush1.msra.mxu0 0.0
      %1668 = vmatprep.subr.mxu0 0.0
      %1669 = vmatpush1.msra.mxu0 0.0
      %1670 = vmatprep.subr.mxu0 0.0
      %1671 = vmatpush1.msra.mxu0 0.0
      %1672 = vmatprep.subr.mxu0 0.0
      %1673 = vmatpush1.msra.mxu0 0.0
      %1674 = vmatprep.subr.mxu0 0.0
      %1675 = vmatpush1.msra.mxu0 0.0
      %1676 = vmatprep.subr.mxu0 0.0
      %1677 = vmatpush1.msra.mxu0 0.0
      %1678 = vmatprep.subr.mxu0 0.0
      %1679 = vmatpush1.msra.mxu0 0.0
      %1680 = vmatprep.subr.mxu0 0.0
      %1681 = vmatpush1.msra.mxu0 0.0
      %1682 = vmatprep.subr.mxu0 0.0
      %1683 = vmatpush1.msra.mxu0 0.0
      %1684 = vmatprep.subr.mxu0 0.0
      %1685 = vmatpush1.msra.mxu0 0.0
      %1686 = vmatprep.subr.mxu0 0.0
      %1687 = vmatpush1.msra.mxu0 0.0
      %1688 = vmatprep.subr.mxu0 0.0
      %1689 = vmatpush1.msra.mxu0 0.0
      %1690 = vmatprep.subr.mxu0 0.0
      %1691 = vmatpush1.msra.mxu0 0.0
      %1692 = vmatprep.subr.mxu0 0.0
      %1693 = vmatpush1.msra.mxu0 0.0
      %1694 = vmatprep.subr.mxu0 0.0
      %1695 = vmatpush1.msra.mxu0 0.0
      %1696 = vmatprep.subr.mxu0 0.0
      %1697 = vmatpush1.msra.mxu0 0.0
      %1698 = vmatprep.subr.mxu0 0.0
      %1699 = vmatpush1.msra.mxu0 0.0
      %1700 = vmatprep.subr.mxu0 0.0
      %1701 = vmatpush1.msra.mxu0 0.0
      %1702 = vmatprep.subr.mxu0 0.0
      %1703 = vmatpush1.msra.mxu0 0.0
      %1704 = vmatprep.subr.mxu0 0.0
      %1705 = vmatpush1.msra.mxu0 0.0
      %1706 = vmatprep.subr.mxu0 0.0
      %1707 = vmatpush1.msra.mxu0 0.0
      %1708 = vmatprep.subr.mxu0 0.0
      %1709 = vmatpush1.msra.mxu0 0.0
      %1710 = vmatprep.subr.mxu0 0.0
      %1711 = vmatpush1.msra.mxu0 0.0
      %1712 = vmatprep.subr.mxu0 0.0
      %1713 = vmatpush1.msra.mxu0 0.0
      %1714 = vmatprep.subr.mxu0 0.0
      %1715 = vmatpush1.msra.mxu0 0.0
      %1716 = vmatprep.subr.mxu0 0.0
      %1717 = vmatpush1.msra.mxu0 0.0
      %1718 = vmatprep.mubr.f32.mxu0 0.0
      %1719 = vmatmul.mubr.f32.gmra.mrb[0].mxu0 %v685
      %v1720 = vpop.f32.mrb[0].mxu0
      %v1721 = vadd.f32 %v1652, %v1720
      %v1722 = vpop.f32.mrb[0].mxu0
      %1723 = vdwg.mxu0
      %s1724 = scalar_lea.vmem %s5, 64
      %v1725 = vld [vmem:[%s1724] sm:$0xff]
      %v1726 = vld [vmem:[%s1724 + $0x8] sm:$0xff]
      %v1727 = vld [vmem:[%s1724 + $0x10] sm:$0xff]
      %v1728 = vld [vmem:[%s1724 + $0x18] sm:$0xff]
      %s1729 = scalar_lea.vmem %s6, 2
      %v1730 = vld [vmem:[%s1729] sm:$0x1]
      %v1732 = vlaneseq
      %v1733 = vshrl.u32 %v1732, 7
      %v1734 = vsub.s32 0, %v1733
      %v1735 = vrot.slane %v1730, %v1734
      %1737 = vmatprep.subr.mxu0 0.0
      %1738 = vmatpush1.msra.mxu0 %v1725
      %1739 = vmatprep.subr.mxu0 0.0
      %1740 = vmatpush1.msra.mxu0 %v1726
      %1741 = vmatprep.subr.mxu0 0.0
      %1742 = vmatpush1.msra.mxu0 %v1727
      %1743 = vmatprep.subr.mxu0 0.0
      %1744 = vmatpush1.msra.mxu0 %v1728
      %1745 = vmatprep.subr.mxu0 0.0
      %1746 = vmatpush1.msra.mxu0 0.0
      %1747 = vmatprep.subr.mxu0 0.0
      %1748 = vmatpush1.msra.mxu0 0.0
      %1749 = vmatprep.subr.mxu0 0.0
      %1750 = vmatpush1.msra.mxu0 0.0
      %1751 = vmatprep.subr.mxu0 0.0
      %1752 = vmatpush1.msra.mxu0 0.0
      %1753 = vmatprep.subr.mxu0 0.0
      %1754 = vmatpush1.msra.mxu0 0.0
      %1755 = vmatprep.subr.mxu0 0.0
      %1756 = vmatpush1.msra.mxu0 0.0
      %1757 = vmatprep.subr.mxu0 0.0
      %1758 = vmatpush1.msra.mxu0 0.0
      %1759 = vmatprep.subr.mxu0 0.0
      %1760 = vmatpush1.msra.mxu0 0.0
      %1761 = vmatprep.subr.mxu0 0.0
      %1762 = vmatpush1.msra.mxu0 0.0
      %1763 = vmatprep.subr.mxu0 0.0
      %1764 = vmatpush1.msra.mxu0 0.0
      %1765 = vmatprep.subr.mxu0 0.0
      %1766 = vmatpush1.msra.mxu0 0.0
      %1767 = vmatprep.subr.mxu0 0.0
      %1768 = vmatpush1.msra.mxu0 0.0
      %1769 = vmatprep.subr.mxu0 0.0
      %1770 = vmatpush1.msra.mxu0 0.0
      %1771 = vmatprep.subr.mxu0 0.0
      %1772 = vmatpush1.msra.mxu0 0.0
      %1773 = vmatprep.subr.mxu0 0.0
      %1774 = vmatpush1.msra.mxu0 0.0
      %1775 = vmatprep.subr.mxu0 0.0
      %1776 = vmatpush1.msra.mxu0 0.0
      %1777 = vmatprep.subr.mxu0 0.0
      %1778 = vmatpush1.msra.mxu0 0.0
      %1779 = vmatprep.subr.mxu0 0.0
      %1780 = vmatpush1.msra.mxu0 0.0
      %1781 = vmatprep.subr.mxu0 0.0
      %1782 = vmatpush1.msra.mxu0 0.0
      %1783 = vmatprep.subr.mxu0 0.0
      %1784 = vmatpush1.msra.mxu0 0.0
      %1785 = vmatprep.subr.mxu0 0.0
      %1786 = vmatpush1.msra.mxu0 0.0
      %1787 = vmatprep.subr.mxu0 0.0
      %1788 = vmatpush1.msra.mxu0 0.0
      %1789 = vmatprep.subr.mxu0 0.0
      %1790 = vmatpush1.msra.mxu0 0.0
      %1791 = vmatprep.subr.mxu0 0.0
      %1792 = vmatpush1.msra.mxu0 0.0
      %1793 = vmatprep.subr.mxu0 0.0
      %1794 = vmatpush1.msra.mxu0 0.0
      %1795 = vmatprep.subr.mxu0 0.0
      %1796 = vmatpush1.msra.mxu0 0.0
      %1797 = vmatprep.subr.mxu0 0.0
      %1798 = vmatpush1.msra.mxu0 0.0
      %1799 = vmatprep.subr.mxu0 0.0
      %1800 = vmatpush1.msra.mxu0 0.0
      %1801 = vmatprep.mubr.f32.mxu0 0.0
      %1802 = vmatmul.mubr.f32.gmra.mrb[0].mxu0 %v685
      %v1803 = vpop.f32.mrb[0].mxu0
      %v1804 = vadd.f32 %v1735, %v1803
      %v1805 = vpop.f32.mrb[0].mxu0
      %1806 = vdwg.mxu0
      %s1807 = scalar_lea.vmem %s7, 64
      %v1808 = vld [vmem:[%s1807] sm:$0xff]
      %v1809 = vld [vmem:[%s1807 + $0x8] sm:$0xff]
      %v1810 = vld [vmem:[%s1807 + $0x10] sm:$0xff]
      %v1811 = vld [vmem:[%s1807 + $0x18] sm:$0xff]
      %s1812 = scalar_lea.vmem %s8, 2
      %v1813 = vld [vmem:[%s1812] sm:$0x1]
      %v1815 = vlaneseq
      %v1816 = vshrl.u32 %v1815, 7
      %v1817 = vsub.s32 0, %v1816
      %v1818 = vrot.slane %v1813, %v1817
      %1820 = vmatprep.subr.mxu0 0.0
      %1821 = vmatpush1.msra.mxu0 %v1808
      %1822 = vmatprep.subr.mxu0 0.0
      %1823 = vmatpush1.msra.mxu0 %v1809
      %1824 = vmatprep.subr.mxu0 0.0
      %1825 = vmatpush1.msra.mxu0 %v1810
      %1826 = vmatprep.subr.mxu0 0.0
      %1827 = vmatpush1.msra.mxu0 %v1811
      %1828 = vmatprep.subr.mxu0 0.0
      %1829 = vmatpush1.msra.mxu0 0.0
      %1830 = vmatprep.subr.mxu0 0.0
      %1831 = vmatpush1.msra.mxu0 0.0
      %1832 = vmatprep.subr.mxu0 0.0
      %1833 = vmatpush1.msra.mxu0 0.0
      %1834 = vmatprep.subr.mxu0 0.0
      %1835 = vmatpush1.msra.mxu0 0.0
      %1836 = vmatprep.subr.mxu0 0.0
      %1837 = vmatpush1.msra.mxu0 0.0
      %1838 = vmatprep.subr.mxu0 0.0
      %1839 = vmatpush1.msra.mxu0 0.0
      %1840 = vmatprep.subr.mxu0 0.0
      %1841 = vmatpush1.msra.mxu0 0.0
      %1842 = vmatprep.subr.mxu0 0.0
      %1843 = vmatpush1.msra.mxu0 0.0
      %1844 = vmatprep.subr.mxu0 0.0
      %1845 = vmatpush1.msra.mxu0 0.0
      %1846 = vmatprep.subr.mxu0 0.0
      %1847 = vmatpush1.msra.mxu0 0.0
      %1848 = vmatprep.subr.mxu0 0.0
      %1849 = vmatpush1.msra.mxu0 0.0
      %1850 = vmatprep.subr.mxu0 0.0
      %1851 = vmatpush1.msra.mxu0 0.0
      %1852 = vmatprep.subr.mxu0 0.0
      %1853 = vmatpush1.msra.mxu0 0.0
      %1854 = vmatprep.subr.mxu0 0.0
      %1855 = vmatpush1.msra.mxu0 0.0
      %1856 = vmatprep.subr.mxu0 0.0
      %1857 = vmatpush1.msra.mxu0 0.0
      %1858 = vmatprep.subr.mxu0 0.0
      %1859 = vmatpush1.msra.mxu0 0.0
      %1860 = vmatprep.subr.mxu0 0.0
      %1861 = vmatpush1.msra.mxu0 0.0
      %1862 = vmatprep.subr.mxu0 0.0
      %1863 = vmatpush1.msra.mxu0 0.0
      %1864 = vmatprep.subr.mxu0 0.0
      %1865 = vmatpush1.msra.mxu0 0.0
      %1866 = vmatprep.subr.mxu0 0.0
      %1867 = vmatpush1.msra.mxu0 0.0
      %1868 = vmatprep.subr.mxu0 0.0
      %1869 = vmatpush1.msra.mxu0 0.0
      %1870 = vmatprep.subr.mxu0 0.0
      %1871 = vmatpush1.msra.mxu0 0.0
      %1872 = vmatprep.subr.mxu0 0.0
      %1873 = vmatpush1.msra.mxu0 0.0
      %1874 = vmatprep.subr.mxu0 0.0
      %1875 = vmatpush1.msra.mxu0 0.0
      %1876 = vmatprep.subr.mxu0 0.0
      %1877 = vmatpush1.msra.mxu0 0.0
      %1878 = vmatprep.subr.mxu0 0.0
      %1879 = vmatpush1.msra.mxu0 0.0
      %1880 = vmatprep.subr.mxu0 0.0
      %1881 = vmatpush1.msra.mxu0 0.0
      %1882 = vmatprep.subr.mxu0 0.0
      %1883 = vmatpush1.msra.mxu0 0.0
      %1884 = vmatprep.mubr.f32.mxu0 0.0
      %1885 = vmatmul.mubr.f32.gmra.mrb[0].mxu0 %v685
      %v1886 = vpop.f32.mrb[0].mxu0
      %v1887 = vadd.f32 %v1818, %v1886
      %v1888 = vpop.f32.mrb[0].mxu0
      %1889 = vdwg.mxu0
      %v1891 = vsel %vm919, %v1721, 0
      %v1894 = vsel %vm919, %v1804, 0
      %1896 = vmatprep.subr.mxu0 0.0
      %1897 = vmatpush1.xpose.msra.mxu0 %v1894
      %1898 = vmatprep.subr.mxu0 0.0
      %1899 = vmatpush1.xpose.msra.mxu0 0.0
      %1900 = vmatprep.subr.mxu0 0.0
      %1901 = vmatpush1.xpose.msra.mxu0 0.0
      %1902 = vmatprep.subr.mxu0 0.0
      %1903 = vmatpush1.xpose.msra.mxu0 0.0
      %1904 = vmatprep.subr.mxu0 0.0
      %1905 = vmatpush1.xpose.msra.mxu0 0.0
      %1906 = vmatprep.subr.mxu0 0.0
      %1907 = vmatpush1.xpose.msra.mxu0 0.0
      %1908 = vmatprep.subr.mxu0 0.0
      %1909 = vmatpush1.xpose.msra.mxu0 0.0
      %1910 = vmatprep.subr.mxu0 0.0
      %1911 = vmatpush1.xpose.msra.mxu0 0.0
      %1912 = vmatprep.subr.mxu0 0.0
      %1913 = vmatpush1.xpose.msra.mxu0 0.0
      %1914 = vmatprep.subr.mxu0 0.0
      %1915 = vmatpush1.xpose.msra.mxu0 0.0
      %1916 = vmatprep.subr.mxu0 0.0
      %1917 = vmatpush1.xpose.msra.mxu0 0.0
      %1918 = vmatprep.subr.mxu0 0.0
      %1919 = vmatpush1.xpose.msra.mxu0 0.0
      %1920 = vmatprep.subr.mxu0 0.0
      %1921 = vmatpush1.xpose.msra.mxu0 0.0
      %1922 = vmatprep.subr.mxu0 0.0
      %1923 = vmatpush1.xpose.msra.mxu0 0.0
      %1924 = vmatprep.subr.mxu0 0.0
      %1925 = vmatpush1.xpose.msra.mxu0 0.0
      %1926 = vmatprep.subr.mxu0 0.0
      %1927 = vmatpush1.xpose.msra.mxu0 0.0
      %1928 = vmatprep.subr.mxu0 0.0
      %1929 = vmatpush1.xpose.msra.mxu0 0.0
      %1930 = vmatprep.subr.mxu0 0.0
      %1931 = vmatpush1.xpose.msra.mxu0 0.0
      %1932 = vmatprep.subr.mxu0 0.0
      %1933 = vmatpush1.xpose.msra.mxu0 0.0
      %1934 = vmatprep.subr.mxu0 0.0
      %1935 = vmatpush1.xpose.msra.mxu0 0.0
      %1936 = vmatprep.subr.mxu0 0.0
      %1937 = vmatpush1.xpose.msra.mxu0 0.0
      %1938 = vmatprep.subr.mxu0 0.0
      %1939 = vmatpush1.xpose.msra.mxu0 0.0
      %1940 = vmatprep.subr.mxu0 0.0
      %1941 = vmatpush1.xpose.msra.mxu0 0.0
      %1942 = vmatprep.subr.mxu0 0.0
      %1943 = vmatpush1.xpose.msra.mxu0 0.0
      %1944 = vmatprep.subr.mxu0 0.0
      %1945 = vmatpush1.xpose.msra.mxu0 0.0
      %1946 = vmatprep.subr.mxu0 0.0
      %1947 = vmatpush1.xpose.msra.mxu0 0.0
      %1948 = vmatprep.subr.mxu0 0.0
      %1949 = vmatpush1.xpose.msra.mxu0 0.0
      %1950 = vmatprep.subr.mxu0 0.0
      %1951 = vmatpush1.xpose.msra.mxu0 0.0
      %1952 = vmatprep.subr.mxu0 0.0
      %1953 = vmatpush1.xpose.msra.mxu0 0.0
      %1954 = vmatprep.subr.mxu0 0.0
      %1955 = vmatpush1.xpose.msra.mxu0 0.0
      %1956 = vmatprep.subr.mxu0 0.0
      %1957 = vmatpush1.xpose.msra.mxu0 0.0
      %1958 = vmatprep.subr.mxu0 0.0
      %1959 = vmatpush1.xpose.msra.mxu0 0.0
      %1960 = vmatprep.mubr.f32.mxu0 0.0
      %1961 = vmatmul.mubr.f32.gmra.mrb[0].mxu0 %v1891
      %v1962 = vpop.f32.mrb[0].mxu0
      %v1963 = vadd.f32 0.0, %v1962
      %v1964 = vpop.f32.mrb[0].mxu0
      %1965 = vdwg.mxu0
      %v1966 = vsel %vm919, %v1963, -inf
      %1967 = vmax.xlane.f32.xlu0 %v1966
      %v1968 = vpop.xlane.xlu0 %1967
      %v1969 = vsub.f32 %v1963, %v1968
      %v1970 = vmul.f32 %v1969, 1.442695
      %v1971 = vpow.pop %v1970
      %v1972 = vsel %vm919, %v1971, 0.0
      %1973 = vadd.xlane.f32.xlu0 %v1972
      %v1974 = vpop.xlane.xlu0 %1973
      %v1975 = vrcp.pop %v1974
      %v1976 = vmul.f32 %v1971, %v1975
      %s1977 = scalar_lea.vmem %s639, 16
      %1978 = vst.msk [vmem:[%s1977] sm:$0xff] %vm919, %v1976
      %v1980 = vsel %vm919, %v1976, 0
      %1982 = vmatprep.subr.mxu0 0.0
      %1983 = vmatpush1.msra.mxu0 %v1887
      %1984 = vmatprep.subr.mxu0 0.0
      %1985 = vmatpush1.msra.mxu0 0.0
      %1986 = vmatprep.subr.mxu0 0.0
      %1987 = vmatpush1.msra.mxu0 0.0
      %1988 = vmatprep.subr.mxu0 0.0
      %1989 = vmatpush1.msra.mxu0 0.0
      %1990 = vmatprep.subr.mxu0 0.0
      %1991 = vmatpush1.msra.mxu0 0.0
      %1992 = vmatprep.subr.mxu0 0.0
      %1993 = vmatpush1.msra.mxu0 0.0
      %1994 = vmatprep.subr.mxu0 0.0
      %1995 = vmatpush1.msra.mxu0 0.0
      %1996 = vmatprep.subr.mxu0 0.0
      %1997 = vmatpush1.msra.mxu0 0.0
      %1998 = vmatprep.subr.mxu0 0.0
      %1999 = vmatpush1.msra.mxu0 0.0
      %2000 = vmatprep.subr.mxu0 0.0
      %2001 = vmatpush1.msra.mxu0 0.0
      %2002 = vmatprep.subr.mxu0 0.0
      %2003 = vmatpush1.msra.mxu0 0.0
      %2004 = vmatprep.subr.mxu0 0.0
      %2005 = vmatpush1.msra.mxu0 0.0
      %2006 = vmatprep.subr.mxu0 0.0
      %2007 = vmatpush1.msra.mxu0 0.0
      %2008 = vmatprep.subr.mxu0 0.0
      %2009 = vmatpush1.msra.mxu0 0.0
      %2010 = vmatprep.subr.mxu0 0.0
      %2011 = vmatpush1.msra.mxu0 0.0
      %2012 = vmatprep.subr.mxu0 0.0
      %2013 = vmatpush1.msra.mxu0 0.0
      %2014 = vmatprep.subr.mxu0 0.0
      %2015 = vmatpush1.msra.mxu0 0.0
      %2016 = vmatprep.subr.mxu0 0.0
      %2017 = vmatpush1.msra.mxu0 0.0
      %2018 = vmatprep.subr.mxu0 0.0
      %2019 = vmatpush1.msra.mxu0 0.0
      %2020 = vmatprep.subr.mxu0 0.0
      %2021 = vmatpush1.msra.mxu0 0.0
      %2022 = vmatprep.subr.mxu0 0.0
      %2023 = vmatpush1.msra.mxu0 0.0
      %2024 = vmatprep.subr.mxu0 0.0
      %2025 = vmatpush1.msra.mxu0 0.0
      %2026 = vmatprep.subr.mxu0 0.0
      %2027 = vmatpush1.msra.mxu0 0.0
      %2028 = vmatprep.subr.mxu0 0.0
      %2029 = vmatpush1.msra.mxu0 0.0
      %2030 = vmatprep.subr.mxu0 0.0
      %2031 = vmatpush1.msra.mxu0 0.0
      %2032 = vmatprep.subr.mxu0 0.0
      %2033 = vmatpush1.msra.mxu0 0.0
      %2034 = vmatprep.subr.mxu0 0.0
      %2035 = vmatpush1.msra.mxu0 0.0
      %2036 = vmatprep.subr.mxu0 0.0
      %2037 = vmatpush1.msra.mxu0 0.0
      %2038 = vmatprep.subr.mxu0 0.0
      %2039 = vmatpush1.msra.mxu0 0.0
      %2040 = vmatprep.subr.mxu0 0.0
      %2041 = vmatpush1.msra.mxu0 0.0
      %2042 = vmatprep.subr.mxu0 0.0
      %2043 = vmatpush1.msra.mxu0 0.0
      %2044 = vmatprep.subr.mxu0 0.0
      %2045 = vmatpush1.msra.mxu0 0.0
      %2046 = vmatprep.mubr.f32.mxu0 0.0
      %2047 = vmatmul.mubr.f32.gmra.mrb[0].mxu0 %v1980
      %v2048 = vpop.f32.mrb[0].mxu0
      %v2049 = vadd.f32 0.0, %v2048
      %v2050 = vpop.f32.mrb[0].mxu0
      %2051 = vdwg.mxu0
      %s2052 = scalar_lea.vmem %s9, 16
      %v2053 = vld [vmem:[%s2052] sm:$0xff]
      %v2055 = vsel %vm919, %v2049, 0
      %2057 = vmatprep.subr.mxu0 0.0
      %2058 = vmatpush1.msra.mxu0 %v2053
      %2059 = vmatprep.subr.mxu0 0.0
      %2060 = vmatpush1.msra.mxu0 0.0
      %2061 = vmatprep.subr.mxu0 0.0
      %2062 = vmatpush1.msra.mxu0 0.0
      %2063 = vmatprep.subr.mxu0 0.0
      %2064 = vmatpush1.msra.mxu0 0.0
      %2065 = vmatprep.subr.mxu0 0.0
      %2066 = vmatpush1.msra.mxu0 0.0
      %2067 = vmatprep.subr.mxu0 0.0
      %2068 = vmatpush1.msra.mxu0 0.0
      %2069 = vmatprep.subr.mxu0 0.0
      %2070 = vmatpush1.msra.mxu0 0.0
      %2071 = vmatprep.subr.mxu0 0.0
      %2072 = vmatpush1.msra.mxu0 0.0
      %2073 = vmatprep.subr.mxu0 0.0
      %2074 = vmatpush1.msra.mxu0 0.0
      %2075 = vmatprep.subr.mxu0 0.0
      %2076 = vmatpush1.msra.mxu0 0.0
      %2077 = vmatprep.subr.mxu0 0.0
      %2078 = vmatpush1.msra.mxu0 0.0
      %2079 = vmatprep.subr.mxu0 0.0
      %2080 = vmatpush1.msra.mxu0 0.0
      %2081 = vmatprep.subr.mxu0 0.0
      %2082 = vmatpush1.msra.mxu0 0.0
      %2083 = vmatprep.subr.mxu0 0.0
      %2084 = vmatpush1.msra.mxu0 0.0
      %2085 = vmatprep.subr.mxu0 0.0
      %2086 = vmatpush1.msra.mxu0 0.0
      %2087 = vmatprep.subr.mxu0 0.0
      %2088 = vmatpush1.msra.mxu0 0.0
      %2089 = vmatprep.subr.mxu0 0.0
      %2090 = vmatpush1.msra.mxu0 0.0
      %2091 = vmatprep.subr.mxu0 0.0
      %2092 = vmatpush1.msra.mxu0 0.0
      %2093 = vmatprep.subr.mxu0 0.0
      %2094 = vmatpush1.msra.mxu0 0.0
      %2095 = vmatprep.subr.mxu0 0.0
      %2096 = vmatpush1.msra.mxu0 0.0
      %2097 = vmatprep.subr.mxu0 0.0
      %2098 = vmatpush1.msra.mxu0 0.0
      %2099 = vmatprep.subr.mxu0 0.0
      %2100 = vmatpush1.msra.mxu0 0.0
      %2101 = vmatprep.subr.mxu0 0.0
      %2102 = vmatpush1.msra.mxu0 0.0
      %2103 = vmatprep.subr.mxu0 0.0
      %2104 = vmatpush1.msra.mxu0 0.0
      %2105 = vmatprep.subr.mxu0 0.0
      %2106 = vmatpush1.msra.mxu0 0.0
      %2107 = vmatprep.subr.mxu0 0.0
      %2108 = vmatpush1.msra.mxu0 0.0
      %2109 = vmatprep.subr.mxu0 0.0
      %2110 = vmatpush1.msra.mxu0 0.0
      %2111 = vmatprep.subr.mxu0 0.0
      %2112 = vmatpush1.msra.mxu0 0.0
      %2113 = vmatprep.subr.mxu0 0.0
      %2114 = vmatpush1.msra.mxu0 0.0
      %2115 = vmatprep.subr.mxu0 0.0
      %2116 = vmatpush1.msra.mxu0 0.0
      %2117 = vmatprep.subr.mxu0 0.0
      %2118 = vmatpush1.msra.mxu0 0.0
      %2119 = vmatprep.subr.mxu0 0.0
      %2120 = vmatpush1.msra.mxu0 0.0
      %2121 = vmatprep.mubr.f32.mxu0 0.0
      %2122 = vmatmul.mubr.f32.gmra.mrb[0].mxu0 %v2055
      %v2123 = vpop.f32.mrb[0].mxu0
      %v2124 = vadd.f32 0.0, %v2123
      %v2125 = vpop.f32.mrb[0].mxu0
      %2126 = vdwg.mxu0
      %v2127 = vadd.f32 %v1638, %v2124
      %s2128 = scalar_lea.vmem %s3, 96
      %v2129 = vld [vmem:[%s2128] sm:$0xff]
      %v2130 = vld [vmem:[%s2128 + $0x8] sm:$0xff]
      %v2131 = vld [vmem:[%s2128 + $0x10] sm:$0xff]
      %v2132 = vld [vmem:[%s2128 + $0x18] sm:$0xff]
      %s2133 = scalar_lea.vmem %s4, 3
      %v2134 = vld [vmem:[%s2133] sm:$0x1]
      %v2136 = vlaneseq
      %v2137 = vshrl.u32 %v2136, 7
      %v2138 = vsub.s32 0, %v2137
      %v2139 = vrot.slane %v2134, %v2138
      %2141 = vmatprep.subr.mxu0 0.0
      %2142 = vmatpush1.msra.mxu0 %v2129
      %2143 = vmatprep.subr.mxu0 0.0
      %2144 = vmatpush1.msra.mxu0 %v2130
      %2145 = vmatprep.subr.mxu0 0.0
      %2146 = vmatpush1.msra.mxu0 %v2131
      %2147 = vmatprep.subr.mxu0 0.0
      %2148 = vmatpush1.msra.mxu0 %v2132
      %2149 = vmatprep.subr.mxu0 0.0
      %2150 = vmatpush1.msra.mxu0 0.0
      %2151 = vmatprep.subr.mxu0 0.0
      %2152 = vmatpush1.msra.mxu0 0.0
      %2153 = vmatprep.subr.mxu0 0.0
      %2154 = vmatpush1.msra.mxu0 0.0
      %2155 = vmatprep.subr.mxu0 0.0
      %2156 = vmatpush1.msra.mxu0 0.0
      %2157 = vmatprep.subr.mxu0 0.0
      %2158 = vmatpush1.msra.mxu0 0.0
      %2159 = vmatprep.subr.mxu0 0.0
      %2160 = vmatpush1.msra.mxu0 0.0
      %2161 = vmatprep.subr.mxu0 0.0
      %2162 = vmatpush1.msra.mxu0 0.0
      %2163 = vmatprep.subr.mxu0 0.0
      %2164 = vmatpush1.msra.mxu0 0.0
      %2165 = vmatprep.subr.mxu0 0.0
      %2166 = vmatpush1.msra.mxu0 0.0
      %2167 = vmatprep.subr.mxu0 0.0
      %2168 = vmatpush1.msra.mxu0 0.0
      %2169 = vmatprep.subr.mxu0 0.0
      %2170 = vmatpush1.msra.mxu0 0.0
      %2171 = vmatprep.subr.mxu0 0.0
      %2172 = vmatpush1.msra.mxu0 0.0
      %2173 = vmatprep.subr.mxu0 0.0
      %2174 = vmatpush1.msra.mxu0 0.0
      %2175 = vmatprep.subr.mxu0 0.0
      %2176 = vmatpush1.msra.mxu0 0.0
      %2177 = vmatprep.subr.mxu0 0.0
      %2178 = vmatpush1.msra.mxu0 0.0
      %2179 = vmatprep.subr.mxu0 0.0
      %2180 = vmatpush1.msra.mxu0 0.0
      %2181 = vmatprep.subr.mxu0 0.0
      %2182 = vmatpush1.msra.mxu0 0.0
      %2183 = vmatprep.subr.mxu0 0.0
      %2184 = vmatpush1.msra.mxu0 0.0
      %2185 = vmatprep.subr.mxu0 0.0
      %2186 = vmatpush1.msra.mxu0 0.0
      %2187 = vmatprep.subr.mxu0 0.0
      %2188 = vmatpush1.msra.mxu0 0.0
      %2189 = vmatprep.subr.mxu0 0.0
      %2190 = vmatpush1.msra.mxu0 0.0
      %2191 = vmatprep.subr.mxu0 0.0
      %2192 = vmatpush1.msra.mxu0 0.0
      %2193 = vmatprep.subr.mxu0 0.0
      %2194 = vmatpush1.msra.mxu0 0.0
      %2195 = vmatprep.subr.mxu0 0.0
      %2196 = vmatpush1.msra.mxu0 0.0
      %2197 = vmatprep.subr.mxu0 0.0
      %2198 = vmatpush1.msra.mxu0 0.0
      %2199 = vmatprep.subr.mxu0 0.0
      %2200 = vmatpush1.msra.mxu0 0.0
      %2201 = vmatprep.subr.mxu0 0.0
      %2202 = vmatpush1.msra.mxu0 0.0
      %2203 = vmatprep.subr.mxu0 0.0
      %2204 = vmatpush1.msra.mxu0 0.0
      %2205 = vmatprep.mubr.f32.mxu0 0.0
      %2206 = vmatmul.mubr.f32.gmra.mrb[0].mxu0 %v685
      %v2207 = vpop.f32.mrb[0].mxu0
      %v2208 = vadd.f32 %v2139, %v2207
      %v2209 = vpop.f32.mrb[0].mxu0
      %2210 = vdwg.mxu0
      %s2211 = scalar_lea.vmem %s5, 96
      %v2212 = vld [vmem:[%s2211] sm:$0xff]
      %v2213 = vld [vmem:[%s2211 + $0x8] sm:$0xff]
      %v2214 = vld [vmem:[%s2211 + $0x10] sm:$0xff]
      %v2215 = vld [vmem:[%s2211 + $0x18] sm:$0xff]
      %s2216 = scalar_lea.vmem %s6, 3
      %v2217 = vld [vmem:[%s2216] sm:$0x1]
      %v2219 = vlaneseq
      %v2220 = vshrl.u32 %v2219, 7
      %v2221 = vsub.s32 0, %v2220
      %v2222 = vrot.slane %v2217, %v2221
      %2224 = vmatprep.subr.mxu0 0.0
      %2225 = vmatpush1.msra.mxu0 %v2212
      %2226 = vmatprep.subr.mxu0 0.0
      %2227 = vmatpush1.msra.mxu0 %v2213
      %2228 = vmatprep.subr.mxu0 0.0
      %2229 = vmatpush1.msra.mxu0 %v2214
      %2230 = vmatprep.subr.mxu0 0.0
      %2231 = vmatpush1.msra.mxu0 %v2215
      %2232 = vmatprep.subr.mxu0 0.0
      %2233 = vmatpush1.msra.mxu0 0.0
      %2234 = vmatprep.subr.mxu0 0.0
      %2235 = vmatpush1.msra.mxu0 0.0
      %2236 = vmatprep.subr.mxu0 0.0
      %2237 = vmatpush1.msra.mxu0 0.0
      %2238 = vmatprep.subr.mxu0 0.0
      %2239 = vmatpush1.msra.mxu0 0.0
      %2240 = vmatprep.subr.mxu0 0.0
      %2241 = vmatpush1.msra.mxu0 0.0
      %2242 = vmatprep.subr.mxu0 0.0
      %2243 = vmatpush1.msra.mxu0 0.0
      %2244 = vmatprep.subr.mxu0 0.0
      %2245 = vmatpush1.msra.mxu0 0.0
      %2246 = vmatprep.subr.mxu0 0.0
      %2247 = vmatpush1.msra.mxu0 0.0
      %2248 = vmatprep.subr.mxu0 0.0
      %2249 = vmatpush1.msra.mxu0 0.0
      %2250 = vmatprep.subr.mxu0 0.0
      %2251 = vmatpush1.msra.mxu0 0.0
      %2252 = vmatprep.subr.mxu0 0.0
      %2253 = vmatpush1.msra.mxu0 0.0
      %2254 = vmatprep.subr.mxu0 0.0
      %2255 = vmatpush1.msra.mxu0 0.0
      %2256 = vmatprep.subr.mxu0 0.0
      %2257 = vmatpush1.msra.mxu0 0.0
      %2258 = vmatprep.subr.mxu0 0.0
      %2259 = vmatpush1.msra.mxu0 0.0
      %2260 = vmatprep.subr.mxu0 0.0
      %2261 = vmatpush1.msra.mxu0 0.0
      %2262 = vmatprep.subr.mxu0 0.0
      %2263 = vmatpush1.msra.mxu0 0.0
      %2264 = vmatprep.subr.mxu0 0.0
      %2265 = vmatpush1.msra.mxu0 0.0
      %2266 = vmatprep.subr.mxu0 0.0
      %2267 = vmatpush1.msra.mxu0 0.0
      %2268 = vmatprep.subr.mxu0 0.0
      %2269 = vmatpush1.msra.mxu0 0.0
      %2270 = vmatprep.subr.mxu0 0.0
      %2271 = vmatpush1.msra.mxu0 0.0
      %2272 = vmatprep.subr.mxu0 0.0
      %2273 = vmatpush1.msra.mxu0 0.0
      %2274 = vmatprep.subr.mxu0 0.0
      %2275 = vmatpush1.msra.mxu0 0.0
      %2276 = vmatprep.subr.mxu0 0.0
      %2277 = vmatpush1.msra.mxu0 0.0
      %2278 = vmatprep.subr.mxu0 0.0
      %2279 = vmatpush1.msra.mxu0 0.0
      %2280 = vmatprep.subr.mxu0 0.0
      %2281 = vmatpush1.msra.mxu0 0.0
      %2282 = vmatprep.subr.mxu0 0.0
      %2283 = vmatpush1.msra.mxu0 0.0
      %2284 = vmatprep.subr.mxu0 0.0
      %2285 = vmatpush1.msra.mxu0 0.0
      %2286 = vmatprep.subr.mxu0 0.0
      %2287 = vmatpush1.msra.mxu0 0.0
      %2288 = vmatprep.mubr.f32.mxu0 0.0
      %2289 = vmatmul.mubr.f32.gmra.mrb[0].mxu0 %v685
      %v2290 = vpop.f32.mrb[0].mxu0
      %v2291 = vadd.f32 %v2222, %v2290
      %v2292 = vpop.f32.mrb[0].mxu0
      %2293 = vdwg.mxu0
      %s2294 = scalar_lea.vmem %s7, 96
      %v2295 = vld [vmem:[%s2294] sm:$0xff]
      %v2296 = vld [vmem:[%s2294 + $0x8] sm:$0xff]
      %v2297 = vld [vmem:[%s2294 + $0x10] sm:$0xff]
      %v2298 = vld [vmem:[%s2294 + $0x18] sm:$0xff]
      %s2299 = scalar_lea.vmem %s8, 3
      %v2300 = vld [vmem:[%s2299] sm:$0x1]
      %v2302 = vlaneseq
      %v2303 = vshrl.u32 %v2302, 7
      %v2304 = vsub.s32 0, %v2303
      %v2305 = vrot.slane %v2300, %v2304
      %2307 = vmatprep.subr.mxu0 0.0
      %2308 = vmatpush1.msra.mxu0 %v2295
      %2309 = vmatprep.subr.mxu0 0.0
      %2310 = vmatpush1.msra.mxu0 %v2296
      %2311 = vmatprep.subr.mxu0 0.0
      %2312 = vmatpush1.msra.mxu0 %v2297
      %2313 = vmatprep.subr.mxu0 0.0
      %2314 = vmatpush1.msra.mxu0 %v2298
      %2315 = vmatprep.subr.mxu0 0.0
      %2316 = vmatpush1.msra.mxu0 0.0
      %2317 = vmatprep.subr.mxu0 0.0
      %2318 = vmatpush1.msra.mxu0 0.0
      %2319 = vmatprep.subr.mxu0 0.0
      %2320 = vmatpush1.msra.mxu0 0.0
      %2321 = vmatprep.subr.mxu0 0.0
      %2322 = vmatpush1.msra.mxu0 0.0
      %2323 = vmatprep.subr.mxu0 0.0
      %2324 = vmatpush1.msra.mxu0 0.0
      %2325 = vmatprep.subr.mxu0 0.0
      %2326 = vmatpush1.msra.mxu0 0.0
      %2327 = vmatprep.subr.mxu0 0.0
      %2328 = vmatpush1.msra.mxu0 0.0
      %2329 = vmatprep.subr.mxu0 0.0
      %2330 = vmatpush1.msra.mxu0 0.0
      %2331 = vmatprep.subr.mxu0 0.0
      %2332 = vmatpush1.msra.mxu0 0.0
      %2333 = vmatprep.subr.mxu0 0.0
      %2334 = vmatpush1.msra.mxu0 0.0
      %2335 = vmatprep.subr.mxu0 0.0
      %2336 = vmatpush1.msra.mxu0 0.0
      %2337 = vmatprep.subr.mxu0 0.0
      %2338 = vmatpush1.msra.mxu0 0.0
      %2339 = vmatprep.subr.mxu0 0.0
      %2340 = vmatpush1.msra.mxu0 0.0
      %2341 = vmatprep.subr.mxu0 0.0
      %2342 = vmatpush1.msra.mxu0 0.0
      %2343 = vmatprep.subr.mxu0 0.0
      %2344 = vmatpush1.msra.mxu0 0.0
      %2345 = vmatprep.subr.mxu0 0.0
      %2346 = vmatpush1.msra.mxu0 0.0
      %2347 = vmatprep.subr.mxu0 0.0
      %2348 = vmatpush1.msra.mxu0 0.0
      %2349 = vmatprep.subr.mxu0 0.0
      %2350 = vmatpush1.msra.mxu0 0.0
      %2351 = vmatprep.subr.mxu0 0.0
      %2352 = vmatpush1.msra.mxu0 0.0
      %2353 = vmatprep.subr.mxu0 0.0
      %2354 = vmatpush1.msra.mxu0 0.0
      %2355 = vmatprep.subr.mxu0 0.0
      %2356 = vmatpush1.msra.mxu0 0.0
      %2357 = vmatprep.subr.mxu0 0.0
      %2358 = vmatpush1.msra.mxu0 0.0
      %2359 = vmatprep.subr.mxu0 0.0
      %2360 = vmatpush1.msra.mxu0 0.0
      %2361 = vmatprep.subr.mxu0 0.0
      %2362 = vmatpush1.msra.mxu0 0.0
      %2363 = vmatprep.subr.mxu0 0.0
      %2364 = vmatpush1.msra.mxu0 0.0
      %2365 = vmatprep.subr.mxu0 0.0
      %2366 = vmatpush1.msra.mxu0 0.0
      %2367 = vmatprep.subr.mxu0 0.0
      %2368 = vmatpush1.msra.mxu0 0.0
      %2369 = vmatprep.subr.mxu0 0.0
      %2370 = vmatpush1.msra.mxu0 0.0
      %2371 = vmatprep.mubr.f32.mxu0 0.0
      %2372 = vmatmul.mubr.f32.gmra.mrb[0].mxu0 %v685
      %v2373 = vpop.f32.mrb[0].mxu0
      %v2374 = vadd.f32 %v2305, %v2373
      %v2375 = vpop.f32.mrb[0].mxu0
      %2376 = vdwg.mxu0
      %v2378 = vsel %vm919, %v2208, 0
      %v2381 = vsel %vm919, %v2291, 0
      %2383 = vmatprep.subr.mxu0 0.0
      %2384 = vmatpush1.xpose.msra.mxu0 %v2381
      %2385 = vmatprep.subr.mxu0 0.0
      %2386 = vmatpush1.xpose.msra.mxu0 0.0
      %2387 = vmatprep.subr.mxu0 0.0
      %2388 = vmatpush1.xpose.msra.mxu0 0.0
      %2389 = vmatprep.subr.mxu0 0.0
      %2390 = vmatpush1.xpose.msra.mxu0 0.0
      %2391 = vmatprep.subr.mxu0 0.0
      %2392 = vmatpush1.xpose.msra.mxu0 0.0
      %2393 = vmatprep.subr.mxu0 0.0
      %2394 = vmatpush1.xpose.msra.mxu0 0.0
      %2395 = vmatprep.subr.mxu0 0.0
      %2396 = vmatpush1.xpose.msra.mxu0 0.0
      %2397 = vmatprep.subr.mxu0 0.0
      %2398 = vmatpush1.xpose.msra.mxu0 0.0
      %2399 = vmatprep.subr.mxu0 0.0
      %2400 = vmatpush1.xpose.msra.mxu0 0.0
      %2401 = vmatprep.subr.mxu0 0.0
      %2402 = vmatpush1.xpose.msra.mxu0 0.0
      %2403 = vmatprep.subr.mxu0 0.0
      %2404 = vmatpush1.xpose.msra.mxu0 0.0
      %2405 = vmatprep.subr.mxu0 0.0
      %2406 = vmatpush1.xpose.msra.mxu0 0.0
      %2407 = vmatprep.subr.mxu0 0.0
      %2408 = vmatpush1.xpose.msra.mxu0 0.0
      %2409 = vmatprep.subr.mxu0 0.0
      %2410 = vmatpush1.xpose.msra.mxu0 0.0
      %2411 = vmatprep.subr.mxu0 0.0
      %2412 = vmatpush1.xpose.msra.mxu0 0.0
      %2413 = vmatprep.subr.mxu0 0.0
      %2414 = vmatpush1.xpose.msra.mxu0 0.0
      %2415 = vmatprep.subr.mxu0 0.0
      %2416 = vmatpush1.xpose.msra.mxu0 0.0
      %2417 = vmatprep.subr.mxu0 0.0
      %2418 = vmatpush1.xpose.msra.mxu0 0.0
      %2419 = vmatprep.subr.mxu0 0.0
      %2420 = vmatpush1.xpose.msra.mxu0 0.0
      %2421 = vmatprep.subr.mxu0 0.0
      %2422 = vmatpush1.xpose.msra.mxu0 0.0
      %2423 = vmatprep.subr.mxu0 0.0
      %2424 = vmatpush1.xpose.msra.mxu0 0.0
      %2425 = vmatprep.subr.mxu0 0.0
      %2426 = vmatpush1.xpose.msra.mxu0 0.0
      %2427 = vmatprep.subr.mxu0 0.0
      %2428 = vmatpush1.xpose.msra.mxu0 0.0
      %2429 = vmatprep.subr.mxu0 0.0
      %2430 = vmatpush1.xpose.msra.mxu0 0.0
      %2431 = vmatprep.subr.mxu0 0.0
      %2432 = vmatpush1.xpose.msra.mxu0 0.0
      %2433 = vmatprep.subr.mxu0 0.0
      %2434 = vmatpush1.xpose.msra.mxu0 0.0
      %2435 = vmatprep.subr.mxu0 0.0
      %2436 = vmatpush1.xpose.msra.mxu0 0.0
      %2437 = vmatprep.subr.mxu0 0.0
      %2438 = vmatpush1.xpose.msra.mxu0 0.0
      %2439 = vmatprep.subr.mxu0 0.0
      %2440 = vmatpush1.xpose.msra.mxu0 0.0
      %2441 = vmatprep.subr.mxu0 0.0
      %2442 = vmatpush1.xpose.msra.mxu0 0.0
      %2443 = vmatprep.subr.mxu0 0.0
      %2444 = vmatpush1.xpose.msra.mxu0 0.0
      %2445 = vmatprep.subr.mxu0 0.0
      %2446 = vmatpush1.xpose.msra.mxu0 0.0
      %2447 = vmatprep.mubr.f32.mxu0 0.0
      %2448 = vmatmul.mubr.f32.gmra.mrb[0].mxu0 %v2378
      %v2449 = vpop.f32.mrb[0].mxu0
      %v2450 = vadd.f32 0.0, %v2449
      %v2451 = vpop.f32.mrb[0].mxu0
      %2452 = vdwg.mxu0
      %v2453 = vsel %vm919, %v2450, -inf
      %2454 = vmax.xlane.f32.xlu0 %v2453
      %v2455 = vpop.xlane.xlu0 %2454
      %v2456 = vsub.f32 %v2450, %v2455
      %v2457 = vmul.f32 %v2456, 1.442695
      %v2458 = vpow.pop %v2457
      %v2459 = vsel %vm919, %v2458, 0.0
      %2460 = vadd.xlane.f32.xlu0 %v2459
      %v2461 = vpop.xlane.xlu0 %2460
      %v2462 = vrcp.pop %v2461
      %v2463 = vmul.f32 %v2458, %v2462
      %s2464 = scalar_lea.vmem %s639, 24
      %2465 = vst.msk [vmem:[%s2464] sm:$0xff] %vm919, %v2463
      %v2467 = vsel %vm919, %v2463, 0
      %2469 = vmatprep.subr.mxu0 0.0
      %2470 = vmatpush1.msra.mxu0 %v2374
      %2471 = vmatprep.subr.mxu0 0.0
      %2472 = vmatpush1.msra.mxu0 0.0
      %2473 = vmatprep.subr.mxu0 0.0
      %2474 = vmatpush1.msra.mxu0 0.0
      %2475 = vmatprep.subr.mxu0 0.0
      %2476 = vmatpush1.msra.mxu0 0.0
      %2477 = vmatprep.subr.mxu0 0.0
      %2478 = vmatpush1.msra.mxu0 0.0
      %2479 = vmatprep.subr.mxu0 0.0
      %2480 = vmatpush1.msra.mxu0 0.0
      %2481 = vmatprep.subr.mxu0 0.0
      %2482 = vmatpush1.msra.mxu0 0.0
      %2483 = vmatprep.subr.mxu0 0.0
      %2484 = vmatpush1.msra.mxu0 0.0
      %2485 = vmatprep.subr.mxu0 0.0
      %2486 = vmatpush1.msra.mxu0 0.0
      %2487 = vmatprep.subr.mxu0 0.0
      %2488 = vmatpush1.msra.mxu0 0.0
      %2489 = vmatprep.subr.mxu0 0.0
      %2490 = vmatpush1.msra.mxu0 0.0
      %2491 = vmatprep.subr.mxu0 0.0
      %2492 = vmatpush1.msra.mxu0 0.0
      %2493 = vmatprep.subr.mxu0 0.0
      %2494 = vmatpush1.msra.mxu0 0.0
      %2495 = vmatprep.subr.mxu0 0.0
      %2496 = vmatpush1.msra.mxu0 0.0
      %2497 = vmatprep.subr.mxu0 0.0
      %2498 = vmatpush1.msra.mxu0 0.0
      %2499 = vmatprep.subr.mxu0 0.0
      %2500 = vmatpush1.msra.mxu0 0.0
      %2501 = vmatprep.subr.mxu0 0.0
      %2502 = vmatpush1.msra.mxu0 0.0
      %2503 = vmatprep.subr.mxu0 0.0
      %2504 = vmatpush1.msra.mxu0 0.0
      %2505 = vmatprep.subr.mxu0 0.0
      %2506 = vmatpush1.msra.mxu0 0.0
      %2507 = vmatprep.subr.mxu0 0.0
      %2508 = vmatpush1.msra.mxu0 0.0
      %2509 = vmatprep.subr.mxu0 0.0
      %2510 = vmatpush1.msra.mxu0 0.0
      %2511 = vmatprep.subr.mxu0 0.0
      %2512 = vmatpush1.msra.mxu0 0.0
      %2513 = vmatprep.subr.mxu0 0.0
      %2514 = vmatpush1.msra.mxu0 0.0
      %2515 = vmatprep.subr.mxu0 0.0
      %2516 = vmatpush1.msra.mxu0 0.0
      %2517 = vmatprep.subr.mxu0 0.0
      %2518 = vmatpush1.msra.mxu0 0.0
      %2519 = vmatprep.subr.mxu0 0.0
      %2520 = vmatpush1.msra.mxu0 0.0
      %2521 = vmatprep.subr.mxu0 0.0
      %2522 = vmatpush1.msra.mxu0 0.0
      %2523 = vmatprep.subr.mxu0 0.0
      %2524 = vmatpush1.msra.mxu0 0.0
      %2525 = vmatprep.subr.mxu0 0.0
      %2526 = vmatpush1.msra.mxu0 0.0
      %2527 = vmatprep.subr.mxu0 0.0
      %2528 = vmatpush1.msra.mxu0 0.0
      %2529 = vmatprep.subr.mxu0 0.0
      %2530 = vmatpush1.msra.mxu0 0.0
      %2531 = vmatprep.subr.mxu0 0.0
      %2532 = vmatpush1.msra.mxu0 0.0
      %2533 = vmatprep.mubr.f32.mxu0 0.0
      %2534 = vmatmul.mubr.f32.gmra.mrb[0].mxu0 %v2467
      %v2535 = vpop.f32.mrb[0].mxu0
      %v2536 = vadd.f32 0.0, %v2535
      %v2537 = vpop.f32.mrb[0].mxu0
      %2538 = vdwg.mxu0
      %s2539 = scalar_lea.vmem %s9, 24
      %v2540 = vld [vmem:[%s2539] sm:$0xff]
      %v2542 = vsel %vm919, %v2536, 0
      %2544 = vmatprep.subr.mxu0 0.0
      %2545 = vmatpush1.msra.mxu0 %v2540
      %2546 = vmatprep.subr.mxu0 0.0
      %2547 = vmatpush1.msra.mxu0 0.0
      %2548 = vmatprep.subr.mxu0 0.0
      %2549 = vmatpush1.msra.mxu0 0.0
      %2550 = vmatprep.subr.mxu0 0.0
      %2551 = vmatpush1.msra.mxu0 0.0
      %2552 = vmatprep.subr.mxu0 0.0
      %2553 = vmatpush1.msra.mxu0 0.0
      %2554 = vmatprep.subr.mxu0 0.0
      %2555 = vmatpush1.msra.mxu0 0.0
      %2556 = vmatprep.subr.mxu0 0.0
      %2557 = vmatpush1.msra.mxu0 0.0
      %2558 = vmatprep.subr.mxu0 0.0
      %2559 = vmatpush1.msra.mxu0 0.0
      %2560 = vmatprep.subr.mxu0 0.0
      %2561 = vmatpush1.msra.mxu0 0.0
      %2562 = vmatprep.subr.mxu0 0.0
      %2563 = vmatpush1.msra.mxu0 0.0
      %2564 = vmatprep.subr.mxu0 0.0
      %2565 = vmatpush1.msra.mxu0 0.0
      %2566 = vmatprep.subr.mxu0 0.0
      %2567 = vmatpush1.msra.mxu0 0.0
      %2568 = vmatprep.subr.mxu0 0.0
      %2569 = vmatpush1.msra.mxu0 0.0
      %2570 = vmatprep.subr.mxu0 0.0
      %2571 = vmatpush1.msra.mxu0 0.0
      %2572 = vmatprep.subr.mxu0 0.0
      %2573 = vmatpush1.msra.mxu0 0.0
      %2574 = vmatprep.subr.mxu0 0.0
      %2575 = vmatpush1.msra.mxu0 0.0
      %2576 = vmatprep.subr.mxu0 0.0
      %2577 = vmatpush1.msra.mxu0 0.0
      %2578 = vmatprep.subr.mxu0 0.0
      %2579 = vmatpush1.msra.mxu0 0.0
      %2580 = vmatprep.subr.mxu0 0.0
      %2581 = vmatpush1.msra.mxu0 0.0
      %2582 = vmatprep.subr.mxu0 0.0
      %2583 = vmatpush1.msra.mxu0 0.0
      %2584 = vmatprep.subr.mxu0 0.0
      %2585 = vmatpush1.msra.mxu0 0.0
      %2586 = vmatprep.subr.mxu0 0.0
      %2587 = vmatpush1.msra.mxu0 0.0
      %2588 = vmatprep.subr.mxu0 0.0
      %2589 = vmatpush1.msra.mxu0 0.0
      %2590 = vmatprep.subr.mxu0 0.0
      %2591 = vmatpush1.msra.mxu0 0.0
      %2592 = vmatprep.subr.mxu0 0.0
      %2593 = vmatpush1.msra.mxu0 0.0
      %2594 = vmatprep.subr.mxu0 0.0
      %2595 = vmatpush1.msra.mxu0 0.0
      %2596 = vmatprep.subr.mxu0 0.0
      %2597 = vmatpush1.msra.mxu0 0.0
      %2598 = vmatprep.subr.mxu0 0.0
      %2599 = vmatpush1.msra.mxu0 0.0
      %2600 = vmatprep.subr.mxu0 0.0
      %2601 = vmatpush1.msra.mxu0 0.0
      %2602 = vmatprep.subr.mxu0 0.0
      %2603 = vmatpush1.msra.mxu0 0.0
      %2604 = vmatprep.subr.mxu0 0.0
      %2605 = vmatpush1.msra.mxu0 0.0
      %2606 = vmatprep.subr.mxu0 0.0
      %2607 = vmatpush1.msra.mxu0 0.0
      %2608 = vmatprep.mubr.f32.mxu0 0.0
      %2609 = vmatmul.mubr.f32.gmra.mrb[0].mxu0 %v2542
      %v2610 = vpop.f32.mrb[0].mxu0
      %v2611 = vadd.f32 0.0, %v2610
      %v2612 = vpop.f32.mrb[0].mxu0
      %2613 = vdwg.mxu0
      %v2614 = vadd.f32 %v2127, %v2611
      %v2615 = vld [vmem:[%s10] sm:$0x1]
      %v2617 = vlaneseq
      %v2618 = vshrl.u32 %v2617, 7
      %v2619 = vsub.s32 0, %v2618
      %v2620 = vrot.slane %v2615, %v2619
      %v2622 = vadd.f32 %v2614, %v2620
      %v2623 = vadd.f32 %v671, %v2622
      %v2624 = vld [vmem:[%s11] sm:$0x1]
      %v2625 = vld [vmem:[%s12] sm:$0x1]
      %v2626 = vsel %vm643, %v2623, 0.0
      %2627 = vadd.xlane.f32.xlu0 %v2626
      %v2628 = vpop.xlane.xlu0 %2627
      %v2629 = vmul.f32 %v2628, %v647
      %v2630 = vsub.f32 %v2623, %v2629
      %v2631 = vmul.f32 %v2630, %v2630
      %v2632 = vsel %vm643, %v2631, 0.0
      %2633 = vadd.xlane.f32.xlu0 %v2632
      %v2634 = vpop.xlane.xlu0 %2633
      %v2635 = vmul.f32 %v2634, %v647
      %v2636 = vadd.f32 %v2635, 1e-12
      %v2637 = vrsqrt.pop %v2636
      %v2638 = vmul.f32 %v2630, %v2637
      %v2640 = vlaneseq
      %v2641 = vshrl.u32 %v2640, 7
      %v2642 = vsub.s32 0, %v2641
      %v2643 = vrot.slane %v2624, %v2642
      %v2645 = vmul.f32 %v2638, %v2643
      %v2647 = vlaneseq
      %v2648 = vshrl.u32 %v2647, 7
      %v2649 = vsub.s32 0, %v2648
      %v2650 = vrot.slane %v2625, %v2649
      %v2652 = vadd.f32 %v2645, %v2650
      %v2653 = vld [vmem:[%s13] sm:$0xff]
      %v2654 = vld [vmem:[%s13 + $0x8] sm:$0xff]
      %v2655 = vld [vmem:[%s13 + $0x10] sm:$0xff]
      %v2656 = vld [vmem:[%s13 + $0x18] sm:$0xff]
      %v2657 = vld [vmem:[%s14] sm:$0x1]
      %v2659 = vlaneseq
      %v2660 = vshrl.u32 %v2659, 7
      %v2661 = vsub.s32 0, %v2660
      %v2662 = vrot.slane %v2657, %v2661
      %v2665 = vsel %vm643, %v2652, 0
      %2667 = vmatprep.subr.mxu0 0.0
      %2668 = vmatpush1.msra.mxu0 %v2653
      %2669 = vmatprep.subr.mxu0 0.0
      %2670 = vmatpush1.msra.mxu0 %v2654
      %2671 = vmatprep.subr.mxu0 0.0
      %2672 = vmatpush1.msra.mxu0 %v2655
      %2673 = vmatprep.subr.mxu0 0.0
      %2674 = vmatpush1.msra.mxu0 %v2656
      %2675 = vmatprep.subr.mxu0 0.0
      %2676 = vmatpush1.msra.mxu0 0.0
      %2677 = vmatprep.subr.mxu0 0.0
      %2678 = vmatpush1.msra.mxu0 0.0
      %2679 = vmatprep.subr.mxu0 0.0
      %2680 = vmatpush1.msra.mxu0 0.0
      %2681 = vmatprep.subr.mxu0 0.0
      %2682 = vmatpush1.msra.mxu0 0.0
      %2683 = vmatprep.subr.mxu0 0.0
      %2684 = vmatpush1.msra.mxu0 0.0
      %2685 = vmatprep.subr.mxu0 0.0
      %2686 = vmatpush1.msra.mxu0 0.0
      %2687 = vmatprep.subr.mxu0 0.0
      %2688 = vmatpush1.msra.mxu0 0.0
      %2689 = vmatprep.subr.mxu0 0.0
      %2690 = vmatpush1.msra.mxu0 0.0
      %2691 = vmatprep.subr.mxu0 0.0
      %2692 = vmatpush1.msra.mxu0 0.0
      %2693 = vmatprep.subr.mxu0 0.0
      %2694 = vmatpush1.msra.mxu0 0.0
      %2695 = vmatprep.subr.mxu0 0.0
      %2696 = vmatpush1.msra.mxu0 0.0
      %2697 = vmatprep.subr.mxu0 0.0
      %2698 = vmatpush1.msra.mxu0 0.0
      %2699 = vmatprep.subr.mxu0 0.0
      %2700 = vmatpush1.msra.mxu0 0.0
      %2701 = vmatprep.subr.mxu0 0.0
      %2702 = vmatpush1.msra.mxu0 0.0
      %2703 = vmatprep.subr.mxu0 0.0
      %2704 = vmatpush1.msra.mxu0 0.0
      %2705 = vmatprep.subr.mxu0 0.0
      %2706 = vmatpush1.msra.mxu0 0.0
      %2707 = vmatprep.subr.mxu0 0.0
      %2708 = vmatpush1.msra.mxu0 0.0
      %2709 = vmatprep.subr.mxu0 0.0
      %2710 = vmatpush1.msra.mxu0 0.0
      %2711 = vmatprep.subr.mxu0 0.0
      %2712 = vmatpush1.msra.mxu0 0.0
      %2713 = vmatprep.subr.mxu0 0.0
      %2714 = vmatpush1.msra.mxu0 0.0
      %2715 = vmatprep.subr.mxu0 0.0
      %2716 = vmatpush1.msra.mxu0 0.0
      %2717 = vmatprep.subr.mxu0 0.0
      %2718 = vmatpush1.msra.mxu0 0.0
      %2719 = vmatprep.subr.mxu0 0.0
      %2720 = vmatpush1.msra.mxu0 0.0
      %2721 = vmatprep.subr.mxu0 0.0
      %2722 = vmatpush1.msra.mxu0 0.0
      %2723 = vmatprep.subr.mxu0 0.0
      %2724 = vmatpush1.msra.mxu0 0.0
      %2725 = vmatprep.subr.mxu0 0.0
      %2726 = vmatpush1.msra.mxu0 0.0
      %2727 = vmatprep.subr.mxu0 0.0
      %2728 = vmatpush1.msra.mxu0 0.0
      %2729 = vmatprep.subr.mxu0 0.0
      %2730 = vmatpush1.msra.mxu0 0.0
      %2731 = vmatprep.mubr.f32.mxu0 0.0
      %2732 = vmatmul.mubr.f32.gmra.mrb[0].mxu0 %v2665
      %v2733 = vpop.f32.mrb[0].mxu0
      %v2734 = vadd.f32 %v2662, %v2733
      %v2735 = vpop.f32.mrb[0].mxu0
      %2736 = vdwg.mxu0
      %v2737 = vmul.f32 %v2734, 0.5
      %v2738 = vmul.f32 %v2734, 0.044715
      %v2739 = vmul.f32 %v2738, %v2734
      %v2740 = vmul.f32 %v2739, %v2734
      %v2741 = vadd.f32 %v2734, %v2740
      %v2742 = vmul.f32 %v2741, 0.7978846
      %v2743 = vtanh.pop %v2742
      %v2744 = vadd.f32 %v2743, 1.0
      %v2745 = vmul.f32 %v2737, %v2744
      %v2746 = vld [vmem:[%s15] sm:$0xff]
      %v2747 = vld [vmem:[%s15 + $0x8] sm:$0xff]
      %v2748 = vld [vmem:[%s15 + $0x10] sm:$0xff]
      %v2749 = vld [vmem:[%s15 + $0x18] sm:$0xff]
      %v2750 = vld [vmem:[%s15 + $0x20] sm:$0xff]
      %v2751 = vld [vmem:[%s15 + $0x28] sm:$0xff]
      %v2752 = vld [vmem:[%s15 + $0x30] sm:$0xff]
      %v2753 = vld [vmem:[%s15 + $0x38] sm:$0xff]
      %v2754 = vld [vmem:[%s16] sm:$0x1]
      %v2756 = vlaneseq
      %v2757 = vshrl.u32 %v2756, 7
      %v2758 = vsub.s32 0, %v2757
      %v2759 = vrot.slane %v2754, %v2758
      %vm2761 = vcmask 523264
      %v2763 = vsel %vm2761, %v2745, 0
      %2765 = vmatprep.subr.mxu0 0.0
      %2766 = vmatpush1.msra.mxu0 %v2746
      %2767 = vmatprep.subr.mxu0 0.0
      %2768 = vmatpush1.msra.mxu0 %v2747
      %2769 = vmatprep.subr.mxu0 0.0
      %2770 = vmatpush1.msra.mxu0 %v2748
      %2771 = vmatprep.subr.mxu0 0.0
      %2772 = vmatpush1.msra.mxu0 %v2749
      %2773 = vmatprep.subr.mxu0 0.0
      %2774 = vmatpush1.msra.mxu0 %v2750
      %2775 = vmatprep.subr.mxu0 0.0
      %2776 = vmatpush1.msra.mxu0 %v2751
      %2777 = vmatprep.subr.mxu0 0.0
      %2778 = vmatpush1.msra.mxu0 %v2752
      %2779 = vmatprep.subr.mxu0 0.0
      %2780 = vmatpush1.msra.mxu0 %v2753
      %2781 = vmatprep.subr.mxu0 0.0
      %2782 = vmatpush1.msra.mxu0 0.0
      %2783 = vmatprep.subr.mxu0 0.0
      %2784 = vmatpush1.msra.mxu0 0.0
      %2785 = vmatprep.subr.mxu0 0.0
      %2786 = vmatpush1.msra.mxu0 0.0
      %2787 = vmatprep.subr.mxu0 0.0
      %2788 = vmatpush1.msra.mxu0 0.0
      %2789 = vmatprep.subr.mxu0 0.0
      %2790 = vmatpush1.msra.mxu0 0.0
      %2791 = vmatprep.subr.mxu0 0.0
      %2792 = vmatpush1.msra.mxu0 0.0
      %2793 = vmatprep.subr.mxu0 0.0
      %2794 = vmatpush1.msra.mxu0 0.0
      %2795 = vmatprep.subr.mxu0 0.0
      %2796 = vmatpush1.msra.mxu0 0.0
      %2797 = vmatprep.subr.mxu0 0.0
      %2798 = vmatpush1.msra.mxu0 0.0
      %2799 = vmatprep.subr.mxu0 0.0
      %2800 = vmatpush1.msra.mxu0 0.0
      %2801 = vmatprep.subr.mxu0 0.0
      %2802 = vmatpush1.msra.mxu0 0.0
      %2803 = vmatprep.subr.mxu0 0.0
      %2804 = vmatpush1.msra.mxu0 0.0
      %2805 = vmatprep.subr.mxu0 0.0
      %2806 = vmatpush1.msra.mxu0 0.0
      %2807 = vmatprep.subr.mxu0 0.0
      %2808 = vmatpush1.msra.mxu0 0.0
      %2809 = vmatprep.subr.mxu0 0.0
      %2810 = vmatpush1.msra.mxu0 0.0
      %2811 = vmatprep.subr.mxu0 0.0
      %2812 = vmatpush1.msra.mxu0 0.0
      %2813 = vmatprep.subr.mxu0 0.0
      %2814 = vmatpush1.msra.mxu0 0.0
      %2815 = vmatprep.subr.mxu0 0.0
      %2816 = vmatpush1.msra.mxu0 0.0
      %2817 = vmatprep.subr.mxu0 0.0
      %2818 = vmatpush1.msra.mxu0 0.0
      %2819 = vmatprep.subr.mxu0 0.0
      %2820 = vmatpush1.msra.mxu0 0.0
      %2821 = vmatprep.subr.mxu0 0.0
      %2822 = vmatpush1.msra.mxu0 0.0
      %2823 = vmatprep.subr.mxu0 0.0
      %2824 = vmatpush1.msra.mxu0 0.0
      %2825 = vmatprep.subr.mxu0 0.0
      %2826 = vmatpush1.msra.mxu0 0.0
      %2827 = vmatprep.subr.mxu0 0.0
      %2828 = vmatpush1.msra.mxu0 0.0
      %2829 = vmatprep.mubr.f32.mxu0 0.0
      %2830 = vmatmul.mubr.f32.gmra.mrb[0].mxu0 %v2763
      %v2831 = vpop.f32.mrb[0].mxu0
      %v2832 = vadd.f32 %v2759, %v2831
      %v2833 = vpop.f32.mrb[0].mxu0
      %2834 = vdwg.mxu0
      %v2835 = vadd.f32 %v2652, %v2832
      %v2836 = vld [vmem:[%s17] sm:$0x1]
      %v2837 = vld [vmem:[%s18] sm:$0x1]
      %v2838 = vsel %vm643, %v2835, 0.0
      %2839 = vadd.xlane.f32.xlu0 %v2838
      %v2840 = vpop.xlane.xlu0 %2839
      %v2841 = vmul.f32 %v2840, %v647
      %v2842 = vsub.f32 %v2835, %v2841
      %v2843 = vmul.f32 %v2842, %v2842
      %v2844 = vsel %vm643, %v2843, 0.0
      %2845 = vadd.xlane.f32.xlu0 %v2844
      %v2846 = vpop.xlane.xlu0 %2845
      %v2847 = vmul.f32 %v2846, %v647
      %v2848 = vadd.f32 %v2847, 1e-12
      %v2849 = vrsqrt.pop %v2848
      %v2850 = vmul.f32 %v2842, %v2849
      %v2852 = vlaneseq
      %v2853 = vshrl.u32 %v2852, 7
      %v2854 = vsub.s32 0, %v2853
      %v2855 = vrot.slane %v2836, %v2854
      %v2857 = vmul.f32 %v2850, %v2855
      %v2859 = vlaneseq
      %v2860 = vshrl.u32 %v2859, 7
      %v2861 = vsub.s32 0, %v2860
      %v2862 = vrot.slane %v2837, %v2861
      %v2864 = vadd.f32 %v2857, %v2862
      %s2865 = scalar_lea.vmem %s634, 8
      %2866 = vst.msk [vmem:[%s2865] sm:$0xff] %vm643, %v2864
      %s2867 = scalar_lea.vmem %s3, 128
      %v2868 = vld [vmem:[%s2867] sm:$0xff]
      %v2869 = vld [vmem:[%s2867 + $0x8] sm:$0xff]
      %v2870 = vld [vmem:[%s2867 + $0x10] sm:$0xff]
      %v2871 = vld [vmem:[%s2867 + $0x18] sm:$0xff]
      %s2872 = scalar_lea.vmem %s4, 4
      %v2873 = vld [vmem:[%s2872] sm:$0x1]
      %v2875 = vlaneseq
      %v2876 = vshrl.u32 %v2875, 7
      %v2877 = vsub.s32 0, %v2876
      %v2878 = vrot.slane %v2873, %v2877
      %v2881 = vsel %vm643, %v2864, 0
      %2883 = vmatprep.subr.mxu0 0.0
      %2884 = vmatpush1.msra.mxu0 %v2868
      %2885 = vmatprep.subr.mxu0 0.0
      %2886 = vmatpush1.msra.mxu0 %v2869
      %2887 = vmatprep.subr.mxu0 0.0
      %2888 = vmatpush1.msra.mxu0 %v2870
      %2889 = vmatprep.subr.mxu0 0.0
      %2890 = vmatpush1.msra.mxu0 %v2871
      %2891 = vmatprep.subr.mxu0 0.0
      %2892 = vmatpush1.msra.mxu0 0.0
      %2893 = vmatprep.subr.mxu0 0.0
      %2894 = vmatpush1.msra.mxu0 0.0
      %2895 = vmatprep.subr.mxu0 0.0
      %2896 = vmatpush1.msra.mxu0 0.0
      %2897 = vmatprep.subr.mxu0 0.0
      %2898 = vmatpush1.msra.mxu0 0.0
      %2899 = vmatprep.subr.mxu0 0.0
      %2900 = vmatpush1.msra.mxu0 0.0
      %2901 = vmatprep.subr.mxu0 0.0
      %2902 = vmatpush1.msra.mxu0 0.0
      %2903 = vmatprep.subr.mxu0 0.0
      %2904 = vmatpush1.msra.mxu0 0.0
      %2905 = vmatprep.subr.mxu0 0.0
      %2906 = vmatpush1.msra.mxu0 0.0
      %2907 = vmatprep.subr.mxu0 0.0
      %2908 = vmatpush1.msra.mxu0 0.0
      %2909 = vmatprep.subr.mxu0 0.0
      %2910 = vmatpush1.msra.mxu0 0.0
      %2911 = vmatprep.subr.mxu0 0.0
      %2912 = vmatpush1.msra.mxu0 0.0
      %2913 = vmatprep.subr.mxu0 0.0
      %2914 = vmatpush1.msra.mxu0 0.0
      %2915 = vmatprep.subr.mxu0 0.0
      %2916 = vmatpush1.msra.mxu0 0.0
      %2917 = vmatprep.subr.mxu0 0.0
      %2918 = vmatpush1.msra.mxu0 0.0
      %2919 = vmatprep.subr.mxu0 0.0
      %2920 = vmatpush1.msra.mxu0 0.0
      %2921 = vmatprep.subr.mxu0 0.0
      %2922 = vmatpush1.msra.mxu0 0.0
      %2923 = vmatprep.subr.mxu0 0.0
      %2924 = vmatpush1.msra.mxu0 0.0
      %2925 = vmatprep.subr.mxu0 0.0
      %2926 = vmatpush1.msra.mxu0 0.0
      %2927 = vmatprep.subr.mxu0 0.0
      %2928 = vmatpush1.msra.mxu0 0.0
      %2929 = vmatprep.subr.mxu0 0.0
      %2930 = vmatpush1.msra.mxu0 0.0
      %2931 = vmatprep.subr.mxu0 0.0
      %2932 = vmatpush1.msra.mxu0 0.0
      %2933 = vmatprep.subr.mxu0 0.0
      %2934 = vmatpush1.msra.mxu0 0.0
      %2935 = vmatprep.subr.mxu0 0.0
      %2936 = vmatpush1.msra.mxu0 0.0
      %2937 = vmatprep.subr.mxu0 0.0
      %2938 = vmatpush1.msra.mxu0 0.0
      %2939 = vmatprep.subr.mxu0 0.0
      %2940 = vmatpush1.msra.mxu0 0.0
      %2941 = vmatprep.subr.mxu0 0.0
      %2942 = vmatpush1.msra.mxu0 0.0
      %2943 = vmatprep.subr.mxu0 0.0
      %2944 = vmatpush1.msra.mxu0 0.0
      %2945 = vmatprep.subr.mxu0 0.0
      %2946 = vmatpush1.msra.mxu0 0.0
      %2947 = vmatprep.mubr.f32.mxu0 0.0
      %2948 = vmatmul.mubr.f32.gmra.mrb[0].mxu0 %v2881
      %v2949 = vpop.f32.mrb[0].mxu0
      %v2950 = vadd.f32 %v2878, %v2949
      %v2951 = vpop.f32.mrb[0].mxu0
      %2952 = vdwg.mxu0
      %s2953 = scalar_lea.vmem %s5, 128
      %v2954 = vld [vmem:[%s2953] sm:$0xff]
      %v2955 = vld [vmem:[%s2953 + $0x8] sm:$0xff]
      %v2956 = vld [vmem:[%s2953 + $0x10] sm:$0xff]
      %v2957 = vld [vmem:[%s2953 + $0x18] sm:$0xff]
      %s2958 = scalar_lea.vmem %s6, 4
      %v2959 = vld [vmem:[%s2958] sm:$0x1]
      %v2961 = vlaneseq
      %v2962 = vshrl.u32 %v2961, 7
      %v2963 = vsub.s32 0, %v2962
      %v2964 = vrot.slane %v2959, %v2963
      %2966 = vmatprep.subr.mxu0 0.0
      %2967 = vmatpush1.msra.mxu0 %v2954
      %2968 = vmatprep.subr.mxu0 0.0
      %2969 = vmatpush1.msra.mxu0 %v2955
      %2970 = vmatprep.subr.mxu0 0.0
      %2971 = vmatpush1.msra.mxu0 %v2956
      %2972 = vmatprep.subr.mxu0 0.0
      %2973 = vmatpush1.msra.mxu0 %v2957
      %2974 = vmatprep.subr.mxu0 0.0
      %2975 = vmatpush1.msra.mxu0 0.0
      %2976 = vmatprep.subr.mxu0 0.0
      %2977 = vmatpush1.msra.mxu0 0.0
      %2978 = vmatprep.subr.mxu0 0.0
      %2979 = vmatpush1.msra.mxu0 0.0
      %2980 = vmatprep.subr.mxu0 0.0
      %2981 = vmatpush1.msra.mxu0 0.0
      %2982 = vmatprep.subr.mxu0 0.0
      %2983 = vmatpush1.msra.mxu0 0.0
      %2984 = vmatprep.subr.mxu0 0.0
      %2985 = vmatpush1.msra.mxu0 0.0
      %2986 = vmatprep.subr.mxu0 0.0
      %2987 = vmatpush1.msra.mxu0 0.0
      %2988 = vmatprep.subr.mxu0 0.0
      %2989 = vmatpush1.msra.mxu0 0.0
      %2990 = vmatprep.subr.mxu0 0.0
      %2991 = vmatpush1.msra.mxu0 0.0
      %2992 = vmatprep.subr.mxu0 0.0
      %2993 = vmatpush1.msra.mxu0 0.0
      %2994 = vmatprep.subr.mxu0 0.0
      %2995 = vmatpush1.msra.mxu0 0.0
      %2996 = vmatprep.subr.mxu0 0.0
      %2997 = vmatpush1.msra.mxu0 0.0
      %2998 = vmatprep.subr.mxu0 0.0
      %2999 = vmatpush1.msra.mxu0 0.0
      %3000 = vmatprep.subr.mxu0 0.0
      %3001 = vmatpush1.msra.mxu0 0.0
      %3002 = vmatprep.subr.mxu0 0.0
      %3003 = vmatpush1.msra.mxu0 0.0
      %3004 = vmatprep.subr.mxu0 0.0
      %3005 = vmatpush1.msra.mxu0 0.0
      %3006 = vmatprep.subr.mxu0 0.0
      %3007 = vmatpush1.msra.mxu0 0.0
      %3008 = vmatprep.subr.mxu0 0.0
      %3009 = vmatpush1.msra.mxu0 0.0
      %3010 = vmatprep.subr.mxu0 0.0
      %3011 = vmatpush1.msra.mxu0 0.0
      %3012 = vmatprep.subr.mxu0 0.0
      %3013 = vmatpush1.msra.mxu0 0.0
      %3014 = vmatprep.subr.mxu0 0.0
      %3015 = vmatpush1.msra.mxu0 0.0
      %3016 = vmatprep.subr.mxu0 0.0
      %3017 = vmatpush1.msra.mxu0 0.0
      %3018 = vmatprep.subr.mxu0 0.0
      %3019 = vmatpush1.msra.mxu0 0.0
      %3020 = vmatprep.subr.mxu0 0.0
      %3021 = vmatpush1.msra.mxu0 0.0
      %3022 = vmatprep.subr.mxu0 0.0
      %3023 = vmatpush1.msra.mxu0 0.0
      %3024 = vmatprep.subr.mxu0 0.0
      %3025 = vmatpush1.msra.mxu0 0.0
      %3026 = vmatprep.subr.mxu0 0.0
      %3027 = vmatpush1.msra.mxu0 0.0
      %3028 = vmatprep.subr.mxu0 0.0
      %3029 = vmatpush1.msra.mxu0 0.0
      %3030 = vmatprep.mubr.f32.mxu0 0.0
      %3031 = vmatmul.mubr.f32.gmra.mrb[0].mxu0 %v2881
      %v3032 = vpop.f32.mrb[0].mxu0
      %v3033 = vadd.f32 %v2964, %v3032
      %v3034 = vpop.f32.mrb[0].mxu0
      %3035 = vdwg.mxu0
      %s3036 = scalar_lea.vmem %s7, 128
      %v3037 = vld [vmem:[%s3036] sm:$0xff]
      %v3038 = vld [vmem:[%s3036 + $0x8] sm:$0xff]
      %v3039 = vld [vmem:[%s3036 + $0x10] sm:$0xff]
      %v3040 = vld [vmem:[%s3036 + $0x18] sm:$0xff]
      %s3041 = scalar_lea.vmem %s8, 4
      %v3042 = vld [vmem:[%s3041] sm:$0x1]
      %v3044 = vlaneseq
      %v3045 = vshrl.u32 %v3044, 7
      %v3046 = vsub.s32 0, %v3045
      %v3047 = vrot.slane %v3042, %v3046
      %3049 = vmatprep.subr.mxu0 0.0
      %3050 = vmatpush1.msra.mxu0 %v3037
      %3051 = vmatprep.subr.mxu0 0.0
      %3052 = vmatpush1.msra.mxu0 %v3038
      %3053 = vmatprep.subr.mxu0 0.0
      %3054 = vmatpush1.msra.mxu0 %v3039
      %3055 = vmatprep.subr.mxu0 0.0
      %3056 = vmatpush1.msra.mxu0 %v3040
      %3057 = vmatprep.subr.mxu0 0.0
      %3058 = vmatpush1.msra.mxu0 0.0
      %3059 = vmatprep.subr.mxu0 0.0
      %3060 = vmatpush1.msra.mxu0 0.0
      %3061 = vmatprep.subr.mxu0 0.0
      %3062 = vmatpush1.msra.mxu0 0.0
      %3063 = vmatprep.subr.mxu0 0.0
      %3064 = vmatpush1.msra.mxu0 0.0
      %3065 = vmatprep.subr.mxu0 0.0
      %3066 = vmatpush1.msra.mxu0 0.0
      %3067 = vmatprep.subr.mxu0 0.0
      %3068 = vmatpush1.msra.mxu0 0.0
      %3069 = vmatprep.subr.mxu0 0.0
      %3070 = vmatpush1.msra.mxu0 0.0
      %3071 = vmatprep.subr.mxu0 0.0
      %3072 = vmatpush1.msra.mxu0 0.0
      %3073 = vmatprep.subr.mxu0 0.0
      %3074 = vmatpush1.msra.mxu0 0.0
      %3075 = vmatprep.subr.mxu0 0.0
      %3076 = vmatpush1.msra.mxu0 0.0
      %3077 = vmatprep.subr.mxu0 0.0
      %3078 = vmatpush1.msra.mxu0 0.0
      %3079 = vmatprep.subr.mxu0 0.0
      %3080 = vmatpush1.msra.mxu0 0.0
      %3081 = vmatprep.subr.mxu0 0.0
      %3082 = vmatpush1.msra.mxu0 0.0
      %3083 = vmatprep.subr.mxu0 0.0
      %3084 = vmatpush1.msra.mxu0 0.0
      %3085 = vmatprep.subr.mxu0 0.0
      %3086 = vmatpush1.msra.mxu0 0.0
      %3087 = vmatprep.subr.mxu0 0.0
      %3088 = vmatpush1.msra.mxu0 0.0
      %3089 = vmatprep.subr.mxu0 0.0
      %3090 = vmatpush1.msra.mxu0 0.0
      %3091 = vmatprep.subr.mxu0 0.0
      %3092 = vmatpush1.msra.mxu0 0.0
      %3093 = vmatprep.subr.mxu0 0.0
      %3094 = vmatpush1.msra.mxu0 0.0
      %3095 = vmatprep.subr.mxu0 0.0
      %3096 = vmatpush1.msra.mxu0 0.0
      %3097 = vmatprep.subr.mxu0 0.0
      %3098 = vmatpush1.msra.mxu0 0.0
      %3099 = vmatprep.subr.mxu0 0.0
      %3100 = vmatpush1.msra.mxu0 0.0
      %3101 = vmatprep.subr.mxu0 0.0
      %3102 = vmatpush1.msra.mxu0 0.0
      %3103 = vmatprep.subr.mxu0 0.0
      %3104 = vmatpush1.msra.mxu0 0.0
      %3105 = vmatprep.subr.mxu0 0.0
      %3106 = vmatpush1.msra.mxu0 0.0
      %3107 = vmatprep.subr.mxu0 0.0
      %3108 = vmatpush1.msra.mxu0 0.0
      %3109 = vmatprep.subr.mxu0 0.0
      %3110 = vmatpush1.msra.mxu0 0.0
      %3111 = vmatprep.subr.mxu0 0.0
      %3112 = vmatpush1.msra.mxu0 0.0
      %3113 = vmatprep.mubr.f32.mxu0 0.0
      %3114 = vmatmul.mubr.f32.gmra.mrb[0].mxu0 %v2881
      %v3115 = vpop.f32.mrb[0].mxu0
      %v3116 = vadd.f32 %v3047, %v3115
      %v3117 = vpop.f32.mrb[0].mxu0
      %3118 = vdwg.mxu0
      %v3120 = vsel %vm919, %v2950, 0
      %v3123 = vsel %vm919, %v3033, 0
      %3125 = vmatprep.subr.mxu0 0.0
      %3126 = vmatpush1.xpose.msra.mxu0 %v3123
      %3127 = vmatprep.subr.mxu0 0.0
      %3128 = vmatpush1.xpose.msra.mxu0 0.0
      %3129 = vmatprep.subr.mxu0 0.0
      %3130 = vmatpush1.xpose.msra.mxu0 0.0
      %3131 = vmatprep.subr.mxu0 0.0
      %3132 = vmatpush1.xpose.msra.mxu0 0.0
      %3133 = vmatprep.subr.mxu0 0.0
      %3134 = vmatpush1.xpose.msra.mxu0 0.0
      %3135 = vmatprep.subr.mxu0 0.0
      %3136 = vmatpush1.xpose.msra.mxu0 0.0
      %3137 = vmatprep.subr.mxu0 0.0
      %3138 = vmatpush1.xpose.msra.mxu0 0.0
      %3139 = vmatprep.subr.mxu0 0.0
      %3140 = vmatpush1.xpose.msra.mxu0 0.0
      %3141 = vmatprep.subr.mxu0 0.0
      %3142 = vmatpush1.xpose.msra.mxu0 0.0
      %3143 = vmatprep.subr.mxu0 0.0
      %3144 = vmatpush1.xpose.msra.mxu0 0.0
      %3145 = vmatprep.subr.mxu0 0.0
      %3146 = vmatpush1.xpose.msra.mxu0 0.0
      %3147 = vmatprep.subr.mxu0 0.0
      %3148 = vmatpush1.xpose.msra.mxu0 0.0
      %3149 = vmatprep.subr.mxu0 0.0
      %3150 = vmatpush1.xpose.msra.mxu0 0.0
      %3151 = vmatprep.subr.mxu0 0.0
      %3152 = vmatpush1.xpose.msra.mxu0 0.0
      %3153 = vmatprep.subr.mxu0 0.0
      %3154 = vmatpush1.xpose.msra.mxu0 0.0
      %3155 = vmatprep.subr.mxu0 0.0
      %3156 = vmatpush1.xpose.msra.mxu0 0.0
      %3157 = vmatprep.subr.mxu0 0.0
      %3158 = vmatpush1.xpose.msra.mxu0 0.0
      %3159 = vmatprep.subr.mxu0 0.0
      %3160 = vmatpush1.xpose.msra.mxu0 0.0
      %3161 = vmatprep.subr.mxu0 0.0
      %3162 = vmatpush1.xpose.msra.mxu0 0.0
      %3163 = vmatprep.subr.mxu0 0.0
      %3164 = vmatpush1.xpose.msra.mxu0 0.0
      %3165 = vmatprep.subr.mxu0 0.0
      %3166 = vmatpush1.xpose.msra.mxu0 0.0
      %3167 = vmatprep.subr.mxu0 0.0
      %3168 = vmatpush1.xpose.msra.mxu0 0.0
      %3169 = vmatprep.subr.mxu0 0.0
      %3170 = vmatpush1.xpose.msra.mxu0 0.0
      %3171 = vmatprep.subr.mxu0 0.0
      %3172 = vmatpush1.xpose.msra.mxu0 0.0
      %3173 = vmatprep.subr.mxu0 0.0
      %3174 = vmatpush1.xpose.msra.mxu0 0.0
      %3175 = vmatprep.subr.mxu0 0.0
      %3176 = vmatpush1.xpose.msra.mxu0 0.0
      %3177 = vmatprep.subr.mxu0 0.0
      %3178 = vmatpush1.xpose.msra.mxu0 0.0
      %3179 = vmatprep.subr.mxu0 0.0
      %3180 = vmatpush1.xpose.msra.mxu0 0.0
      %3181 = vmatprep.subr.mxu0 0.0
      %3182 = vmatpush1.xpose.msra.mxu0 0.0
      %3183 = vmatprep.subr.mxu0 0.0
      %3184 = vmatpush1.xpose.msra.mxu0 0.0
      %3185 = vmatprep.subr.mxu0 0.0
      %3186 = vmatpush1.xpose.msra.mxu0 0.0
      %3187 = vmatprep.subr.mxu0 0.0
      %3188 = vmatpush1.xpose.msra.mxu0 0.0
      %3189 = vmatprep.mubr.f32.mxu0 0.0
      %3190 = vmatmul.mubr.f32.gmra.mrb[0].mxu0 %v3120
      %v3191 = vpop.f32.mrb[0].mxu0
      %v3192 = vadd.f32 0.0, %v3191
      %v3193 = vpop.f32.mrb[0].mxu0
      %3194 = vdwg.mxu0
      %v3195 = vsel %vm919, %v3192, -inf
      %3196 = vmax.xlane.f32.xlu0 %v3195
      %v3197 = vpop.xlane.xlu0 %3196
      %v3198 = vsub.f32 %v3192, %v3197
      %v3199 = vmul.f32 %v3198, 1.442695
      %v3200 = vpow.pop %v3199
      %v3201 = vsel %vm919, %v3200, 0.0
      %3202 = vadd.xlane.f32.xlu0 %v3201
      %v3203 = vpop.xlane.xlu0 %3202
      %v3204 = vrcp.pop %v3203
      %v3205 = vmul.f32 %v3200, %v3204
      %s3206 = scalar_lea.vmem %s639, 32
      %3207 = vst.msk [vmem:[%s3206] sm:$0xff] %vm919, %v3205
      %v3209 = vsel %vm919, %v3205, 0
      %3211 = vmatprep.subr.mxu0 0.0
      %3212 = vmatpush1.msra.mxu0 %v3116
      %3213 = vmatprep.subr.mxu0 0.0
      %3214 = vmatpush1.msra.mxu0 0.0
      %3215 = vmatprep.subr.mxu0 0.0
      %3216 = vmatpush1.msra.mxu0 0.0
      %3217 = vmatprep.subr.mxu0 0.0
      %3218 = vmatpush1.msra.mxu0 0.0
      %3219 = vmatprep.subr.mxu0 0.0
      %3220 = vmatpush1.msra.mxu0 0.0
      %3221 = vmatprep.subr.mxu0 0.0
      %3222 = vmatpush1.msra.mxu0 0.0
      %3223 = vmatprep.subr.mxu0 0.0
      %3224 = vmatpush1.msra.mxu0 0.0
      %3225 = vmatprep.subr.mxu0 0.0
      %3226 = vmatpush1.msra.mxu0 0.0
      %3227 = vmatprep.subr.mxu0 0.0
      %3228 = vmatpush1.msra.mxu0 0.0
      %3229 = vmatprep.subr.mxu0 0.0
      %3230 = vmatpush1.msra.mxu0 0.0
      %3231 = vmatprep.subr.mxu0 0.0
      %3232 = vmatpush1.msra.mxu0 0.0
      %3233 = vmatprep.subr.mxu0 0.0
      %3234 = vmatpush1.msra.mxu0 0.0
      %3235 = vmatprep.subr.mxu0 0.0
      %3236 = vmatpush1.msra.mxu0 0.0
      %3237 = vmatprep.subr.mxu0 0.0
      %3238 = vmatpush1.msra.mxu0 0.0
      %3239 = vmatprep.subr.mxu0 0.0
      %3240 = vmatpush1.msra.mxu0 0.0
      %3241 = vmatprep.subr.mxu0 0.0
      %3242 = vmatpush1.msra.mxu0 0.0
      %3243 = vmatprep.subr.mxu0 0.0
      %3244 = vmatpush1.msra.mxu0 0.0
      %3245 = vmatprep.subr.mxu0 0.0
      %3246 = vmatpush1.msra.mxu0 0.0
      %3247 = vmatprep.subr.mxu0 0.0
      %3248 = vmatpush1.msra.mxu0 0.0
      %3249 = vmatprep.subr.mxu0 0.0
      %3250 = vmatpush1.msra.mxu0 0.0
      %3251 = vmatprep.subr.mxu0 0.0
      %3252 = vmatpush1.msra.mxu0 0.0
      %3253 = vmatprep.subr.mxu0 0.0
      %3254 = vmatpush1.msra.mxu0 0.0
      %3255 = vmatprep.subr.mxu0 0.0
      %3256 = vmatpush1.msra.mxu0 0.0
      %3257 = vmatprep.subr.mxu0 0.0
      %3258 = vmatpush1.msra.mxu0 0.0
      %3259 = vmatprep.subr.mxu0 0.0
      %3260 = vmatpush1.msra.mxu0 0.0
      %3261 = vmatprep.subr.mxu0 0.0
      %3262 = vmatpush1.msra.mxu0 0.0
      %3263 = vmatprep.subr.mxu0 0.0
      %3264 = vmatpush1.msra.mxu0 0.0
      %3265 = vmatprep.subr.mxu0 0.0
      %3266 = vmatpush1.msra.mxu0 0.0
      %3267 = vmatprep.subr.mxu0 0.0
      %3268 = vmatpush1.msra.mxu0 0.0
      %3269 = vmatprep.subr.mxu0 0.0
      %3270 = vmatpush1.msra.mxu0 0.0
      %3271 = vmatprep.subr.mxu0 0.0
      %3272 = vmatpush1.msra.mxu0 0.0
      %3273 = vmatprep.subr.mxu0 0.0
      %3274 = vmatpush1.msra.mxu0 0.0
      %3275 = vmatprep.mubr.f32.mxu0 0.0
      %3276 = vmatmul.mubr.f32.gmra.mrb[0].mxu0 %v3209
      %v3277 = vpop.f32.mrb[0].mxu0
      %v3278 = vadd.f32 0.0, %v3277
      %v3279 = vpop.f32.mrb[0].mxu0
      %3280 = vdwg.mxu0
      %s3281 = scalar_lea.vmem %s9, 32
      %v3282 = vld [vmem:[%s3281] sm:$0xff]
      %s3283 = scalar_lea.vmem %s3, 160
      %v3284 = vld [vmem:[%s3283] sm:$0xff]
      %v3285 = vld [vmem:[%s3283 + $0x8] sm:$0xff]
      %v3286 = vld [vmem:[%s3283 + $0x10] sm:$0xff]
      %v3287 = vld [vmem:[%s3283 + $0x18] sm:$0xff]
      %s3288 = scalar_lea.vmem %s4, 5
      %v3289 = vld [vmem:[%s3288] sm:$0x1]
      %v3291 = vlaneseq
      %v3292 = vshrl.u32 %v3291, 7
      %v3293 = vsub.s32 0, %v3292
      %v3294 = vrot.slane %v3289, %v3293
      %3296 = vmatprep.subr.mxu0 0.0
      %3297 = vmatpush1.msra.mxu0 %v3284
      %3298 = vmatprep.subr.mxu0 0.0
      %3299 = vmatpush1.msra.mxu0 %v3285
      %3300 = vmatprep.subr.mxu0 0.0
      %3301 = vmatpush1.msra.mxu0 %v3286
      %3302 = vmatprep.subr.mxu0 0.0
      %3303 = vmatpush1.msra.mxu0 %v3287
      %3304 = vmatprep.subr.mxu0 0.0
      %3305 = vmatpush1.msra.mxu0 0.0
      %3306 = vmatprep.subr.mxu0 0.0
      %3307 = vmatpush1.msra.mxu0 0.0
      %3308 = vmatprep.subr.mxu0 0.0
      %3309 = vmatpush1.msra.mxu0 0.0
      %3310 = vmatprep.subr.mxu0 0.0
      %3311 = vmatpush1.msra.mxu0 0.0
      %3312 = vmatprep.subr.mxu0 0.0
      %3313 = vmatpush1.msra.mxu0 0.0
      %3314 = vmatprep.subr.mxu0 0.0
      %3315 = vmatpush1.msra.mxu0 0.0
      %3316 = vmatprep.subr.mxu0 0.0
      %3317 = vmatpush1.msra.mxu0 0.0
      %3318 = vmatprep.subr.mxu0 0.0
      %3319 = vmatpush1.msra.mxu0 0.0
      %3320 = vmatprep.subr.mxu0 0.0
      %3321 = vmatpush1.msra.mxu0 0.0
      %3322 = vmatprep.subr.mxu0 0.0
      %3323 = vmatpush1.msra.mxu0 0.0
      %3324 = vmatprep.subr.mxu0 0.0
      %3325 = vmatpush1.msra.mxu0 0.0
      %3326 = vmatprep.subr.mxu0 0.0
      %3327 = vmatpush1.msra.mxu0 0.0
      %3328 = vmatprep.subr.mxu0 0.0
      %3329 = vmatpush1.msra.mxu0 0.0
      %3330 = vmatprep.subr.mxu0 0.0
      %3331 = vmatpush1.msra.mxu0 0.0
      %3332 = vmatprep.subr.mxu0 0.0
      %3333 = vmatpush1.msra.mxu0 0.0
      %3334 = vmatprep.subr.mxu0 0.0
      %3335 = vmatpush1.msra.mxu0 0.0
      %3336 = vmatprep.subr.mxu0 0.0
      %3337 = vmatpush1.msra.mxu0 0.0
      %3338 = vmatprep.subr.mxu0 0.0
      %3339 = vmatpush1.msra.mxu0 0.0
      %3340 = vmatprep.subr.mxu0 0.0
      %3341 = vmatpush1.msra.mxu0 0.0
      %3342 = vmatprep.subr.mxu0 0.0
      %3343 = vmatpush1.msra.mxu0 0.0
      %3344 = vmatprep.subr.mxu0 0.0
      %3345 = vmatpush1.msra.mxu0 0.0
      %3346 = vmatprep.subr.mxu0 0.0
      %3347 = vmatpush1.msra.mxu0 0.0
      %3348 = vmatprep.subr.mxu0 0.0
      %3349 = vmatpush1.msra.mxu0 0.0
      %3350 = vmatprep.subr.mxu0 0.0
      %3351 = vmatpush1.msra.mxu0 0.0
      %3352 = vmatprep.subr.mxu0 0.0
      %3353 = vmatpush1.msra.mxu0 0.0
      %3354 = vmatprep.subr.mxu0 0.0
      %3355 = vmatpush1.msra.mxu0 0.0
      %3356 = vmatprep.subr.mxu0 0.0
      %3357 = vmatpush1.msra.mxu0 0.0
      %3358 = vmatprep.subr.mxu0 0.0
      %3359 = vmatpush1.msra.mxu0 0.0
      %3360 = vmatprep.mubr.f32.mxu0 0.0
      %3361 = vmatmul.mubr.f32.gmra.mrb[0].mxu0 %v2881
      %v3362 = vpop.f32.mrb[0].mxu0
      %v3363 = vadd.f32 %v3294, %v3362
      %v3364 = vpop.f32.mrb[0].mxu0
      %3365 = vdwg.mxu0
      %s3366 = scalar_lea.vmem %s5, 160
      %v3367 = vld [vmem:[%s3366] sm:$0xff]
      %v3368 = vld [vmem:[%s3366 + $0x8] sm:$0xff]
      %v3369 = vld [vmem:[%s3366 + $0x10] sm:$0xff]
      %v3370 = vld [vmem:[%s3366 + $0x18] sm:$0xff]
      %s3371 = scalar_lea.vmem %s6, 5
      %v3372 = vld [vmem:[%s3371] sm:$0x1]
      %v3374 = vlaneseq
      %v3375 = vshrl.u32 %v3374, 7
      %v3376 = vsub.s32 0, %v3375
      %v3377 = vrot.slane %v3372, %v3376
      %3379 = vmatprep.subr.mxu0 0.0
      %3380 = vmatpush1.msra.mxu0 %v3367
      %3381 = vmatprep.subr.mxu0 0.0
      %3382 = vmatpush1.msra.mxu0 %v3368
      %3383 = vmatprep.subr.mxu0 0.0
      %3384 = vmatpush1.msra.mxu0 %v3369
      %3385 = vmatprep.subr.mxu0 0.0
      %3386 = vmatpush1.msra.mxu0 %v3370
      %3387 = vmatprep.subr.mxu0 0.0
      %3388 = vmatpush1.msra.mxu0 0.0
      %3389 = vmatprep.subr.mxu0 0.0
      %3390 = vmatpush1.msra.mxu0 0.0
      %3391 = vmatprep.subr.mxu0 0.0
      %3392 = vmatpush1.msra.mxu0 0.0
      %3393 = vmatprep.subr.mxu0 0.0
      %3394 = vmatpush1.msra.mxu0 0.0
      %3395 = vmatprep.subr.mxu0 0.0
      %3396 = vmatpush1.msra.mxu0 0.0
      %3397 = vmatprep.subr.mxu0 0.0
      %3398 = vmatpush1.msra.mxu0 0.0
      %3399 = vmatprep.subr.mxu0 0.0
      %3400 = vmatpush1.msra.mxu0 0.0
      %3401 = vmatprep.subr.mxu0 0.0
      %3402 = vmatpush1.msra.mxu0 0.0
      %3403 = vmatprep.subr.mxu0 0.0
      %3404 = vmatpush1.msra.mxu0 0.0
      %3405 = vmatprep.subr.mxu0 0.0
      %3406 = vmatpush1.msra.mxu0 0.0
      %3407 = vmatprep.subr.mxu0 0.0
      %3408 = vmatpush1.msra.mxu0 0.0
      %3409 = vmatprep.subr.mxu0 0.0
      %3410 = vmatpush1.msra.mxu0 0.0
      %3411 = vmatprep.subr.mxu0 0.0
      %3412 = vmatpush1.msra.mxu0 0.0
      %3413 = vmatprep.subr.mxu0 0.0
      %3414 = vmatpush1.msra.mxu0 0.0
      %3415 = vmatprep.subr.mxu0 0.0
      %3416 = vmatpush1.msra.mxu0 0.0
      %3417 = vmatprep.subr.mxu0 0.0
      %3418 = vmatpush1.msra.mxu0 0.0
      %3419 = vmatprep.subr.mxu0 0.0
      %3420 = vmatpush1.msra.mxu0 0.0
      %3421 = vmatprep.subr.mxu0 0.0
      %3422 = vmatpush1.msra.mxu0 0.0
      %3423 = vmatprep.subr.mxu0 0.0
      %3424 = vmatpush1.msra.mxu0 0.0
      %3425 = vmatprep.subr.mxu0 0.0
      %3426 = vmatpush1.msra.mxu0 0.0
      %3427 = vmatprep.subr.mxu0 0.0
      %3428 = vmatpush1.msra.mxu0 0.0
      %3429 = vmatprep.subr.mxu0 0.0
      %3430 = vmatpush1.msra.mxu0 0.0
      %3431 = vmatprep.subr.mxu0 0.0
      %3432 = vmatpush1.msra.mxu0 0.0
      %3433 = vmatprep.subr.mxu0 0.0
      %3434 = vmatpush1.msra.mxu0 0.0
      %3435 = vmatprep.subr.mxu0 0.0
      %3436 = vmatpush1.msra.mxu0 0.0
      %3437 = vmatprep.subr.mxu0 0.0
      %3438 = vmatpush1.msra.mxu0 0.0
      %3439 = vmatprep.subr.mxu0 0.0
      %3440 = vmatpush1.msra.mxu0 0.0
      %3441 = vmatprep.subr.mxu0 0.0
      %3442 = vmatpush1.msra.mxu0 0.0
      %3443 = vmatprep.mubr.f32.mxu0 0.0
      %3444 = vmatmul.mubr.f32.gmra.mrb[0].mxu0 %v2881
      %v3445 = vpop.f32.mrb[0].mxu0
      %v3446 = vadd.f32 %v3377, %v3445
      %v3447 = vpop.f32.mrb[0].mxu0
      %3448 = vdwg.mxu0
      %s3449 = scalar_lea.vmem %s7, 160
      %v3450 = vld [vmem:[%s3449] sm:$0xff]
      %v3451 = vld [vmem:[%s3449 + $0x8] sm:$0xff]
      %v3452 = vld [vmem:[%s3449 + $0x10] sm:$0xff]
      %v3453 = vld [vmem:[%s3449 + $0x18] sm:$0xff]
      %s3454 = scalar_lea.vmem %s8, 5
      %v3455 = vld [vmem:[%s3454] sm:$0x1]
      %v3457 = vlaneseq
      %v3458 = vshrl.u32 %v3457, 7
      %v3459 = vsub.s32 0, %v3458
      %v3460 = vrot.slane %v3455, %v3459
      %3462 = vmatprep.subr.mxu0 0.0
      %3463 = vmatpush1.msra.mxu0 %v3450
      %3464 = vmatprep.subr.mxu0 0.0
      %3465 = vmatpush1.msra.mxu0 %v3451
      %3466 = vmatprep.subr.mxu0 0.0
      %3467 = vmatpush1.msra.mxu0 %v3452
      %3468 = vmatprep.subr.mxu0 0.0
      %3469 = vmatpush1.msra.mxu0 %v3453
      %3470 = vmatprep.subr.mxu0 0.0
      %3471 = vmatpush1.msra.mxu0 0.0
      %3472 = vmatprep.subr.mxu0 0.0
      %3473 = vmatpush1.msra.mxu0 0.0
      %3474 = vmatprep.subr.mxu0 0.0
      %3475 = vmatpush1.msra.mxu0 0.0
      %3476 = vmatprep.subr.mxu0 0.0
      %3477 = vmatpush1.msra.mxu0 0.0
      %3478 = vmatprep.subr.mxu0 0.0
      %3479 = vmatpush1.msra.mxu0 0.0
      %3480 = vmatprep.subr.mxu0 0.0
      %3481 = vmatpush1.msra.mxu0 0.0
      %3482 = vmatprep.subr.mxu0 0.0
      %3483 = vmatpush1.msra.mxu0 0.0
      %3484 = vmatprep.subr.mxu0 0.0
      %3485 = vmatpush1.msra.mxu0 0.0
      %3486 = vmatprep.subr.mxu0 0.0
      %3487 = vmatpush1.msra.mxu0 0.0
      %3488 = vmatprep.subr.mxu0 0.0
      %3489 = vmatpush1.msra.mxu0 0.0
      %3490 = vmatprep.subr.mxu0 0.0
      %3491 = vmatpush1.msra.mxu0 0.0
      %3492 = vmatprep.subr.mxu0 0.0
      %3493 = vmatpush1.msra.mxu0 0.0
      %3494 = vmatprep.subr.mxu0 0.0
      %3495 = vmatpush1.msra.mxu0 0.0
      %3496 = vmatprep.subr.mxu0 0.0
      %3497 = vmatpush1.msra.mxu0 0.0
      %3498 = vmatprep.subr.mxu0 0.0
      %3499 = vmatpush1.msra.mxu0 0.0
      %3500 = vmatprep.subr.mxu0 0.0
      %3501 = vmatpush1.msra.mxu0 0.0
      %3502 = vmatprep.subr.mxu0 0.0
      %3503 = vmatpush1.msra.mxu0 0.0
      %3504 = vmatprep.subr.mxu0 0.0
      %3505 = vmatpush1.msra.mxu0 0.0
      %3506 = vmatprep.subr.mxu0 0.0
      %3507 = vmatpush1.msra.mxu0 0.0
      %3508 = vmatprep.subr.mxu0 0.0
      %3509 = vmatpush1.msra.mxu0 0.0
      %3510 = vmatprep.subr.mxu0 0.0
      %3511 = vmatpush1.msra.mxu0 0.0
      %3512 = vmatprep.subr.mxu0 0.0
      %3513 = vmatpush1.msra.mxu0 0.0
      %3514 = vmatprep.subr.mxu0 0.0
      %3515 = vmatpush1.msra.mxu0 0.0
      %3516 = vmatprep.subr.mxu0 0.0
      %3517 = vmatpush1.msra.mxu0 0.0
      %3518 = vmatprep.subr.mxu0 0.0
      %3519 = vmatpush1.msra.mxu0 0.0
      %3520 = vmatprep.subr.mxu0 0.0
      %3521 = vmatpush1.msra.mxu0 0.0
      %3522 = vmatprep.subr.mxu0 0.0
      %3523 = vmatpush1.msra.mxu0 0.0
      %3524 = vmatprep.subr.mxu0 0.0
      %3525 = vmatpush1.msra.mxu0 0.0
      %3526 = vmatprep.mubr.f32.mxu0 0.0
      %3527 = vmatmul.mubr.f32.gmra.mrb[0].mxu0 %v2881
      %v3528 = vpop.f32.mrb[0].mxu0
      %v3529 = vadd.f32 %v3460, %v3528
      %v3530 = vpop.f32.mrb[0].mxu0
      %3531 = vdwg.mxu0
      %v3533 = vsel %vm919, %v3363, 0
      %v3536 = vsel %vm919, %v3446, 0
      %3538 = vmatprep.subr.mxu0 0.0
      %3539 = vmatpush1.xpose.msra.mxu0 %v3536
      %3540 = vmatprep.subr.mxu0 0.0
      %3541 = vmatpush1.xpose.msra.mxu0 0.0
      %3542 = vmatprep.subr.mxu0 0.0
      %3543 = vmatpush1.xpose.msra.mxu0 0.0
      %3544 = vmatprep.subr.mxu0 0.0
      %3545 = vmatpush1.xpose.msra.mxu0 0.0
      %3546 = vmatprep.subr.mxu0 0.0
      %3547 = vmatpush1.xpose.msra.mxu0 0.0
      %3548 = vmatprep.subr.mxu0 0.0
      %3549 = vmatpush1.xpose.msra.mxu0 0.0
      %3550 = vmatprep.subr.mxu0 0.0
      %3551 = vmatpush1.xpose.msra.mxu0 0.0
      %3552 = vmatprep.subr.mxu0 0.0
      %3553 = vmatpush1.xpose.msra.mxu0 0.0
      %3554 = vmatprep.subr.mxu0 0.0
      %3555 = vmatpush1.xpose.msra.mxu0 0.0
      %3556 = vmatprep.subr.mxu0 0.0
      %3557 = vmatpush1.xpose.msra.mxu0 0.0
      %3558 = vmatprep.subr.mxu0 0.0
      %3559 = vmatpush1.xpose.msra.mxu0 0.0
      %3560 = vmatprep.subr.mxu0 0.0
      %3561 = vmatpush1.xpose.msra.mxu0 0.0
      %3562 = vmatprep.subr.mxu0 0.0
      %3563 = vmatpush1.xpose.msra.mxu0 0.0
      %3564 = vmatprep.subr.mxu0 0.0
      %3565 = vmatpush1.xpose.msra.mxu0 0.0
      %3566 = vmatprep.subr.mxu0 0.0
      %3567 = vmatpush1.xpose.msra.mxu0 0.0
      %3568 = vmatprep.subr.mxu0 0.0
      %3569 = vmatpush1.xpose.msra.mxu0 0.0
      %3570 = vmatprep.subr.mxu0 0.0
      %3571 = vmatpush1.xpose.msra.mxu0 0.0
      %3572 = vmatprep.subr.mxu0 0.0
      %3573 = vmatpush1.xpose.msra.mxu0 0.0
      %3574 = vmatprep.subr.mxu0 0.0
      %3575 = vmatpush1.xpose.msra.mxu0 0.0
      %3576 = vmatprep.subr.mxu0 0.0
      %3577 = vmatpush1.xpose.msra.mxu0 0.0
      %3578 = vmatprep.subr.mxu0 0.0
      %3579 = vmatpush1.xpose.msra.mxu0 0.0
      %3580 = vmatprep.subr.mxu0 0.0
      %3581 = vmatpush1.xpose.msra.mxu0 0.0
      %3582 = vmatprep.subr.mxu0 0.0
      %3583 = vmatpush1.xpose.msra.mxu0 0.0
      %3584 = vmatprep.subr.mxu0 0.0
      %3585 = vmatpush1.xpose.msra.mxu0 0.0
      %3586 = vmatprep.subr.mxu0 0.0
      %3587 = vmatpush1.xpose.msra.mxu0 0.0
      %3588 = vmatprep.subr.mxu0 0.0
      %3589 = vmatpush1.xpose.msra.mxu0 0.0
      %3590 = vmatprep.subr.mxu0 0.0
      %3591 = vmatpush1.xpose.msra.mxu0 0.0
      %3592 = vmatprep.subr.mxu0 0.0
      %3593 = vmatpush1.xpose.msra.mxu0 0.0
      %3594 = vmatprep.subr.mxu0 0.0
      %3595 = vmatpush1.xpose.msra.mxu0 0.0
      %3596 = vmatprep.subr.mxu0 0.0
      %3597 = vmatpush1.xpose.msra.mxu0 0.0
      %3598 = vmatprep.subr.mxu0 0.0
      %3599 = vmatpush1.xpose.msra.mxu0 0.0
      %3600 = vmatprep.subr.mxu0 0.0
      %3601 = vmatpush1.xpose.msra.mxu0 0.0
      %3602 = vmatprep.mubr.f32.mxu0 0.0
      %3603 = vmatmul.mubr.f32.gmra.mrb[0].mxu0 %v3533
      %v3604 = vpop.f32.mrb[0].mxu0
      %v3605 = vadd.f32 0.0, %v3604
      %v3606 = vpop.f32.mrb[0].mxu0
      %3607 = vdwg.mxu0
      %v3608 = vsel %vm919, %v3605, -inf
      %3609 = vmax.xlane.f32.xlu0 %v3608
      %v3610 = vpop.xlane.xlu0 %3609
      %v3611 = vsub.f32 %v3605, %v3610
      %v3612 = vmul.f32 %v3611, 1.442695
      %v3613 = vpow.pop %v3612
      %v3614 = vsel %vm919, %v3613, 0.0
      %3615 = vadd.xlane.f32.xlu0 %v3614
      %v3616 = vpop.xlane.xlu0 %3615
      %v3617 = vrcp.pop %v3616
      %v3618 = vmul.f32 %v3613, %v3617
      %s3619 = scalar_lea.vmem %s639, 40
      %3620 = vst.msk [vmem:[%s3619] sm:$0xff] %vm919, %v3618
      %v3622 = vsel %vm919, %v3618, 0
      %3624 = vmatprep.subr.mxu0 0.0
      %3625 = vmatpush1.msra.mxu0 %v3529
      %3626 = vmatprep.subr.mxu0 0.0
      %3627 = vmatpush1.msra.mxu0 0.0
      %3628 = vmatprep.subr.mxu0 0.0
      %3629 = vmatpush1.msra.mxu0 0.0
      %3630 = vmatprep.subr.mxu0 0.0
      %3631 = vmatpush1.msra.mxu0 0.0
      %3632 = vmatprep.subr.mxu0 0.0
      %3633 = vmatpush1.msra.mxu0 0.0
      %3634 = vmatprep.subr.mxu0 0.0
      %3635 = vmatpush1.msra.mxu0 0.0
      %3636 = vmatprep.subr.mxu0 0.0
      %3637 = vmatpush1.msra.mxu0 0.0
      %3638 = vmatprep.subr.mxu0 0.0
      %3639 = vmatpush1.msra.mxu0 0.0
      %3640 = vmatprep.subr.mxu0 0.0
      %3641 = vmatpush1.msra.mxu0 0.0
      %3642 = vmatprep.subr.mxu0 0.0
      %3643 = vmatpush1.msra.mxu0 0.0
      %3644 = vmatprep.subr.mxu0 0.0
      %3645 = vmatpush1.msra.mxu0 0.0
      %3646 = vmatprep.subr.mxu0 0.0
      %3647 = vmatpush1.msra.mxu0 0.0
      %3648 = vmatprep.subr.mxu0 0.0
      %3649 = vmatpush1.msra.mxu0 0.0
      %3650 = vmatprep.subr.mxu0 0.0
      %3651 = vmatpush1.msra.mxu0 0.0
      %3652 = vmatprep.subr.mxu0 0.0
      %3653 = vmatpush1.msra.mxu0 0.0
      %3654 = vmatprep.subr.mxu0 0.0
      %3655 = vmatpush1.msra.mxu0 0.0
      %3656 = vmatprep.subr.mxu0 0.0
      %3657 = vmatpush1.msra.mxu0 0.0
      %3658 = vmatprep.subr.mxu0 0.0
      %3659 = vmatpush1.msra.mxu0 0.0
      %3660 = vmatprep.subr.mxu0 0.0
      %3661 = vmatpush1.msra.mxu0 0.0
      %3662 = vmatprep.subr.mxu0 0.0
      %3663 = vmatpush1.msra.mxu0 0.0
      %3664 = vmatprep.subr.mxu0 0.0
      %3665 = vmatpush1.msra.mxu0 0.0
      %3666 = vmatprep.subr.mxu0 0.0
      %3667 = vmatpush1.msra.mxu0 0.0
      %3668 = vmatprep.subr.mxu0 0.0
      %3669 = vmatpush1.msra.mxu0 0.0
      %3670 = vmatprep.subr.mxu0 0.0
      %3671 = vmatpush1.msra.mxu0 0.0
      %3672 = vmatprep.subr.mxu0 0.0
      %3673 = vmatpush1.msra.mxu0 0.0
      %3674 = vmatprep.subr.mxu0 0.0
      %3675 = vmatpush1.msra.mxu0 0.0
      %3676 = vmatprep.subr.mxu0 0.0
      %3677 = vmatpush1.msra.mxu0 0.0
      %3678 = vmatprep.subr.mxu0 0.0
      %3679 = vmatpush1.msra.mxu0 0.0
      %3680 = vmatprep.subr.mxu0 0.0
      %3681 = vmatpush1.msra.mxu0 0.0
      %3682 = vmatprep.subr.mxu0 0.0
      %3683 = vmatpush1.msra.mxu0 0.0
      %3684 = vmatprep.subr.mxu0 0.0
      %3685 = vmatpush1.msra.mxu0 0.0
      %3686 = vmatprep.subr.mxu0 0.0
      %3687 = vmatpush1.msra.mxu0 0.0
      %3688 = vmatprep.mubr.f32.mxu0 0.0
      %3689 = vmatmul.mubr.f32.gmra.mrb[0].mxu0 %v3622
      %v3690 = vpop.f32.mrb[0].mxu0
      %v3691 = vadd.f32 0.0, %v3690
      %v3692 = vpop.f32.mrb[0].mxu0
      %3693 = vdwg.mxu0
      %s3694 = scalar_lea.vmem %s9, 40
      %v3695 = vld [vmem:[%s3694] sm:$0xff]
      %v3697 = vsel %vm919, %v3691, 0
      %3699 = vmatprep.subr.mxu0 0.0
      %3700 = vmatpush1.msra.mxu0 %v3695
      %3701 = vmatprep.subr.mxu0 0.0
      %3702 = vmatpush1.msra.mxu0 0.0
      %3703 = vmatprep.subr.mxu0 0.0
      %3704 = vmatpush1.msra.mxu0 0.0
      %3705 = vmatprep.subr.mxu0 0.0
      %3706 = vmatpush1.msra.mxu0 0.0
      %3707 = vmatprep.subr.mxu0 0.0
      %3708 = vmatpush1.msra.mxu0 0.0
      %3709 = vmatprep.subr.mxu0 0.0
      %3710 = vmatpush1.msra.mxu0 0.0
      %3711 = vmatprep.subr.mxu0 0.0
      %3712 = vmatpush1.msra.mxu0 0.0
      %3713 = vmatprep.subr.mxu0 0.0
      %3714 = vmatpush1.msra.mxu0 0.0
      %3715 = vmatprep.subr.mxu0 0.0
      %3716 = vmatpush1.msra.mxu0 0.0
      %3717 = vmatprep.subr.mxu0 0.0
      %3718 = vmatpush1.msra.mxu0 0.0
      %3719 = vmatprep.subr.mxu0 0.0
      %3720 = vmatpush1.msra.mxu0 0.0
      %3721 = vmatprep.subr.mxu0 0.0
      %3722 = vmatpush1.msra.mxu0 0.0
      %3723 = vmatprep.subr.mxu0 0.0
      %3724 = vmatpush1.msra.mxu0 0.0
      %3725 = vmatprep.subr.mxu0 0.0
      %3726 = vmatpush1.msra.mxu0 0.0
      %3727 = vmatprep.subr.mxu0 0.0
      %3728 = vmatpush1.msra.mxu0 0.0
      %3729 = vmatprep.subr.mxu0 0.0
      %3730 = vmatpush1.msra.mxu0 0.0
      %3731 = vmatprep.subr.mxu0 0.0
      %3732 = vmatpush1.msra.mxu0 0.0
      %3733 = vmatprep.subr.mxu0 0.0
      %3734 = vmatpush1.msra.mxu0 0.0
      %3735 = vmatprep.subr.mxu0 0.0
      %3736 = vmatpush1.msra.mxu0 0.0
      %3737 = vmatprep.subr.mxu0 0.0
      %3738 = vmatpush1.msra.mxu0 0.0
      %3739 = vmatprep.subr.mxu0 0.0
      %3740 = vmatpush1.msra.mxu0 0.0
      %3741 = vmatprep.subr.mxu0 0.0
      %3742 = vmatpush1.msra.mxu0 0.0
      %3743 = vmatprep.subr.mxu0 0.0
      %3744 = vmatpush1.msra.mxu0 0.0
      %3745 = vmatprep.subr.mxu0 0.0
      %3746 = vmatpush1.msra.mxu0 0.0
      %3747 = vmatprep.subr.mxu0 0.0
      %3748 = vmatpush1.msra.mxu0 0.0
      %3749 = vmatprep.subr.mxu0 0.0
      %3750 = vmatpush1.msra.mxu0 0.0
      %3751 = vmatprep.subr.mxu0 0.0
      %3752 = vmatpush1.msra.mxu0 0.0
      %3753 = vmatprep.subr.mxu0 0.0
      %3754 = vmatpush1.msra.mxu0 0.0
      %3755 = vmatprep.subr.mxu0 0.0
      %3756 = vmatpush1.msra.mxu0 0.0
      %3757 = vmatprep.subr.mxu0 0.0
      %3758 = vmatpush1.msra.mxu0 0.0
      %3759 = vmatprep.subr.mxu0 0.0
      %3760 = vmatpush1.msra.mxu0 0.0
      %3761 = vmatprep.subr.mxu0 0.0
      %3762 = vmatpush1.msra.mxu0 0.0
      %3763 = vmatprep.mubr.f32.mxu0 0.0
      %3764 = vmatmul.mubr.f32.gmra.mrb[0].mxu0 %v3697
      %v3765 = vpop.f32.mrb[0].mxu0
      %v3766 = vadd.f32 0.0, %v3765
      %v3767 = vpop.f32.mrb[0].mxu0
      %3768 = vdwg.mxu0
      %v3770 = vsel %vm919, %v3278, 0
      %3772 = vmatprep.subr.mxu0 0.0
      %3773 = vmatpush1.msra.mxu0 %v3282
      %3774 = vmatprep.subr.mxu0 0.0
      %3775 = vmatpush1.msra.mxu0 0.0
      %3776 = vmatprep.subr.mxu0 0.0
      %3777 = vmatpush1.msra.mxu0 0.0
      %3778 = vmatprep.subr.mxu0 0.0
      %3779 = vmatpush1.msra.mxu0 0.0
      %3780 = vmatprep.subr.mxu0 0.0
      %3781 = vmatpush1.msra.mxu0 0.0
      %3782 = vmatprep.subr.mxu0 0.0
      %3783 = vmatpush1.msra.mxu0 0.0
      %3784 = vmatprep.subr.mxu0 0.0
      %3785 = vmatpush1.msra.mxu0 0.0
      %3786 = vmatprep.subr.mxu0 0.0
      %3787 = vmatpush1.msra.mxu0 0.0
      %3788 = vmatprep.subr.mxu0 0.0
      %3789 = vmatpush1.msra.mxu0 0.0
      %3790 = vmatprep.subr.mxu0 0.0
      %3791 = vmatpush1.msra.mxu0 0.0
      %3792 = vmatprep.subr.mxu0 0.0
      %3793 = vmatpush1.msra.mxu0 0.0
      %3794 = vmatprep.subr.mxu0 0.0
      %3795 = vmatpush1.msra.mxu0 0.0
      %3796 = vmatprep.subr.mxu0 0.0
      %3797 = vmatpush1.msra.mxu0 0.0
      %3798 = vmatprep.subr.mxu0 0.0
      %3799 = vmatpush1.msra.mxu0 0.0
      %3800 = vmatprep.subr.mxu0 0.0
      %3801 = vmatpush1.msra.mxu0 0.0
      %3802 = vmatprep.subr.mxu0 0.0
      %3803 = vmatpush1.msra.mxu0 0.0
      %3804 = vmatprep.subr.mxu0 0.0
      %3805 = vmatpush1.msra.mxu0 0.0
      %3806 = vmatprep.subr.mxu0 0.0
      %3807 = vmatpush1.msra.mxu0 0.0
      %3808 = vmatprep.subr.mxu0 0.0
      %3809 = vmatpush1.msra.mxu0 0.0
      %3810 = vmatprep.subr.mxu0 0.0
      %3811 = vmatpush1.msra.mxu0 0.0
      %3812 = vmatprep.subr.mxu0 0.0
      %3813 = vmatpush1.msra.mxu0 0.0
      %3814 = vmatprep.subr.mxu0 0.0
      %3815 = vmatpush1.msra.mxu0 0.0
      %3816 = vmatprep.subr.mxu0 0.0
      %3817 = vmatpush1.msra.mxu0 0.0
      %3818 = vmatprep.subr.mxu0 0.0
      %3819 = vmatpush1.msra.mxu0 0.0
      %3820 = vmatprep.subr.mxu0 0.0
      %3821 = vmatpush1.msra.mxu0 0.0
      %3822 = vmatprep.subr.mxu0 0.0
      %3823 = vmatpush1.msra.mxu0 0.0
      %3824 = vmatprep.subr.mxu0 0.0
      %3825 = vmatpush1.msra.mxu0 0.0
      %3826 = vmatprep.subr.mxu0 0.0
      %3827 = vmatpush1.msra.mxu0 0.0
      %3828 = vmatprep.subr.mxu0 0.0
      %3829 = vmatpush1.msra.mxu0 0.0
      %3830 = vmatprep.subr.mxu0 0.0
      %3831 = vmatpush1.msra.mxu0 0.0
      %3832 = vmatprep.subr.mxu0 0.0
      %3833 = vmatpush1.msra.mxu0 0.0
      %3834 = vmatprep.subr.mxu0 0.0
      %3835 = vmatpush1.msra.mxu0 0.0
      %3836 = vmatprep.mubr.f32.mxu0 0.0
      %3837 = vmatmul.mubr.f32.gmra.mrb[0].mxu0 %v3770
      %v3838 = vpop.f32.mrb[0].mxu0
      %v3839 = vadd.f32 %v3766, %v3838
      %v3840 = vpop.f32.mrb[0].mxu0
      %3841 = vdwg.mxu0
      %s3842 = scalar_lea.vmem %s3, 192
      %v3843 = vld [vmem:[%s3842] sm:$0xff]
      %v3844 = vld [vmem:[%s3842 + $0x8] sm:$0xff]
      %v3845 = vld [vmem:[%s3842 + $0x10] sm:$0xff]
      %v3846 = vld [vmem:[%s3842 + $0x18] sm:$0xff]
      %s3847 = scalar_lea.vmem %s4, 6
      %v3848 = vld [vmem:[%s3847] sm:$0x1]
      %v3850 = vlaneseq
      %v3851 = vshrl.u32 %v3850, 7
      %v3852 = vsub.s32 0, %v3851
      %v3853 = vrot.slane %v3848, %v3852
      %3855 = vmatprep.subr.mxu0 0.0
      %3856 = vmatpush1.msra.mxu0 %v3843
      %3857 = vmatprep.subr.mxu0 0.0
      %3858 = vmatpush1.msra.mxu0 %v3844
      %3859 = vmatprep.subr.mxu0 0.0
      %3860 = vmatpush1.msra.mxu0 %v3845
      %3861 = vmatprep.subr.mxu0 0.0
      %3862 = vmatpush1.msra.mxu0 %v3846
      %3863 = vmatprep.subr.mxu0 0.0
      %3864 = vmatpush1.msra.mxu0 0.0
      %3865 = vmatprep.subr.mxu0 0.0
      %3866 = vmatpush1.msra.mxu0 0.0
      %3867 = vmatprep.subr.mxu0 0.0
      %3868 = vmatpush1.msra.mxu0 0.0
      %3869 = vmatprep.subr.mxu0 0.0
      %3870 = vmatpush1.msra.mxu0 0.0
      %3871 = vmatprep.subr.mxu0 0.0
      %3872 = vmatpush1.msra.mxu0 0.0
      %3873 = vmatprep.subr.mxu0 0.0
      %3874 = vmatpush1.msra.mxu0 0.0
      %3875 = vmatprep.subr.mxu0 0.0
      %3876 = vmatpush1.msra.mxu0 0.0
      %3877 = vmatprep.subr.mxu0 0.0
      %3878 = vmatpush1.msra.mxu0 0.0
      %3879 = vmatprep.subr.mxu0 0.0
      %3880 = vmatpush1.msra.mxu0 0.0
      %3881 = vmatprep.subr.mxu0 0.0
      %3882 = vmatpush1.msra.mxu0 0.0
      %3883 = vmatprep.subr.mxu0 0.0
      %3884 = vmatpush1.msra.mxu0 0.0
      %3885 = vmatprep.subr.mxu0 0.0
      %3886 = vmatpush1.msra.mxu0 0.0
      %3887 = vmatprep.subr.mxu0 0.0
      %3888 = vmatpush1.msra.mxu0 0.0
      %3889 = vmatprep.subr.mxu0 0.0
      %3890 = vmatpush1.msra.mxu0 0.0
      %3891 = vmatprep.subr.mxu0 0.0
      %3892 = vmatpush1.msra.mxu0 0.0
      %3893 = vmatprep.subr.mxu0 0.0
      %3894 = vmatpush1.msra.mxu0 0.0
      %3895 = vmatprep.subr.mxu0 0.0
      %3896 = vmatpush1.msra.mxu0 0.0
      %3897 = vmatprep.subr.mxu0 0.0
      %3898 = vmatpush1.msra.mxu0 0.0
      %3899 = vmatprep.subr.mxu0 0.0
      %3900 = vmatpush1.msra.mxu0 0.0
      %3901 = vmatprep.subr.mxu0 0.0
      %3902 = vmatpush1.msra.mxu0 0.0
      %3903 = vmatprep.subr.mxu0 0.0
      %3904 = vmatpush1.msra.mxu0 0.0
      %3905 = vmatprep.subr.mxu0 0.0
      %3906 = vmatpush1.msra.mxu0 0.0
      %3907 = vmatprep.subr.mxu0 0.0
      %3908 = vmatpush1.msra.mxu0 0.0
      %3909 = vmatprep.subr.mxu0 0.0
      %3910 = vmatpush1.msra.mxu0 0.0
      %3911 = vmatprep.subr.mxu0 0.0
      %3912 = vmatpush1.msra.mxu0 0.0
      %3913 = vmatprep.subr.mxu0 0.0
      %3914 = vmatpush1.msra.mxu0 0.0
      %3915 = vmatprep.subr.mxu0 0.0
      %3916 = vmatpush1.msra.mxu0 0.0
      %3917 = vmatprep.subr.mxu0 0.0
      %3918 = vmatpush1.msra.mxu0 0.0
      %3919 = vmatprep.mubr.f32.mxu0 0.0
      %3920 = vmatmul.mubr.f32.gmra.mrb[0].mxu0 %v2881
      %v3921 = vpop.f32.mrb[0].mxu0
      %v3922 = vadd.f32 %v3853, %v3921
      %v3923 = vpop.f32.mrb[0].mxu0
      %3924 = vdwg.mxu0
      %s3925 = scalar_lea.vmem %s5, 192
      %v3926 = vld [vmem:[%s3925] sm:$0xff]
      %v3927 = vld [vmem:[%s3925 + $0x8] sm:$0xff]
      %v3928 = vld [vmem:[%s3925 + $0x10] sm:$0xff]
      %v3929 = vld [vmem:[%s3925 + $0x18] sm:$0xff]
      %s3930 = scalar_lea.vmem %s6, 6
      %v3931 = vld [vmem:[%s3930] sm:$0x1]
      %v3933 = vlaneseq
      %v3934 = vshrl.u32 %v3933, 7
      %v3935 = vsub.s32 0, %v3934
      %v3936 = vrot.slane %v3931, %v3935
      %3938 = vmatprep.subr.mxu0 0.0
      %3939 = vmatpush1.msra.mxu0 %v3926
      %3940 = vmatprep.subr.mxu0 0.0
      %3941 = vmatpush1.msra.mxu0 %v3927
      %3942 = vmatprep.subr.mxu0 0.0
      %3943 = vmatpush1.msra.mxu0 %v3928
      %3944 = vmatprep.subr.mxu0 0.0
      %3945 = vmatpush1.msra.mxu0 %v3929
      %3946 = vmatprep.subr.mxu0 0.0
      %3947 = vmatpush1.msra.mxu0 0.0
      %3948 = vmatprep.subr.mxu0 0.0
      %3949 = vmatpush1.msra.mxu0 0.0
      %3950 = vmatprep.subr.mxu0 0.0
      %3951 = vmatpush1.msra.mxu0 0.0
      %3952 = vmatprep.subr.mxu0 0.0
      %3953 = vmatpush1.msra.mxu0 0.0
      %3954 = vmatprep.subr.mxu0 0.0
      %3955 = vmatpush1.msra.mxu0 0.0
      %3956 = vmatprep.subr.mxu0 0.0
      %3957 = vmatpush1.msra.mxu0 0.0
      %3958 = vmatprep.subr.mxu0 0.0
      %3959 = vmatpush1.msra.mxu0 0.0
      %3960 = vmatprep.subr.mxu0 0.0
      %3961 = vmatpush1.msra.mxu0 0.0
      %3962 = vmatprep.subr.mxu0 0.0
      %3963 = vmatpush1.msra.mxu0 0.0
      %3964 = vmatprep.subr.mxu0 0.0
      %3965 = vmatpush1.msra.mxu0 0.0
      %3966 = vmatprep.subr.mxu0 0.0
      %3967 = vmatpush1.msra.mxu0 0.0
      %3968 = vmatprep.subr.mxu0 0.0
      %3969 = vmatpush1.msra.mxu0 0.0
      %3970 = vmatprep.subr.mxu0 0.0
      %3971 = vmatpush1.msra.mxu0 0.0
      %3972 = vmatprep.subr.mxu0 0.0
      %3973 = vmatpush1.msra.mxu0 0.0
      %3974 = vmatprep.subr.mxu0 0.0
      %3975 = vmatpush1.msra.mxu0 0.0
      %3976 = vmatprep.subr.mxu0 0.0
      %3977 = vmatpush1.msra.mxu0 0.0
      %3978 = vmatprep.subr.mxu0 0.0
      %3979 = vmatpush1.msra.mxu0 0.0
      %3980 = vmatprep.subr.mxu0 0.0
      %3981 = vmatpush1.msra.mxu0 0.0
      %3982 = vmatprep.subr.mxu0 0.0
      %3983 = vmatpush1.msra.mxu0 0.0
      %3984 = vmatprep.subr.mxu0 0.0
      %3985 = vmatpush1.msra.mxu0 0.0
      %3986 = vmatprep.subr.mxu0 0.0
      %3987 = vmatpush1.msra.mxu0 0.0
      %3988 = vmatprep.subr.mxu0 0.0
      %3989 = vmatpush1.msra.mxu0 0.0
      %3990 = vmatprep.subr.mxu0 0.0
      %3991 = vmatpush1.msra.mxu0 0.0
      %3992 = vmatprep.subr.mxu0 0.0
      %3993 = vmatpush1.msra.mxu0 0.0
      %3994 = vmatprep.subr.mxu0 0.0
      %3995 = vmatpush1.msra.mxu0 0.0
      %3996 = vmatprep.subr.mxu0 0.0
      %3997 = vmatpush1.msra.mxu0 0.0
      %3998 = vmatprep.subr.mxu0 0.0
      %3999 = vmatpush1.msra.mxu0 0.0
      %4000 = vmatprep.subr.mxu0 0.0
      %4001 = vmatpush1.msra.mxu0 0.0
      %4002 = vmatprep.mubr.f32.mxu0 0.0
      %4003 = vmatmul.mubr.f32.gmra.mrb[0].mxu0 %v2881
      %v4004 = vpop.f32.mrb[0].mxu0
      %v4005 = vadd.f32 %v3936, %v4004
      %v4006 = vpop.f32.mrb[0].mxu0
      %4007 = vdwg.mxu0
      %s4008 = scalar_lea.vmem %s7, 192
      %v4009 = vld [vmem:[%s4008] sm:$0xff]
      %v4010 = vld [vmem:[%s4008 + $0x8] sm:$0xff]
      %v4011 = vld [vmem:[%s4008 + $0x10] sm:$0xff]
      %v4012 = vld [vmem:[%s4008 + $0x18] sm:$0xff]
      %s4013 = scalar_lea.vmem %s8, 6
      %v4014 = vld [vmem:[%s4013] sm:$0x1]
      %v4016 = vlaneseq
      %v4017 = vshrl.u32 %v4016, 7
      %v4018 = vsub.s32 0, %v4017
      %v4019 = vrot.slane %v4014, %v4018
      %4021 = vmatprep.subr.mxu0 0.0
      %4022 = vmatpush1.msra.mxu0 %v4009
      %4023 = vmatprep.subr.mxu0 0.0
      %4024 = vmatpush1.msra.mxu0 %v4010
      %4025 = vmatprep.subr.mxu0 0.0
      %4026 = vmatpush1.msra.mxu0 %v4011
      %4027 = vmatprep.subr.mxu0 0.0
      %4028 = vmatpush1.msra.mxu0 %v4012
      %4029 = vmatprep.subr.mxu0 0.0
      %4030 = vmatpush1.msra.mxu0 0.0
      %4031 = vmatprep.subr.mxu0 0.0
      %4032 = vmatpush1.msra.mxu0 0.0
      %4033 = vmatprep.subr.mxu0 0.0
      %4034 = vmatpush1.msra.mxu0 0.0
      %4035 = vmatprep.subr.mxu0 0.0
      %4036 = vmatpush1.msra.mxu0 0.0
      %4037 = vmatprep.subr.mxu0 0.0
      %4038 = vmatpush1.msra.mxu0 0.0
      %4039 = vmatprep.subr.mxu0 0.0
      %4040 = vmatpush1.msra.mxu0 0.0
      %4041 = vmatprep.subr.mxu0 0.0
      %4042 = vmatpush1.msra.mxu0 0.0
      %4043 = vmatprep.subr.mxu0 0.0
      %4044 = vmatpush1.msra.mxu0 0.0
      %4045 = vmatprep.subr.mxu0 0.0
      %4046 = vmatpush1.msra.mxu0 0.0
      %4047 = vmatprep.subr.mxu0 0.0
      %4048 = vmatpush1.msra.mxu0 0.0
      %4049 = vmatprep.subr.mxu0 0.0
      %4050 = vmatpush1.msra.mxu0 0.0
      %4051 = vmatprep.subr.mxu0 0.0
      %4052 = vmatpush1.msra.mxu0 0.0
      %4053 = vmatprep.subr.mxu0 0.0
      %4054 = vmatpush1.msra.mxu0 0.0
      %4055 = vmatprep.subr.mxu0 0.0
      %4056 = vmatpush1.msra.mxu0 0.0
      %4057 = vmatprep.subr.mxu0 0.0
      %4058 = vmatpush1.msra.mxu0 0.0
      %4059 = vmatprep.subr.mxu0 0.0
      %4060 = vmatpush1.msra.mxu0 0.0
      %4061 = vmatprep.subr.mxu0 0.0
      %4062 = vmatpush1.msra.mxu0 0.0
      %4063 = vmatprep.subr.mxu0 0.0
      %4064 = vmatpush1.msra.mxu0 0.0
      %4065 = vmatprep.subr.mxu0 0.0
      %4066 = vmatpush1.msra.mxu0 0.0
      %4067 = vmatprep.subr.mxu0 0.0
      %4068 = vmatpush1.msra.mxu0 0.0
      %4069 = vmatprep.subr.mxu0 0.0
      %4070 = vmatpush1.msra.mxu0 0.0
      %4071 = vmatprep.subr.mxu0 0.0
      %4072 = vmatpush1.msra.mxu0 0.0
      %4073 = vmatprep.subr.mxu0 0.0
      %4074 = vmatpush1.msra.mxu0 0.0
      %4075 = vmatprep.subr.mxu0 0.0
      %4076 = vmatpush1.msra.mxu0 0.0
      %4077 = vmatprep.subr.mxu0 0.0
      %4078 = vmatpush1.msra.mxu0 0.0
      %4079 = vmatprep.subr.mxu0 0.0
      %4080 = vmatpush1.msra.mxu0 0.0
      %4081 = vmatprep.subr.mxu0 0.0
      %4082 = vmatpush1.msra.mxu0 0.0
      %4083 = vmatprep.subr.mxu0 0.0
      %4084 = vmatpush1.msra.mxu0 0.0
      %4085 = vmatprep.mubr.f32.mxu0 0.0
      %4086 = vmatmul.mubr.f32.gmra.mrb[0].mxu0 %v2881
      %v4087 = vpop.f32.mrb[0].mxu0
      %v4088 = vadd.f32 %v4019, %v4087
      %v4089 = vpop.f32.mrb[0].mxu0
      %4090 = vdwg.mxu0
      %v4092 = vsel %vm919, %v3922, 0
      %v4095 = vsel %vm919, %v4005, 0
      %4097 = vmatprep.subr.mxu0 0.0
      %4098 = vmatpush1.xpose.msra.mxu0 %v4095
      %4099 = vmatprep.subr.mxu0 0.0
      %4100 = vmatpush1.xpose.msra.mxu0 0.0
      %4101 = vmatprep.subr.mxu0 0.0
      %4102 = vmatpush1.xpose.msra.mxu0 0.0
      %4103 = vmatprep.subr.mxu0 0.0
      %4104 = vmatpush1.xpose.msra.mxu0 0.0
      %4105 = vmatprep.subr.mxu0 0.0
      %4106 = vmatpush1.xpose.msra.mxu0 0.0
      %4107 = vmatprep.subr.mxu0 0.0
      %4108 = vmatpush1.xpose.msra.mxu0 0.0
      %4109 = vmatprep.subr.mxu0 0.0
      %4110 = vmatpush1.xpose.msra.mxu0 0.0
      %4111 = vmatprep.subr.mxu0 0.0
      %4112 = vmatpush1.xpose.msra.mxu0 0.0
      %4113 = vmatprep.subr.mxu0 0.0
      %4114 = vmatpush1.xpose.msra.mxu0 0.0
      %4115 = vmatprep.subr.mxu0 0.0
      %4116 = vmatpush1.xpose.msra.mxu0 0.0
      %4117 = vmatprep.subr.mxu0 0.0
      %4118 = vmatpush1.xpose.msra.mxu0 0.0
      %4119 = vmatprep.subr.mxu0 0.0
      %4120 = vmatpush1.xpose.msra.mxu0 0.0
      %4121 = vmatprep.subr.mxu0 0.0
      %4122 = vmatpush1.xpose.msra.mxu0 0.0
      %4123 = vmatprep.subr.mxu0 0.0
      %4124 = vmatpush1.xpose.msra.mxu0 0.0
      %4125 = vmatprep.subr.mxu0 0.0
      %4126 = vmatpush1.xpose.msra.mxu0 0.0
      %4127 = vmatprep.subr.mxu0 0.0
      %4128 = vmatpush1.xpose.msra.mxu0 0.0
      %4129 = vmatprep.subr.mxu0 0.0
      %4130 = vmatpush1.xpose.msra.mxu0 0.0
      %4131 = vmatprep.subr.mxu0 0.0
      %4132 = vmatpush1.xpose.msra.mxu0 0.0
      %4133 = vmatprep.subr.mxu0 0.0
      %4134 = vmatpush1.xpose.msra.mxu0 0.0
      %4135 = vmatprep.subr.mxu0 0.0
      %4136 = vmatpush1.xpose.msra.mxu0 0.0
      %4137 = vmatprep.subr.mxu0 0.0
      %4138 = vmatpush1.xpose.msra.mxu0 0.0
      %4139 = vmatprep.subr.mxu0 0.0
      %4140 = vmatpush1.xpose.msra.mxu0 0.0
      %4141 = vmatprep.subr.mxu0 0.0
      %4142 = vmatpush1.xpose.msra.mxu0 0.0
      %4143 = vmatprep.subr.mxu0 0.0
      %4144 = vmatpush1.xpose.msra.mxu0 0.0
      %4145 = vmatprep.subr.mxu0 0.0
      %4146 = vmatpush1.xpose.msra.mxu0 0.0
      %4147 = vmatprep.subr.mxu0 0.0
      %4148 = vmatpush1.xpose.msra.mxu0 0.0
      %4149 = vmatprep.subr.mxu0 0.0
      %4150 = vmatpush1.xpose.msra.mxu0 0.0
      %4151 = vmatprep.subr.mxu0 0.0
      %4152 = vmatpush1.xpose.msra.mxu0 0.0
      %4153 = vmatprep.subr.mxu0 0.0
      %4154 = vmatpush1.xpose.msra.mxu0 0.0
      %4155 = vmatprep.subr.mxu0 0.0
      %4156 = vmatpush1.xpose.msra.mxu0 0.0
      %4157 = vmatprep.subr.mxu0 0.0
      %4158 = vmatpush1.xpose.msra.mxu0 0.0
      %4159 = vmatprep.subr.mxu0 0.0
      %4160 = vmatpush1.xpose.msra.mxu0 0.0
      %4161 = vmatprep.mubr.f32.mxu0 0.0
      %4162 = vmatmul.mubr.f32.gmra.mrb[0].mxu0 %v4092
      %v4163 = vpop.f32.mrb[0].mxu0
      %v4164 = vadd.f32 0.0, %v4163
      %v4165 = vpop.f32.mrb[0].mxu0
      %4166 = vdwg.mxu0
      %v4167 = vsel %vm919, %v4164, -inf
      %4168 = vmax.xlane.f32.xlu0 %v4167
      %v4169 = vpop.xlane.xlu0 %4168
      %v4170 = vsub.f32 %v4164, %v4169
      %v4171 = vmul.f32 %v4170, 1.442695
      %v4172 = vpow.pop %v4171
      %v4173 = vsel %vm919, %v4172, 0.0
      %4174 = vadd.xlane.f32.xlu0 %v4173
      %v4175 = vpop.xlane.xlu0 %4174
      %v4176 = vrcp.pop %v4175
      %v4177 = vmul.f32 %v4172, %v4176
      %s4178 = scalar_lea.vmem %s639, 48
      %4179 = vst.msk [vmem:[%s4178] sm:$0xff] %vm919, %v4177
      %v4181 = vsel %vm919, %v4177, 0
      %4183 = vmatprep.subr.mxu0 0.0
      %4184 = vmatpush1.msra.mxu0 %v4088
      %4185 = vmatprep.subr.mxu0 0.0
      %4186 = vmatpush1.msra.mxu0 0.0
      %4187 = vmatprep.subr.mxu0 0.0
      %4188 = vmatpush1.msra.mxu0 0.0
      %4189 = vmatprep.subr.mxu0 0.0
      %4190 = vmatpush1.msra.mxu0 0.0
      %4191 = vmatprep.subr.mxu0 0.0
      %4192 = vmatpush1.msra.mxu0 0.0
      %4193 = vmatprep.subr.mxu0 0.0
      %4194 = vmatpush1.msra.mxu0 0.0
      %4195 = vmatprep.subr.mxu0 0.0
      %4196 = vmatpush1.msra.mxu0 0.0
      %4197 = vmatprep.subr.mxu0 0.0
      %4198 = vmatpush1.msra.mxu0 0.0
      %4199 = vmatprep.subr.mxu0 0.0
      %4200 = vmatpush1.msra.mxu0 0.0
      %4201 = vmatprep.subr.mxu0 0.0
      %4202 = vmatpush1.msra.mxu0 0.0
      %4203 = vmatprep.subr.mxu0 0.0
      %4204 = vmatpush1.msra.mxu0 0.0
      %4205 = vmatprep.subr.mxu0 0.0
      %4206 = vmatpush1.msra.mxu0 0.0
      %4207 = vmatprep.subr.mxu0 0.0
      %4208 = vmatpush1.msra.mxu0 0.0
      %4209 = vmatprep.subr.mxu0 0.0
      %4210 = vmatpush1.msra.mxu0 0.0
      %4211 = vmatprep.subr.mxu0 0.0
      %4212 = vmatpush1.msra.mxu0 0.0
      %4213 = vmatprep.subr.mxu0 0.0
      %4214 = vmatpush1.msra.mxu0 0.0
      %4215 = vmatprep.subr.mxu0 0.0
      %4216 = vmatpush1.msra.mxu0 0.0
      %4217 = vmatprep.subr.mxu0 0.0
      %4218 = vmatpush1.msra.mxu0 0.0
      %4219 = vmatprep.subr.mxu0 0.0
      %4220 = vmatpush1.msra.mxu0 0.0
      %4221 = vmatprep.subr.mxu0 0.0
      %4222 = vmatpush1.msra.mxu0 0.0
      %4223 = vmatprep.subr.mxu0 0.0
      %4224 = vmatpush1.msra.mxu0 0.0
      %4225 = vmatprep.subr.mxu0 0.0
      %4226 = vmatpush1.msra.mxu0 0.0
      %4227 = vmatprep.subr.mxu0 0.0
      %4228 = vmatpush1.msra.mxu0 0.0
      %4229 = vmatprep.subr.mxu0 0.0
      %4230 = vmatpush1.msra.mxu0 0.0
      %4231 = vmatprep.subr.mxu0 0.0
      %4232 = vmatpush1.msra.mxu0 0.0
      %4233 = vmatprep.subr.mxu0 0.0
      %4234 = vmatpush1.msra.mxu0 0.0
      %4235 = vmatprep.subr.mxu0 0.0
      %4236 = vmatpush1.msra.mxu0 0.0
      %4237 = vmatprep.subr.mxu0 0.0
      %4238 = vmatpush1.msra.mxu0 0.0
      %4239 = vmatprep.subr.mxu0 0.0
      %4240 = vmatpush1.msra.mxu0 0.0
      %4241 = vmatprep.subr.mxu0 0.0
      %4242 = vmatpush1.msra.mxu0 0.0
      %4243 = vmatprep.subr.mxu0 0.0
      %4244 = vmatpush1.msra.mxu0 0.0
      %4245 = vmatprep.subr.mxu0 0.0
      %4246 = vmatpush1.msra.mxu0 0.0
      %4247 = vmatprep.mubr.f32.mxu0 0.0
      %4248 = vmatmul.mubr.f32.gmra.mrb[0].mxu0 %v4181
      %v4249 = vpop.f32.mrb[0].mxu0
      %v4250 = vadd.f32 0.0, %v4249
      %v4251 = vpop.f32.mrb[0].mxu0
      %4252 = vdwg.mxu0
      %s4253 = scalar_lea.vmem %s9, 48
      %v4254 = vld [vmem:[%s4253] sm:$0xff]
      %v4256 = vsel %vm919, %v4250, 0
      %4258 = vmatprep.subr.mxu0 0.0
      %4259 = vmatpush1.msra.mxu0 %v4254
      %4260 = vmatprep.subr.mxu0 0.0
      %4261 = vmatpush1.msra.mxu0 0.0
      %4262 = vmatprep.subr.mxu0 0.0
      %4263 = vmatpush1.msra.mxu0 0.0
      %4264 = vmatprep.subr.mxu0 0.0
      %4265 = vmatpush1.msra.mxu0 0.0
      %4266 = vmatprep.subr.mxu0 0.0
      %4267 = vmatpush1.msra.mxu0 0.0
      %4268 = vmatprep.subr.mxu0 0.0
      %4269 = vmatpush1.msra.mxu0 0.0
      %4270 = vmatprep.subr.mxu0 0.0
      %4271 = vmatpush1.msra.mxu0 0.0
      %4272 = vmatprep.subr.mxu0 0.0
      %4273 = vmatpush1.msra.mxu0 0.0
      %4274 = vmatprep.subr.mxu0 0.0
      %4275 = vmatpush1.msra.mxu0 0.0
      %4276 = vmatprep.subr.mxu0 0.0
      %4277 = vmatpush1.msra.mxu0 0.0
      %4278 = vmatprep.subr.mxu0 0.0
      %4279 = vmatpush1.msra.mxu0 0.0
      %4280 = vmatprep.subr.mxu0 0.0
      %4281 = vmatpush1.msra.mxu0 0.0
      %4282 = vmatprep.subr.mxu0 0.0
      %4283 = vmatpush1.msra.mxu0 0.0
      %4284 = vmatprep.subr.mxu0 0.0
      %4285 = vmatpush1.msra.mxu0 0.0
      %4286 = vmatprep.subr.mxu0 0.0
      %4287 = vmatpush1.msra.mxu0 0.0
      %4288 = vmatprep.subr.mxu0 0.0
      %4289 = vmatpush1.msra.mxu0 0.0
      %4290 = vmatprep.subr.mxu0 0.0
      %4291 = vmatpush1.msra.mxu0 0.0
      %4292 = vmatprep.subr.mxu0 0.0
      %4293 = vmatpush1.msra.mxu0 0.0
      %4294 = vmatprep.subr.mxu0 0.0
      %4295 = vmatpush1.msra.mxu0 0.0
      %4296 = vmatprep.subr.mxu0 0.0
      %4297 = vmatpush1.msra.mxu0 0.0
      %4298 = vmatprep.subr.mxu0 0.0
      %4299 = vmatpush1.msra.mxu0 0.0
      %4300 = vmatprep.subr.mxu0 0.0
      %4301 = vmatpush1.msra.mxu0 0.0
      %4302 = vmatprep.subr.mxu0 0.0
      %4303 = vmatpush1.msra.mxu0 0.0
      %4304 = vmatprep.subr.mxu0 0.0
      %4305 = vmatpush1.msra.mxu0 0.0
      %4306 = vmatprep.subr.mxu0 0.0
      %4307 = vmatpush1.msra.mxu0 0.0
      %4308 = vmatprep.subr.mxu0 0.0
      %4309 = vmatpush1.msra.mxu0 0.0
      %4310 = vmatprep.subr.mxu0 0.0
      %4311 = vmatpush1.msra.mxu0 0.0
      %4312 = vmatprep.subr.mxu0 0.0
      %4313 = vmatpush1.msra.mxu0 0.0
      %4314 = vmatprep.subr.mxu0 0.0
      %4315 = vmatpush1.msra.mxu0 0.0
      %4316 = vmatprep.subr.mxu0 0.0
      %4317 = vmatpush1.msra.mxu0 0.0
      %4318 = vmatprep.subr.mxu0 0.0
      %4319 = vmatpush1.msra.mxu0 0.0
      %4320 = vmatprep.subr.mxu0 0.0
      %4321 = vmatpush1.msra.mxu0 0.0
      %4322 = vmatprep.mubr.f32.mxu0 0.0
      %4323 = vmatmul.mubr.f32.gmra.mrb[0].mxu0 %v4256
      %v4324 = vpop.f32.mrb[0].mxu0
      %v4325 = vadd.f32 0.0, %v4324
      %v4326 = vpop.f32.mrb[0].mxu0
      %4327 = vdwg.mxu0
      %v4328 = vadd.f32 %v3839, %v4325
      %s4329 = scalar_lea.vmem %s3, 224
      %v4330 = vld [vmem:[%s4329] sm:$0xff]
      %v4331 = vld [vmem:[%s4329 + $0x8] sm:$0xff]
      %v4332 = vld [vmem:[%s4329 + $0x10] sm:$0xff]
      %v4333 = vld [vmem:[%s4329 + $0x18] sm:$0xff]
      %s4334 = scalar_lea.vmem %s4, 7
      %v4335 = vld [vmem:[%s4334] sm:$0x1]
      %v4337 = vlaneseq
      %v4338 = vshrl.u32 %v4337, 7
      %v4339 = vsub.s32 0, %v4338
      %v4340 = vrot.slane %v4335, %v4339
      %4342 = vmatprep.subr.mxu0 0.0
      %4343 = vmatpush1.msra.mxu0 %v4330
      %4344 = vmatprep.subr.mxu0 0.0
      %4345 = vmatpush1.msra.mxu0 %v4331
      %4346 = vmatprep.subr.mxu0 0.0
      %4347 = vmatpush1.msra.mxu0 %v4332
      %4348 = vmatprep.subr.mxu0 0.0
      %4349 = vmatpush1.msra.mxu0 %v4333
      %4350 = vmatprep.subr.mxu0 0.0
      %4351 = vmatpush1.msra.mxu0 0.0
      %4352 = vmatprep.subr.mxu0 0.0
      %4353 = vmatpush1.msra.mxu0 0.0
      %4354 = vmatprep.subr.mxu0 0.0
      %4355 = vmatpush1.msra.mxu0 0.0
      %4356 = vmatprep.subr.mxu0 0.0
      %4357 = vmatpush1.msra.mxu0 0.0
      %4358 = vmatprep.subr.mxu0 0.0
      %4359 = vmatpush1.msra.mxu0 0.0
      %4360 = vmatprep.subr.mxu0 0.0
      %4361 = vmatpush1.msra.mxu0 0.0
      %4362 = vmatprep.subr.mxu0 0.0
      %4363 = vmatpush1.msra.mxu0 0.0
      %4364 = vmatprep.subr.mxu0 0.0
      %4365 = vmatpush1.msra.mxu0 0.0
      %4366 = vmatprep.subr.mxu0 0.0
      %4367 = vmatpush1.msra.mxu0 0.0
      %4368 = vmatprep.subr.mxu0 0.0
      %4369 = vmatpush1.msra.mxu0 0.0
      %4370 = vmatprep.subr.mxu0 0.0
      %4371 = vmatpush1.msra.mxu0 0.0
      %4372 = vmatprep.subr.mxu0 0.0
      %4373 = vmatpush1.msra.mxu0 0.0
      %4374 = vmatprep.subr.mxu0 0.0
      %4375 = vmatpush1.msra.mxu0 0.0
      %4376 = vmatprep.subr.mxu0 0.0
      %4377 = vmatpush1.msra.mxu0 0.0
      %4378 = vmatprep.subr.mxu0 0.0
      %4379 = vmatpush1.msra.mxu0 0.0
      %4380 = vmatprep.subr.mxu0 0.0
      %4381 = vmatpush1.msra.mxu0 0.0
      %4382 = vmatprep.subr.mxu0 0.0
      %4383 = vmatpush1.msra.mxu0 0.0
      %4384 = vmatprep.subr.mxu0 0.0
      %4385 = vmatpush1.msra.mxu0 0.0
      %4386 = vmatprep.subr.mxu0 0.0
      %4387 = vmatpush1.msra.mxu0 0.0
      %4388 = vmatprep.subr.mxu0 0.0
      %4389 = vmatpush1.msra.mxu0 0.0
      %4390 = vmatprep.subr.mxu0 0.0
      %4391 = vmatpush1.msra.mxu0 0.0
      %4392 = vmatprep.subr.mxu0 0.0
      %4393 = vmatpush1.msra.mxu0 0.0
      %4394 = vmatprep.subr.mxu0 0.0
      %4395 = vmatpush1.msra.mxu0 0.0
      %4396 = vmatprep.subr.mxu0 0.0
      %4397 = vmatpush1.msra.mxu0 0.0
      %4398 = vmatprep.subr.mxu0 0.0
      %4399 = vmatpush1.msra.mxu0 0.0
      %4400 = vmatprep.subr.mxu0 0.0
      %4401 = vmatpush1.msra.mxu0 0.0
      %4402 = vmatprep.subr.mxu0 0.0
      %4403 = vmatpush1.msra.mxu0 0.0
      %4404 = vmatprep.subr.mxu0 0.0
      %4405 = vmatpush1.msra.mxu0 0.0
      %4406 = vmatprep.mubr.f32.mxu0 0.0
      %4407 = vmatmul.mubr.f32.gmra.mrb[0].mxu0 %v2881
      %v4408 = vpop.f32.mrb[0].mxu0
      %v4409 = vadd.f32 %v4340, %v4408
      %v4410 = vpop.f32.mrb[0].mxu0
      %4411 = vdwg.mxu0
      %s4412 = scalar_lea.vmem %s5, 224
      %v4413 = vld [vmem:[%s4412] sm:$0xff]
      %v4414 = vld [vmem:[%s4412 + $0x8] sm:$0xff]
      %v4415 = vld [vmem:[%s4412 + $0x10] sm:$0xff]
      %v4416 = vld [vmem:[%s4412 + $0x18] sm:$0xff]
      %s4417 = scalar_lea.vmem %s6, 7
      %v4418 = vld [vmem:[%s4417] sm:$0x1]
      %v4420 = vlaneseq
      %v4421 = vshrl.u32 %v4420, 7
      %v4422 = vsub.s32 0, %v4421
      %v4423 = vrot.slane %v4418, %v4422
      %4425 = vmatprep.subr.mxu0 0.0
      %4426 = vmatpush1.msra.mxu0 %v4413
      %4427 = vmatprep.subr.mxu0 0.0
      %4428 = vmatpush1.msra.mxu0 %v4414
      %4429 = vmatprep.subr.mxu0 0.0
      %4430 = vmatpush1.msra.mxu0 %v4415
      %4431 = vmatprep.subr.mxu0 0.0
      %4432 = vmatpush1.msra.mxu0 %v4416
      %4433 = vmatprep.subr.mxu0 0.0
      %4434 = vmatpush1.msra.mxu0 0.0
      %4435 = vmatprep.subr.mxu0 0.0
      %4436 = vmatpush1.msra.mxu0 0.0
      %4437 = vmatprep.subr.mxu0 0.0
      %4438 = vmatpush1.msra.mxu0 0.0
      %4439 = vmatprep.subr.mxu0 0.0
      %4440 = vmatpush1.msra.mxu0 0.0
      %4441 = vmatprep.subr.mxu0 0.0
      %4442 = vmatpush1.msra.mxu0 0.0
      %4443 = vmatprep.subr.mxu0 0.0
      %4444 = vmatpush1.msra.mxu0 0.0
      %4445 = vmatprep.subr.mxu0 0.0
      %4446 = vmatpush1.msra.mxu0 0.0
      %4447 = vmatprep.subr.mxu0 0.0
      %4448 = vmatpush1.msra.mxu0 0.0
      %4449 = vmatprep.subr.mxu0 0.0
      %4450 = vmatpush1.msra.mxu0 0.0
      %4451 = vmatprep.subr.mxu0 0.0
      %4452 = vmatpush1.msra.mxu0 0.0
      %4453 = vmatprep.subr.mxu0 0.0
      %4454 = vmatpush1.msra.mxu0 0.0
      %4455 = vmatprep.subr.mxu0 0.0
      %4456 = vmatpush1.msra.mxu0 0.0
      %4457 = vmatprep.subr.mxu0 0.0
      %4458 = vmatpush1.msra.mxu0 0.0
      %4459 = vmatprep.subr.mxu0 0.0
      %4460 = vmatpush1.msra.mxu0 0.0
      %4461 = vmatprep.subr.mxu0 0.0
      %4462 = vmatpush1.msra.mxu0 0.0
      %4463 = vmatprep.subr.mxu0 0.0
      %4464 = vmatpush1.msra.mxu0 0.0
      %4465 = vmatprep.subr.mxu0 0.0
      %4466 = vmatpush1.msra.mxu0 0.0
      %4467 = vmatprep.subr.mxu0 0.0
      %4468 = vmatpush1.msra.mxu0 0.0
      %4469 = vmatprep.subr.mxu0 0.0
      %4470 = vmatpush1.msra.mxu0 0.0
      %4471 = vmatprep.subr.mxu0 0.0
      %4472 = vmatpush1.msra.mxu0 0.0
      %4473 = vmatprep.subr.mxu0 0.0
      %4474 = vmatpush1.msra.mxu0 0.0
      %4475 = vmatprep.subr.mxu0 0.0
      %4476 = vmatpush1.msra.mxu0 0.0
      %4477 = vmatprep.subr.mxu0 0.0
      %4478 = vmatpush1.msra.mxu0 0.0
      %4479 = vmatprep.subr.mxu0 0.0
      %4480 = vmatpush1.msra.mxu0 0.0
      %4481 = vmatprep.subr.mxu0 0.0
      %4482 = vmatpush1.msra.mxu0 0.0
      %4483 = vmatprep.subr.mxu0 0.0
      %4484 = vmatpush1.msra.mxu0 0.0
      %4485 = vmatprep.subr.mxu0 0.0
      %4486 = vmatpush1.msra.mxu0 0.0
      %4487 = vmatprep.subr.mxu0 0.0
      %4488 = vmatpush1.msra.mxu0 0.0
      %4489 = vmatprep.mubr.f32.mxu0 0.0
      %4490 = vmatmul.mubr.f32.gmra.mrb[0].mxu0 %v2881
      %v4491 = vpop.f32.mrb[0].mxu0
      %v4492 = vadd.f32 %v4423, %v4491
      %v4493 = vpop.f32.mrb[0].mxu0
      %4494 = vdwg.mxu0
      %s4495 = scalar_lea.vmem %s7, 224
      %v4496 = vld [vmem:[%s4495] sm:$0xff]
      %v4497 = vld [vmem:[%s4495 + $0x8] sm:$0xff]
      %v4498 = vld [vmem:[%s4495 + $0x10] sm:$0xff]
      %v4499 = vld [vmem:[%s4495 + $0x18] sm:$0xff]
      %s4500 = scalar_lea.vmem %s8, 7
      %v4501 = vld [vmem:[%s4500] sm:$0x1]
      %v4503 = vlaneseq
      %v4504 = vshrl.u32 %v4503, 7
      %v4505 = vsub.s32 0, %v4504
      %v4506 = vrot.slane %v4501, %v4505
      %4508 = vmatprep.subr.mxu0 0.0
      %4509 = vmatpush1.msra.mxu0 %v4496
      %4510 = vmatprep.subr.mxu0 0.0
      %4511 = vmatpush1.msra.mxu0 %v4497
      %4512 = vmatprep.subr.mxu0 0.0
      %4513 = vmatpush1.msra.mxu0 %v4498
      %4514 = vmatprep.subr.mxu0 0.0
      %4515 = vmatpush1.msra.mxu0 %v4499
      %4516 = vmatprep.subr.mxu0 0.0
      %4517 = vmatpush1.msra.mxu0 0.0
      %4518 = vmatprep.subr.mxu0 0.0
      %4519 = vmatpush1.msra.mxu0 0.0
      %4520 = vmatprep.subr.mxu0 0.0
      %4521 = vmatpush1.msra.mxu0 0.0
      %4522 = vmatprep.subr.mxu0 0.0
      %4523 = vmatpush1.msra.mxu0 0.0
      %4524 = vmatprep.subr.mxu0 0.0
      %4525 = vmatpush1.msra.mxu0 0.0
      %4526 = vmatprep.subr.mxu0 0.0
      %4527 = vmatpush1.msra.mxu0 0.0
      %4528 = vmatprep.subr.mxu0 0.0
      %4529 = vmatpush1.msra.mxu0 0.0
      %4530 = vmatprep.subr.mxu0 0.0
      %4531 = vmatpush1.msra.mxu0 0.0
      %4532 = vmatprep.subr.mxu0 0.0
      %4533 = vmatpush1.msra.mxu0 0.0
      %4534 = vmatprep.subr.mxu0 0.0
      %4535 = vmatpush1.msra.mxu0 0.0
      %4536 = vmatprep.subr.mxu0 0.0
      %4537 = vmatpush1.msra.mxu0 0.0
      %4538 = vmatprep.subr.mxu0 0.0
      %4539 = vmatpush1.msra.mxu0 0.0
      %4540 = vmatprep.subr.mxu0 0.0
      %4541 = vmatpush1.msra.mxu0 0.0
      %4542 = vmatprep.subr.mxu0 0.0
      %4543 = vmatpush1.msra.mxu0 0.0
      %4544 = vmatprep.subr.mxu0 0.0
      %4545 = vmatpush1.msra.mxu0 0.0
      %4546 = vmatprep.subr.mxu0 0.0
      %4547 = vmatpush1.msra.mxu0 0.0
      %4548 = vmatprep.subr.mxu0 0.0
      %4549 = vmatpush1.msra.mxu0 0.0
      %4550 = vmatprep.subr.mxu0 0.0
      %4551 = vmatpush1.msra.mxu0 0.0
      %4552 = vmatprep.subr.mxu0 0.0
      %4553 = vmatpush1.msra.mxu0 0.0
      %4554 = vmatprep.subr.mxu0 0.0
      %4555 = vmatpush1.msra.mxu0 0.0
      %4556 = vmatprep.subr.mxu0 0.0
      %4557 = vmatpush1.msra.mxu0 0.0
      %4558 = vmatprep.subr.mxu0 0.0
      %4559 = vmatpush1.msra.mxu0 0.0
      %4560 = vmatprep.subr.mxu0 0.0
      %4561 = vmatpush1.msra.mxu0 0.0
      %4562 = vmatprep.subr.mxu0 0.0
      %4563 = vmatpush1.msra.mxu0 0.0
      %4564 = vmatprep.subr.mxu0 0.0
      %4565 = vmatpush1.msra.mxu0 0.0
      %4566 = vmatprep.subr.mxu0 0.0
      %4567 = vmatpush1.msra.mxu0 0.0
      %4568 = vmatprep.subr.mxu0 0.0
      %4569 = vmatpush1.msra.mxu0 0.0
      %4570 = vmatprep.subr.mxu0 0.0
      %4571 = vmatpush1.msra.mxu0 0.0
      %4572 = vmatprep.mubr.f32.mxu0 0.0
      %4573 = vmatmul.mubr.f32.gmra.mrb[0].mxu0 %v2881
      %v4574 = vpop.f32.mrb[0].mxu0
      %v4575 = vadd.f32 %v4506, %v4574
      %v4576 = vpop.f32.mrb[0].mxu0
      %4577 = vdwg.mxu0
      %v4579 = vsel %vm919, %v4409, 0
      %v4582 = vsel %vm919, %v4492, 0
      %4584 = vmatprep.subr.mxu0 0.0
      %4585 = vmatpush1.xpose.msra.mxu0 %v4582
      %4586 = vmatprep.subr.mxu0 0.0
      %4587 = vmatpush1.xpose.msra.mxu0 0.0
      %4588 = vmatprep.subr.mxu0 0.0
      %4589 = vmatpush1.xpose.msra.mxu0 0.0
      %4590 = vmatprep.subr.mxu0 0.0
      %4591 = vmatpush1.xpose.msra.mxu0 0.0
      %4592 = vmatprep.subr.mxu0 0.0
      %4593 = vmatpush1.xpose.msra.mxu0 0.0
      %4594 = vmatprep.subr.mxu0 0.0
      %4595 = vmatpush1.xpose.msra.mxu0 0.0
      %4596 = vmatprep.subr.mxu0 0.0
      %4597 = vmatpush1.xpose.msra.mxu0 0.0
      %4598 = vmatprep.subr.mxu0 0.0
      %4599 = vmatpush1.xpose.msra.mxu0 0.0
      %4600 = vmatprep.subr.mxu0 0.0
      %4601 = vmatpush1.xpose.msra.mxu0 0.0
      %4602 = vmatprep.subr.mxu0 0.0
      %4603 = vmatpush1.xpose.msra.mxu0 0.0
      %4604 = vmatprep.subr.mxu0 0.0
      %4605 = vmatpush1.xpose.msra.mxu0 0.0
      %4606 = vmatprep.subr.mxu0 0.0
      %4607 = vmatpush1.xpose.msra.mxu0 0.0
      %4608 = vmatprep.subr.mxu0 0.0
      %4609 = vmatpush1.xpose.msra.mxu0 0.0
      %4610 = vmatprep.subr.mxu0 0.0
      %4611 = vmatpush1.xpose.msra.mxu0 0.0
      %4612 = vmatprep.subr.mxu0 0.0
      %4613 = vmatpush1.xpose.msra.mxu0 0.0
      %4614 = vmatprep.subr.mxu0 0.0
      %4615 = vmatpush1.xpose.msra.mxu0 0.0
      %4616 = vmatprep.subr.mxu0 0.0
      %4617 = vmatpush1.xpose.msra.mxu0 0.0
      %4618 = vmatprep.subr.mxu0 0.0
      %4619 = vmatpush1.xpose.msra.mxu0 0.0
      %4620 = vmatprep.subr.mxu0 0.0
      %4621 = vmatpush1.xpose.msra.mxu0 0.0
      %4622 = vmatprep.subr.mxu0 0.0
      %4623 = vmatpush1.xpose.msra.mxu0 0.0
      %4624 = vmatprep.subr.mxu0 0.0
      %4625 = vmatpush1.xpose.msra.mxu0 0.0
      %4626 = vmatprep.subr.mxu0 0.0
      %4627 = vmatpush1.xpose.msra.mxu0 0.0
      %4628 = vmatprep.subr.mxu0 0.0
      %4629 = vmatpush1.xpose.msra.mxu0 0.0
      %4630 = vmatprep.subr.mxu0 0.0
      %4631 = vmatpush1.xpose.msra.mxu0 0.0
      %4632 = vmatprep.subr.mxu0 0.0
      %4633 = vmatpush1.xpose.msra.mxu0 0.0
      %4634 = vmatprep.subr.mxu0 0.0
      %4635 = vmatpush1.xpose.msra.mxu0 0.0
      %4636 = vmatprep.subr.mxu0 0.0
      %4637 = vmatpush1.xpose.msra.mxu0 0.0
      %4638 = vmatprep.subr.mxu0 0.0
      %4639 = vmatpush1.xpose.msra.mxu0 0.0
      %4640 = vmatprep.subr.mxu0 0.0
      %4641 = vmatpush1.xpose.msra.mxu0 0.0
      %4642 = vmatprep.subr.mxu0 0.0
      %4643 = vmatpush1.xpose.msra.mxu0 0.0
      %4644 = vmatprep.subr.mxu0 0.0
      %4645 = vmatpush1.xpose.msra.mxu0 0.0
      %4646 = vmatprep.subr.mxu0 0.0
      %4647 = vmatpush1.xpose.msra.mxu0 0.0
      %4648 = vmatprep.mubr.f32.mxu0 0.0
      %4649 = vmatmul.mubr.f32.gmra.mrb[0].mxu0 %v4579
      %v4650 = vpop.f32.mrb[0].mxu0
      %v4651 = vadd.f32 0.0, %v4650
      %v4652 = vpop.f32.mrb[0].mxu0
      %4653 = vdwg.mxu0
      %v4654 = vsel %vm919, %v4651, -inf
      %4655 = vmax.xlane.f32.xlu0 %v4654
      %v4656 = vpop.xlane.xlu0 %4655
      %v4657 = vsub.f32 %v4651, %v4656
      %v4658 = vmul.f32 %v4657, 1.442695
      %v4659 = vpow.pop %v4658
      %v4660 = vsel %vm919, %v4659, 0.0
      %4661 = vadd.xlane.f32.xlu0 %v4660
      %v4662 = vpop.xlane.xlu0 %4661
      %v4663 = vrcp.pop %v4662
      %v4664 = vmul.f32 %v4659, %v4663
      %s4665 = scalar_lea.vmem %s639, 56
      %4666 = vst.msk [vmem:[%s4665] sm:$0xff] %vm919, %v4664
      %v4668 = vsel %vm919, %v4664, 0
      %4670 = vmatprep.subr.mxu0 0.0
      %4671 = vmatpush1.msra.mxu0 %v4575
      %4672 = vmatprep.subr.mxu0 0.0
      %4673 = vmatpush1.msra.mxu0 0.0
      %4674 = vmatprep.subr.mxu0 0.0
      %4675 = vmatpush1.msra.mxu0 0.0
      %4676 = vmatprep.subr.mxu0 0.0
      %4677 = vmatpush1.msra.mxu0 0.0
      %4678 = vmatprep.subr.mxu0 0.0
      %4679 = vmatpush1.msra.mxu0 0.0
      %4680 = vmatprep.subr.mxu0 0.0
      %4681 = vmatpush1.msra.mxu0 0.0
      %4682 = vmatprep.subr.mxu0 0.0
      %4683 = vmatpush1.msra.mxu0 0.0
      %4684 = vmatprep.subr.mxu0 0.0
      %4685 = vmatpush1.msra.mxu0 0.0
      %4686 = vmatprep.subr.mxu0 0.0
      %4687 = vmatpush1.msra.mxu0 0.0
      %4688 = vmatprep.subr.mxu0 0.0
      %4689 = vmatpush1.msra.mxu0 0.0
      %4690 = vmatprep.subr.mxu0 0.0
      %4691 = vmatpush1.msra.mxu0 0.0
      %4692 = vmatprep.subr.mxu0 0.0
      %4693 = vmatpush1.msra.mxu0 0.0
      %4694 = vmatprep.subr.mxu0 0.0
      %4695 = vmatpush1.msra.mxu0 0.0
      %4696 = vmatprep.subr.mxu0 0.0
      %4697 = vmatpush1.msra.mxu0 0.0
      %4698 = vmatprep.subr.mxu0 0.0
      %4699 = vmatpush1.msra.mxu0 0.0
      %4700 = vmatprep.subr.mxu0 0.0
      %4701 = vmatpush1.msra.mxu0 0.0
      %4702 = vmatprep.subr.mxu0 0.0
      %4703 = vmatpush1.msra.mxu0 0.0
      %4704 = vmatprep.subr.mxu0 0.0
      %4705 = vmatpush1.msra.mxu0 0.0
      %4706 = vmatprep.subr.mxu0 0.0
      %4707 = vmatpush1.msra.mxu0 0.0
      %4708 = vmatprep.subr.mxu0 0.0
      %4709 = vmatpush1.msra.mxu0 0.0
      %4710 = vmatprep.subr.mxu0 0.0
      %4711 = vmatpush1.msra.mxu0 0.0
      %4712 = vmatprep.subr.mxu0 0.0
      %4713 = vmatpush1.msra.mxu0 0.0
      %4714 = vmatprep.subr.mxu0 0.0
      %4715 = vmatpush1.msra.mxu0 0.0
      %4716 = vmatprep.subr.mxu0 0.0
      %4717 = vmatpush1.msra.mxu0 0.0
      %4718 = vmatprep.subr.mxu0 0.0
      %4719 = vmatpush1.msra.mxu0 0.0
      %4720 = vmatprep.subr.mxu0 0.0
      %4721 = vmatpush1.msra.mxu0 0.0
      %4722 = vmatprep.subr.mxu0 0.0
      %4723 = vmatpush1.msra.mxu0 0.0
      %4724 = vmatprep.subr.mxu0 0.0
      %4725 = vmatpush1.msra.mxu0 0.0
      %4726 = vmatprep.subr.mxu0 0.0
      %4727 = vmatpush1.msra.mxu0 0.0
      %4728 = vmatprep.subr.mxu0 0.0
      %4729 = vmatpush1.msra.mxu0 0.0
      %4730 = vmatprep.subr.mxu0 0.0
      %4731 = vmatpush1.msra.mxu0 0.0
      %4732 = vmatprep.subr.mxu0 0.0
      %4733 = vmatpush1.msra.mxu0 0.0
      %4734 = vmatprep.mubr.f32.mxu0 0.0
      %4735 = vmatmul.mubr.f32.gmra.mrb[0].mxu0 %v4668
      %v4736 = vpop.f32.mrb[0].mxu0
      %v4737 = vadd.f32 0.0, %v4736
      %v4738 = vpop.f32.mrb[0].mxu0
      %4739 = vdwg.mxu0
      %s4740 = scalar_lea.vmem %s9, 56
      %v4741 = vld [vmem:[%s4740] sm:$0xff]
      %v4743 = vsel %vm919, %v4737, 0
      %4745 = vmatprep.subr.mxu0 0.0
      %4746 = vmatpush1.msra.mxu0 %v4741
      %4747 = vmatprep.subr.mxu0 0.0
      %4748 = vmatpush1.msra.mxu0 0.0
      %4749 = vmatprep.subr.mxu0 0.0
      %4750 = vmatpush1.msra.mxu0 0.0
      %4751 = vmatprep.subr.mxu0 0.0
      %4752 = vmatpush1.msra.mxu0 0.0
      %4753 = vmatprep.subr.mxu0 0.0
      %4754 = vmatpush1.msra.mxu0 0.0
      %4755 = vmatprep.subr.mxu0 0.0
      %4756 = vmatpush1.msra.mxu0 0.0
      %4757 = vmatprep.subr.mxu0 0.0
      %4758 = vmatpush1.msra.mxu0 0.0
      %4759 = vmatprep.subr.mxu0 0.0
      %4760 = vmatpush1.msra.mxu0 0.0
      %4761 = vmatprep.subr.mxu0 0.0
      %4762 = vmatpush1.msra.mxu0 0.0
      %4763 = vmatprep.subr.mxu0 0.0
      %4764 = vmatpush1.msra.mxu0 0.0
      %4765 = vmatprep.subr.mxu0 0.0
      %4766 = vmatpush1.msra.mxu0 0.0
      %4767 = vmatprep.subr.mxu0 0.0
      %4768 = vmatpush1.msra.mxu0 0.0
      %4769 = vmatprep.subr.mxu0 0.0
      %4770 = vmatpush1.msra.mxu0 0.0
      %4771 = vmatprep.subr.mxu0 0.0
      %4772 = vmatpush1.msra.mxu0 0.0
      %4773 = vmatprep.subr.mxu0 0.0
      %4774 = vmatpush1.msra.mxu0 0.0
      %4775 = vmatprep.subr.mxu0 0.0
      %4776 = vmatpush1.msra.mxu0 0.0
      %4777 = vmatprep.subr.mxu0 0.0
      %4778 = vmatpush1.msra.mxu0 0.0
      %4779 = vmatprep.subr.mxu0 0.0
      %4780 = vmatpush1.msra.mxu0 0.0
      %4781 = vmatprep.subr.mxu0 0.0
      %4782 = vmatpush1.msra.mxu0 0.0
      %4783 = vmatprep.subr.mxu0 0.0
      %4784 = vmatpush1.msra.mxu0 0.0
      %4785 = vmatprep.subr.mxu0 0.0
      %4786 = vmatpush1.msra.mxu0 0.0
      %4787 = vmatprep.subr.mxu0 0.0
      %4788 = vmatpush1.msra.mxu0 0.0
      %4789 = vmatprep.subr.mxu0 0.0
      %4790 = vmatpush1.msra.mxu0 0.0
      %4791 = vmatprep.subr.mxu0 0.0
      %4792 = vmatpush1.msra.mxu0 0.0
      %4793 = vmatprep.subr.mxu0 0.0
      %4794 = vmatpush1.msra.mxu0 0.0
      %4795 = vmatprep.subr.mxu0 0.0
      %4796 = vmatpush1.msra.mxu0 0.0
      %4797 = vmatprep.subr.mxu0 0.0
      %4798 = vmatpush1.msra.mxu0 0.0
      %4799 = vmatprep.subr.mxu0 0.0
      %4800 = vmatpush1.msra.mxu0 0.0
      %4801 = vmatprep.subr.mxu0 0.0
      %4802 = vmatpush1.msra.mxu0 0.0
      %4803 = vmatprep.subr.mxu0 0.0
      %4804 = vmatpush1.msra.mxu0 0.0
      %4805 = vmatprep.subr.mxu0 0.0
      %4806 = vmatpush1.msra.mxu0 0.0
      %4807 = vmatprep.subr.mxu0 0.0
      %4808 = vmatpush1.msra.mxu0 0.0
      %4809 = vmatprep.mubr.f32.mxu0 0.0
      %4810 = vmatmul.mubr.f32.gmra.mrb[0].mxu0 %v4743
      %v4811 = vpop.f32.mrb[0].mxu0
      %v4812 = vadd.f32 0.0, %v4811
      %v4813 = vpop.f32.mrb[0].mxu0
      %4814 = vdwg.mxu0
      %v4815 = vadd.f32 %v4328, %v4812
      %s4816 = scalar_lea.vmem %s10, 1
      %v4817 = vld [vmem:[%s4816] sm:$0x1]
      %v4819 = vlaneseq
      %v4820 = vshrl.u32 %v4819, 7
      %v4821 = vsub.s32 0, %v4820
      %v4822 = vrot.slane %v4817, %v4821
      %v4824 = vadd.f32 %v4815, %v4822
      %v4825 = vadd.f32 %v2864, %v4824
      %s4826 = scalar_lea.vmem %s11, 1
      %v4827 = vld [vmem:[%s4826] sm:$0x1]
      %s4828 = scalar_lea.vmem %s12, 1
      %v4829 = vld [vmem:[%s4828] sm:$0x1]
      %v4830 = vsel %vm643, %v4825, 0.0
      %4831 = vadd.xlane.f32.xlu0 %v4830
      %v4832 = vpop.xlane.xlu0 %4831
      %v4833 = vmul.f32 %v4832, %v647
      %v4834 = vsub.f32 %v4825, %v4833
      %v4835 = vmul.f32 %v4834, %v4834
      %v4836 = vsel %vm643, %v4835, 0.0
      %4837 = vadd.xlane.f32.xlu0 %v4836
      %v4838 = vpop.xlane.xlu0 %4837
      %v4839 = vmul.f32 %v4838, %v647
      %v4840 = vadd.f32 %v4839, 1e-12
      %v4841 = vrsqrt.pop %v4840
      %v4842 = vmul.f32 %v4834, %v4841
      %v4844 = vlaneseq
      %v4845 = vshrl.u32 %v4844, 7
      %v4846 = vsub.s32 0, %v4845
      %v4847 = vrot.slane %v4827, %v4846
      %v4849 = vmul.f32 %v4842, %v4847
      %v4851 = vlaneseq
      %v4852 = vshrl.u32 %v4851, 7
      %v4853 = vsub.s32 0, %v4852
      %v4854 = vrot.slane %v4829, %v4853
      %v4856 = vadd.f32 %v4849, %v4854
      %s4857 = scalar_lea.vmem %s13, 32
      %v4858 = vld [vmem:[%s4857] sm:$0xff]
      %v4859 = vld [vmem:[%s4857 + $0x8] sm:$0xff]
      %v4860 = vld [vmem:[%s4857 + $0x10] sm:$0xff]
      %v4861 = vld [vmem:[%s4857 + $0x18] sm:$0xff]
      %s4862 = scalar_lea.vmem %s14, 1
      %v4863 = vld [vmem:[%s4862] sm:$0x1]
      %v4865 = vlaneseq
      %v4866 = vshrl.u32 %v4865, 7
      %v4867 = vsub.s32 0, %v4866
      %v4868 = vrot.slane %v4863, %v4867
      %v4871 = vsel %vm643, %v4856, 0
      %4873 = vmatprep.subr.mxu0 0.0
      %4874 = vmatpush1.msra.mxu0 %v4858
      %4875 = vmatprep.subr.mxu0 0.0
      %4876 = vmatpush1.msra.mxu0 %v4859
      %4877 = vmatprep.subr.mxu0 0.0
      %4878 = vmatpush1.msra.mxu0 %v4860
      %4879 = vmatprep.subr.mxu0 0.0
      %4880 = vmatpush1.msra.mxu0 %v4861
      %4881 = vmatprep.subr.mxu0 0.0
      %4882 = vmatpush1.msra.mxu0 0.0
      %4883 = vmatprep.subr.mxu0 0.0
      %4884 = vmatpush1.msra.mxu0 0.0
      %4885 = vmatprep.subr.mxu0 0.0
      %4886 = vmatpush1.msra.mxu0 0.0
      %4887 = vmatprep.subr.mxu0 0.0
      %4888 = vmatpush1.msra.mxu0 0.0
      %4889 = vmatprep.subr.mxu0 0.0
      %4890 = vmatpush1.msra.mxu0 0.0
      %4891 = vmatprep.subr.mxu0 0.0
      %4892 = vmatpush1.msra.mxu0 0.0
      %4893 = vmatprep.subr.mxu0 0.0
      %4894 = vmatpush1.msra.mxu0 0.0
      %4895 = vmatprep.subr.mxu0 0.0
      %4896 = vmatpush1.msra.mxu0 0.0
      %4897 = vmatprep.subr.mxu0 0.0
      %4898 = vmatpush1.msra.mxu0 0.0
      %4899 = vmatprep.subr.mxu0 0.0
      %4900 = vmatpush1.msra.mxu0 0.0
      %4901 = vmatprep.subr.mxu0 0.0
      %4902 = vmatpush1.msra.mxu0 0.0
      %4903 = vmatprep.subr.mxu0 0.0
      %4904 = vmatpush1.msra.mxu0 0.0
      %4905 = vmatprep.subr.mxu0 0.0
      %4906 = vmatpush1.msra.mxu0 0.0
      %4907 = vmatprep.subr.mxu0 0.0
      %4908 = vmatpush1.msra.mxu0 0.0
      %4909 = vmatprep.subr.mxu0 0.0
      %4910 = vmatpush1.msra.mxu0 0.0
      %4911 = vmatprep.subr.mxu0 0.0
      %4912 = vmatpush1.msra.mxu0 0.0
      %4913 = vmatprep.subr.mxu0 0.0
      %4914 = vmatpush1.msra.mxu0 0.0
      %4915 = vmatprep.subr.mxu0 0.0
      %4916 = vmatpush1.msra.mxu0 0.0
      %4917 = vmatprep.subr.mxu0 0.0
      %4918 = vmatpush1.msra.mxu0 0.0
      %4919 = vmatprep.subr.mxu0 0.0
      %4920 = vmatpush1.msra.mxu0 0.0
      %4921 = vmatprep.subr.mxu0 0.0
      %4922 = vmatpush1.msra.mxu0 0.0
      %4923 = vmatprep.subr.mxu0 0.0
      %4924 = vmatpush1.msra.mxu0 0.0
      %4925 = vmatprep.subr.mxu0 0.0
      %4926 = vmatpush1.msra.mxu0 0.0
      %4927 = vmatprep.subr.mxu0 0.0
      %4928 = vmatpush1.msra.mxu0 0.0
      %4929 = vmatprep.subr.mxu0 0.0
      %4930 = vmatpush1.msra.mxu0 0.0
      %4931 = vmatprep.subr.mxu0 0.0
      %4932 = vmatpush1.msra.mxu0 0.0
      %4933 = vmatprep.subr.mxu0 0.0
      %4934 = vmatpush1.msra.mxu0 0.0
      %4935 = vmatprep.subr.mxu0 0.0
      %4936 = vmatpush1.msra.mxu0 0.0
      %4937 = vmatprep.mubr.f32.mxu0 0.0
      %4938 = vmatmul.mubr.f32.gmra.mrb[0].mxu0 %v4871
      %v4939 = vpop.f32.mrb[0].mxu0
      %v4940 = vadd.f32 %v4868, %v4939
      %v4941 = vpop.f32.mrb[0].mxu0
      %4942 = vdwg.mxu0
      %v4943 = vmul.f32 %v4940, 0.5
      %v4944 = vmul.f32 %v4940, 0.044715
      %v4945 = vmul.f32 %v4944, %v4940
      %v4946 = vmul.f32 %v4945, %v4940
      %v4947 = vadd.f32 %v4940, %v4946
      %v4948 = vmul.f32 %v4947, 0.7978846
      %v4949 = vtanh.pop %v4948
      %v4950 = vadd.f32 %v4949, 1.0
      %v4951 = vmul.f32 %v4943, %v4950
      %s4952 = scalar_lea.vmem %s15, 64
      %v4953 = vld [vmem:[%s4952] sm:$0xff]
      %v4954 = vld [vmem:[%s4952 + $0x8] sm:$0xff]
      %v4955 = vld [vmem:[%s4952 + $0x10] sm:$0xff]
      %v4956 = vld [vmem:[%s4952 + $0x18] sm:$0xff]
      %v4957 = vld [vmem:[%s4952 + $0x20] sm:$0xff]
      %v4958 = vld [vmem:[%s4952 + $0x28] sm:$0xff]
      %v4959 = vld [vmem:[%s4952 + $0x30] sm:$0xff]
      %v4960 = vld [vmem:[%s4952 + $0x38] sm:$0xff]
      %s4961 = scalar_lea.vmem %s16, 1
      %v4962 = vld [vmem:[%s4961] sm:$0x1]
      %v4964 = vlaneseq
      %v4965 = vshrl.u32 %v4964, 7
      %v4966 = vsub.s32 0, %v4965
      %v4967 = vrot.slane %v4962, %v4966
      %v4970 = vsel %vm2761, %v4951, 0
      %4972 = vmatprep.subr.mxu0 0.0
      %4973 = vmatpush1.msra.mxu0 %v4953
      %4974 = vmatprep.subr.mxu0 0.0
      %4975 = vmatpush1.msra.mxu0 %v4954
      %4976 = vmatprep.subr.mxu0 0.0
      %4977 = vmatpush1.msra.mxu0 %v4955
      %4978 = vmatprep.subr.mxu0 0.0
      %4979 = vmatpush1.msra.mxu0 %v4956
      %4980 = vmatprep.subr.mxu0 0.0
      %4981 = vmatpush1.msra.mxu0 %v4957
      %4982 = vmatprep.subr.mxu0 0.0
      %4983 = vmatpush1.msra.mxu0 %v4958
      %4984 = vmatprep.subr.mxu0 0.0
      %4985 = vmatpush1.msra.mxu0 %v4959
      %4986 = vmatprep.subr.mxu0 0.0
      %4987 = vmatpush1.msra.mxu0 %v4960
      %4988 = vmatprep.subr.mxu0 0.0
      %4989 = vmatpush1.msra.mxu0 0.0
      %4990 = vmatprep.subr.mxu0 0.0
      %4991 = vmatpush1.msra.mxu0 0.0
      %4992 = vmatprep.subr.mxu0 0.0
      %4993 = vmatpush1.msra.mxu0 0.0
      %4994 = vmatprep.subr.mxu0 0.0
      %4995 = vmatpush1.msra.mxu0 0.0
      %4996 = vmatprep.subr.mxu0 0.0
      %4997 = vmatpush1.msra.mxu0 0.0
      %4998 = vmatprep.subr.mxu0 0.0
      %4999 = vmatpush1.msra.mxu0 0.0
      %5000 = vmatprep.subr.mxu0 0.0
      %5001 = vmatpush1.msra.mxu0 0.0
      %5002 = vmatprep.subr.mxu0 0.0
      %5003 = vmatpush1.msra.mxu0 0.0
      %5004 = vmatprep.subr.mxu0 0.0
      %5005 = vmatpush1.msra.mxu0 0.0
      %5006 = vmatprep.subr.mxu0 0.0
      %5007 = vmatpush1.msra.mxu0 0.0
      %5008 = vmatprep.subr.mxu0 0.0
      %5009 = vmatpush1.msra.mxu0 0.0
      %5010 = vmatprep.subr.mxu0 0.0
      %5011 = vmatpush1.msra.mxu0 0.0
      %5012 = vmatprep.subr.mxu0 0.0
      %5013 = vmatpush1.msra.mxu0 0.0
      %5014 = vmatprep.subr.mxu0 0.0
      %5015 = vmatpush1.msra.mxu0 0.0
      %5016 = vmatprep.subr.mxu0 0.0
      %5017 = vmatpush1.msra.mxu0 0.0
      %5018 = vmatprep.subr.mxu0 0.0
      %5019 = vmatpush1.msra.mxu0 0.0
      %5020 = vmatprep.subr.mxu0 0.0
      %5021 = vmatpush1.msra.mxu0 0.0
      %5022 = vmatprep.subr.mxu0 0.0
      %5023 = vmatpush1.msra.mxu0 0.0
      %5024 = vmatprep.subr.mxu0 0.0
      %5025 = vmatpush1.msra.mxu0 0.0
      %5026 = vmatprep.subr.mxu0 0.0
      %5027 = vmatpush1.msra.mxu0 0.0
      %5028 = vmatprep.subr.mxu0 0.0
      %5029 = vmatpush1.msra.mxu0 0.0
      %5030 = vmatprep.subr.mxu0 0.0
      %5031 = vmatpush1.msra.mxu0 0.0
      %5032 = vmatprep.subr.mxu0 0.0
      %5033 = vmatpush1.msra.mxu0 0.0
      %5034 = vmatprep.subr.mxu0 0.0
      %5035 = vmatpush1.msra.mxu0 0.0
      %5036 = vmatprep.mubr.f32.mxu0 0.0
      %5037 = vmatmul.mubr.f32.gmra.mrb[0].mxu0 %v4970
      %v5038 = vpop.f32.mrb[0].mxu0
      %v5039 = vadd.f32 %v4967, %v5038
      %v5040 = vpop.f32.mrb[0].mxu0
      %5041 = vdwg.mxu0
      %v5042 = vadd.f32 %v4856, %v5039
      %s5043 = scalar_lea.vmem %s17, 1
      %v5044 = vld [vmem:[%s5043] sm:$0x1]
      %s5045 = scalar_lea.vmem %s18, 1
      %v5046 = vld [vmem:[%s5045] sm:$0x1]
      %v5047 = vsel %vm643, %v5042, 0.0
      %5048 = vadd.xlane.f32.xlu0 %v5047
      %v5049 = vpop.xlane.xlu0 %5048
      %v5050 = vmul.f32 %v5049, %v647
      %v5051 = vsub.f32 %v5042, %v5050
      %v5052 = vmul.f32 %v5051, %v5051
      %v5053 = vsel %vm643, %v5052, 0.0
      %5054 = vadd.xlane.f32.xlu0 %v5053
      %v5055 = vpop.xlane.xlu0 %5054
      %v5056 = vmul.f32 %v5055, %v647
      %v5057 = vadd.f32 %v5056, 1e-12
      %v5058 = vrsqrt.pop %v5057
      %v5059 = vmul.f32 %v5051, %v5058
      %v5061 = vlaneseq
      %v5062 = vshrl.u32 %v5061, 7
      %v5063 = vsub.s32 0, %v5062
      %v5064 = vrot.slane %v5044, %v5063
      %v5066 = vmul.f32 %v5059, %v5064
      %v5068 = vlaneseq
      %v5069 = vshrl.u32 %v5068, 7
      %v5070 = vsub.s32 0, %v5069
      %v5071 = vrot.slane %v5046, %v5070
      %v5073 = vadd.f32 %v5066, %v5071
      %s5074 = scalar_lea.vmem %s634, 16
      %5075 = vst.msk [vmem:[%s5074] sm:$0xff] %vm643, %v5073
      %p5076 = scmp.lt.s32.totalorder %s32, 1
      %s5077 = scalar_select %p5076, %s32, 1
      %s5078 = smul.addr %s5077, 3
      %s5079 = smul.addr %s5078, 8
      %s5080 = scalar_lea.vmem %s19, %s5079
      %p5081 = scmp.lt.s32.totalorder %s32, 1
      %s5082 = scalar_select %p5081, %s32, 1
      %s5083 = smul.addr %s5082, 8
      %s5084 = smul.addr %s5083, 8
      %s5085 = scalar_lea.vmem %s20, %s5084
      // Predicated region
      $region97: #{encoder_forward.1} parent=95 // pred_check
        %p5086 = pneg %p454
      $region98: #{encoder_forward.1} parent=95 // pred_check_branch
        %5088 = sbr.rel (%p5086) target = $region100
      $region99: #{encoder_forward.1} parent=95 // pred_region
        _
      $region100: #{encoder_forward.1} parent=95 // pred_fallthru
        _
      // Predicated region
      $region101: #{encoder_forward.1} parent=95 // pred_check
        %p5089 = pneg %p480
      $region102: #{encoder_forward.1} parent=95 // pred_check_branch
        %5091 = sbr.rel (%p5089) target = $region104
      $region103: #{encoder_forward.1} parent=95 // pred_region
        _
      $region104: #{encoder_forward.1} parent=95 // pred_fallthru
        _
    $region96: #{encoder_forward.1} parent=5 // pred_fallthru
      _
    %p5092 = scmp.le.s32.totalorder 2, %s27
    // Predicated region
    $region105: #{encoder_forward.1} parent=5 // pred_check
      %p5093 = pneg %p5092
    $region106: #{encoder_forward.1} parent=5 // pred_check_branch
      %5095 = sbr.rel (%p5093) target = $region108
    $region107: #{encoder_forward.1} parent=5 // pred_region
      %s5096 = ssub.s32 %s27, 2
      // Predicated region
      $region109: #{encoder_forward.1} parent=107 // pred_check
        %p5097 = pneg %p460
      $region110: #{encoder_forward.1} parent=107 // pred_check_branch
        %5099 = sbr.rel (%p5097) target = $region112
      $region111: #{encoder_forward.1} parent=107 // pred_region
        %p5100 = scmp.lt.s32.totalorder %s33, 1
        %s5101 = scalar_select %p5100, %s33, 1
        %s5102 = smul.addr %s5101, 3
        %s5103 = smul.addr %s5102, 8
        %s5104 = scalar_lea.vmem %s19, %s5103
      $region112: #{encoder_forward.1} parent=107 // pred_fallthru
        _
      // Predicated region
      $region113: #{encoder_forward.1} parent=107 // pred_check
        %p5105 = pneg %p486
      $region114: #{encoder_forward.1} parent=107 // pred_check_branch
        %5107 = sbr.rel (%p5105) target = $region116
      $region115: #{encoder_forward.1} parent=107 // pred_region
        %p5108 = scmp.lt.s32.totalorder %s33, 1
        %s5109 = scalar_select %p5108, %s33, 1
        %s5110 = smul.addr %s5109, 8
        %s5111 = smul.addr %s5110, 8
        %s5112 = scalar_lea.vmem %s20, %s5111
      $region116: #{encoder_forward.1} parent=107 // pred_fallthru
        _
    $region108: #{encoder_forward.1} parent=5 // pred_fallthru
      _
  $region6: #{encoder_forward.1} parent=0 // loop_footer
    %s31 = sadd.s32 1, %s27
  $region7: #{encoder_forward.1} parent=0 // loop_footer_branch
    %26 = sbr.rel target = $region3
  $region8: #{encoder_forward.1} parent=0 // loop_exit
    _

</llo_original>
